<compile_context>
chip_gen: v6e
topology: v6e:2x2x1
jax: 0.10.0
libtpu: 0.0.40
codegen_flags: <defaults>
</compile_context>

<pallas_src>
import functools
import math

import jax
import jax.numpy as jnp
from jax.experimental import pallas as pl
from jax.experimental.pallas import tpu as pltpu


# ---------------------------------------------------------------------------
# In-kernel helpers (values + weight refs; every shape / trip count is static)
# ---------------------------------------------------------------------------
def _gru_seq(x_tm, batch, steps, wih_ref, whh_ref, b_ref):
    """Single-layer GRU (PyTorch gate order r,z,n), h0 = 0.

    x_tm: (steps*batch, D) time-major blocks of `batch` rows.
    Returns (list of per-step hidden states (batch, H), last hidden (batch, H)).
    """
    wih = wih_ref[...]                       # (D, 3H)
    whh = whh_ref[...]                       # (H, 3H)
    hdim = whh.shape[0]
    # Hoisted input projection: one matmul for all (t, n) pairs.
    gi = jnp.dot(x_tm, wih, preferred_element_type=jnp.float32) + b_ref[0:1, :]
    bhh = b_ref[1:2, :]
    h = jnp.zeros((batch, hdim), jnp.float32)
    hs = []
    for t in range(steps):                   # static unroll (steps <= 5)
        gi_t = gi[t * batch:(t + 1) * batch, :]
        gh = jnp.dot(h, whh, preferred_element_type=jnp.float32) + bhh
        r = jax.nn.sigmoid(gi_t[:, :hdim] + gh[:, :hdim])
        z = jax.nn.sigmoid(gi_t[:, hdim:2 * hdim] + gh[:, hdim:2 * hdim])
        n = jnp.tanh(gi_t[:, 2 * hdim:] + r * gh[:, 2 * hdim:])
        h = (1.0 - z) * n + z * h
        hs.append(h)
    return hs, h


def _attn_ctx(hs, last, w1_ref, w2_ref, v_ref, b_ref):
    """score_t = V(tanh(W1 last + W2 h_t)); softmax over t; ctx = sum_t a_t h_t."""
    w2 = w2_ref[...]
    v = v_ref[...]                           # (1, H) row of the V linear
    b2 = b_ref[1:2, :]
    bv = b_ref[2:3, 0:1]                     # (1, 1) bias of V
    h1 = (jnp.dot(last, w1_ref[...], preferred_element_type=jnp.float32)
          + b_ref[0:1, :])
    scores = []
    for h_t in hs:
        e_t = jnp.tanh(h1 + jnp.dot(h_t, w2, preferred_element_type=jnp.float32)
                       + b2)                                    # (batch, H)
        scores.append(jnp.sum(e_t * v, axis=-1, keepdims=True) + bv)  # (batch, 1)
    # streaming softmax over the (static, tiny) step axis -- no relayouts
    m = scores[0]
    for s_t in scores[1:]:
        m = jnp.maximum(m, s_t)
    exps = [jnp.exp(s_t - m) for s_t in scores]
    denom = exps[0]
    for e in exps[1:]:
        denom = denom + e
    inv = 1.0 / denom
    ctx = jnp.zeros_like(last)
    for e, h_t in zip(exps, hs):
        ctx = ctx + (e * inv) * h_t
    return ctx                                                  # (batch, H)


# ---------------------------------------------------------------------------
# Fused per-stock kernel (grid = (stock_num,))
# ---------------------------------------------------------------------------
def _mansf_stock_kernel(
        # data
        text_ref, price_ref,
        # price GRU + attention
        pg_wih_ref, pg_whh_ref, pg_b_ref,
        pa_w1_ref, pa_w2_ref, pa_v_ref, pa_b_ref,
        # tweet GRU + attention
        tg_wih_ref, tg_whh_ref, tg_b_ref,
        ta_w1_ref, ta_w2_ref, ta_v_ref, ta_b_ref,
        # news GRU + attention
        ng_wih_ref, ng_whh_ref, ng_b_ref,
        na_w1_ref, na_w2_ref, na_v_ref, na_b_ref,
        # bilinear (+ constant expansion operators) and head
        bl_w_ref, bl_b_ref, rrep_ref, rtile_ref, hd_w_ref, hd_b_ref,
        # output
        out_ref,
        *, num_d, num_tw):
    # ---- price path: GRU over num_d days (batch=1), attention over days ----
    p_hs, p_last = _gru_seq(price_ref[...], 1, num_d,
                            pg_wih_ref, pg_whh_ref, pg_b_ref)
    x_vec = _attn_ctx(p_hs, p_last, pa_w1_ref, pa_w2_ref, pa_v_ref, pa_b_ref)

    # ---- tweet path: all num_d days batched, GRU over num_tw tweets ----
    t_hs, t_last = _gru_seq(text_ref[...], num_d, num_tw,
                            tg_wih_ref, tg_whh_ref, tg_b_ref)
    news = _attn_ctx(t_hs, t_last, ta_w1_ref, ta_w2_ref, ta_v_ref, ta_b_ref)

    # ---- news path: GRU over days (batch=1), attention over days ----
    n_hs, n_last = _gru_seq(news, 1, num_d, ng_wih_ref, ng_whh_ref, ng_b_ref)
    text_vec = _attn_ctx(n_hs, n_last, na_w1_ref, na_w2_ref, na_v_ref, na_b_ref)

    # ---- bilinear fusion: tanh(sum_{i,j} text_i W[k,i,j] x_j + b_k) ----
    # Build the flattened outer product (index i*H + j) via constant
    # expansion matrices (no in-kernel lane reshape needed).
    trep = jnp.dot(text_vec, rrep_ref[...],
                   preferred_element_type=jnp.float32)          # (1, H*H): text[i]
    xtil = jnp.dot(x_vec, rtile_ref[...],
                   preferred_element_type=jnp.float32)          # (1, H*H): x[j]
    combined = jnp.tanh(
        jnp.dot(trep * xtil, bl_w_ref[...],
                preferred_element_type=jnp.float32) + bl_b_ref[...])   # (1, H)

    # ---- head: probs = softmax(tanh(combined @ Wx + bx), classes) ----
    # TODO(synk): RGATConv contribution omitted (source not provided); its
    # output is treated as zero (F.elu(0) == 0), so probs = softmax(out_1).
    z = jnp.tanh(jnp.dot(combined, hd_w_ref[...],
                         preferred_element_type=jnp.float32) + hd_b_ref[...])
    out_ref[...] = jax.nn.softmax(z, axis=-1)                   # (1, 2)


# ---------------------------------------------------------------------------
# Parameter initialization (PyTorch-style uniform bounds), stacked over stocks
# ---------------------------------------------------------------------------
def init_mansf(key, nhid, stock_num, text_ft_dim, pr_ft=3):
    H = nhid
    bound = 1.0 / math.sqrt(H)

    def u(k, shape):
        return jax.random.uniform(k, shape, jnp.float32, -bound, bound)

    def gru_stack(k, in_dim):
        ks = jax.random.split(k, stock_num)
        wih, whh, b = [], [], []
        for kk in ks:
            k1, k2, k3, k4 = jax.random.split(kk, 4)
            wih.append(u(k1, (3 * H, in_dim)).T)                 # (D, 3H)
            whh.append(u(k2, (3 * H, H)).T)                      # (H, 3H)
            b.append(jnp.stack([u(k3, (3 * H,)), u(k4, (3 * H,))]))
        return {"wih": jnp.stack(wih), "whh": jnp.stack(whh), "b": jnp.stack(b)}

    def attn_stack(k):
        ks = jax.random.split(k, stock_num)
        w1, w2, v, b = [], [], [], []
        for kk in ks:
            k1, k2, k3, k4, k5, k6 = jax.random.split(kk, 6)
            w1.append(u(k1, (H, H)).T)
            w2.append(u(k2, (H, H)).T)
            v.append(u(k3, (1, H)))                              # V weight row
            b.append(jnp.stack([u(k4, (H,)), u(k5, (H,)),
                                jnp.full((H,), u(k6, (1,))[0])]))
        return {"w1": jnp.stack(w1), "w2": jnp.stack(w2),
                "v": jnp.stack(v), "b": jnp.stack(b)}

    def bilinear_stack(k):
        ks = jax.random.split(k, stock_num)
        w, b = [], []
        for kk in ks:
            k1, k2 = jax.random.split(kk)
            W = u(k1, (H, H, H))                                 # (out k, in1 i, in2 j)
            w.append(jnp.transpose(W, (1, 2, 0)).reshape(H * H, H))   # row i*H+j
            b.append(u(k2, (1, H)))
        return {"w": jnp.stack(w), "b": jnp.stack(b)}

    kgp, kap, ktg, kaw, kng, kat, kbl, khd = jax.random.split(key, 8)
    k_hw, k_hb = jax.random.split(khd)
    eye = jnp.eye(H, dtype=jnp.float32)
    return {
        "grup": gru_stack(kgp, pr_ft),
        "attnp": attn_stack(kap),
        "tweet_gru": gru_stack(ktg, text_ft_dim),
        "attn_tweet": attn_stack(kaw),
        "grut": gru_stack(kng, H),
        "attnt": attn_stack(kat),
        "bilinear": bilinear_stack(kbl),
        "linear_x": {"w": u(k_hw, (2, H)).T, "b": u(k_hb, (1, 2))},
        # constant lane-expansion operators for the fused bilinear
        #   text @ rrep  -> text[i] at flat index i*H + j
        #   x    @ rtile -> x[j]    at flat index i*H + j
        "rrep": jnp.repeat(eye, H, axis=1),                      # (H, H*H)
        "rtile": jnp.tile(eye, (1, H)),                          # (H, H*H)
    }


# ---------------------------------------------------------------------------
# MANSF forward (single fused pallas_call over the stock grid)
# ---------------------------------------------------------------------------
def mansf_forward(params, text_input, price_input, edge_index, edge_type):
    del edge_index, edge_type  # TODO(synk): RGATConv branch omitted.
    B, S, Dd, Tw, Ft = text_input.shape
    assert B == 1, "original forward's cat/reshape/squeeze(0) assumes batch_size == 1"

    price = price_input[0].astype(jnp.float32)                   # (S, Dd, 3)
    # time-major tweet layout: row (tw*Dd + d) = text_input[0, s, d, tw, :]
    text_tm = jnp.transpose(text_input[0].astype(jnp.float32),
                            (0, 2, 1, 3)).reshape(S, Tw * Dd, Ft)

    def per_stock_spec(arr):
        shp = tuple(arr.shape[1:])
        return pl.BlockSpec((None,) + shp,
                            lambda s, _n=len(shp): (s,) + (0,) * _n)

    def shared_spec(arr):
        shp = tuple(arr.shape)
        return pl.BlockSpec(shp, lambda s, _n=len(shp): (0,) * _n)

    inputs, specs = [], []

    def add_ps(arr):
        inputs.append(arr)
        specs.append(per_stock_spec(arr))

    def add_sh(arr):
        inputs.append(arr)
        specs.append(shared_spec(arr))

    add_ps(text_tm)
    add_ps(price)
    for name in ("grup", "attnp", "tweet_gru", "attn_tweet", "grut", "attnt"):
        d = params[name]
        if "wih" in d:                                           # GRU block
            add_ps(d["wih"]); add_ps(d["whh"]); add_ps(d["b"])
        else:                                                    # attention block
            add_ps(d["w1"]); add_ps(d["w2"]); add_ps(d["v"]); add_ps(d["b"])
    add_ps(params["bilinear"]["w"])
    add_ps(params["bilinear"]["b"])
    add_sh(params["rrep"])
    add_sh(params["rtile"])
    add_sh(params["linear_x"]["w"])
    add_sh(params["linear_x"]["b"])

    probs3 = pl.pallas_call(
        functools.partial(_mansf_stock_kernel, num_d=Dd, num_tw=Tw),
        grid=(S,),
        in_specs=specs,
        out_specs=pl.BlockSpec((None, 1, 2), lambda s: (s, 0, 0)),
        out_shape=jax.ShapeDtypeStruct((S, 1, 2), jnp.float32),
        compiler_params=pltpu.CompilerParams(
            dimension_semantics=("parallel",)),
    )(*inputs)
    return probs3.reshape(S, 2)


if __name__ == "__main__":
    key = jax.random.PRNGKey(0)
    B, S, Dd, Tw, Ft, H = 1, 3, 4, 5, 16, 32

    kparam, ktext, kprice = jax.random.split(key, 3)
    params = init_mansf(kparam, nhid=H, stock_num=S, text_ft_dim=Ft, pr_ft=3)

    text_input = jax.random.normal(ktext, (B, S, Dd, Tw, Ft), jnp.float32)
    price_input = jax.random.normal(kprice, (B, S, Dd, 3), jnp.float32)
    edge_index = jnp.array([[0, 1, 2], [1, 2, 0]], jnp.int32)    # unused (RGAT omitted)
    edge_type = jnp.zeros((3,), jnp.int32)                       # unused (RGAT omitted)

    fwd = jax.jit(mansf_forward)
    probs = jax.block_until_ready(
        fwd(params, text_input, price_input, edge_index, edge_type))

    assert probs.shape == (S, 2)
    assert bool(jnp.all(jnp.isfinite(probs)))
    assert bool(jnp.allclose(jnp.sum(probs, axis=1), 1.0, atol=1e-3))
    print("KERNEL_OK")
</pallas_src>

<mosaic_0001>
module attributes {stable_mosaic.version = 11 : i64} {
  func.func @_mansf_stock_kernel(%arg0: i32, %arg1: memref<1x20x16xf32, #tpu.memory_space<vmem>>, %arg2: memref<1x4x3xf32, #tpu.memory_space<vmem>>, %arg3: memref<1x3x96xf32, #tpu.memory_space<vmem>>, %arg4: memref<1x32x96xf32, #tpu.memory_space<vmem>>, %arg5: memref<1x2x96xf32, #tpu.memory_space<vmem>>, %arg6: memref<1x32x32xf32, #tpu.memory_space<vmem>>, %arg7: memref<1x32x32xf32, #tpu.memory_space<vmem>>, %arg8: memref<1x1x32xf32, #tpu.memory_space<vmem>>, %arg9: memref<1x3x32xf32, #tpu.memory_space<vmem>>, %arg10: memref<1x16x96xf32, #tpu.memory_space<vmem>>, %arg11: memref<1x32x96xf32, #tpu.memory_space<vmem>>, %arg12: memref<1x2x96xf32, #tpu.memory_space<vmem>>, %arg13: memref<1x32x32xf32, #tpu.memory_space<vmem>>, %arg14: memref<1x32x32xf32, #tpu.memory_space<vmem>>, %arg15: memref<1x1x32xf32, #tpu.memory_space<vmem>>, %arg16: memref<1x3x32xf32, #tpu.memory_space<vmem>>, %arg17: memref<1x32x96xf32, #tpu.memory_space<vmem>>, %arg18: memref<1x32x96xf32, #tpu.memory_space<vmem>>, %arg19: memref<1x2x96xf32, #tpu.memory_space<vmem>>, %arg20: memref<1x32x32xf32, #tpu.memory_space<vmem>>, %arg21: memref<1x32x32xf32, #tpu.memory_space<vmem>>, %arg22: memref<1x1x32xf32, #tpu.memory_space<vmem>>, %arg23: memref<1x3x32xf32, #tpu.memory_space<vmem>>, %arg24: memref<1x1024x32xf32, #tpu.memory_space<vmem>>, %arg25: memref<1x1x32xf32, #tpu.memory_space<vmem>>, %arg26: memref<32x1024xf32, #tpu.memory_space<vmem>>, %arg27: memref<32x1024xf32, #tpu.memory_space<vmem>>, %arg28: memref<32x2xf32, #tpu.memory_space<vmem>>, %arg29: memref<1x2xf32, #tpu.memory_space<vmem>>, %arg30: memref<1x1x2xf32, #tpu.memory_space<vmem>>) attributes {dimension_semantics = [#tpu.dimension_semantics<parallel>], iteration_bounds = array<i64: 3>, scalar_prefetch = 0 : i64, scratch_operands = 0 : i64, tpu.core_type = #tpu.core_type<tc>, window_params = [{transform_indices = @transform_0, window_bounds = array<i64: 1, 20, 16>}, {transform_indices = @transform_1, window_bounds = array<i64: 1, 4, 3>}, {transform_indices = @transform_2, window_bounds = array<i64: 1, 3, 96>}, {transform_indices = @transform_3, window_bounds = array<i64: 1, 32, 96>}, {transform_indices = @transform_4, window_bounds = array<i64: 1, 2, 96>}, {transform_indices = @transform_5, window_bounds = array<i64: 1, 32, 32>}, {transform_indices = @transform_6, window_bounds = array<i64: 1, 32, 32>}, {transform_indices = @transform_7, window_bounds = array<i64: 1, 1, 32>}, {transform_indices = @transform_8, window_bounds = array<i64: 1, 3, 32>}, {transform_indices = @transform_9, window_bounds = array<i64: 1, 16, 96>}, {transform_indices = @transform_10, window_bounds = array<i64: 1, 32, 96>}, {transform_indices = @transform_11, window_bounds = array<i64: 1, 2, 96>}, {transform_indices = @transform_12, window_bounds = array<i64: 1, 32, 32>}, {transform_indices = @transform_13, window_bounds = array<i64: 1, 32, 32>}, {transform_indices = @transform_14, window_bounds = array<i64: 1, 1, 32>}, {transform_indices = @transform_15, window_bounds = array<i64: 1, 3, 32>}, {transform_indices = @transform_16, window_bounds = array<i64: 1, 32, 96>}, {transform_indices = @transform_17, window_bounds = array<i64: 1, 32, 96>}, {transform_indices = @transform_18, window_bounds = array<i64: 1, 2, 96>}, {transform_indices = @transform_19, window_bounds = array<i64: 1, 32, 32>}, {transform_indices = @transform_20, window_bounds = array<i64: 1, 32, 32>}, {transform_indices = @transform_21, window_bounds = array<i64: 1, 1, 32>}, {transform_indices = @transform_22, window_bounds = array<i64: 1, 3, 32>}, {transform_indices = @transform_23, window_bounds = array<i64: 1, 1024, 32>}, {transform_indices = @transform_24, window_bounds = array<i64: 1, 1, 32>}, {pipeline_mode = #tpu.pipeline_mode<synchronous>, transform_indices = @transform_25, window_bounds = array<i64: 32, 1024>}, {pipeline_mode = #tpu.pipeline_mode<synchronous>, transform_indices = @transform_26, window_bounds = array<i64: 32, 1024>}, {pipeline_mode = #tpu.pipeline_mode<synchronous>, transform_indices = @transform_27, window_bounds = array<i64: 32, 2>}, {pipeline_mode = #tpu.pipeline_mode<synchronous>, transform_indices = @transform_28, window_bounds = array<i64: 1, 2>}, {transform_indices = @transform_29, window_bounds = array<i64: 1, 1, 2>}]} {
    %c0 = arith.constant 0 : index
    %c0_0 = arith.constant 0 : index
    %c0_1 = arith.constant 0 : index
    %0 = vector.load %arg2[%c0, %c0_0, %c0_1] : memref<1x4x3xf32, #tpu.memory_space<vmem>>, vector<1x4x3xf32>
    %1 = vector.shape_cast %0 : vector<1x4x3xf32> to vector<4x3xf32>
    %c0_2 = arith.constant 0 : index
    %c0_3 = arith.constant 0 : index
    %c0_4 = arith.constant 0 : index
    %2 = vector.load %arg3[%c0_2, %c0_3, %c0_4] : memref<1x3x96xf32, #tpu.memory_space<vmem>>, vector<1x3x96xf32>
    %3 = vector.shape_cast %2 : vector<1x3x96xf32> to vector<3x96xf32>
    %c0_5 = arith.constant 0 : index
    %c0_6 = arith.constant 0 : index
    %c0_7 = arith.constant 0 : index
    %4 = vector.load %arg4[%c0_5, %c0_6, %c0_7] : memref<1x32x96xf32, #tpu.memory_space<vmem>>, vector<1x32x96xf32>
    %5 = vector.shape_cast %4 : vector<1x32x96xf32> to vector<32x96xf32>
    %cst = arith.constant dense<0.000000e+00> : vector<4x96xf32>
    %6 = tpu.matmul %1, %3, %cst {dimension_numbers = #tpu.dot_dimension_numbers<[1], [0], [0], [1], [0, 0, 1, 1], [], []>} : vector<4x3xf32>, vector<3x96xf32>, vector<4x96xf32> -> vector<4x96xf32>
    %c0_8 = arith.constant 0 : index
    %c0_9 = arith.constant 0 : index
    %c0_10 = arith.constant 0 : index
    %7 = vector.load %arg5[%c0_8, %c0_9, %c0_10] : memref<1x2x96xf32, #tpu.memory_space<vmem>>, vector<1x1x96xf32>
    %8 = vector.shape_cast %7 : vector<1x1x96xf32> to vector<1x96xf32>
    %9 = vector.broadcast %8 : vector<1x96xf32> to vector<4x96xf32>
    %10 = arith.addf %6, %9 : vector<4x96xf32>
    %c0_11 = arith.constant 0 : index
    %c1 = arith.constant 1 : index
    %c0_12 = arith.constant 0 : index
    %11 = vector.load %arg5[%c0_11, %c1, %c0_12] : memref<1x2x96xf32, #tpu.memory_space<vmem>>, vector<1x1x96xf32>
    %12 = vector.shape_cast %11 : vector<1x1x96xf32> to vector<1x96xf32>
    %cst_13 = arith.constant 0.000000e+00 : f32
    %13 = vector.broadcast %cst_13 : f32 to vector<1x32xf32>
    %14 = vector.extract_strided_slice %10 {offsets = [0, 0], sizes = [1, 96], strides = [1, 1]} : vector<4x96xf32> to vector<1x96xf32>
    %cst_14 = arith.constant dense<0.000000e+00> : vector<1x96xf32>
    %15 = tpu.matmul %13, %5, %cst_14 {dimension_numbers = #tpu.dot_dimension_numbers<[1], [0], [0], [1], [0, 0, 1, 1], [], []>} : vector<1x32xf32>, vector<32x96xf32>, vector<1x96xf32> -> vector<1x96xf32>
    %16 = arith.addf %15, %12 : vector<1x96xf32>
    %17 = vector.extract_strided_slice %14 {offsets = [0, 0], sizes = [1, 32], strides = [1, 1]} : vector<1x96xf32> to vector<1x32xf32>
    %18 = vector.extract_strided_slice %16 {offsets = [0, 0], sizes = [1, 32], strides = [1, 1]} : vector<1x96xf32> to vector<1x32xf32>
    %19 = arith.addf %17, %18 : vector<1x32xf32>
    %20 = arith.negf %19 : vector<1x32xf32>
    %21 = math.exp %20 : vector<1x32xf32>
    %cst_15 = arith.constant 1.000000e+00 : f32
    %22 = vector.broadcast %cst_15 : f32 to vector<1x32xf32>
    %23 = arith.addf %22, %21 : vector<1x32xf32>
    %24 = arith.divf %22, %23 : vector<1x32xf32>
    %25 = vector.extract_strided_slice %14 {offsets = [0, 32], sizes = [1, 32], strides = [1, 1]} : vector<1x96xf32> to vector<1x32xf32>
    %26 = vector.extract_strided_slice %16 {offsets = [0, 32], sizes = [1, 32], strides = [1, 1]} : vector<1x96xf32> to vector<1x32xf32>
    %27 = arith.addf %25, %26 : vector<1x32xf32>
    %28 = arith.negf %27 : vector<1x32xf32>
    %29 = math.exp %28 : vector<1x32xf32>
    %cst_16 = arith.constant 1.000000e+00 : f32
    %30 = vector.broadcast %cst_16 : f32 to vector<1x32xf32>
    %31 = arith.addf %30, %29 : vector<1x32xf32>
    %32 = arith.divf %30, %31 : vector<1x32xf32>
    %33 = vector.extract_strided_slice %14 {offsets = [0, 64], sizes = [1, 32], strides = [1, 1]} : vector<1x96xf32> to vector<1x32xf32>
    %34 = vector.extract_strided_slice %16 {offsets = [0, 64], sizes = [1, 32], strides = [1, 1]} : vector<1x96xf32> to vector<1x32xf32>
    %35 = arith.mulf %24, %34 : vector<1x32xf32>
    %36 = arith.addf %33, %35 : vector<1x32xf32>
    %37 = math.tanh %36 : vector<1x32xf32>
    %cst_17 = arith.constant 1.000000e+00 : f32
    %38 = vector.broadcast %cst_17 : f32 to vector<1x32xf32>
    %39 = arith.subf %38, %32 : vector<1x32xf32>
    %40 = arith.mulf %39, %37 : vector<1x32xf32>
    %41 = arith.mulf %32, %13 : vector<1x32xf32>
    %42 = arith.addf %40, %41 : vector<1x32xf32>
    %43 = vector.extract_strided_slice %10 {offsets = [1, 0], sizes = [1, 96], strides = [1, 1]} : vector<4x96xf32> to vector<1x96xf32>
    %cst_18 = arith.constant dense<0.000000e+00> : vector<1x96xf32>
    %44 = tpu.matmul %42, %5, %cst_18 {dimension_numbers = #tpu.dot_dimension_numbers<[1], [0], [0], [1], [0, 0, 1, 1], [], []>} : vector<1x32xf32>, vector<32x96xf32>, vector<1x96xf32> -> vector<1x96xf32>
    %45 = arith.addf %44, %12 : vector<1x96xf32>
    %46 = vector.extract_strided_slice %43 {offsets = [0, 0], sizes = [1, 32], strides = [1, 1]} : vector<1x96xf32> to vector<1x32xf32>
    %47 = vector.extract_strided_slice %45 {offsets = [0, 0], sizes = [1, 32], strides = [1, 1]} : vector<1x96xf32> to vector<1x32xf32>
    %48 = arith.addf %46, %47 : vector<1x32xf32>
    %49 = arith.negf %48 : vector<1x32xf32>
    %50 = math.exp %49 : vector<1x32xf32>
    %cst_19 = arith.constant 1.000000e+00 : f32
    %51 = vector.broadcast %cst_19 : f32 to vector<1x32xf32>
    %52 = arith.addf %51, %50 : vector<1x32xf32>
    %53 = arith.divf %51, %52 : vector<1x32xf32>
    %54 = vector.extract_strided_slice %43 {offsets = [0, 32], sizes = [1, 32], strides = [1, 1]} : vector<1x96xf32> to vector<1x32xf32>
    %55 = vector.extract_strided_slice %45 {offsets = [0, 32], sizes = [1, 32], strides = [1, 1]} : vector<1x96xf32> to vector<1x32xf32>
    %56 = arith.addf %54, %55 : vector<1x32xf32>
    %57 = arith.negf %56 : vector<1x32xf32>
    %58 = math.exp %57 : vector<1x32xf32>
    %cst_20 = arith.constant 1.000000e+00 : f32
    %59 = vector.broadcast %cst_20 : f32 to vector<1x32xf32>
    %60 = arith.addf %59, %58 : vector<1x32xf32>
    %61 = arith.divf %59, %60 : vector<1x32xf32>
    %62 = vector.extract_strided_slice %43 {offsets = [0, 64], sizes = [1, 32], strides = [1, 1]} : vector<1x96xf32> to vector<1x32xf32>
    %63 = vector.extract_strided_slice %45 {offsets = [0, 64], sizes = [1, 32], strides = [1, 1]} : vector<1x96xf32> to vector<1x32xf32>
    %64 = arith.mulf %53, %63 : vector<1x32xf32>
    %65 = arith.addf %62, %64 : vector<1x32xf32>
    %66 = math.tanh %65 : vector<1x32xf32>
    %cst_21 = arith.constant 1.000000e+00 : f32
    %67 = vector.broadcast %cst_21 : f32 to vector<1x32xf32>
    %68 = arith.subf %67, %61 : vector<1x32xf32>
    %69 = arith.mulf %68, %66 : vector<1x32xf32>
    %70 = arith.mulf %61, %42 : vector<1x32xf32>
    %71 = arith.addf %69, %70 : vector<1x32xf32>
    %72 = vector.extract_strided_slice %10 {offsets = [2, 0], sizes = [1, 96], strides = [1, 1]} : vector<4x96xf32> to vector<1x96xf32>
    %cst_22 = arith.constant dense<0.000000e+00> : vector<1x96xf32>
    %73 = tpu.matmul %71, %5, %cst_22 {dimension_numbers = #tpu.dot_dimension_numbers<[1], [0], [0], [1], [0, 0, 1, 1], [], []>} : vector<1x32xf32>, vector<32x96xf32>, vector<1x96xf32> -> vector<1x96xf32>
    %74 = arith.addf %73, %12 : vector<1x96xf32>
    %75 = vector.extract_strided_slice %72 {offsets = [0, 0], sizes = [1, 32], strides = [1, 1]} : vector<1x96xf32> to vector<1x32xf32>
    %76 = vector.extract_strided_slice %74 {offsets = [0, 0], sizes = [1, 32], strides = [1, 1]} : vector<1x96xf32> to vector<1x32xf32>
    %77 = arith.addf %75, %76 : vector<1x32xf32>
    %78 = arith.negf %77 : vector<1x32xf32>
    %79 = math.exp %78 : vector<1x32xf32>
    %cst_23 = arith.constant 1.000000e+00 : f32
    %80 = vector.broadcast %cst_23 : f32 to vector<1x32xf32>
    %81 = arith.addf %80, %79 : vector<1x32xf32>
    %82 = arith.divf %80, %81 : vector<1x32xf32>
    %83 = vector.extract_strided_slice %72 {offsets = [0, 32], sizes = [1, 32], strides = [1, 1]} : vector<1x96xf32> to vector<1x32xf32>
    %84 = vector.extract_strided_slice %74 {offsets = [0, 32], sizes = [1, 32], strides = [1, 1]} : vector<1x96xf32> to vector<1x32xf32>
    %85 = arith.addf %83, %84 : vector<1x32xf32>
    %86 = arith.negf %85 : vector<1x32xf32>
    %87 = math.exp %86 : vector<1x32xf32>
    %cst_24 = arith.constant 1.000000e+00 : f32
    %88 = vector.broadcast %cst_24 : f32 to vector<1x32xf32>
    %89 = arith.addf %88, %87 : vector<1x32xf32>
    %90 = arith.divf %88, %89 : vector<1x32xf32>
    %91 = vector.extract_strided_slice %72 {offsets = [0, 64], sizes = [1, 32], strides = [1, 1]} : vector<1x96xf32> to vector<1x32xf32>
    %92 = vector.extract_strided_slice %74 {offsets = [0, 64], sizes = [1, 32], strides = [1, 1]} : vector<1x96xf32> to vector<1x32xf32>
    %93 = arith.mulf %82, %92 : vector<1x32xf32>
    %94 = arith.addf %91, %93 : vector<1x32xf32>
    %95 = math.tanh %94 : vector<1x32xf32>
    %cst_25 = arith.constant 1.000000e+00 : f32
    %96 = vector.broadcast %cst_25 : f32 to vector<1x32xf32>
    %97 = arith.subf %96, %90 : vector<1x32xf32>
    %98 = arith.mulf %97, %95 : vector<1x32xf32>
    %99 = arith.mulf %90, %71 : vector<1x32xf32>
    %100 = arith.addf %98, %99 : vector<1x32xf32>
    %101 = vector.extract_strided_slice %10 {offsets = [3, 0], sizes = [1, 96], strides = [1, 1]} : vector<4x96xf32> to vector<1x96xf32>
    %cst_26 = arith.constant dense<0.000000e+00> : vector<1x96xf32>
    %102 = tpu.matmul %100, %5, %cst_26 {dimension_numbers = #tpu.dot_dimension_numbers<[1], [0], [0], [1], [0, 0, 1, 1], [], []>} : vector<1x32xf32>, vector<32x96xf32>, vector<1x96xf32> -> vector<1x96xf32>
    %103 = arith.addf %102, %12 : vector<1x96xf32>
    %104 = vector.extract_strided_slice %101 {offsets = [0, 0], sizes = [1, 32], strides = [1, 1]} : vector<1x96xf32> to vector<1x32xf32>
    %105 = vector.extract_strided_slice %103 {offsets = [0, 0], sizes = [1, 32], strides = [1, 1]} : vector<1x96xf32> to vector<1x32xf32>
    %106 = arith.addf %104, %105 : vector<1x32xf32>
    %107 = arith.negf %106 : vector<1x32xf32>
    %108 = math.exp %107 : vector<1x32xf32>
    %cst_27 = arith.constant 1.000000e+00 : f32
    %109 = vector.broadcast %cst_27 : f32 to vector<1x32xf32>
    %110 = arith.addf %109, %108 : vector<1x32xf32>
    %111 = arith.divf %109, %110 : vector<1x32xf32>
    %112 = vector.extract_strided_slice %101 {offsets = [0, 32], sizes = [1, 32], strides = [1, 1]} : vector<1x96xf32> to vector<1x32xf32>
    %113 = vector.extract_strided_slice %103 {offsets = [0, 32], sizes = [1, 32], strides = [1, 1]} : vector<1x96xf32> to vector<1x32xf32>
    %114 = arith.addf %112, %113 : vector<1x32xf32>
    %115 = arith.negf %114 : vector<1x32xf32>
    %116 = math.exp %115 : vector<1x32xf32>
    %cst_28 = arith.constant 1.000000e+00 : f32
    %117 = vector.broadcast %cst_28 : f32 to vector<1x32xf32>
    %118 = arith.addf %117, %116 : vector<1x32xf32>
    %119 = arith.divf %117, %118 : vector<1x32xf32>
    %120 = vector.extract_strided_slice %101 {offsets = [0, 64], sizes = [1, 32], strides = [1, 1]} : vector<1x96xf32> to vector<1x32xf32>
    %121 = vector.extract_strided_slice %103 {offsets = [0, 64], sizes = [1, 32], strides = [1, 1]} : vector<1x96xf32> to vector<1x32xf32>
    %122 = arith.mulf %111, %121 : vector<1x32xf32>
    %123 = arith.addf %120, %122 : vector<1x32xf32>
    %124 = math.tanh %123 : vector<1x32xf32>
    %cst_29 = arith.constant 1.000000e+00 : f32
    %125 = vector.broadcast %cst_29 : f32 to vector<1x32xf32>
    %126 = arith.subf %125, %119 : vector<1x32xf32>
    %127 = arith.mulf %126, %124 : vector<1x32xf32>
    %128 = arith.mulf %119, %100 : vector<1x32xf32>
    %129 = arith.addf %127, %128 : vector<1x32xf32>
    %c0_30 = arith.constant 0 : index
    %c0_31 = arith.constant 0 : index
    %c0_32 = arith.constant 0 : index
    %130 = vector.load %arg7[%c0_30, %c0_31, %c0_32] : memref<1x32x32xf32, #tpu.memory_space<vmem>>, vector<1x32x32xf32>
    %131 = vector.shape_cast %130 : vector<1x32x32xf32> to vector<32x32xf32>
    %c0_33 = arith.constant 0 : index
    %c0_34 = arith.constant 0 : index
    %c0_35 = arith.constant 0 : index
    %132 = vector.load %arg8[%c0_33, %c0_34, %c0_35] : memref<1x1x32xf32, #tpu.memory_space<vmem>>, vector<1x1x32xf32>
    %133 = vector.shape_cast %132 : vector<1x1x32xf32> to vector<1x32xf32>
    %c0_36 = arith.constant 0 : index
    %c1_37 = arith.constant 1 : index
    %c0_38 = arith.constant 0 : index
    %134 = vector.load %arg9[%c0_36, %c1_37, %c0_38] : memref<1x3x32xf32, #tpu.memory_space<vmem>>, vector<1x1x32xf32>
    %135 = vector.shape_cast %134 : vector<1x1x32xf32> to vector<1x32xf32>
    %c0_39 = arith.constant 0 : index
    %c2 = arith.constant 2 : index
    %c0_40 = arith.constant 0 : index
    %136 = vector.load %arg9[%c0_39, %c2, %c0_40] : memref<1x3x32xf32, #tpu.memory_space<vmem>>, vector<1x1x1xf32>
    %137 = vector.shape_cast %136 : vector<1x1x1xf32> to vector<1x1xf32>
    %c0_41 = arith.constant 0 : index
    %c0_42 = arith.constant 0 : index
    %c0_43 = arith.constant 0 : index
    %138 = vector.load %arg6[%c0_41, %c0_42, %c0_43] : memref<1x32x32xf32, #tpu.memory_space<vmem>>, vector<1x32x32xf32>
    %139 = vector.shape_cast %138 : vector<1x32x32xf32> to vector<32x32xf32>
    %cst_44 = arith.constant dense<0.000000e+00> : vector<1x32xf32>
    %140 = tpu.matmul %129, %139, %cst_44 {dimension_numbers = #tpu.dot_dimension_numbers<[1], [0], [0], [1], [0, 0, 1, 1], [], []>} : vector<1x32xf32>, vector<32x32xf32>, vector<1x32xf32> -> vector<1x32xf32>
    %c0_45 = arith.constant 0 : index
    %c0_46 = arith.constant 0 : index
    %c0_47 = arith.constant 0 : index
    %141 = vector.load %arg9[%c0_45, %c0_46, %c0_47] : memref<1x3x32xf32, #tpu.memory_space<vmem>>, vector<1x1x32xf32>
    %142 = vector.shape_cast %141 : vector<1x1x32xf32> to vector<1x32xf32>
    %143 = arith.addf %140, %142 : vector<1x32xf32>
    %cst_48 = arith.constant dense<0.000000e+00> : vector<1x32xf32>
    %144 = tpu.matmul %42, %131, %cst_48 {dimension_numbers = #tpu.dot_dimension_numbers<[1], [0], [0], [1], [0, 0, 1, 1], [], []>} : vector<1x32xf32>, vector<32x32xf32>, vector<1x32xf32> -> vector<1x32xf32>
    %145 = arith.addf %143, %144 : vector<1x32xf32>
    %146 = arith.addf %145, %135 : vector<1x32xf32>
    %147 = math.tanh %146 : vector<1x32xf32>
    %148 = arith.mulf %147, %133 : vector<1x32xf32>
    %cst_49 = arith.constant dense<0.000000e+00> : vector<1xf32>
    %149 = vector.multi_reduction <add>, %148, %cst_49 [1] : vector<1x32xf32> to vector<1xf32>
    %150 = vector.shape_cast %149 : vector<1xf32> to vector<1x1xf32>
    %151 = arith.addf %150, %137 : vector<1x1xf32>
    %cst_50 = arith.constant dense<0.000000e+00> : vector<1x32xf32>
    %152 = tpu.matmul %71, %131, %cst_50 {dimension_numbers = #tpu.dot_dimension_numbers<[1], [0], [0], [1], [0, 0, 1, 1], [], []>} : vector<1x32xf32>, vector<32x32xf32>, vector<1x32xf32> -> vector<1x32xf32>
    %153 = arith.addf %143, %152 : vector<1x32xf32>
    %154 = arith.addf %153, %135 : vector<1x32xf32>
    %155 = math.tanh %154 : vector<1x32xf32>
    %156 = arith.mulf %155, %133 : vector<1x32xf32>
    %cst_51 = arith.constant dense<0.000000e+00> : vector<1xf32>
    %157 = vector.multi_reduction <add>, %156, %cst_51 [1] : vector<1x32xf32> to vector<1xf32>
    %158 = vector.shape_cast %157 : vector<1xf32> to vector<1x1xf32>
    %159 = arith.addf %158, %137 : vector<1x1xf32>
    %cst_52 = arith.constant dense<0.000000e+00> : vector<1x32xf32>
    %160 = tpu.matmul %100, %131, %cst_52 {dimension_numbers = #tpu.dot_dimension_numbers<[1], [0], [0], [1], [0, 0, 1, 1], [], []>} : vector<1x32xf32>, vector<32x32xf32>, vector<1x32xf32> -> vector<1x32xf32>
    %161 = arith.addf %143, %160 : vector<1x32xf32>
    %162 = arith.addf %161, %135 : vector<1x32xf32>
    %163 = math.tanh %162 : vector<1x32xf32>
    %164 = arith.mulf %163, %133 : vector<1x32xf32>
    %cst_53 = arith.constant dense<0.000000e+00> : vector<1xf32>
    %165 = vector.multi_reduction <add>, %164, %cst_53 [1] : vector<1x32xf32> to vector<1xf32>
    %166 = vector.shape_cast %165 : vector<1xf32> to vector<1x1xf32>
    %167 = arith.addf %166, %137 : vector<1x1xf32>
    %cst_54 = arith.constant dense<0.000000e+00> : vector<1x32xf32>
    %168 = tpu.matmul %129, %131, %cst_54 {dimension_numbers = #tpu.dot_dimension_numbers<[1], [0], [0], [1], [0, 0, 1, 1], [], []>} : vector<1x32xf32>, vector<32x32xf32>, vector<1x32xf32> -> vector<1x32xf32>
    %169 = arith.addf %143, %168 : vector<1x32xf32>
    %170 = arith.addf %169, %135 : vector<1x32xf32>
    %171 = math.tanh %170 : vector<1x32xf32>
    %172 = arith.mulf %171, %133 : vector<1x32xf32>
    %cst_55 = arith.constant dense<0.000000e+00> : vector<1xf32>
    %173 = vector.multi_reduction <add>, %172, %cst_55 [1] : vector<1x32xf32> to vector<1xf32>
    %174 = vector.shape_cast %173 : vector<1xf32> to vector<1x1xf32>
    %175 = arith.addf %174, %137 : vector<1x1xf32>
    %176 = arith.maximumf %151, %159 : vector<1x1xf32>
    %177 = arith.maximumf %176, %167 : vector<1x1xf32>
    %178 = arith.maximumf %177, %175 : vector<1x1xf32>
    %179 = arith.subf %151, %178 : vector<1x1xf32>
    %180 = math.exp %179 : vector<1x1xf32>
    %181 = arith.subf %159, %178 : vector<1x1xf32>
    %182 = math.exp %181 : vector<1x1xf32>
    %183 = arith.subf %167, %178 : vector<1x1xf32>
    %184 = math.exp %183 : vector<1x1xf32>
    %185 = arith.subf %175, %178 : vector<1x1xf32>
    %186 = math.exp %185 : vector<1x1xf32>
    %187 = arith.addf %180, %182 : vector<1x1xf32>
    %188 = arith.addf %187, %184 : vector<1x1xf32>
    %189 = arith.addf %188, %186 : vector<1x1xf32>
    %cst_56 = arith.constant 1.000000e+00 : f32
    %190 = vector.broadcast %cst_56 : f32 to vector<1x1xf32>
    %191 = arith.divf %190, %189 : vector<1x1xf32>
    %cst_57 = arith.constant 0.000000e+00 : f32
    %192 = vector.broadcast %cst_57 : f32 to vector<1x32xf32>
    %193 = arith.mulf %180, %191 : vector<1x1xf32>
    %194 = vector.broadcast %193 : vector<1x1xf32> to vector<1x32xf32>
    %195 = arith.mulf %194, %42 : vector<1x32xf32>
    %196 = arith.addf %192, %195 : vector<1x32xf32>
    %197 = arith.mulf %182, %191 : vector<1x1xf32>
    %198 = vector.broadcast %197 : vector<1x1xf32> to vector<1x32xf32>
    %199 = arith.mulf %198, %71 : vector<1x32xf32>
    %200 = arith.addf %196, %199 : vector<1x32xf32>
    %201 = arith.mulf %184, %191 : vector<1x1xf32>
    %202 = vector.broadcast %201 : vector<1x1xf32> to vector<1x32xf32>
    %203 = arith.mulf %202, %100 : vector<1x32xf32>
    %204 = arith.addf %200, %203 : vector<1x32xf32>
    %205 = arith.mulf %186, %191 : vector<1x1xf32>
    %206 = vector.broadcast %205 : vector<1x1xf32> to vector<1x32xf32>
    %207 = arith.mulf %206, %129 : vector<1x32xf32>
    %208 = arith.addf %204, %207 : vector<1x32xf32>
    %c0_58 = arith.constant 0 : index
    %c0_59 = arith.constant 0 : index
    %c0_60 = arith.constant 0 : index
    %209 = vector.load %arg1[%c0_58, %c0_59, %c0_60] : memref<1x20x16xf32, #tpu.memory_space<vmem>>, vector<1x20x16xf32>
    %210 = vector.shape_cast %209 : vector<1x20x16xf32> to vector<20x16xf32>
    %c0_61 = arith.constant 0 : index
    %c0_62 = arith.constant 0 : index
    %c0_63 = arith.constant 0 : index
    %211 = vector.load %arg10[%c0_61, %c0_62, %c0_63] : memref<1x16x96xf32, #tpu.memory_space<vmem>>, vector<1x16x96xf32>
    %212 = vector.shape_cast %211 : vector<1x16x96xf32> to vector<16x96xf32>
    %c0_64 = arith.constant 0 : index
    %c0_65 = arith.constant 0 : index
    %c0_66 = arith.constant 0 : index
    %213 = vector.load %arg11[%c0_64, %c0_65, %c0_66] : memref<1x32x96xf32, #tpu.memory_space<vmem>>, vector<1x32x96xf32>
    %214 = vector.shape_cast %213 : vector<1x32x96xf32> to vector<32x96xf32>
    %cst_67 = arith.constant dense<0.000000e+00> : vector<20x96xf32>
    %215 = tpu.matmul %210, %212, %cst_67 {dimension_numbers = #tpu.dot_dimension_numbers<[1], [0], [0], [1], [0, 0, 1, 1], [], []>} : vector<20x16xf32>, vector<16x96xf32>, vector<20x96xf32> -> vector<20x96xf32>
    %c0_68 = arith.constant 0 : index
    %c0_69 = arith.constant 0 : index
    %c0_70 = arith.constant 0 : index
    %216 = vector.load %arg12[%c0_68, %c0_69, %c0_70] : memref<1x2x96xf32, #tpu.memory_space<vmem>>, vector<1x1x96xf32>
    %217 = vector.shape_cast %216 : vector<1x1x96xf32> to vector<1x96xf32>
    %218 = vector.broadcast %217 : vector<1x96xf32> to vector<20x96xf32>
    %219 = arith.addf %215, %218 : vector<20x96xf32>
    %c0_71 = arith.constant 0 : index
    %c1_72 = arith.constant 1 : index
    %c0_73 = arith.constant 0 : index
    %220 = vector.load %arg12[%c0_71, %c1_72, %c0_73] : memref<1x2x96xf32, #tpu.memory_space<vmem>>, vector<1x1x96xf32>
    %221 = vector.shape_cast %220 : vector<1x1x96xf32> to vector<1x96xf32>
    %cst_74 = arith.constant 0.000000e+00 : f32
    %222 = vector.broadcast %cst_74 : f32 to vector<4x32xf32>
    %223 = vector.extract_strided_slice %219 {offsets = [0, 0], sizes = [4, 96], strides = [1, 1]} : vector<20x96xf32> to vector<4x96xf32>
    %cst_75 = arith.constant dense<0.000000e+00> : vector<4x96xf32>
    %224 = tpu.matmul %222, %214, %cst_75 {dimension_numbers = #tpu.dot_dimension_numbers<[1], [0], [0], [1], [0, 0, 1, 1], [], []>} : vector<4x32xf32>, vector<32x96xf32>, vector<4x96xf32> -> vector<4x96xf32>
    %225 = vector.broadcast %221 : vector<1x96xf32> to vector<4x96xf32>
    %226 = arith.addf %224, %225 : vector<4x96xf32>
    %227 = vector.extract_strided_slice %223 {offsets = [0, 0], sizes = [4, 32], strides = [1, 1]} : vector<4x96xf32> to vector<4x32xf32>
    %228 = vector.extract_strided_slice %226 {offsets = [0, 0], sizes = [4, 32], strides = [1, 1]} : vector<4x96xf32> to vector<4x32xf32>
    %229 = arith.addf %227, %228 : vector<4x32xf32>
    %230 = arith.negf %229 : vector<4x32xf32>
    %231 = math.exp %230 : vector<4x32xf32>
    %cst_76 = arith.constant 1.000000e+00 : f32
    %232 = vector.broadcast %cst_76 : f32 to vector<4x32xf32>
    %233 = arith.addf %232, %231 : vector<4x32xf32>
    %234 = arith.divf %232, %233 : vector<4x32xf32>
    %235 = vector.extract_strided_slice %223 {offsets = [0, 32], sizes = [4, 32], strides = [1, 1]} : vector<4x96xf32> to vector<4x32xf32>
    %236 = vector.extract_strided_slice %226 {offsets = [0, 32], sizes = [4, 32], strides = [1, 1]} : vector<4x96xf32> to vector<4x32xf32>
    %237 = arith.addf %235, %236 : vector<4x32xf32>
    %238 = arith.negf %237 : vector<4x32xf32>
    %239 = math.exp %238 : vector<4x32xf32>
    %cst_77 = arith.constant 1.000000e+00 : f32
    %240 = vector.broadcast %cst_77 : f32 to vector<4x32xf32>
    %241 = arith.addf %240, %239 : vector<4x32xf32>
    %242 = arith.divf %240, %241 : vector<4x32xf32>
    %243 = vector.extract_strided_slice %223 {offsets = [0, 64], sizes = [4, 32], strides = [1, 1]} : vector<4x96xf32> to vector<4x32xf32>
    %244 = vector.extract_strided_slice %226 {offsets = [0, 64], sizes = [4, 32], strides = [1, 1]} : vector<4x96xf32> to vector<4x32xf32>
    %245 = arith.mulf %234, %244 : vector<4x32xf32>
    %246 = arith.addf %243, %245 : vector<4x32xf32>
    %247 = math.tanh %246 : vector<4x32xf32>
    %cst_78 = arith.constant 1.000000e+00 : f32
    %248 = vector.broadcast %cst_78 : f32 to vector<4x32xf32>
    %249 = arith.subf %248, %242 : vector<4x32xf32>
    %250 = arith.mulf %249, %247 : vector<4x32xf32>
    %251 = arith.mulf %242, %222 : vector<4x32xf32>
    %252 = arith.addf %250, %251 : vector<4x32xf32>
    %253 = vector.extract_strided_slice %219 {offsets = [4, 0], sizes = [4, 96], strides = [1, 1]} : vector<20x96xf32> to vector<4x96xf32>
    %cst_79 = arith.constant dense<0.000000e+00> : vector<4x96xf32>
    %254 = tpu.matmul %252, %214, %cst_79 {dimension_numbers = #tpu.dot_dimension_numbers<[1], [0], [0], [1], [0, 0, 1, 1], [], []>} : vector<4x32xf32>, vector<32x96xf32>, vector<4x96xf32> -> vector<4x96xf32>
    %255 = vector.broadcast %221 : vector<1x96xf32> to vector<4x96xf32>
    %256 = arith.addf %254, %255 : vector<4x96xf32>
    %257 = vector.extract_strided_slice %253 {offsets = [0, 0], sizes = [4, 32], strides = [1, 1]} : vector<4x96xf32> to vector<4x32xf32>
    %258 = vector.extract_strided_slice %256 {offsets = [0, 0], sizes = [4, 32], strides = [1, 1]} : vector<4x96xf32> to vector<4x32xf32>
    %259 = arith.addf %257, %258 : vector<4x32xf32>
    %260 = arith.negf %259 : vector<4x32xf32>
    %261 = math.exp %260 : vector<4x32xf32>
    %cst_80 = arith.constant 1.000000e+00 : f32
    %262 = vector.broadcast %cst_80 : f32 to vector<4x32xf32>
    %263 = arith.addf %262, %261 : vector<4x32xf32>
    %264 = arith.divf %262, %263 : vector<4x32xf32>
    %265 = vector.extract_strided_slice %253 {offsets = [0, 32], sizes = [4, 32], strides = [1, 1]} : vector<4x96xf32> to vector<4x32xf32>
    %266 = vector.extract_strided_slice %256 {offsets = [0, 32], sizes = [4, 32], strides = [1, 1]} : vector<4x96xf32> to vector<4x32xf32>
    %267 = arith.addf %265, %266 : vector<4x32xf32>
    %268 = arith.negf %267 : vector<4x32xf32>
    %269 = math.exp %268 : vector<4x32xf32>
    %cst_81 = arith.constant 1.000000e+00 : f32
    %270 = vector.broadcast %cst_81 : f32 to vector<4x32xf32>
    %271 = arith.addf %270, %269 : vector<4x32xf32>
    %272 = arith.divf %270, %271 : vector<4x32xf32>
    %273 = vector.extract_strided_slice %253 {offsets = [0, 64], sizes = [4, 32], strides = [1, 1]} : vector<4x96xf32> to vector<4x32xf32>
    %274 = vector.extract_strided_slice %256 {offsets = [0, 64], sizes = [4, 32], strides = [1, 1]} : vector<4x96xf32> to vector<4x32xf32>
    %275 = arith.mulf %264, %274 : vector<4x32xf32>
    %276 = arith.addf %273, %275 : vector<4x32xf32>
    %277 = math.tanh %276 : vector<4x32xf32>
    %cst_82 = arith.constant 1.000000e+00 : f32
    %278 = vector.broadcast %cst_82 : f32 to vector<4x32xf32>
    %279 = arith.subf %278, %272 : vector<4x32xf32>
    %280 = arith.mulf %279, %277 : vector<4x32xf32>
    %281 = arith.mulf %272, %252 : vector<4x32xf32>
    %282 = arith.addf %280, %281 : vector<4x32xf32>
    %283 = vector.extract_strided_slice %219 {offsets = [8, 0], sizes = [4, 96], strides = [1, 1]} : vector<20x96xf32> to vector<4x96xf32>
    %cst_83 = arith.constant dense<0.000000e+00> : vector<4x96xf32>
    %284 = tpu.matmul %282, %214, %cst_83 {dimension_numbers = #tpu.dot_dimension_numbers<[1], [0], [0], [1], [0, 0, 1, 1], [], []>} : vector<4x32xf32>, vector<32x96xf32>, vector<4x96xf32> -> vector<4x96xf32>
    %285 = vector.broadcast %221 : vector<1x96xf32> to vector<4x96xf32>
    %286 = arith.addf %284, %285 : vector<4x96xf32>
    %287 = vector.extract_strided_slice %283 {offsets = [0, 0], sizes = [4, 32], strides = [1, 1]} : vector<4x96xf32> to vector<4x32xf32>
    %288 = vector.extract_strided_slice %286 {offsets = [0, 0], sizes = [4, 32], strides = [1, 1]} : vector<4x96xf32> to vector<4x32xf32>
    %289 = arith.addf %287, %288 : vector<4x32xf32>
    %290 = arith.negf %289 : vector<4x32xf32>
    %291 = math.exp %290 : vector<4x32xf32>
    %cst_84 = arith.constant 1.000000e+00 : f32
    %292 = vector.broadcast %cst_84 : f32 to vector<4x32xf32>
    %293 = arith.addf %292, %291 : vector<4x32xf32>
    %294 = arith.divf %292, %293 : vector<4x32xf32>
    %295 = vector.extract_strided_slice %283 {offsets = [0, 32], sizes = [4, 32], strides = [1, 1]} : vector<4x96xf32> to vector<4x32xf32>
    %296 = vector.extract_strided_slice %286 {offsets = [0, 32], sizes = [4, 32], strides = [1, 1]} : vector<4x96xf32> to vector<4x32xf32>
    %297 = arith.addf %295, %296 : vector<4x32xf32>
    %298 = arith.negf %297 : vector<4x32xf32>
    %299 = math.exp %298 : vector<4x32xf32>
    %cst_85 = arith.constant 1.000000e+00 : f32
    %300 = vector.broadcast %cst_85 : f32 to vector<4x32xf32>
    %301 = arith.addf %300, %299 : vector<4x32xf32>
    %302 = arith.divf %300, %301 : vector<4x32xf32>
    %303 = vector.extract_strided_slice %283 {offsets = [0, 64], sizes = [4, 32], strides = [1, 1]} : vector<4x96xf32> to vector<4x32xf32>
    %304 = vector.extract_strided_slice %286 {offsets = [0, 64], sizes = [4, 32], strides = [1, 1]} : vector<4x96xf32> to vector<4x32xf32>
    %305 = arith.mulf %294, %304 : vector<4x32xf32>
    %306 = arith.addf %303, %305 : vector<4x32xf32>
    %307 = math.tanh %306 : vector<4x32xf32>
    %cst_86 = arith.constant 1.000000e+00 : f32
    %308 = vector.broadcast %cst_86 : f32 to vector<4x32xf32>
    %309 = arith.subf %308, %302 : vector<4x32xf32>
    %310 = arith.mulf %309, %307 : vector<4x32xf32>
    %311 = arith.mulf %302, %282 : vector<4x32xf32>
    %312 = arith.addf %310, %311 : vector<4x32xf32>
    %313 = vector.extract_strided_slice %219 {offsets = [12, 0], sizes = [4, 96], strides = [1, 1]} : vector<20x96xf32> to vector<4x96xf32>
    %cst_87 = arith.constant dense<0.000000e+00> : vector<4x96xf32>
    %314 = tpu.matmul %312, %214, %cst_87 {dimension_numbers = #tpu.dot_dimension_numbers<[1], [0], [0], [1], [0, 0, 1, 1], [], []>} : vector<4x32xf32>, vector<32x96xf32>, vector<4x96xf32> -> vector<4x96xf32>
    %315 = vector.broadcast %221 : vector<1x96xf32> to vector<4x96xf32>
    %316 = arith.addf %314, %315 : vector<4x96xf32>
    %317 = vector.extract_strided_slice %313 {offsets = [0, 0], sizes = [4, 32], strides = [1, 1]} : vector<4x96xf32> to vector<4x32xf32>
    %318 = vector.extract_strided_slice %316 {offsets = [0, 0], sizes = [4, 32], strides = [1, 1]} : vector<4x96xf32> to vector<4x32xf32>
    %319 = arith.addf %317, %318 : vector<4x32xf32>
    %320 = arith.negf %319 : vector<4x32xf32>
    %321 = math.exp %320 : vector<4x32xf32>
    %cst_88 = arith.constant 1.000000e+00 : f32
    %322 = vector.broadcast %cst_88 : f32 to vector<4x32xf32>
    %323 = arith.addf %322, %321 : vector<4x32xf32>
    %324 = arith.divf %322, %323 : vector<4x32xf32>
    %325 = vector.extract_strided_slice %313 {offsets = [0, 32], sizes = [4, 32], strides = [1, 1]} : vector<4x96xf32> to vector<4x32xf32>
    %326 = vector.extract_strided_slice %316 {offsets = [0, 32], sizes = [4, 32], strides = [1, 1]} : vector<4x96xf32> to vector<4x32xf32>
    %327 = arith.addf %325, %326 : vector<4x32xf32>
    %328 = arith.negf %327 : vector<4x32xf32>
    %329 = math.exp %328 : vector<4x32xf32>
    %cst_89 = arith.constant 1.000000e+00 : f32
    %330 = vector.broadcast %cst_89 : f32 to vector<4x32xf32>
    %331 = arith.addf %330, %329 : vector<4x32xf32>
    %332 = arith.divf %330, %331 : vector<4x32xf32>
    %333 = vector.extract_strided_slice %313 {offsets = [0, 64], sizes = [4, 32], strides = [1, 1]} : vector<4x96xf32> to vector<4x32xf32>
    %334 = vector.extract_strided_slice %316 {offsets = [0, 64], sizes = [4, 32], strides = [1, 1]} : vector<4x96xf32> to vector<4x32xf32>
    %335 = arith.mulf %324, %334 : vector<4x32xf32>
    %336 = arith.addf %333, %335 : vector<4x32xf32>
    %337 = math.tanh %336 : vector<4x32xf32>
    %cst_90 = arith.constant 1.000000e+00 : f32
    %338 = vector.broadcast %cst_90 : f32 to vector<4x32xf32>
    %339 = arith.subf %338, %332 : vector<4x32xf32>
    %340 = arith.mulf %339, %337 : vector<4x32xf32>
    %341 = arith.mulf %332, %312 : vector<4x32xf32>
    %342 = arith.addf %340, %341 : vector<4x32xf32>
    %343 = vector.extract_strided_slice %219 {offsets = [16, 0], sizes = [4, 96], strides = [1, 1]} : vector<20x96xf32> to vector<4x96xf32>
    %cst_91 = arith.constant dense<0.000000e+00> : vector<4x96xf32>
    %344 = tpu.matmul %342, %214, %cst_91 {dimension_numbers = #tpu.dot_dimension_numbers<[1], [0], [0], [1], [0, 0, 1, 1], [], []>} : vector<4x32xf32>, vector<32x96xf32>, vector<4x96xf32> -> vector<4x96xf32>
    %345 = vector.broadcast %221 : vector<1x96xf32> to vector<4x96xf32>
    %346 = arith.addf %344, %345 : vector<4x96xf32>
    %347 = vector.extract_strided_slice %343 {offsets = [0, 0], sizes = [4, 32], strides = [1, 1]} : vector<4x96xf32> to vector<4x32xf32>
    %348 = vector.extract_strided_slice %346 {offsets = [0, 0], sizes = [4, 32], strides = [1, 1]} : vector<4x96xf32> to vector<4x32xf32>
    %349 = arith.addf %347, %348 : vector<4x32xf32>
    %350 = arith.negf %349 : vector<4x32xf32>
    %351 = math.exp %350 : vector<4x32xf32>
    %cst_92 = arith.constant 1.000000e+00 : f32
    %352 = vector.broadcast %cst_92 : f32 to vector<4x32xf32>
    %353 = arith.addf %352, %351 : vector<4x32xf32>
    %354 = arith.divf %352, %353 : vector<4x32xf32>
    %355 = vector.extract_strided_slice %343 {offsets = [0, 32], sizes = [4, 32], strides = [1, 1]} : vector<4x96xf32> to vector<4x32xf32>
    %356 = vector.extract_strided_slice %346 {offsets = [0, 32], sizes = [4, 32], strides = [1, 1]} : vector<4x96xf32> to vector<4x32xf32>
    %357 = arith.addf %355, %356 : vector<4x32xf32>
    %358 = arith.negf %357 : vector<4x32xf32>
    %359 = math.exp %358 : vector<4x32xf32>
    %cst_93 = arith.constant 1.000000e+00 : f32
    %360 = vector.broadcast %cst_93 : f32 to vector<4x32xf32>
    %361 = arith.addf %360, %359 : vector<4x32xf32>
    %362 = arith.divf %360, %361 : vector<4x32xf32>
    %363 = vector.extract_strided_slice %343 {offsets = [0, 64], sizes = [4, 32], strides = [1, 1]} : vector<4x96xf32> to vector<4x32xf32>
    %364 = vector.extract_strided_slice %346 {offsets = [0, 64], sizes = [4, 32], strides = [1, 1]} : vector<4x96xf32> to vector<4x32xf32>
    %365 = arith.mulf %354, %364 : vector<4x32xf32>
    %366 = arith.addf %363, %365 : vector<4x32xf32>
    %367 = math.tanh %366 : vector<4x32xf32>
    %cst_94 = arith.constant 1.000000e+00 : f32
    %368 = vector.broadcast %cst_94 : f32 to vector<4x32xf32>
    %369 = arith.subf %368, %362 : vector<4x32xf32>
    %370 = arith.mulf %369, %367 : vector<4x32xf32>
    %371 = arith.mulf %362, %342 : vector<4x32xf32>
    %372 = arith.addf %370, %371 : vector<4x32xf32>
    %c0_95 = arith.constant 0 : index
    %c0_96 = arith.constant 0 : index
    %c0_97 = arith.constant 0 : index
    %373 = vector.load %arg14[%c0_95, %c0_96, %c0_97] : memref<1x32x32xf32, #tpu.memory_space<vmem>>, vector<1x32x32xf32>
    %374 = vector.shape_cast %373 : vector<1x32x32xf32> to vector<32x32xf32>
    %c0_98 = arith.constant 0 : index
    %c0_99 = arith.constant 0 : index
    %c0_100 = arith.constant 0 : index
    %375 = vector.load %arg15[%c0_98, %c0_99, %c0_100] : memref<1x1x32xf32, #tpu.memory_space<vmem>>, vector<1x1x32xf32>
    %376 = vector.shape_cast %375 : vector<1x1x32xf32> to vector<1x32xf32>
    %c0_101 = arith.constant 0 : index
    %c1_102 = arith.constant 1 : index
    %c0_103 = arith.constant 0 : index
    %377 = vector.load %arg16[%c0_101, %c1_102, %c0_103] : memref<1x3x32xf32, #tpu.memory_space<vmem>>, vector<1x1x32xf32>
    %378 = vector.shape_cast %377 : vector<1x1x32xf32> to vector<1x32xf32>
    %c0_104 = arith.constant 0 : index
    %c2_105 = arith.constant 2 : index
    %c0_106 = arith.constant 0 : index
    %379 = vector.load %arg16[%c0_104, %c2_105, %c0_106] : memref<1x3x32xf32, #tpu.memory_space<vmem>>, vector<1x1x1xf32>
    %380 = vector.shape_cast %379 : vector<1x1x1xf32> to vector<1x1xf32>
    %c0_107 = arith.constant 0 : index
    %c0_108 = arith.constant 0 : index
    %c0_109 = arith.constant 0 : index
    %381 = vector.load %arg13[%c0_107, %c0_108, %c0_109] : memref<1x32x32xf32, #tpu.memory_space<vmem>>, vector<1x32x32xf32>
    %382 = vector.shape_cast %381 : vector<1x32x32xf32> to vector<32x32xf32>
    %cst_110 = arith.constant dense<0.000000e+00> : vector<4x32xf32>
    %383 = tpu.matmul %372, %382, %cst_110 {dimension_numbers = #tpu.dot_dimension_numbers<[1], [0], [0], [1], [0, 0, 1, 1], [], []>} : vector<4x32xf32>, vector<32x32xf32>, vector<4x32xf32> -> vector<4x32xf32>
    %c0_111 = arith.constant 0 : index
    %c0_112 = arith.constant 0 : index
    %c0_113 = arith.constant 0 : index
    %384 = vector.load %arg16[%c0_111, %c0_112, %c0_113] : memref<1x3x32xf32, #tpu.memory_space<vmem>>, vector<1x1x32xf32>
    %385 = vector.shape_cast %384 : vector<1x1x32xf32> to vector<1x32xf32>
    %386 = vector.broadcast %385 : vector<1x32xf32> to vector<4x32xf32>
    %387 = arith.addf %383, %386 : vector<4x32xf32>
    %cst_114 = arith.constant dense<0.000000e+00> : vector<4x32xf32>
    %388 = tpu.matmul %252, %374, %cst_114 {dimension_numbers = #tpu.dot_dimension_numbers<[1], [0], [0], [1], [0, 0, 1, 1], [], []>} : vector<4x32xf32>, vector<32x32xf32>, vector<4x32xf32> -> vector<4x32xf32>
    %389 = arith.addf %387, %388 : vector<4x32xf32>
    %390 = vector.broadcast %378 : vector<1x32xf32> to vector<4x32xf32>
    %391 = arith.addf %389, %390 : vector<4x32xf32>
    %392 = math.tanh %391 : vector<4x32xf32>
    %393 = vector.broadcast %376 : vector<1x32xf32> to vector<4x32xf32>
    %394 = arith.mulf %392, %393 : vector<4x32xf32>
    %cst_115 = arith.constant dense<0.000000e+00> : vector<4xf32>
    %395 = vector.multi_reduction <add>, %394, %cst_115 [1] : vector<4x32xf32> to vector<4xf32>
    %396 = vector.shape_cast %395 : vector<4xf32> to vector<4x1xf32>
    %397 = vector.broadcast %380 : vector<1x1xf32> to vector<4x1xf32>
    %398 = arith.addf %396, %397 : vector<4x1xf32>
    %cst_116 = arith.constant dense<0.000000e+00> : vector<4x32xf32>
    %399 = tpu.matmul %282, %374, %cst_116 {dimension_numbers = #tpu.dot_dimension_numbers<[1], [0], [0], [1], [0, 0, 1, 1], [], []>} : vector<4x32xf32>, vector<32x32xf32>, vector<4x32xf32> -> vector<4x32xf32>
    %400 = arith.addf %387, %399 : vector<4x32xf32>
    %401 = vector.broadcast %378 : vector<1x32xf32> to vector<4x32xf32>
    %402 = arith.addf %400, %401 : vector<4x32xf32>
    %403 = math.tanh %402 : vector<4x32xf32>
    %404 = vector.broadcast %376 : vector<1x32xf32> to vector<4x32xf32>
    %405 = arith.mulf %403, %404 : vector<4x32xf32>
    %cst_117 = arith.constant dense<0.000000e+00> : vector<4xf32>
    %406 = vector.multi_reduction <add>, %405, %cst_117 [1] : vector<4x32xf32> to vector<4xf32>
    %407 = vector.shape_cast %406 : vector<4xf32> to vector<4x1xf32>
    %408 = vector.broadcast %380 : vector<1x1xf32> to vector<4x1xf32>
    %409 = arith.addf %407, %408 : vector<4x1xf32>
    %cst_118 = arith.constant dense<0.000000e+00> : vector<4x32xf32>
    %410 = tpu.matmul %312, %374, %cst_118 {dimension_numbers = #tpu.dot_dimension_numbers<[1], [0], [0], [1], [0, 0, 1, 1], [], []>} : vector<4x32xf32>, vector<32x32xf32>, vector<4x32xf32> -> vector<4x32xf32>
    %411 = arith.addf %387, %410 : vector<4x32xf32>
    %412 = vector.broadcast %378 : vector<1x32xf32> to vector<4x32xf32>
    %413 = arith.addf %411, %412 : vector<4x32xf32>
    %414 = math.tanh %413 : vector<4x32xf32>
    %415 = vector.broadcast %376 : vector<1x32xf32> to vector<4x32xf32>
    %416 = arith.mulf %414, %415 : vector<4x32xf32>
    %cst_119 = arith.constant dense<0.000000e+00> : vector<4xf32>
    %417 = vector.multi_reduction <add>, %416, %cst_119 [1] : vector<4x32xf32> to vector<4xf32>
    %418 = vector.shape_cast %417 : vector<4xf32> to vector<4x1xf32>
    %419 = vector.broadcast %380 : vector<1x1xf32> to vector<4x1xf32>
    %420 = arith.addf %418, %419 : vector<4x1xf32>
    %cst_120 = arith.constant dense<0.000000e+00> : vector<4x32xf32>
    %421 = tpu.matmul %342, %374, %cst_120 {dimension_numbers = #tpu.dot_dimension_numbers<[1], [0], [0], [1], [0, 0, 1, 1], [], []>} : vector<4x32xf32>, vector<32x32xf32>, vector<4x32xf32> -> vector<4x32xf32>
    %422 = arith.addf %387, %421 : vector<4x32xf32>
    %423 = vector.broadcast %378 : vector<1x32xf32> to vector<4x32xf32>
    %424 = arith.addf %422, %423 : vector<4x32xf32>
    %425 = math.tanh %424 : vector<4x32xf32>
    %426 = vector.broadcast %376 : vector<1x32xf32> to vector<4x32xf32>
    %427 = arith.mulf %425, %426 : vector<4x32xf32>
    %cst_121 = arith.constant dense<0.000000e+00> : vector<4xf32>
    %428 = vector.multi_reduction <add>, %427, %cst_121 [1] : vector<4x32xf32> to vector<4xf32>
    %429 = vector.shape_cast %428 : vector<4xf32> to vector<4x1xf32>
    %430 = vector.broadcast %380 : vector<1x1xf32> to vector<4x1xf32>
    %431 = arith.addf %429, %430 : vector<4x1xf32>
    %cst_122 = arith.constant dense<0.000000e+00> : vector<4x32xf32>
    %432 = tpu.matmul %372, %374, %cst_122 {dimension_numbers = #tpu.dot_dimension_numbers<[1], [0], [0], [1], [0, 0, 1, 1], [], []>} : vector<4x32xf32>, vector<32x32xf32>, vector<4x32xf32> -> vector<4x32xf32>
    %433 = arith.addf %387, %432 : vector<4x32xf32>
    %434 = vector.broadcast %378 : vector<1x32xf32> to vector<4x32xf32>
    %435 = arith.addf %433, %434 : vector<4x32xf32>
    %436 = math.tanh %435 : vector<4x32xf32>
    %437 = vector.broadcast %376 : vector<1x32xf32> to vector<4x32xf32>
    %438 = arith.mulf %436, %437 : vector<4x32xf32>
    %cst_123 = arith.constant dense<0.000000e+00> : vector<4xf32>
    %439 = vector.multi_reduction <add>, %438, %cst_123 [1] : vector<4x32xf32> to vector<4xf32>
    %440 = vector.shape_cast %439 : vector<4xf32> to vector<4x1xf32>
    %441 = vector.broadcast %380 : vector<1x1xf32> to vector<4x1xf32>
    %442 = arith.addf %440, %441 : vector<4x1xf32>
    %443 = arith.maximumf %398, %409 : vector<4x1xf32>
    %444 = arith.maximumf %443, %420 : vector<4x1xf32>
    %445 = arith.maximumf %444, %431 : vector<4x1xf32>
    %446 = arith.maximumf %445, %442 : vector<4x1xf32>
    %447 = arith.subf %398, %446 : vector<4x1xf32>
    %448 = math.exp %447 : vector<4x1xf32>
    %449 = arith.subf %409, %446 : vector<4x1xf32>
    %450 = math.exp %449 : vector<4x1xf32>
    %451 = arith.subf %420, %446 : vector<4x1xf32>
    %452 = math.exp %451 : vector<4x1xf32>
    %453 = arith.subf %431, %446 : vector<4x1xf32>
    %454 = math.exp %453 : vector<4x1xf32>
    %455 = arith.subf %442, %446 : vector<4x1xf32>
    %456 = math.exp %455 : vector<4x1xf32>
    %457 = arith.addf %448, %450 : vector<4x1xf32>
    %458 = arith.addf %457, %452 : vector<4x1xf32>
    %459 = arith.addf %458, %454 : vector<4x1xf32>
    %460 = arith.addf %459, %456 : vector<4x1xf32>
    %cst_124 = arith.constant 1.000000e+00 : f32
    %461 = vector.broadcast %cst_124 : f32 to vector<4x1xf32>
    %462 = arith.divf %461, %460 : vector<4x1xf32>
    %cst_125 = arith.constant 0.000000e+00 : f32
    %463 = vector.broadcast %cst_125 : f32 to vector<4x32xf32>
    %464 = arith.mulf %448, %462 : vector<4x1xf32>
    %465 = vector.broadcast %464 : vector<4x1xf32> to vector<4x32xf32>
    %466 = arith.mulf %465, %252 : vector<4x32xf32>
    %467 = arith.addf %463, %466 : vector<4x32xf32>
    %468 = arith.mulf %450, %462 : vector<4x1xf32>
    %469 = vector.broadcast %468 : vector<4x1xf32> to vector<4x32xf32>
    %470 = arith.mulf %469, %282 : vector<4x32xf32>
    %471 = arith.addf %467, %470 : vector<4x32xf32>
    %472 = arith.mulf %452, %462 : vector<4x1xf32>
    %473 = vector.broadcast %472 : vector<4x1xf32> to vector<4x32xf32>
    %474 = arith.mulf %473, %312 : vector<4x32xf32>
    %475 = arith.addf %471, %474 : vector<4x32xf32>
    %476 = arith.mulf %454, %462 : vector<4x1xf32>
    %477 = vector.broadcast %476 : vector<4x1xf32> to vector<4x32xf32>
    %478 = arith.mulf %477, %342 : vector<4x32xf32>
    %479 = arith.addf %475, %478 : vector<4x32xf32>
    %480 = arith.mulf %456, %462 : vector<4x1xf32>
    %481 = vector.broadcast %480 : vector<4x1xf32> to vector<4x32xf32>
    %482 = arith.mulf %481, %372 : vector<4x32xf32>
    %483 = arith.addf %479, %482 : vector<4x32xf32>
    %c0_126 = arith.constant 0 : index
    %c0_127 = arith.constant 0 : index
    %c0_128 = arith.constant 0 : index
    %484 = vector.load %arg17[%c0_126, %c0_127, %c0_128] : memref<1x32x96xf32, #tpu.memory_space<vmem>>, vector<1x32x96xf32>
    %485 = vector.shape_cast %484 : vector<1x32x96xf32> to vector<32x96xf32>
    %c0_129 = arith.constant 0 : index
    %c0_130 = arith.constant 0 : index
    %c0_131 = arith.constant 0 : index
    %486 = vector.load %arg18[%c0_129, %c0_130, %c0_131] : memref<1x32x96xf32, #tpu.memory_space<vmem>>, vector<1x32x96xf32>
    %487 = vector.shape_cast %486 : vector<1x32x96xf32> to vector<32x96xf32>
    %cst_132 = arith.constant dense<0.000000e+00> : vector<4x96xf32>
    %488 = tpu.matmul %483, %485, %cst_132 {dimension_numbers = #tpu.dot_dimension_numbers<[1], [0], [0], [1], [0, 0, 1, 1], [], []>} : vector<4x32xf32>, vector<32x96xf32>, vector<4x96xf32> -> vector<4x96xf32>
    %c0_133 = arith.constant 0 : index
    %c0_134 = arith.constant 0 : index
    %c0_135 = arith.constant 0 : index
    %489 = vector.load %arg19[%c0_133, %c0_134, %c0_135] : memref<1x2x96xf32, #tpu.memory_space<vmem>>, vector<1x1x96xf32>
    %490 = vector.shape_cast %489 : vector<1x1x96xf32> to vector<1x96xf32>
    %491 = vector.broadcast %490 : vector<1x96xf32> to vector<4x96xf32>
    %492 = arith.addf %488, %491 : vector<4x96xf32>
    %c0_136 = arith.constant 0 : index
    %c1_137 = arith.constant 1 : index
    %c0_138 = arith.constant 0 : index
    %493 = vector.load %arg19[%c0_136, %c1_137, %c0_138] : memref<1x2x96xf32, #tpu.memory_space<vmem>>, vector<1x1x96xf32>
    %494 = vector.shape_cast %493 : vector<1x1x96xf32> to vector<1x96xf32>
    %cst_139 = arith.constant 0.000000e+00 : f32
    %495 = vector.broadcast %cst_139 : f32 to vector<1x32xf32>
    %496 = vector.extract_strided_slice %492 {offsets = [0, 0], sizes = [1, 96], strides = [1, 1]} : vector<4x96xf32> to vector<1x96xf32>
    %cst_140 = arith.constant dense<0.000000e+00> : vector<1x96xf32>
    %497 = tpu.matmul %495, %487, %cst_140 {dimension_numbers = #tpu.dot_dimension_numbers<[1], [0], [0], [1], [0, 0, 1, 1], [], []>} : vector<1x32xf32>, vector<32x96xf32>, vector<1x96xf32> -> vector<1x96xf32>
    %498 = arith.addf %497, %494 : vector<1x96xf32>
    %499 = vector.extract_strided_slice %496 {offsets = [0, 0], sizes = [1, 32], strides = [1, 1]} : vector<1x96xf32> to vector<1x32xf32>
    %500 = vector.extract_strided_slice %498 {offsets = [0, 0], sizes = [1, 32], strides = [1, 1]} : vector<1x96xf32> to vector<1x32xf32>
    %501 = arith.addf %499, %500 : vector<1x32xf32>
    %502 = arith.negf %501 : vector<1x32xf32>
    %503 = math.exp %502 : vector<1x32xf32>
    %cst_141 = arith.constant 1.000000e+00 : f32
    %504 = vector.broadcast %cst_141 : f32 to vector<1x32xf32>
    %505 = arith.addf %504, %503 : vector<1x32xf32>
    %506 = arith.divf %504, %505 : vector<1x32xf32>
    %507 = vector.extract_strided_slice %496 {offsets = [0, 32], sizes = [1, 32], strides = [1, 1]} : vector<1x96xf32> to vector<1x32xf32>
    %508 = vector.extract_strided_slice %498 {offsets = [0, 32], sizes = [1, 32], strides = [1, 1]} : vector<1x96xf32> to vector<1x32xf32>
    %509 = arith.addf %507, %508 : vector<1x32xf32>
    %510 = arith.negf %509 : vector<1x32xf32>
    %511 = math.exp %510 : vector<1x32xf32>
    %cst_142 = arith.constant 1.000000e+00 : f32
    %512 = vector.broadcast %cst_142 : f32 to vector<1x32xf32>
    %513 = arith.addf %512, %511 : vector<1x32xf32>
    %514 = arith.divf %512, %513 : vector<1x32xf32>
    %515 = vector.extract_strided_slice %496 {offsets = [0, 64], sizes = [1, 32], strides = [1, 1]} : vector<1x96xf32> to vector<1x32xf32>
    %516 = vector.extract_strided_slice %498 {offsets = [0, 64], sizes = [1, 32], strides = [1, 1]} : vector<1x96xf32> to vector<1x32xf32>
    %517 = arith.mulf %506, %516 : vector<1x32xf32>
    %518 = arith.addf %515, %517 : vector<1x32xf32>
    %519 = math.tanh %518 : vector<1x32xf32>
    %cst_143 = arith.constant 1.000000e+00 : f32
    %520 = vector.broadcast %cst_143 : f32 to vector<1x32xf32>
    %521 = arith.subf %520, %514 : vector<1x32xf32>
    %522 = arith.mulf %521, %519 : vector<1x32xf32>
    %523 = arith.mulf %514, %495 : vector<1x32xf32>
    %524 = arith.addf %522, %523 : vector<1x32xf32>
    %525 = vector.extract_strided_slice %492 {offsets = [1, 0], sizes = [1, 96], strides = [1, 1]} : vector<4x96xf32> to vector<1x96xf32>
    %cst_144 = arith.constant dense<0.000000e+00> : vector<1x96xf32>
    %526 = tpu.matmul %524, %487, %cst_144 {dimension_numbers = #tpu.dot_dimension_numbers<[1], [0], [0], [1], [0, 0, 1, 1], [], []>} : vector<1x32xf32>, vector<32x96xf32>, vector<1x96xf32> -> vector<1x96xf32>
    %527 = arith.addf %526, %494 : vector<1x96xf32>
    %528 = vector.extract_strided_slice %525 {offsets = [0, 0], sizes = [1, 32], strides = [1, 1]} : vector<1x96xf32> to vector<1x32xf32>
    %529 = vector.extract_strided_slice %527 {offsets = [0, 0], sizes = [1, 32], strides = [1, 1]} : vector<1x96xf32> to vector<1x32xf32>
    %530 = arith.addf %528, %529 : vector<1x32xf32>
    %531 = arith.negf %530 : vector<1x32xf32>
    %532 = math.exp %531 : vector<1x32xf32>
    %cst_145 = arith.constant 1.000000e+00 : f32
    %533 = vector.broadcast %cst_145 : f32 to vector<1x32xf32>
    %534 = arith.addf %533, %532 : vector<1x32xf32>
    %535 = arith.divf %533, %534 : vector<1x32xf32>
    %536 = vector.extract_strided_slice %525 {offsets = [0, 32], sizes = [1, 32], strides = [1, 1]} : vector<1x96xf32> to vector<1x32xf32>
    %537 = vector.extract_strided_slice %527 {offsets = [0, 32], sizes = [1, 32], strides = [1, 1]} : vector<1x96xf32> to vector<1x32xf32>
    %538 = arith.addf %536, %537 : vector<1x32xf32>
    %539 = arith.negf %538 : vector<1x32xf32>
    %540 = math.exp %539 : vector<1x32xf32>
    %cst_146 = arith.constant 1.000000e+00 : f32
    %541 = vector.broadcast %cst_146 : f32 to vector<1x32xf32>
    %542 = arith.addf %541, %540 : vector<1x32xf32>
    %543 = arith.divf %541, %542 : vector<1x32xf32>
    %544 = vector.extract_strided_slice %525 {offsets = [0, 64], sizes = [1, 32], strides = [1, 1]} : vector<1x96xf32> to vector<1x32xf32>
    %545 = vector.extract_strided_slice %527 {offsets = [0, 64], sizes = [1, 32], strides = [1, 1]} : vector<1x96xf32> to vector<1x32xf32>
    %546 = arith.mulf %535, %545 : vector<1x32xf32>
    %547 = arith.addf %544, %546 : vector<1x32xf32>
    %548 = math.tanh %547 : vector<1x32xf32>
    %cst_147 = arith.constant 1.000000e+00 : f32
    %549 = vector.broadcast %cst_147 : f32 to vector<1x32xf32>
    %550 = arith.subf %549, %543 : vector<1x32xf32>
    %551 = arith.mulf %550, %548 : vector<1x32xf32>
    %552 = arith.mulf %543, %524 : vector<1x32xf32>
    %553 = arith.addf %551, %552 : vector<1x32xf32>
    %554 = vector.extract_strided_slice %492 {offsets = [2, 0], sizes = [1, 96], strides = [1, 1]} : vector<4x96xf32> to vector<1x96xf32>
    %cst_148 = arith.constant dense<0.000000e+00> : vector<1x96xf32>
    %555 = tpu.matmul %553, %487, %cst_148 {dimension_numbers = #tpu.dot_dimension_numbers<[1], [0], [0], [1], [0, 0, 1, 1], [], []>} : vector<1x32xf32>, vector<32x96xf32>, vector<1x96xf32> -> vector<1x96xf32>
    %556 = arith.addf %555, %494 : vector<1x96xf32>
    %557 = vector.extract_strided_slice %554 {offsets = [0, 0], sizes = [1, 32], strides = [1, 1]} : vector<1x96xf32> to vector<1x32xf32>
    %558 = vector.extract_strided_slice %556 {offsets = [0, 0], sizes = [1, 32], strides = [1, 1]} : vector<1x96xf32> to vector<1x32xf32>
    %559 = arith.addf %557, %558 : vector<1x32xf32>
    %560 = arith.negf %559 : vector<1x32xf32>
    %561 = math.exp %560 : vector<1x32xf32>
    %cst_149 = arith.constant 1.000000e+00 : f32
    %562 = vector.broadcast %cst_149 : f32 to vector<1x32xf32>
    %563 = arith.addf %562, %561 : vector<1x32xf32>
    %564 = arith.divf %562, %563 : vector<1x32xf32>
    %565 = vector.extract_strided_slice %554 {offsets = [0, 32], sizes = [1, 32], strides = [1, 1]} : vector<1x96xf32> to vector<1x32xf32>
    %566 = vector.extract_strided_slice %556 {offsets = [0, 32], sizes = [1, 32], strides = [1, 1]} : vector<1x96xf32> to vector<1x32xf32>
    %567 = arith.addf %565, %566 : vector<1x32xf32>
    %568 = arith.negf %567 : vector<1x32xf32>
    %569 = math.exp %568 : vector<1x32xf32>
    %cst_150 = arith.constant 1.000000e+00 : f32
    %570 = vector.broadcast %cst_150 : f32 to vector<1x32xf32>
    %571 = arith.addf %570, %569 : vector<1x32xf32>
    %572 = arith.divf %570, %571 : vector<1x32xf32>
    %573 = vector.extract_strided_slice %554 {offsets = [0, 64], sizes = [1, 32], strides = [1, 1]} : vector<1x96xf32> to vector<1x32xf32>
    %574 = vector.extract_strided_slice %556 {offsets = [0, 64], sizes = [1, 32], strides = [1, 1]} : vector<1x96xf32> to vector<1x32xf32>
    %575 = arith.mulf %564, %574 : vector<1x32xf32>
    %576 = arith.addf %573, %575 : vector<1x32xf32>
    %577 = math.tanh %576 : vector<1x32xf32>
    %cst_151 = arith.constant 1.000000e+00 : f32
    %578 = vector.broadcast %cst_151 : f32 to vector<1x32xf32>
    %579 = arith.subf %578, %572 : vector<1x32xf32>
    %580 = arith.mulf %579, %577 : vector<1x32xf32>
    %581 = arith.mulf %572, %553 : vector<1x32xf32>
    %582 = arith.addf %580, %581 : vector<1x32xf32>
    %583 = vector.extract_strided_slice %492 {offsets = [3, 0], sizes = [1, 96], strides = [1, 1]} : vector<4x96xf32> to vector<1x96xf32>
    %cst_152 = arith.constant dense<0.000000e+00> : vector<1x96xf32>
    %584 = tpu.matmul %582, %487, %cst_152 {dimension_numbers = #tpu.dot_dimension_numbers<[1], [0], [0], [1], [0, 0, 1, 1], [], []>} : vector<1x32xf32>, vector<32x96xf32>, vector<1x96xf32> -> vector<1x96xf32>
    %585 = arith.addf %584, %494 : vector<1x96xf32>
    %586 = vector.extract_strided_slice %583 {offsets = [0, 0], sizes = [1, 32], strides = [1, 1]} : vector<1x96xf32> to vector<1x32xf32>
    %587 = vector.extract_strided_slice %585 {offsets = [0, 0], sizes = [1, 32], strides = [1, 1]} : vector<1x96xf32> to vector<1x32xf32>
    %588 = arith.addf %586, %587 : vector<1x32xf32>
    %589 = arith.negf %588 : vector<1x32xf32>
    %590 = math.exp %589 : vector<1x32xf32>
    %cst_153 = arith.constant 1.000000e+00 : f32
    %591 = vector.broadcast %cst_153 : f32 to vector<1x32xf32>
    %592 = arith.addf %591, %590 : vector<1x32xf32>
    %593 = arith.divf %591, %592 : vector<1x32xf32>
    %594 = vector.extract_strided_slice %583 {offsets = [0, 32], sizes = [1, 32], strides = [1, 1]} : vector<1x96xf32> to vector<1x32xf32>
    %595 = vector.extract_strided_slice %585 {offsets = [0, 32], sizes = [1, 32], strides = [1, 1]} : vector<1x96xf32> to vector<1x32xf32>
    %596 = arith.addf %594, %595 : vector<1x32xf32>
    %597 = arith.negf %596 : vector<1x32xf32>
    %598 = math.exp %597 : vector<1x32xf32>
    %cst_154 = arith.constant 1.000000e+00 : f32
    %599 = vector.broadcast %cst_154 : f32 to vector<1x32xf32>
    %600 = arith.addf %599, %598 : vector<1x32xf32>
    %601 = arith.divf %599, %600 : vector<1x32xf32>
    %602 = vector.extract_strided_slice %583 {offsets = [0, 64], sizes = [1, 32], strides = [1, 1]} : vector<1x96xf32> to vector<1x32xf32>
    %603 = vector.extract_strided_slice %585 {offsets = [0, 64], sizes = [1, 32], strides = [1, 1]} : vector<1x96xf32> to vector<1x32xf32>
    %604 = arith.mulf %593, %603 : vector<1x32xf32>
    %605 = arith.addf %602, %604 : vector<1x32xf32>
    %606 = math.tanh %605 : vector<1x32xf32>
    %cst_155 = arith.constant 1.000000e+00 : f32
    %607 = vector.broadcast %cst_155 : f32 to vector<1x32xf32>
    %608 = arith.subf %607, %601 : vector<1x32xf32>
    %609 = arith.mulf %608, %606 : vector<1x32xf32>
    %610 = arith.mulf %601, %582 : vector<1x32xf32>
    %611 = arith.addf %609, %610 : vector<1x32xf32>
    %c0_156 = arith.constant 0 : index
    %c0_157 = arith.constant 0 : index
    %c0_158 = arith.constant 0 : index
    %612 = vector.load %arg21[%c0_156, %c0_157, %c0_158] : memref<1x32x32xf32, #tpu.memory_space<vmem>>, vector<1x32x32xf32>
    %613 = vector.shape_cast %612 : vector<1x32x32xf32> to vector<32x32xf32>
    %c0_159 = arith.constant 0 : index
    %c0_160 = arith.constant 0 : index
    %c0_161 = arith.constant 0 : index
    %614 = vector.load %arg22[%c0_159, %c0_160, %c0_161] : memref<1x1x32xf32, #tpu.memory_space<vmem>>, vector<1x1x32xf32>
    %615 = vector.shape_cast %614 : vector<1x1x32xf32> to vector<1x32xf32>
    %c0_162 = arith.constant 0 : index
    %c1_163 = arith.constant 1 : index
    %c0_164 = arith.constant 0 : index
    %616 = vector.load %arg23[%c0_162, %c1_163, %c0_164] : memref<1x3x32xf32, #tpu.memory_space<vmem>>, vector<1x1x32xf32>
    %617 = vector.shape_cast %616 : vector<1x1x32xf32> to vector<1x32xf32>
    %c0_165 = arith.constant 0 : index
    %c2_166 = arith.constant 2 : index
    %c0_167 = arith.constant 0 : index
    %618 = vector.load %arg23[%c0_165, %c2_166, %c0_167] : memref<1x3x32xf32, #tpu.memory_space<vmem>>, vector<1x1x1xf32>
    %619 = vector.shape_cast %618 : vector<1x1x1xf32> to vector<1x1xf32>
    %c0_168 = arith.constant 0 : index
    %c0_169 = arith.constant 0 : index
    %c0_170 = arith.constant 0 : index
    %620 = vector.load %arg20[%c0_168, %c0_169, %c0_170] : memref<1x32x32xf32, #tpu.memory_space<vmem>>, vector<1x32x32xf32>
    %621 = vector.shape_cast %620 : vector<1x32x32xf32> to vector<32x32xf32>
    %cst_171 = arith.constant dense<0.000000e+00> : vector<1x32xf32>
    %622 = tpu.matmul %611, %621, %cst_171 {dimension_numbers = #tpu.dot_dimension_numbers<[1], [0], [0], [1], [0, 0, 1, 1], [], []>} : vector<1x32xf32>, vector<32x32xf32>, vector<1x32xf32> -> vector<1x32xf32>
    %c0_172 = arith.constant 0 : index
    %c0_173 = arith.constant 0 : index
    %c0_174 = arith.constant 0 : index
    %623 = vector.load %arg23[%c0_172, %c0_173, %c0_174] : memref<1x3x32xf32, #tpu.memory_space<vmem>>, vector<1x1x32xf32>
    %624 = vector.shape_cast %623 : vector<1x1x32xf32> to vector<1x32xf32>
    %625 = arith.addf %622, %624 : vector<1x32xf32>
    %cst_175 = arith.constant dense<0.000000e+00> : vector<1x32xf32>
    %626 = tpu.matmul %524, %613, %cst_175 {dimension_numbers = #tpu.dot_dimension_numbers<[1], [0], [0], [1], [0, 0, 1, 1], [], []>} : vector<1x32xf32>, vector<32x32xf32>, vector<1x32xf32> -> vector<1x32xf32>
    %627 = arith.addf %625, %626 : vector<1x32xf32>
    %628 = arith.addf %627, %617 : vector<1x32xf32>
    %629 = math.tanh %628 : vector<1x32xf32>
    %630 = arith.mulf %629, %615 : vector<1x32xf32>
    %cst_176 = arith.constant dense<0.000000e+00> : vector<1xf32>
    %631 = vector.multi_reduction <add>, %630, %cst_176 [1] : vector<1x32xf32> to vector<1xf32>
    %632 = vector.shape_cast %631 : vector<1xf32> to vector<1x1xf32>
    %633 = arith.addf %632, %619 : vector<1x1xf32>
    %cst_177 = arith.constant dense<0.000000e+00> : vector<1x32xf32>
    %634 = tpu.matmul %553, %613, %cst_177 {dimension_numbers = #tpu.dot_dimension_numbers<[1], [0], [0], [1], [0, 0, 1, 1], [], []>} : vector<1x32xf32>, vector<32x32xf32>, vector<1x32xf32> -> vector<1x32xf32>
    %635 = arith.addf %625, %634 : vector<1x32xf32>
    %636 = arith.addf %635, %617 : vector<1x32xf32>
    %637 = math.tanh %636 : vector<1x32xf32>
    %638 = arith.mulf %637, %615 : vector<1x32xf32>
    %cst_178 = arith.constant dense<0.000000e+00> : vector<1xf32>
    %639 = vector.multi_reduction <add>, %638, %cst_178 [1] : vector<1x32xf32> to vector<1xf32>
    %640 = vector.shape_cast %639 : vector<1xf32> to vector<1x1xf32>
    %641 = arith.addf %640, %619 : vector<1x1xf32>
    %cst_179 = arith.constant dense<0.000000e+00> : vector<1x32xf32>
    %642 = tpu.matmul %582, %613, %cst_179 {dimension_numbers = #tpu.dot_dimension_numbers<[1], [0], [0], [1], [0, 0, 1, 1], [], []>} : vector<1x32xf32>, vector<32x32xf32>, vector<1x32xf32> -> vector<1x32xf32>
    %643 = arith.addf %625, %642 : vector<1x32xf32>
    %644 = arith.addf %643, %617 : vector<1x32xf32>
    %645 = math.tanh %644 : vector<1x32xf32>
    %646 = arith.mulf %645, %615 : vector<1x32xf32>
    %cst_180 = arith.constant dense<0.000000e+00> : vector<1xf32>
    %647 = vector.multi_reduction <add>, %646, %cst_180 [1] : vector<1x32xf32> to vector<1xf32>
    %648 = vector.shape_cast %647 : vector<1xf32> to vector<1x1xf32>
    %649 = arith.addf %648, %619 : vector<1x1xf32>
    %cst_181 = arith.constant dense<0.000000e+00> : vector<1x32xf32>
    %650 = tpu.matmul %611, %613, %cst_181 {dimension_numbers = #tpu.dot_dimension_numbers<[1], [0], [0], [1], [0, 0, 1, 1], [], []>} : vector<1x32xf32>, vector<32x32xf32>, vector<1x32xf32> -> vector<1x32xf32>
    %651 = arith.addf %625, %650 : vector<1x32xf32>
    %652 = arith.addf %651, %617 : vector<1x32xf32>
    %653 = math.tanh %652 : vector<1x32xf32>
    %654 = arith.mulf %653, %615 : vector<1x32xf32>
    %cst_182 = arith.constant dense<0.000000e+00> : vector<1xf32>
    %655 = vector.multi_reduction <add>, %654, %cst_182 [1] : vector<1x32xf32> to vector<1xf32>
    %656 = vector.shape_cast %655 : vector<1xf32> to vector<1x1xf32>
    %657 = arith.addf %656, %619 : vector<1x1xf32>
    %658 = arith.maximumf %633, %641 : vector<1x1xf32>
    %659 = arith.maximumf %658, %649 : vector<1x1xf32>
    %660 = arith.maximumf %659, %657 : vector<1x1xf32>
    %661 = arith.subf %633, %660 : vector<1x1xf32>
    %662 = math.exp %661 : vector<1x1xf32>
    %663 = arith.subf %641, %660 : vector<1x1xf32>
    %664 = math.exp %663 : vector<1x1xf32>
    %665 = arith.subf %649, %660 : vector<1x1xf32>
    %666 = math.exp %665 : vector<1x1xf32>
    %667 = arith.subf %657, %660 : vector<1x1xf32>
    %668 = math.exp %667 : vector<1x1xf32>
    %669 = arith.addf %662, %664 : vector<1x1xf32>
    %670 = arith.addf %669, %666 : vector<1x1xf32>
    %671 = arith.addf %670, %668 : vector<1x1xf32>
    %cst_183 = arith.constant 1.000000e+00 : f32
    %672 = vector.broadcast %cst_183 : f32 to vector<1x1xf32>
    %673 = arith.divf %672, %671 : vector<1x1xf32>
    %cst_184 = arith.constant 0.000000e+00 : f32
    %674 = vector.broadcast %cst_184 : f32 to vector<1x32xf32>
    %675 = arith.mulf %662, %673 : vector<1x1xf32>
    %676 = vector.broadcast %675 : vector<1x1xf32> to vector<1x32xf32>
    %677 = arith.mulf %676, %524 : vector<1x32xf32>
    %678 = arith.addf %674, %677 : vector<1x32xf32>
    %679 = arith.mulf %664, %673 : vector<1x1xf32>
    %680 = vector.broadcast %679 : vector<1x1xf32> to vector<1x32xf32>
    %681 = arith.mulf %680, %553 : vector<1x32xf32>
    %682 = arith.addf %678, %681 : vector<1x32xf32>
    %683 = arith.mulf %666, %673 : vector<1x1xf32>
    %684 = vector.broadcast %683 : vector<1x1xf32> to vector<1x32xf32>
    %685 = arith.mulf %684, %582 : vector<1x32xf32>
    %686 = arith.addf %682, %685 : vector<1x32xf32>
    %687 = arith.mulf %668, %673 : vector<1x1xf32>
    %688 = vector.broadcast %687 : vector<1x1xf32> to vector<1x32xf32>
    %689 = arith.mulf %688, %611 : vector<1x32xf32>
    %690 = arith.addf %686, %689 : vector<1x32xf32>
    %c0_185 = arith.constant 0 : index
    %c0_186 = arith.constant 0 : index
    %691 = vector.load %arg26[%c0_185, %c0_186] : memref<32x1024xf32, #tpu.memory_space<vmem>>, vector<32x1024xf32>
    %cst_187 = arith.constant dense<0.000000e+00> : vector<1x1024xf32>
    %692 = tpu.matmul %690, %691, %cst_187 {dimension_numbers = #tpu.dot_dimension_numbers<[1], [0], [0], [1], [0, 0, 1, 1], [], []>} : vector<1x32xf32>, vector<32x1024xf32>, vector<1x1024xf32> -> vector<1x1024xf32>
    %c0_188 = arith.constant 0 : index
    %c0_189 = arith.constant 0 : index
    %693 = vector.load %arg27[%c0_188, %c0_189] : memref<32x1024xf32, #tpu.memory_space<vmem>>, vector<32x1024xf32>
    %cst_190 = arith.constant dense<0.000000e+00> : vector<1x1024xf32>
    %694 = tpu.matmul %208, %693, %cst_190 {dimension_numbers = #tpu.dot_dimension_numbers<[1], [0], [0], [1], [0, 0, 1, 1], [], []>} : vector<1x32xf32>, vector<32x1024xf32>, vector<1x1024xf32> -> vector<1x1024xf32>
    %695 = arith.mulf %692, %694 : vector<1x1024xf32>
    %c0_191 = arith.constant 0 : index
    %c0_192 = arith.constant 0 : index
    %c0_193 = arith.constant 0 : index
    %696 = vector.load %arg24[%c0_191, %c0_192, %c0_193] : memref<1x1024x32xf32, #tpu.memory_space<vmem>>, vector<1x1024x32xf32>
    %697 = vector.shape_cast %696 : vector<1x1024x32xf32> to vector<1024x32xf32>
    %cst_194 = arith.constant dense<0.000000e+00> : vector<1x32xf32>
    %698 = tpu.matmul %695, %697, %cst_194 {dimension_numbers = #tpu.dot_dimension_numbers<[1], [0], [0], [1], [0, 0, 1, 1], [], []>} : vector<1x1024xf32>, vector<1024x32xf32>, vector<1x32xf32> -> vector<1x32xf32>
    %c0_195 = arith.constant 0 : index
    %c0_196 = arith.constant 0 : index
    %c0_197 = arith.constant 0 : index
    %699 = vector.load %arg25[%c0_195, %c0_196, %c0_197] : memref<1x1x32xf32, #tpu.memory_space<vmem>>, vector<1x1x32xf32>
    %700 = vector.shape_cast %699 : vector<1x1x32xf32> to vector<1x32xf32>
    %701 = arith.addf %698, %700 : vector<1x32xf32>
    %702 = math.tanh %701 : vector<1x32xf32>
    %c0_198 = arith.constant 0 : index
    %c0_199 = arith.constant 0 : index
    %703 = vector.load %arg28[%c0_198, %c0_199] : memref<32x2xf32, #tpu.memory_space<vmem>>, vector<32x2xf32>
    %cst_200 = arith.constant dense<0.000000e+00> : vector<1x2xf32>
    %704 = tpu.matmul %702, %703, %cst_200 {dimension_numbers = #tpu.dot_dimension_numbers<[1], [0], [0], [1], [0, 0, 1, 1], [], []>} : vector<1x32xf32>, vector<32x2xf32>, vector<1x2xf32> -> vector<1x2xf32>
    %c0_201 = arith.constant 0 : index
    %c0_202 = arith.constant 0 : index
    %705 = vector.load %arg29[%c0_201, %c0_202] : memref<1x2xf32, #tpu.memory_space<vmem>>, vector<1x2xf32>
    %706 = arith.addf %704, %705 : vector<1x2xf32>
    %707 = math.tanh %706 : vector<1x2xf32>
    %cst_203 = arith.constant dense<0xFF800000> : vector<1xf32>
    %708 = vector.multi_reduction <maximumf>, %707, %cst_203 [1] : vector<1x2xf32> to vector<1xf32>
    %cst_204 = arith.constant 0xFF800000 : f32
    %709 = vector.broadcast %cst_204 : f32 to vector<1xf32>
    %710 = arith.maximumf %709, %708 : vector<1xf32>
    %711 = vector.shape_cast %710 : vector<1xf32> to vector<1x1xf32>
    %712 = vector.broadcast %711 : vector<1x1xf32> to vector<1x2xf32>
    %713 = arith.subf %707, %712 : vector<1x2xf32>
    %714 = math.exp %713 : vector<1x2xf32>
    %cst_205 = arith.constant dense<0.000000e+00> : vector<1xf32>
    %715 = vector.multi_reduction <add>, %714, %cst_205 [1] : vector<1x2xf32> to vector<1xf32>
    %716 = vector.shape_cast %715 : vector<1xf32> to vector<1x1xf32>
    %717 = vector.broadcast %716 : vector<1x1xf32> to vector<1x2xf32>
    %718 = arith.divf %714, %717 : vector<1x2xf32>
    %c0_206 = arith.constant 0 : index
    %c0_207 = arith.constant 0 : index
    %c0_208 = arith.constant 0 : index
    %719 = vector.load %arg30[%c0_206, %c0_207, %c0_208] : memref<1x1x2xf32, #tpu.memory_space<vmem>>, vector<1x1x2xf32>
    %720 = vector.shape_cast %719 : vector<1x1x2xf32> to vector<1x2xf32>
    %721 = vector.shape_cast %718 : vector<1x2xf32> to vector<1x1x2xf32>
    tpu.vector_store %arg30[%c0_206, %c0_207, %c0_208], %721 {strides = array<i32>} : memref<1x1x2xf32, #tpu.memory_space<vmem>>, vector<1x1x2xf32>,
    return
  }
  func.func @transform_0(%arg0: i32) -> (i32, i32, i32) {
    %c0_i32 = arith.constant 0 : i32
    %c0_i32_0 = arith.constant 0 : i32
    %c0_i32_1 = arith.constant 0 : i32
    return %arg0, %c0_i32, %c0_i32_0 : i32, i32, i32
  }
  func.func @transform_1(%arg0: i32) -> (i32, i32, i32) {
    %c0_i32 = arith.constant 0 : i32
    %c0_i32_0 = arith.constant 0 : i32
    %c0_i32_1 = arith.constant 0 : i32
    return %arg0, %c0_i32, %c0_i32_0 : i32, i32, i32
  }
  func.func @transform_2(%arg0: i32) -> (i32, i32, i32) {
    %c0_i32 = arith.constant 0 : i32
    %c0_i32_0 = arith.constant 0 : i32
    %c0_i32_1 = arith.constant 0 : i32
    return %arg0, %c0_i32, %c0_i32_0 : i32, i32, i32
  }
  func.func @transform_3(%arg0: i32) -> (i32, i32, i32) {
    %c0_i32 = arith.constant 0 : i32
    %c0_i32_0 = arith.constant 0 : i32
    %c0_i32_1 = arith.constant 0 : i32
    return %arg0, %c0_i32, %c0_i32_0 : i32, i32, i32
  }
  func.func @transform_4(%arg0: i32) -> (i32, i32, i32) {
    %c0_i32 = arith.constant 0 : i32
    %c0_i32_0 = arith.constant 0 : i32
    %c0_i32_1 = arith.constant 0 : i32
    return %arg0, %c0_i32, %c0_i32_0 : i32, i32, i32
  }
  func.func @transform_5(%arg0: i32) -> (i32, i32, i32) {
    %c0_i32 = arith.constant 0 : i32
    %c0_i32_0 = arith.constant 0 : i32
    %c0_i32_1 = arith.constant 0 : i32
    return %arg0, %c0_i32, %c0_i32_0 : i32, i32, i32
  }
  func.func @transform_6(%arg0: i32) -> (i32, i32, i32) {
    %c0_i32 = arith.constant 0 : i32
    %c0_i32_0 = arith.constant 0 : i32
    %c0_i32_1 = arith.constant 0 : i32
    return %arg0, %c0_i32, %c0_i32_0 : i32, i32, i32
  }
  func.func @transform_7(%arg0: i32) -> (i32, i32, i32) {
    %c0_i32 = arith.constant 0 : i32
    %c0_i32_0 = arith.constant 0 : i32
    %c0_i32_1 = arith.constant 0 : i32
    return %arg0, %c0_i32, %c0_i32_0 : i32, i32, i32
  }
  func.func @transform_8(%arg0: i32) -> (i32, i32, i32) {
    %c0_i32 = arith.constant 0 : i32
    %c0_i32_0 = arith.constant 0 : i32
    %c0_i32_1 = arith.constant 0 : i32
    return %arg0, %c0_i32, %c0_i32_0 : i32, i32, i32
  }
  func.func @transform_9(%arg0: i32) -> (i32, i32, i32) {
    %c0_i32 = arith.constant 0 : i32
    %c0_i32_0 = arith.constant 0 : i32
    %c0_i32_1 = arith.constant 0 : i32
    return %arg0, %c0_i32, %c0_i32_0 : i32, i32, i32
  }
  func.func @transform_10(%arg0: i32) -> (i32, i32, i32) {
    %c0_i32 = arith.constant 0 : i32
    %c0_i32_0 = arith.constant 0 : i32
    %c0_i32_1 = arith.constant 0 : i32
    return %arg0, %c0_i32, %c0_i32_0 : i32, i32, i32
  }
  func.func @transform_11(%arg0: i32) -> (i32, i32, i32) {
    %c0_i32 = arith.constant 0 : i32
    %c0_i32_0 = arith.constant 0 : i32
    %c0_i32_1 = arith.constant 0 : i32
    return %arg0, %c0_i32, %c0_i32_0 : i32, i32, i32
  }
  func.func @transform_12(%arg0: i32) -> (i32, i32, i32) {
    %c0_i32 = arith.constant 0 : i32
    %c0_i32_0 = arith.constant 0 : i32
    %c0_i32_1 = arith.constant 0 : i32
    return %arg0, %c0_i32, %c0_i32_0 : i32, i32, i32
  }
  func.func @transform_13(%arg0: i32) -> (i32, i32, i32) {
    %c0_i32 = arith.constant 0 : i32
    %c0_i32_0 = arith.constant 0 : i32
    %c0_i32_1 = arith.constant 0 : i32
    return %arg0, %c0_i32, %c0_i32_0 : i32, i32, i32
  }
  func.func @transform_14(%arg0: i32) -> (i32, i32, i32) {
    %c0_i32 = arith.constant 0 : i32
    %c0_i32_0 = arith.constant 0 : i32
    %c0_i32_1 = arith.constant 0 : i32
    return %arg0, %c0_i32, %c0_i32_0 : i32, i32, i32
  }
  func.func @transform_15(%arg0: i32) -> (i32, i32, i32) {
    %c0_i32 = arith.constant 0 : i32
    %c0_i32_0 = arith.constant 0 : i32
    %c0_i32_1 = arith.constant 0 : i32
    return %arg0, %c0_i32, %c0_i32_0 : i32, i32, i32
  }
  func.func @transform_16(%arg0: i32) -> (i32, i32, i32) {
    %c0_i32 = arith.constant 0 : i32
    %c0_i32_0 = arith.constant 0 : i32
    %c0_i32_1 = arith.constant 0 : i32
    return %arg0, %c0_i32, %c0_i32_0 : i32, i32, i32
  }
  func.func @transform_17(%arg0: i32) -> (i32, i32, i32) {
    %c0_i32 = arith.constant 0 : i32
    %c0_i32_0 = arith.constant 0 : i32
    %c0_i32_1 = arith.constant 0 : i32
    return %arg0, %c0_i32, %c0_i32_0 : i32, i32, i32
  }
  func.func @transform_18(%arg0: i32) -> (i32, i32, i32) {
    %c0_i32 = arith.constant 0 : i32
    %c0_i32_0 = arith.constant 0 : i32
    %c0_i32_1 = arith.constant 0 : i32
    return %arg0, %c0_i32, %c0_i32_0 : i32, i32, i32
  }
  func.func @transform_19(%arg0: i32) -> (i32, i32, i32) {
    %c0_i32 = arith.constant 0 : i32
    %c0_i32_0 = arith.constant 0 : i32
    %c0_i32_1 = arith.constant 0 : i32
    return %arg0, %c0_i32, %c0_i32_0 : i32, i32, i32
  }
  func.func @transform_20(%arg0: i32) -> (i32, i32, i32) {
    %c0_i32 = arith.constant 0 : i32
    %c0_i32_0 = arith.constant 0 : i32
    %c0_i32_1 = arith.constant 0 : i32
    return %arg0, %c0_i32, %c0_i32_0 : i32, i32, i32
  }
  func.func @transform_21(%arg0: i32) -> (i32, i32, i32) {
    %c0_i32 = arith.constant 0 : i32
    %c0_i32_0 = arith.constant 0 : i32
    %c0_i32_1 = arith.constant 0 : i32
    return %arg0, %c0_i32, %c0_i32_0 : i32, i32, i32
  }
  func.func @transform_22(%arg0: i32) -> (i32, i32, i32) {
    %c0_i32 = arith.constant 0 : i32
    %c0_i32_0 = arith.constant 0 : i32
    %c0_i32_1 = arith.constant 0 : i32
    return %arg0, %c0_i32, %c0_i32_0 : i32, i32, i32
  }
  func.func @transform_23(%arg0: i32) -> (i32, i32, i32) {
    %c0_i32 = arith.constant 0 : i32
    %c0_i32_0 = arith.constant 0 : i32
    %c0_i32_1 = arith.constant 0 : i32
    return %arg0, %c0_i32, %c0_i32_0 : i32, i32, i32
  }
  func.func @transform_24(%arg0: i32) -> (i32, i32, i32) {
    %c0_i32 = arith.constant 0 : i32
    %c0_i32_0 = arith.constant 0 : i32
    %c0_i32_1 = arith.constant 0 : i32
    return %arg0, %c0_i32, %c0_i32_0 : i32, i32, i32
  }
  func.func @transform_25(%arg0: i32) -> (i32, i32) {
    %c0_i32 = arith.constant 0 : i32
    %c0_i32_0 = arith.constant 0 : i32
    %c0_i32_1 = arith.constant 0 : i32
    return %c0_i32, %c0_i32_0 : i32, i32
  }
  func.func @transform_26(%arg0: i32) -> (i32, i32) {
    %c0_i32 = arith.constant 0 : i32
    %c0_i32_0 = arith.constant 0 : i32
    %c0_i32_1 = arith.constant 0 : i32
    return %c0_i32, %c0_i32_0 : i32, i32
  }
  func.func @transform_27(%arg0: i32) -> (i32, i32) {
    %c0_i32 = arith.constant 0 : i32
    %c0_i32_0 = arith.constant 0 : i32
    %c0_i32_1 = arith.constant 0 : i32
    return %c0_i32, %c0_i32_0 : i32, i32
  }
  func.func @transform_28(%arg0: i32) -> (i32, i32) {
    %c0_i32 = arith.constant 0 : i32
    %c0_i32_0 = arith.constant 0 : i32
    %c0_i32_1 = arith.constant 0 : i32
    return %c0_i32, %c0_i32_0 : i32, i32
  }
  func.func @transform_29(%arg0: i32) -> (i32, i32, i32) {
    %c0_i32 = arith.constant 0 : i32
    %c0_i32_0 = arith.constant 0 : i32
    %c0_i32_1 = arith.constant 0 : i32
    return %arg0, %c0_i32, %c0_i32_0 : i32, i32, i32
  }
}

</mosaic_0001>

<llo_original>
// kernel: mansf_forward.1
$region0: #{mansf_forward.1}
  #allocation0 [shape = 'u32[]', space=smem, size = 0x4, offset = 0x4, fixed_abs, tag = 'smem constant byte address 0x4 - core index']
  #allocation1 [shape = 'u32[144,128]{1,0:T(1,128)}', space=vmem, size = 0x12000, scoped, tag = 'internal scratch']
  %s0 = inlined_call_operand.smem [shape: u32[30], index: -1, kind: input, shape index: {}]
  %s1 = sld [smem:[%s0]]
  %s2 = scalar_lea.smem %s0, 1
  %s3 = sld [smem:[%s2]]
  %s4 = scalar_lea.smem %s0, 2
  %s5 = sld [smem:[%s4]]
  %s6 = scalar_lea.smem %s0, 3
  %s7 = sld [smem:[%s6]]
  %s8 = scalar_lea.smem %s0, 4
  %s9 = sld [smem:[%s8]]
  %s10 = scalar_lea.smem %s0, 5
  %s11 = sld [smem:[%s10]]
  %s12 = scalar_lea.smem %s0, 6
  %s13 = sld [smem:[%s12]]
  %s14 = scalar_lea.smem %s0, 7
  %s15 = sld [smem:[%s14]]
  %s16 = scalar_lea.smem %s0, 8
  %s17 = sld [smem:[%s16]]
  %s18 = scalar_lea.smem %s0, 9
  %s19 = sld [smem:[%s18]]
  %s20 = scalar_lea.smem %s0, 10
  %s21 = sld [smem:[%s20]]
  %s22 = scalar_lea.smem %s0, 11
  %s23 = sld [smem:[%s22]]
  %s24 = scalar_lea.smem %s0, 12
  %s25 = sld [smem:[%s24]]
  %s26 = scalar_lea.smem %s0, 13
  %s27 = sld [smem:[%s26]]
  %s28 = scalar_lea.smem %s0, 14
  %s29 = sld [smem:[%s28]]
  %s30 = scalar_lea.smem %s0, 15
  %s31 = sld [smem:[%s30]]
  %s32 = scalar_lea.smem %s0, 16
  %s33 = sld [smem:[%s32]]
  %s34 = scalar_lea.smem %s0, 17
  %s35 = sld [smem:[%s34]]
  %s36 = scalar_lea.smem %s0, 18
  %s37 = sld [smem:[%s36]]
  %s38 = scalar_lea.smem %s0, 19
  %s39 = sld [smem:[%s38]]
  %s40 = scalar_lea.smem %s0, 20
  %s41 = sld [smem:[%s40]]
  %s42 = scalar_lea.smem %s0, 21
  %s43 = sld [smem:[%s42]]
  %s44 = scalar_lea.smem %s0, 22
  %s45 = sld [smem:[%s44]]
  %s46 = scalar_lea.smem %s0, 23
  %s47 = sld [smem:[%s46]]
  %s48 = scalar_lea.smem %s0, 24
  %s49 = sld [smem:[%s48]]
  %s50 = scalar_lea.smem %s0, 25
  %s51 = sld [smem:[%s50]]
  %s52 = scalar_lea.smem %s0, 26
  %s53 = sld [smem:[%s52]]
  %s54 = scalar_lea.smem %s0, 27
  %s55 = sld [smem:[%s54]]
  %s56 = scalar_lea.smem %s0, 28
  %s57 = sld [smem:[%s56]]
  %s58 = scalar_lea.smem %s0, 29
  %s59 = sld [smem:[%s58]]
  %s60 = sld [smem:[#allocation0]]
  $region149: #{mansf_forward.1} parent=0
    _
  %s62 = ssub.s32 1, %s60
  %s63 = scalar_select 0, %s62, %s60
  loop: start=0, step=1, limit=5
  $region2: #{mansf_forward.1} parent=0 // loop_pre_header
    _
  $region3: #{mansf_forward.1} parent=0 // loop_header
    %s65 = sphi 0, %s69
    %p66 = scmp.ge.s32.totalorder %s65, 5
    %s75 = sphi 0, %s77
    %s78 = sphi 0, %s75
    %s79 = sphi 0, %s78
    %s95 = sphi 0, %s79
    %s101 = sphi 0, %s103
    %s104 = sphi 0, %s101
    %s105 = sphi 0, %s104
    %s121 = sphi 0, %s105
    %s127 = sphi 0, %s129
    %s130 = sphi 0, %s127
    %s131 = sphi 0, %s130
    %s147 = sphi 0, %s131
    %s153 = sphi 0, %s155
    %s156 = sphi 0, %s153
    %s157 = sphi 0, %s156
    %s173 = sphi 0, %s157
    %s179 = sphi 0, %s181
    %s182 = sphi 0, %s179
    %s183 = sphi 0, %s182
    %s199 = sphi 0, %s183
    %s205 = sphi 0, %s207
    %s208 = sphi 0, %s205
    %s209 = sphi 0, %s208
    %s225 = sphi 0, %s209
    %s231 = sphi 0, %s233
    %s234 = sphi 0, %s231
    %s235 = sphi 0, %s234
    %s251 = sphi 0, %s235
    %s257 = sphi 0, %s259
    %s260 = sphi 0, %s257
    %s261 = sphi 0, %s260
    %s277 = sphi 0, %s261
    %s283 = sphi 0, %s285
    %s286 = sphi 0, %s283
    %s287 = sphi 0, %s286
    %s303 = sphi 0, %s287
    %s309 = sphi 0, %s311
    %s312 = sphi 0, %s309
    %s313 = sphi 0, %s312
    %s329 = sphi 0, %s313
    %s335 = sphi 0, %s337
    %s338 = sphi 0, %s335
    %s339 = sphi 0, %s338
    %s355 = sphi 0, %s339
    %s361 = sphi 0, %s363
    %s364 = sphi 0, %s361
    %s365 = sphi 0, %s364
    %s381 = sphi 0, %s365
    %s387 = sphi 0, %s389
    %s390 = sphi 0, %s387
    %s391 = sphi 0, %s390
    %s407 = sphi 0, %s391
    %s413 = sphi 0, %s415
    %s416 = sphi 0, %s413
    %s417 = sphi 0, %s416
    %s433 = sphi 0, %s417
    %s439 = sphi 0, %s441
    %s442 = sphi 0, %s439
    %s443 = sphi 0, %s442
    %s459 = sphi 0, %s443
    %s465 = sphi 0, %s467
    %s468 = sphi 0, %s465
    %s469 = sphi 0, %s468
    %s485 = sphi 0, %s469
    %s491 = sphi 0, %s493
    %s494 = sphi 0, %s491
    %s495 = sphi 0, %s494
    %s511 = sphi 0, %s495
    %s517 = sphi 0, %s519
    %s520 = sphi 0, %s517
    %s521 = sphi 0, %s520
    %s537 = sphi 0, %s521
    %s543 = sphi 0, %s545
    %s546 = sphi 0, %s543
    %s547 = sphi 0, %s546
    %s563 = sphi 0, %s547
    %s569 = sphi 0, %s571
    %s572 = sphi 0, %s569
    %s573 = sphi 0, %s572
    %s589 = sphi 0, %s573
    %s595 = sphi 0, %s597
    %s598 = sphi 0, %s595
    %s599 = sphi 0, %s598
    %s615 = sphi 0, %s599
    %s621 = sphi 0, %s623
    %s624 = sphi 0, %s621
    %s625 = sphi 0, %s624
    %s641 = sphi 0, %s625
    %s647 = sphi 0, %s649
    %s650 = sphi 0, %s647
    %s651 = sphi 0, %s650
    %s667 = sphi 0, %s651
    %s673 = sphi 0, %s675
    %s676 = sphi 0, %s673
    %s677 = sphi 0, %s676
    %s693 = sphi 0, %s677
    %s699 = sphi 0, %s701
    %s702 = sphi 0, %s699
    %s703 = sphi 0, %s702
    %s719 = sphi 0, %s703
    %s723 = sphi 0, %s723
    %s725 = sphi 0, %s723
    %s726 = sphi 0, %s725
    %s740 = sphi 0, %s726
    %s744 = sphi 0, %s744
    %s746 = sphi 0, %s744
    %s747 = sphi 0, %s746
    %s761 = sphi 0, %s747
    %s765 = sphi 0, %s765
    %s767 = sphi 0, %s765
    %s768 = sphi 0, %s767
    %s782 = sphi 0, %s768
    %s786 = sphi 0, %s786
    %s788 = sphi 0, %s786
    %s789 = sphi 0, %s788
    %s803 = sphi 0, %s789
    %s809 = sphi 0, %s811
    %s812 = sphi 0, %s809
    %s813 = sphi 0, %s812
    %s829 = sphi 0, %s813
  $region4: #{mansf_forward.1} parent=0 // loop_header_branch
    %68 = sbr.rel (%p66) target = $region8
  $region5: #{mansf_forward.1} parent=0 // loop_body
    %s70 = ssub.s32 %s65, 1
    %s71 = ssub.s32 %s65, 2
    %s72 = sadd.s32 %s65, 1
    %s73 = ssub.s32 %s65, %s72
    %p74 = scmp.eq.s32.totalorder %s73, 0
    %s76 = sadd.s32 %s75, 1
    %s77 = scalar_select %p74, %s75, %s76
    %p80 = pneg %p74
    %p81 = scmp.eq.s32.totalorder %s65, 2
    %p82 = por %p80, %p81
    %p83 = scmp.ne.s32.totalorder %s75, %s78
    %p84 = scmp.eq.s32.totalorder %s65, 0
    %p85 = por %p83, %p84
    %p86 = scmp.ne.s32.totalorder %s75, %s78
    %p87 = scmp.eq.s32.totalorder %s70, 2
    %p88 = por %p86, %p87
    %p89 = scmp.ne.s32.totalorder %s78, %s79
    %p90 = scmp.eq.s32.totalorder %s70, 0
    %p91 = por %p89, %p90
    %p92 = scmp.ne.s32.totalorder %s78, %s79
    %p93 = scmp.eq.s32.totalorder %s71, 2
    %p94 = por %p92, %p93
    %p96 = scmp.ne.s32.totalorder %s79, %s95
    %p97 = scmp.eq.s32.totalorder %s71, 0
    %p98 = por %p96, %p97
    %s99 = ssub.s32 %s65, %s72
    %p100 = scmp.eq.s32.totalorder %s99, 0
    %s102 = sadd.s32 %s101, 1
    %s103 = scalar_select %p100, %s101, %s102
    %p106 = pneg %p100
    %p107 = scmp.eq.s32.totalorder %s65, 2
    %p108 = por %p106, %p107
    %p109 = scmp.ne.s32.totalorder %s101, %s104
    %p110 = scmp.eq.s32.totalorder %s65, 0
    %p111 = por %p109, %p110
    %p112 = scmp.ne.s32.totalorder %s101, %s104
    %p113 = scmp.eq.s32.totalorder %s70, 2
    %p114 = por %p112, %p113
    %p115 = scmp.ne.s32.totalorder %s104, %s105
    %p116 = scmp.eq.s32.totalorder %s70, 0
    %p117 = por %p115, %p116
    %p118 = scmp.ne.s32.totalorder %s104, %s105
    %p119 = scmp.eq.s32.totalorder %s71, 2
    %p120 = por %p118, %p119
    %p122 = scmp.ne.s32.totalorder %s105, %s121
    %p123 = scmp.eq.s32.totalorder %s71, 0
    %p124 = por %p122, %p123
    %s125 = ssub.s32 %s65, %s72
    %p126 = scmp.eq.s32.totalorder %s125, 0
    %s128 = sadd.s32 %s127, 1
    %s129 = scalar_select %p126, %s127, %s128
    %p132 = pneg %p126
    %p133 = scmp.eq.s32.totalorder %s65, 2
    %p134 = por %p132, %p133
    %p135 = scmp.ne.s32.totalorder %s127, %s130
    %p136 = scmp.eq.s32.totalorder %s65, 0
    %p137 = por %p135, %p136
    %p138 = scmp.ne.s32.totalorder %s127, %s130
    %p139 = scmp.eq.s32.totalorder %s70, 2
    %p140 = por %p138, %p139
    %p141 = scmp.ne.s32.totalorder %s130, %s131
    %p142 = scmp.eq.s32.totalorder %s70, 0
    %p143 = por %p141, %p142
    %p144 = scmp.ne.s32.totalorder %s130, %s131
    %p145 = scmp.eq.s32.totalorder %s71, 2
    %p146 = por %p144, %p145
    %p148 = scmp.ne.s32.totalorder %s131, %s147
    %p149 = scmp.eq.s32.totalorder %s71, 0
    %p150 = por %p148, %p149
    %s151 = ssub.s32 %s65, %s72
    %p152 = scmp.eq.s32.totalorder %s151, 0
    %s154 = sadd.s32 %s153, 1
    %s155 = scalar_select %p152, %s153, %s154
    %p158 = pneg %p152
    %p159 = scmp.eq.s32.totalorder %s65, 2
    %p160 = por %p158, %p159
    %p161 = scmp.ne.s32.totalorder %s153, %s156
    %p162 = scmp.eq.s32.totalorder %s65, 0
    %p163 = por %p161, %p162
    %p164 = scmp.ne.s32.totalorder %s153, %s156
    %p165 = scmp.eq.s32.totalorder %s70, 2
    %p166 = por %p164, %p165
    %p167 = scmp.ne.s32.totalorder %s156, %s157
    %p168 = scmp.eq.s32.totalorder %s70, 0
    %p169 = por %p167, %p168
    %p170 = scmp.ne.s32.totalorder %s156, %s157
    %p171 = scmp.eq.s32.totalorder %s71, 2
    %p172 = por %p170, %p171
    %p174 = scmp.ne.s32.totalorder %s157, %s173
    %p175 = scmp.eq.s32.totalorder %s71, 0
    %p176 = por %p174, %p175
    %s177 = ssub.s32 %s65, %s72
    %p178 = scmp.eq.s32.totalorder %s177, 0
    %s180 = sadd.s32 %s179, 1
    %s181 = scalar_select %p178, %s179, %s180
    %p184 = pneg %p178
    %p185 = scmp.eq.s32.totalorder %s65, 2
    %p186 = por %p184, %p185
    %p187 = scmp.ne.s32.totalorder %s179, %s182
    %p188 = scmp.eq.s32.totalorder %s65, 0
    %p189 = por %p187, %p188
    %p190 = scmp.ne.s32.totalorder %s179, %s182
    %p191 = scmp.eq.s32.totalorder %s70, 2
    %p192 = por %p190, %p191
    %p193 = scmp.ne.s32.totalorder %s182, %s183
    %p194 = scmp.eq.s32.totalorder %s70, 0
    %p195 = por %p193, %p194
    %p196 = scmp.ne.s32.totalorder %s182, %s183
    %p197 = scmp.eq.s32.totalorder %s71, 2
    %p198 = por %p196, %p197
    %p200 = scmp.ne.s32.totalorder %s183, %s199
    %p201 = scmp.eq.s32.totalorder %s71, 0
    %p202 = por %p200, %p201
    %s203 = ssub.s32 %s65, %s72
    %p204 = scmp.eq.s32.totalorder %s203, 0
    %s206 = sadd.s32 %s205, 1
    %s207 = scalar_select %p204, %s205, %s206
    %p210 = pneg %p204
    %p211 = scmp.eq.s32.totalorder %s65, 2
    %p212 = por %p210, %p211
    %p213 = scmp.ne.s32.totalorder %s205, %s208
    %p214 = scmp.eq.s32.totalorder %s65, 0
    %p215 = por %p213, %p214
    %p216 = scmp.ne.s32.totalorder %s205, %s208
    %p217 = scmp.eq.s32.totalorder %s70, 2
    %p218 = por %p216, %p217
    %p219 = scmp.ne.s32.totalorder %s208, %s209
    %p220 = scmp.eq.s32.totalorder %s70, 0
    %p221 = por %p219, %p220
    %p222 = scmp.ne.s32.totalorder %s208, %s209
    %p223 = scmp.eq.s32.totalorder %s71, 2
    %p224 = por %p222, %p223
    %p226 = scmp.ne.s32.totalorder %s209, %s225
    %p227 = scmp.eq.s32.totalorder %s71, 0
    %p228 = por %p226, %p227
    %s229 = ssub.s32 %s65, %s72
    %p230 = scmp.eq.s32.totalorder %s229, 0
    %s232 = sadd.s32 %s231, 1
    %s233 = scalar_select %p230, %s231, %s232
    %p236 = pneg %p230
    %p237 = scmp.eq.s32.totalorder %s65, 2
    %p238 = por %p236, %p237
    %p239 = scmp.ne.s32.totalorder %s231, %s234
    %p240 = scmp.eq.s32.totalorder %s65, 0
    %p241 = por %p239, %p240
    %p242 = scmp.ne.s32.totalorder %s231, %s234
    %p243 = scmp.eq.s32.totalorder %s70, 2
    %p244 = por %p242, %p243
    %p245 = scmp.ne.s32.totalorder %s234, %s235
    %p246 = scmp.eq.s32.totalorder %s70, 0
    %p247 = por %p245, %p246
    %p248 = scmp.ne.s32.totalorder %s234, %s235
    %p249 = scmp.eq.s32.totalorder %s71, 2
    %p250 = por %p248, %p249
    %p252 = scmp.ne.s32.totalorder %s235, %s251
    %p253 = scmp.eq.s32.totalorder %s71, 0
    %p254 = por %p252, %p253
    %s255 = ssub.s32 %s65, %s72
    %p256 = scmp.eq.s32.totalorder %s255, 0
    %s258 = sadd.s32 %s257, 1
    %s259 = scalar_select %p256, %s257, %s258
    %p262 = pneg %p256
    %p263 = scmp.eq.s32.totalorder %s65, 2
    %p264 = por %p262, %p263
    %p265 = scmp.ne.s32.totalorder %s257, %s260
    %p266 = scmp.eq.s32.totalorder %s65, 0
    %p267 = por %p265, %p266
    %p268 = scmp.ne.s32.totalorder %s257, %s260
    %p269 = scmp.eq.s32.totalorder %s70, 2
    %p270 = por %p268, %p269
    %p271 = scmp.ne.s32.totalorder %s260, %s261
    %p272 = scmp.eq.s32.totalorder %s70, 0
    %p273 = por %p271, %p272
    %p274 = scmp.ne.s32.totalorder %s260, %s261
    %p275 = scmp.eq.s32.totalorder %s71, 2
    %p276 = por %p274, %p275
    %p278 = scmp.ne.s32.totalorder %s261, %s277
    %p279 = scmp.eq.s32.totalorder %s71, 0
    %p280 = por %p278, %p279
    %s281 = ssub.s32 %s65, %s72
    %p282 = scmp.eq.s32.totalorder %s281, 0
    %s284 = sadd.s32 %s283, 1
    %s285 = scalar_select %p282, %s283, %s284
    %p288 = pneg %p282
    %p289 = scmp.eq.s32.totalorder %s65, 2
    %p290 = por %p288, %p289
    %p291 = scmp.ne.s32.totalorder %s283, %s286
    %p292 = scmp.eq.s32.totalorder %s65, 0
    %p293 = por %p291, %p292
    %p294 = scmp.ne.s32.totalorder %s283, %s286
    %p295 = scmp.eq.s32.totalorder %s70, 2
    %p296 = por %p294, %p295
    %p297 = scmp.ne.s32.totalorder %s286, %s287
    %p298 = scmp.eq.s32.totalorder %s70, 0
    %p299 = por %p297, %p298
    %p300 = scmp.ne.s32.totalorder %s286, %s287
    %p301 = scmp.eq.s32.totalorder %s71, 2
    %p302 = por %p300, %p301
    %p304 = scmp.ne.s32.totalorder %s287, %s303
    %p305 = scmp.eq.s32.totalorder %s71, 0
    %p306 = por %p304, %p305
    %s307 = ssub.s32 %s65, %s72
    %p308 = scmp.eq.s32.totalorder %s307, 0
    %s310 = sadd.s32 %s309, 1
    %s311 = scalar_select %p308, %s309, %s310
    %p314 = pneg %p308
    %p315 = scmp.eq.s32.totalorder %s65, 2
    %p316 = por %p314, %p315
    %p317 = scmp.ne.s32.totalorder %s309, %s312
    %p318 = scmp.eq.s32.totalorder %s65, 0
    %p319 = por %p317, %p318
    %p320 = scmp.ne.s32.totalorder %s309, %s312
    %p321 = scmp.eq.s32.totalorder %s70, 2
    %p322 = por %p320, %p321
    %p323 = scmp.ne.s32.totalorder %s312, %s313
    %p324 = scmp.eq.s32.totalorder %s70, 0
    %p325 = por %p323, %p324
    %p326 = scmp.ne.s32.totalorder %s312, %s313
    %p327 = scmp.eq.s32.totalorder %s71, 2
    %p328 = por %p326, %p327
    %p330 = scmp.ne.s32.totalorder %s313, %s329
    %p331 = scmp.eq.s32.totalorder %s71, 0
    %p332 = por %p330, %p331
    %s333 = ssub.s32 %s65, %s72
    %p334 = scmp.eq.s32.totalorder %s333, 0
    %s336 = sadd.s32 %s335, 1
    %s337 = scalar_select %p334, %s335, %s336
    %p340 = pneg %p334
    %p341 = scmp.eq.s32.totalorder %s65, 2
    %p342 = por %p340, %p341
    %p343 = scmp.ne.s32.totalorder %s335, %s338
    %p344 = scmp.eq.s32.totalorder %s65, 0
    %p345 = por %p343, %p344
    %p346 = scmp.ne.s32.totalorder %s335, %s338
    %p347 = scmp.eq.s32.totalorder %s70, 2
    %p348 = por %p346, %p347
    %p349 = scmp.ne.s32.totalorder %s338, %s339
    %p350 = scmp.eq.s32.totalorder %s70, 0
    %p351 = por %p349, %p350
    %p352 = scmp.ne.s32.totalorder %s338, %s339
    %p353 = scmp.eq.s32.totalorder %s71, 2
    %p354 = por %p352, %p353
    %p356 = scmp.ne.s32.totalorder %s339, %s355
    %p357 = scmp.eq.s32.totalorder %s71, 0
    %p358 = por %p356, %p357
    %s359 = ssub.s32 %s65, %s72
    %p360 = scmp.eq.s32.totalorder %s359, 0
    %s362 = sadd.s32 %s361, 1
    %s363 = scalar_select %p360, %s361, %s362
    %p366 = pneg %p360
    %p367 = scmp.eq.s32.totalorder %s65, 2
    %p368 = por %p366, %p367
    %p369 = scmp.ne.s32.totalorder %s361, %s364
    %p370 = scmp.eq.s32.totalorder %s65, 0
    %p371 = por %p369, %p370
    %p372 = scmp.ne.s32.totalorder %s361, %s364
    %p373 = scmp.eq.s32.totalorder %s70, 2
    %p374 = por %p372, %p373
    %p375 = scmp.ne.s32.totalorder %s364, %s365
    %p376 = scmp.eq.s32.totalorder %s70, 0
    %p377 = por %p375, %p376
    %p378 = scmp.ne.s32.totalorder %s364, %s365
    %p379 = scmp.eq.s32.totalorder %s71, 2
    %p380 = por %p378, %p379
    %p382 = scmp.ne.s32.totalorder %s365, %s381
    %p383 = scmp.eq.s32.totalorder %s71, 0
    %p384 = por %p382, %p383
    %s385 = ssub.s32 %s65, %s72
    %p386 = scmp.eq.s32.totalorder %s385, 0
    %s388 = sadd.s32 %s387, 1
    %s389 = scalar_select %p386, %s387, %s388
    %p392 = pneg %p386
    %p393 = scmp.eq.s32.totalorder %s65, 2
    %p394 = por %p392, %p393
    %p395 = scmp.ne.s32.totalorder %s387, %s390
    %p396 = scmp.eq.s32.totalorder %s65, 0
    %p397 = por %p395, %p396
    %p398 = scmp.ne.s32.totalorder %s387, %s390
    %p399 = scmp.eq.s32.totalorder %s70, 2
    %p400 = por %p398, %p399
    %p401 = scmp.ne.s32.totalorder %s390, %s391
    %p402 = scmp.eq.s32.totalorder %s70, 0
    %p403 = por %p401, %p402
    %p404 = scmp.ne.s32.totalorder %s390, %s391
    %p405 = scmp.eq.s32.totalorder %s71, 2
    %p406 = por %p404, %p405
    %p408 = scmp.ne.s32.totalorder %s391, %s407
    %p409 = scmp.eq.s32.totalorder %s71, 0
    %p410 = por %p408, %p409
    %s411 = ssub.s32 %s65, %s72
    %p412 = scmp.eq.s32.totalorder %s411, 0
    %s414 = sadd.s32 %s413, 1
    %s415 = scalar_select %p412, %s413, %s414
    %p418 = pneg %p412
    %p419 = scmp.eq.s32.totalorder %s65, 2
    %p420 = por %p418, %p419
    %p421 = scmp.ne.s32.totalorder %s413, %s416
    %p422 = scmp.eq.s32.totalorder %s65, 0
    %p423 = por %p421, %p422
    %p424 = scmp.ne.s32.totalorder %s413, %s416
    %p425 = scmp.eq.s32.totalorder %s70, 2
    %p426 = por %p424, %p425
    %p427 = scmp.ne.s32.totalorder %s416, %s417
    %p428 = scmp.eq.s32.totalorder %s70, 0
    %p429 = por %p427, %p428
    %p430 = scmp.ne.s32.totalorder %s416, %s417
    %p431 = scmp.eq.s32.totalorder %s71, 2
    %p432 = por %p430, %p431
    %p434 = scmp.ne.s32.totalorder %s417, %s433
    %p435 = scmp.eq.s32.totalorder %s71, 0
    %p436 = por %p434, %p435
    %s437 = ssub.s32 %s65, %s72
    %p438 = scmp.eq.s32.totalorder %s437, 0
    %s440 = sadd.s32 %s439, 1
    %s441 = scalar_select %p438, %s439, %s440
    %p444 = pneg %p438
    %p445 = scmp.eq.s32.totalorder %s65, 2
    %p446 = por %p444, %p445
    %p447 = scmp.ne.s32.totalorder %s439, %s442
    %p448 = scmp.eq.s32.totalorder %s65, 0
    %p449 = por %p447, %p448
    %p450 = scmp.ne.s32.totalorder %s439, %s442
    %p451 = scmp.eq.s32.totalorder %s70, 2
    %p452 = por %p450, %p451
    %p453 = scmp.ne.s32.totalorder %s442, %s443
    %p454 = scmp.eq.s32.totalorder %s70, 0
    %p455 = por %p453, %p454
    %p456 = scmp.ne.s32.totalorder %s442, %s443
    %p457 = scmp.eq.s32.totalorder %s71, 2
    %p458 = por %p456, %p457
    %p460 = scmp.ne.s32.totalorder %s443, %s459
    %p461 = scmp.eq.s32.totalorder %s71, 0
    %p462 = por %p460, %p461
    %s463 = ssub.s32 %s65, %s72
    %p464 = scmp.eq.s32.totalorder %s463, 0
    %s466 = sadd.s32 %s465, 1
    %s467 = scalar_select %p464, %s465, %s466
    %p470 = pneg %p464
    %p471 = scmp.eq.s32.totalorder %s65, 2
    %p472 = por %p470, %p471
    %p473 = scmp.ne.s32.totalorder %s465, %s468
    %p474 = scmp.eq.s32.totalorder %s65, 0
    %p475 = por %p473, %p474
    %p476 = scmp.ne.s32.totalorder %s465, %s468
    %p477 = scmp.eq.s32.totalorder %s70, 2
    %p478 = por %p476, %p477
    %p479 = scmp.ne.s32.totalorder %s468, %s469
    %p480 = scmp.eq.s32.totalorder %s70, 0
    %p481 = por %p479, %p480
    %p482 = scmp.ne.s32.totalorder %s468, %s469
    %p483 = scmp.eq.s32.totalorder %s71, 2
    %p484 = por %p482, %p483
    %p486 = scmp.ne.s32.totalorder %s469, %s485
    %p487 = scmp.eq.s32.totalorder %s71, 0
    %p488 = por %p486, %p487
    %s489 = ssub.s32 %s65, %s72
    %p490 = scmp.eq.s32.totalorder %s489, 0
    %s492 = sadd.s32 %s491, 1
    %s493 = scalar_select %p490, %s491, %s492
    %p496 = pneg %p490
    %p497 = scmp.eq.s32.totalorder %s65, 2
    %p498 = por %p496, %p497
    %p499 = scmp.ne.s32.totalorder %s491, %s494
    %p500 = scmp.eq.s32.totalorder %s65, 0
    %p501 = por %p499, %p500
    %p502 = scmp.ne.s32.totalorder %s491, %s494
    %p503 = scmp.eq.s32.totalorder %s70, 2
    %p504 = por %p502, %p503
    %p505 = scmp.ne.s32.totalorder %s494, %s495
    %p506 = scmp.eq.s32.totalorder %s70, 0
    %p507 = por %p505, %p506
    %p508 = scmp.ne.s32.totalorder %s494, %s495
    %p509 = scmp.eq.s32.totalorder %s71, 2
    %p510 = por %p508, %p509
    %p512 = scmp.ne.s32.totalorder %s495, %s511
    %p513 = scmp.eq.s32.totalorder %s71, 0
    %p514 = por %p512, %p513
    %s515 = ssub.s32 %s65, %s72
    %p516 = scmp.eq.s32.totalorder %s515, 0
    %s518 = sadd.s32 %s517, 1
    %s519 = scalar_select %p516, %s517, %s518
    %p522 = pneg %p516
    %p523 = scmp.eq.s32.totalorder %s65, 2
    %p524 = por %p522, %p523
    %p525 = scmp.ne.s32.totalorder %s517, %s520
    %p526 = scmp.eq.s32.totalorder %s65, 0
    %p527 = por %p525, %p526
    %p528 = scmp.ne.s32.totalorder %s517, %s520
    %p529 = scmp.eq.s32.totalorder %s70, 2
    %p530 = por %p528, %p529
    %p531 = scmp.ne.s32.totalorder %s520, %s521
    %p532 = scmp.eq.s32.totalorder %s70, 0
    %p533 = por %p531, %p532
    %p534 = scmp.ne.s32.totalorder %s520, %s521
    %p535 = scmp.eq.s32.totalorder %s71, 2
    %p536 = por %p534, %p535
    %p538 = scmp.ne.s32.totalorder %s521, %s537
    %p539 = scmp.eq.s32.totalorder %s71, 0
    %p540 = por %p538, %p539
    %s541 = ssub.s32 %s65, %s72
    %p542 = scmp.eq.s32.totalorder %s541, 0
    %s544 = sadd.s32 %s543, 1
    %s545 = scalar_select %p542, %s543, %s544
    %p548 = pneg %p542
    %p549 = scmp.eq.s32.totalorder %s65, 2
    %p550 = por %p548, %p549
    %p551 = scmp.ne.s32.totalorder %s543, %s546
    %p552 = scmp.eq.s32.totalorder %s65, 0
    %p553 = por %p551, %p552
    %p554 = scmp.ne.s32.totalorder %s543, %s546
    %p555 = scmp.eq.s32.totalorder %s70, 2
    %p556 = por %p554, %p555
    %p557 = scmp.ne.s32.totalorder %s546, %s547
    %p558 = scmp.eq.s32.totalorder %s70, 0
    %p559 = por %p557, %p558
    %p560 = scmp.ne.s32.totalorder %s546, %s547
    %p561 = scmp.eq.s32.totalorder %s71, 2
    %p562 = por %p560, %p561
    %p564 = scmp.ne.s32.totalorder %s547, %s563
    %p565 = scmp.eq.s32.totalorder %s71, 0
    %p566 = por %p564, %p565
    %s567 = ssub.s32 %s65, %s72
    %p568 = scmp.eq.s32.totalorder %s567, 0
    %s570 = sadd.s32 %s569, 1
    %s571 = scalar_select %p568, %s569, %s570
    %p574 = pneg %p568
    %p575 = scmp.eq.s32.totalorder %s65, 2
    %p576 = por %p574, %p575
    %p577 = scmp.ne.s32.totalorder %s569, %s572
    %p578 = scmp.eq.s32.totalorder %s65, 0
    %p579 = por %p577, %p578
    %p580 = scmp.ne.s32.totalorder %s569, %s572
    %p581 = scmp.eq.s32.totalorder %s70, 2
    %p582 = por %p580, %p581
    %p583 = scmp.ne.s32.totalorder %s572, %s573
    %p584 = scmp.eq.s32.totalorder %s70, 0
    %p585 = por %p583, %p584
    %p586 = scmp.ne.s32.totalorder %s572, %s573
    %p587 = scmp.eq.s32.totalorder %s71, 2
    %p588 = por %p586, %p587
    %p590 = scmp.ne.s32.totalorder %s573, %s589
    %p591 = scmp.eq.s32.totalorder %s71, 0
    %p592 = por %p590, %p591
    %s593 = ssub.s32 %s65, %s72
    %p594 = scmp.eq.s32.totalorder %s593, 0
    %s596 = sadd.s32 %s595, 1
    %s597 = scalar_select %p594, %s595, %s596
    %p600 = pneg %p594
    %p601 = scmp.eq.s32.totalorder %s65, 2
    %p602 = por %p600, %p601
    %p603 = scmp.ne.s32.totalorder %s595, %s598
    %p604 = scmp.eq.s32.totalorder %s65, 0
    %p605 = por %p603, %p604
    %p606 = scmp.ne.s32.totalorder %s595, %s598
    %p607 = scmp.eq.s32.totalorder %s70, 2
    %p608 = por %p606, %p607
    %p609 = scmp.ne.s32.totalorder %s598, %s599
    %p610 = scmp.eq.s32.totalorder %s70, 0
    %p611 = por %p609, %p610
    %p612 = scmp.ne.s32.totalorder %s598, %s599
    %p613 = scmp.eq.s32.totalorder %s71, 2
    %p614 = por %p612, %p613
    %p616 = scmp.ne.s32.totalorder %s599, %s615
    %p617 = scmp.eq.s32.totalorder %s71, 0
    %p618 = por %p616, %p617
    %s619 = ssub.s32 %s65, %s72
    %p620 = scmp.eq.s32.totalorder %s619, 0
    %s622 = sadd.s32 %s621, 1
    %s623 = scalar_select %p620, %s621, %s622
    %p626 = pneg %p620
    %p627 = scmp.eq.s32.totalorder %s65, 2
    %p628 = por %p626, %p627
    %p629 = scmp.ne.s32.totalorder %s621, %s624
    %p630 = scmp.eq.s32.totalorder %s65, 0
    %p631 = por %p629, %p630
    %p632 = scmp.ne.s32.totalorder %s621, %s624
    %p633 = scmp.eq.s32.totalorder %s70, 2
    %p634 = por %p632, %p633
    %p635 = scmp.ne.s32.totalorder %s624, %s625
    %p636 = scmp.eq.s32.totalorder %s70, 0
    %p637 = por %p635, %p636
    %p638 = scmp.ne.s32.totalorder %s624, %s625
    %p639 = scmp.eq.s32.totalorder %s71, 2
    %p640 = por %p638, %p639
    %p642 = scmp.ne.s32.totalorder %s625, %s641
    %p643 = scmp.eq.s32.totalorder %s71, 0
    %p644 = por %p642, %p643
    %s645 = ssub.s32 %s65, %s72
    %p646 = scmp.eq.s32.totalorder %s645, 0
    %s648 = sadd.s32 %s647, 1
    %s649 = scalar_select %p646, %s647, %s648
    %p652 = pneg %p646
    %p653 = scmp.eq.s32.totalorder %s65, 2
    %p654 = por %p652, %p653
    %p655 = scmp.ne.s32.totalorder %s647, %s650
    %p656 = scmp.eq.s32.totalorder %s65, 0
    %p657 = por %p655, %p656
    %p658 = scmp.ne.s32.totalorder %s647, %s650
    %p659 = scmp.eq.s32.totalorder %s70, 2
    %p660 = por %p658, %p659
    %p661 = scmp.ne.s32.totalorder %s650, %s651
    %p662 = scmp.eq.s32.totalorder %s70, 0
    %p663 = por %p661, %p662
    %p664 = scmp.ne.s32.totalorder %s650, %s651
    %p665 = scmp.eq.s32.totalorder %s71, 2
    %p666 = por %p664, %p665
    %p668 = scmp.ne.s32.totalorder %s651, %s667
    %p669 = scmp.eq.s32.totalorder %s71, 0
    %p670 = por %p668, %p669
    %s671 = ssub.s32 %s65, %s72
    %p672 = scmp.eq.s32.totalorder %s671, 0
    %s674 = sadd.s32 %s673, 1
    %s675 = scalar_select %p672, %s673, %s674
    %p678 = pneg %p672
    %p679 = scmp.eq.s32.totalorder %s65, 2
    %p680 = por %p678, %p679
    %p681 = scmp.ne.s32.totalorder %s673, %s676
    %p682 = scmp.eq.s32.totalorder %s65, 0
    %p683 = por %p681, %p682
    %p684 = scmp.ne.s32.totalorder %s673, %s676
    %p685 = scmp.eq.s32.totalorder %s70, 2
    %p686 = por %p684, %p685
    %p687 = scmp.ne.s32.totalorder %s676, %s677
    %p688 = scmp.eq.s32.totalorder %s70, 0
    %p689 = por %p687, %p688
    %p690 = scmp.ne.s32.totalorder %s676, %s677
    %p691 = scmp.eq.s32.totalorder %s71, 2
    %p692 = por %p690, %p691
    %p694 = scmp.ne.s32.totalorder %s677, %s693
    %p695 = scmp.eq.s32.totalorder %s71, 0
    %p696 = por %p694, %p695
    %s697 = ssub.s32 %s65, %s72
    %p698 = scmp.eq.s32.totalorder %s697, 0
    %s700 = sadd.s32 %s699, 1
    %s701 = scalar_select %p698, %s699, %s700
    %p704 = pneg %p698
    %p705 = scmp.eq.s32.totalorder %s65, 2
    %p706 = por %p704, %p705
    %p707 = scmp.ne.s32.totalorder %s699, %s702
    %p708 = scmp.eq.s32.totalorder %s65, 0
    %p709 = por %p707, %p708
    %p710 = scmp.ne.s32.totalorder %s699, %s702
    %p711 = scmp.eq.s32.totalorder %s70, 2
    %p712 = por %p710, %p711
    %p713 = scmp.ne.s32.totalorder %s702, %s703
    %p714 = scmp.eq.s32.totalorder %s70, 0
    %p715 = por %p713, %p714
    %p716 = scmp.ne.s32.totalorder %s702, %s703
    %p717 = scmp.eq.s32.totalorder %s71, 2
    %p718 = por %p716, %p717
    %p720 = scmp.ne.s32.totalorder %s703, %s719
    %p721 = scmp.eq.s32.totalorder %s71, 0
    %p722 = por %p720, %p721
    %s724 = sadd.s32 %s723, 1
    %p727 = scmp.eq.s32.totalorder %s65, 2
    %p728 = scmp.ne.s32.totalorder %s723, %s725
    %p729 = scmp.eq.s32.totalorder %s65, 0
    %p730 = por %p728, %p729
    %p731 = scmp.ne.s32.totalorder %s723, %s725
    %p732 = scmp.eq.s32.totalorder %s70, 2
    %p733 = por %p731, %p732
    %p734 = scmp.ne.s32.totalorder %s725, %s726
    %p735 = scmp.eq.s32.totalorder %s70, 0
    %p736 = por %p734, %p735
    %p737 = scmp.ne.s32.totalorder %s725, %s726
    %p738 = scmp.eq.s32.totalorder %s71, 2
    %p739 = por %p737, %p738
    %p741 = scmp.ne.s32.totalorder %s726, %s740
    %p742 = scmp.eq.s32.totalorder %s71, 0
    %p743 = por %p741, %p742
    %s745 = sadd.s32 %s744, 1
    %p748 = scmp.eq.s32.totalorder %s65, 2
    %p749 = scmp.ne.s32.totalorder %s744, %s746
    %p750 = scmp.eq.s32.totalorder %s65, 0
    %p751 = por %p749, %p750
    %p752 = scmp.ne.s32.totalorder %s744, %s746
    %p753 = scmp.eq.s32.totalorder %s70, 2
    %p754 = por %p752, %p753
    %p755 = scmp.ne.s32.totalorder %s746, %s747
    %p756 = scmp.eq.s32.totalorder %s70, 0
    %p757 = por %p755, %p756
    %p758 = scmp.ne.s32.totalorder %s746, %s747
    %p759 = scmp.eq.s32.totalorder %s71, 2
    %p760 = por %p758, %p759
    %p762 = scmp.ne.s32.totalorder %s747, %s761
    %p763 = scmp.eq.s32.totalorder %s71, 0
    %p764 = por %p762, %p763
    %s766 = sadd.s32 %s765, 1
    %p769 = scmp.eq.s32.totalorder %s65, 2
    %p770 = scmp.ne.s32.totalorder %s765, %s767
    %p771 = scmp.eq.s32.totalorder %s65, 0
    %p772 = por %p770, %p771
    %p773 = scmp.ne.s32.totalorder %s765, %s767
    %p774 = scmp.eq.s32.totalorder %s70, 2
    %p775 = por %p773, %p774
    %p776 = scmp.ne.s32.totalorder %s767, %s768
    %p777 = scmp.eq.s32.totalorder %s70, 0
    %p778 = por %p776, %p777
    %p779 = scmp.ne.s32.totalorder %s767, %s768
    %p780 = scmp.eq.s32.totalorder %s71, 2
    %p781 = por %p779, %p780
    %p783 = scmp.ne.s32.totalorder %s768, %s782
    %p784 = scmp.eq.s32.totalorder %s71, 0
    %p785 = por %p783, %p784
    %s787 = sadd.s32 %s786, 1
    %p790 = scmp.eq.s32.totalorder %s65, 2
    %p791 = scmp.ne.s32.totalorder %s786, %s788
    %p792 = scmp.eq.s32.totalorder %s65, 0
    %p793 = por %p791, %p792
    %p794 = scmp.ne.s32.totalorder %s786, %s788
    %p795 = scmp.eq.s32.totalorder %s70, 2
    %p796 = por %p794, %p795
    %p797 = scmp.ne.s32.totalorder %s788, %s789
    %p798 = scmp.eq.s32.totalorder %s70, 0
    %p799 = por %p797, %p798
    %p800 = scmp.ne.s32.totalorder %s788, %s789
    %p801 = scmp.eq.s32.totalorder %s71, 2
    %p802 = por %p800, %p801
    %p804 = scmp.ne.s32.totalorder %s789, %s803
    %p805 = scmp.eq.s32.totalorder %s71, 0
    %p806 = por %p804, %p805
    %s807 = ssub.s32 %s65, %s72
    %p808 = scmp.eq.s32.totalorder %s807, 0
    %s810 = sadd.s32 %s809, 1
    %s811 = scalar_select %p808, %s809, %s810
    %p814 = pneg %p808
    %p815 = scmp.eq.s32.totalorder %s65, 2
    %p816 = por %p814, %p815
    %p817 = scmp.ne.s32.totalorder %s809, %s812
    %p818 = scmp.eq.s32.totalorder %s65, 0
    %p819 = por %p817, %p818
    %p820 = scmp.ne.s32.totalorder %s809, %s812
    %p821 = scmp.eq.s32.totalorder %s70, 2
    %p822 = por %p820, %p821
    %p823 = scmp.ne.s32.totalorder %s812, %s813
    %p824 = scmp.eq.s32.totalorder %s70, 0
    %p825 = por %p823, %p824
    %p826 = scmp.ne.s32.totalorder %s812, %s813
    %p827 = scmp.eq.s32.totalorder %s71, 2
    %p828 = por %p826, %p827
    %p830 = scmp.ne.s32.totalorder %s813, %s829
    %p831 = scmp.eq.s32.totalorder %s71, 0
    %p832 = por %p830, %p831
    %p833 = scmp.le.s32.totalorder 1, %s65
    %p834 = scmp.lt.s32.totalorder %s65, 4
    %p835 = pnand %p833, %p834
    %p836 = pneg %p835
    // Predicated region
    $region9: #{mansf_forward.1} parent=5 // pred_check
      _
    $region10: #{mansf_forward.1} parent=5 // pred_check_branch
      %838 = sbr.rel (%p835) target = $region12
    $region11: #{mansf_forward.1} parent=5 // pred_region
      %s839 = ssub.s32 %s65, 1
      // Predicated region
      $region13: #{mansf_forward.1} parent=11 // pred_check
        %p840 = pneg %p736
      $region14: #{mansf_forward.1} parent=11 // pred_check_branch
        %842 = sbr.rel (%p840) target = $region16
      $region15: #{mansf_forward.1} parent=11 // pred_region
        _
      $region16: #{mansf_forward.1} parent=11 // pred_fallthru
        _
      // Predicated region
      $region17: #{mansf_forward.1} parent=11 // pred_check
        %p843 = pneg %p757
      $region18: #{mansf_forward.1} parent=11 // pred_check_branch
        %845 = sbr.rel (%p843) target = $region20
      $region19: #{mansf_forward.1} parent=11 // pred_region
        _
      $region20: #{mansf_forward.1} parent=11 // pred_fallthru
        _
      // Predicated region
      $region21: #{mansf_forward.1} parent=11 // pred_check
        %p846 = pneg %p778
      $region22: #{mansf_forward.1} parent=11 // pred_check_branch
        %848 = sbr.rel (%p846) target = $region24
      $region23: #{mansf_forward.1} parent=11 // pred_region
        _
      $region24: #{mansf_forward.1} parent=11 // pred_fallthru
        _
      // Predicated region
      $region25: #{mansf_forward.1} parent=11 // pred_check
        %p849 = pneg %p799
      $region26: #{mansf_forward.1} parent=11 // pred_check_branch
        %851 = sbr.rel (%p849) target = $region28
      $region27: #{mansf_forward.1} parent=11 // pred_region
        _
      $region28: #{mansf_forward.1} parent=11 // pred_fallthru
        _
    $region12: #{mansf_forward.1} parent=5 // pred_fallthru
      _
    %p852 = scmp.lt.s32.totalorder %s65, 3
    // Predicated region
    $region29: #{mansf_forward.1} parent=5 // pred_check
      %p853 = pneg %p852
    $region30: #{mansf_forward.1} parent=5 // pred_check_branch
      %855 = sbr.rel (%p853) target = $region32
    $region31: #{mansf_forward.1} parent=5 // pred_region
      // Predicated region
      $region33: #{mansf_forward.1} parent=31 // pred_check
        %p856 = pneg %p85
      $region34: #{mansf_forward.1} parent=31 // pred_check_branch
        %858 = sbr.rel (%p856) target = $region36
      $region35: #{mansf_forward.1} parent=31 // pred_region
        %p859 = scmp.lt.s32.totalorder %s65, 2
        %s860 = scalar_select %p859, %s65, 2
        %s861 = smul.addr %s860, 3
        %s862 = smul.addr %s861, 8
        %s863 = scalar_lea.vmem %s1, %s862
      $region36: #{mansf_forward.1} parent=31 // pred_fallthru
        _
      // Predicated region
      $region37: #{mansf_forward.1} parent=31 // pred_check
        %p864 = pneg %p111
      $region38: #{mansf_forward.1} parent=31 // pred_check_branch
        %866 = sbr.rel (%p864) target = $region40
      $region39: #{mansf_forward.1} parent=31 // pred_region
        %p867 = scmp.lt.s32.totalorder %s65, 2
        %s868 = scalar_select %p867, %s65, 2
        %s869 = smul.addr %s868, 4
        %s870 = scalar_lea.vmem %s3, %s869
      $region40: #{mansf_forward.1} parent=31 // pred_fallthru
        _
      // Predicated region
      $region41: #{mansf_forward.1} parent=31 // pred_check
        %p871 = pneg %p137
      $region42: #{mansf_forward.1} parent=31 // pred_check_branch
        %873 = sbr.rel (%p871) target = $region44
      $region43: #{mansf_forward.1} parent=31 // pred_region
        %p874 = scmp.lt.s32.totalorder %s65, 2
        %s875 = scalar_select %p874, %s65, 2
        %s876 = smul.addr %s875, 4
        %s877 = scalar_lea.vmem %s5, %s876
      $region44: #{mansf_forward.1} parent=31 // pred_fallthru
        _
      // Predicated region
      $region45: #{mansf_forward.1} parent=31 // pred_check
        %p878 = pneg %p163
      $region46: #{mansf_forward.1} parent=31 // pred_check_branch
        %880 = sbr.rel (%p878) target = $region48
      $region47: #{mansf_forward.1} parent=31 // pred_region
        %p881 = scmp.lt.s32.totalorder %s65, 2
        %s882 = scalar_select %p881, %s65, 2
        %s883 = smul.addr %s882, 4
        %s884 = smul.addr %s883, 8
        %s885 = scalar_lea.vmem %s7, %s884
      $region48: #{mansf_forward.1} parent=31 // pred_fallthru
        _
      // Predicated region
      $region49: #{mansf_forward.1} parent=31 // pred_check
        %p886 = pneg %p189
      $region50: #{mansf_forward.1} parent=31 // pred_check_branch
        %888 = sbr.rel (%p886) target = $region52
      $region51: #{mansf_forward.1} parent=31 // pred_region
        %p889 = scmp.lt.s32.totalorder %s65, 2
        %s890 = scalar_select %p889, %s65, 2
        %s891 = smul.addr %s890, 2
        %s892 = scalar_lea.vmem %s9, %s891
      $region52: #{mansf_forward.1} parent=31 // pred_fallthru
        _
      // Predicated region
      $region53: #{mansf_forward.1} parent=31 // pred_check
        %p893 = pneg %p215
      $region54: #{mansf_forward.1} parent=31 // pred_check_branch
        %895 = sbr.rel (%p893) target = $region56
      $region55: #{mansf_forward.1} parent=31 // pred_region
        %p896 = scmp.lt.s32.totalorder %s65, 2
        %s897 = scalar_select %p896, %s65, 2
        %s898 = smul.addr %s897, 4
        %s899 = smul.addr %s898, 8
        %s900 = scalar_lea.vmem %s11, %s899
      $region56: #{mansf_forward.1} parent=31 // pred_fallthru
        _
      // Predicated region
      $region57: #{mansf_forward.1} parent=31 // pred_check
        %p901 = pneg %p241
      $region58: #{mansf_forward.1} parent=31 // pred_check_branch
        %903 = sbr.rel (%p901) target = $region60
      $region59: #{mansf_forward.1} parent=31 // pred_region
        %p904 = scmp.lt.s32.totalorder %s65, 2
        %s905 = scalar_select %p904, %s65, 2
        %s906 = smul.addr %s905, 4
        %s907 = smul.addr %s906, 8
        %s908 = scalar_lea.vmem %s13, %s907
      $region60: #{mansf_forward.1} parent=31 // pred_fallthru
        _
      // Predicated region
      $region61: #{mansf_forward.1} parent=31 // pred_check
        %p909 = pneg %p267
      $region62: #{mansf_forward.1} parent=31 // pred_check_branch
        %911 = sbr.rel (%p909) target = $region64
      $region63: #{mansf_forward.1} parent=31 // pred_region
        %p912 = scmp.lt.s32.totalorder %s65, 2
        %s913 = scalar_select %p912, %s65, 2
        %s914 = scalar_lea.vmem %s15, %s913
      $region64: #{mansf_forward.1} parent=31 // pred_fallthru
        _
      // Predicated region
      $region65: #{mansf_forward.1} parent=31 // pred_check
        %p915 = pneg %p293
      $region66: #{mansf_forward.1} parent=31 // pred_check_branch
        %917 = sbr.rel (%p915) target = $region68
      $region67: #{mansf_forward.1} parent=31 // pred_region
        %p918 = scmp.lt.s32.totalorder %s65, 2
        %s919 = scalar_select %p918, %s65, 2
        %s920 = smul.addr %s919, 4
        %s921 = scalar_lea.vmem %s17, %s920
      $region68: #{mansf_forward.1} parent=31 // pred_fallthru
        _
      // Predicated region
      $region69: #{mansf_forward.1} parent=31 // pred_check
        %p922 = pneg %p319
      $region70: #{mansf_forward.1} parent=31 // pred_check_branch
        %924 = sbr.rel (%p922) target = $region72
      $region71: #{mansf_forward.1} parent=31 // pred_region
        %p925 = scmp.lt.s32.totalorder %s65, 2
        %s926 = scalar_select %p925, %s65, 2
        %s927 = smul.addr %s926, 2
        %s928 = smul.addr %s927, 8
        %s929 = scalar_lea.vmem %s19, %s928
      $region72: #{mansf_forward.1} parent=31 // pred_fallthru
        _
      // Predicated region
      $region73: #{mansf_forward.1} parent=31 // pred_check
        %p930 = pneg %p345
      $region74: #{mansf_forward.1} parent=31 // pred_check_branch
        %932 = sbr.rel (%p930) target = $region76
      $region75: #{mansf_forward.1} parent=31 // pred_region
        %p933 = scmp.lt.s32.totalorder %s65, 2
        %s934 = scalar_select %p933, %s65, 2
        %s935 = smul.addr %s934, 4
        %s936 = smul.addr %s935, 8
        %s937 = scalar_lea.vmem %s21, %s936
      $region76: #{mansf_forward.1} parent=31 // pred_fallthru
        _
      // Predicated region
      $region77: #{mansf_forward.1} parent=31 // pred_check
        %p938 = pneg %p371
      $region78: #{mansf_forward.1} parent=31 // pred_check_branch
        %940 = sbr.rel (%p938) target = $region80
      $region79: #{mansf_forward.1} parent=31 // pred_region
        %p941 = scmp.lt.s32.totalorder %s65, 2
        %s942 = scalar_select %p941, %s65, 2
        %s943 = smul.addr %s942, 2
        %s944 = scalar_lea.vmem %s23, %s943
      $region80: #{mansf_forward.1} parent=31 // pred_fallthru
        _
      // Predicated region
      $region81: #{mansf_forward.1} parent=31 // pred_check
        %p945 = pneg %p397
      $region82: #{mansf_forward.1} parent=31 // pred_check_branch
        %947 = sbr.rel (%p945) target = $region84
      $region83: #{mansf_forward.1} parent=31 // pred_region
        %p948 = scmp.lt.s32.totalorder %s65, 2
        %s949 = scalar_select %p948, %s65, 2
        %s950 = smul.addr %s949, 4
        %s951 = smul.addr %s950, 8
        %s952 = scalar_lea.vmem %s25, %s951
      $region84: #{mansf_forward.1} parent=31 // pred_fallthru
        _
      // Predicated region
      $region85: #{mansf_forward.1} parent=31 // pred_check
        %p953 = pneg %p423
      $region86: #{mansf_forward.1} parent=31 // pred_check_branch
        %955 = sbr.rel (%p953) target = $region88
      $region87: #{mansf_forward.1} parent=31 // pred_region
        %p956 = scmp.lt.s32.totalorder %s65, 2
        %s957 = scalar_select %p956, %s65, 2
        %s958 = smul.addr %s957, 4
        %s959 = smul.addr %s958, 8
        %s960 = scalar_lea.vmem %s27, %s959
      $region88: #{mansf_forward.1} parent=31 // pred_fallthru
        _
      // Predicated region
      $region89: #{mansf_forward.1} parent=31 // pred_check
        %p961 = pneg %p449
      $region90: #{mansf_forward.1} parent=31 // pred_check_branch
        %963 = sbr.rel (%p961) target = $region92
      $region91: #{mansf_forward.1} parent=31 // pred_region
        %p964 = scmp.lt.s32.totalorder %s65, 2
        %s965 = scalar_select %p964, %s65, 2
        %s966 = scalar_lea.vmem %s29, %s965
      $region92: #{mansf_forward.1} parent=31 // pred_fallthru
        _
      // Predicated region
      $region93: #{mansf_forward.1} parent=31 // pred_check
        %p967 = pneg %p475
      $region94: #{mansf_forward.1} parent=31 // pred_check_branch
        %969 = sbr.rel (%p967) target = $region96
      $region95: #{mansf_forward.1} parent=31 // pred_region
        %p970 = scmp.lt.s32.totalorder %s65, 2
        %s971 = scalar_select %p970, %s65, 2
        %s972 = smul.addr %s971, 4
        %s973 = scalar_lea.vmem %s31, %s972
      $region96: #{mansf_forward.1} parent=31 // pred_fallthru
        _
      // Predicated region
      $region97: #{mansf_forward.1} parent=31 // pred_check
        %p974 = pneg %p501
      $region98: #{mansf_forward.1} parent=31 // pred_check_branch
        %976 = sbr.rel (%p974) target = $region100
      $region99: #{mansf_forward.1} parent=31 // pred_region
        %p977 = scmp.lt.s32.totalorder %s65, 2
        %s978 = scalar_select %p977, %s65, 2
        %s979 = smul.addr %s978, 4
        %s980 = smul.addr %s979, 8
        %s981 = scalar_lea.vmem %s33, %s980
      $region100: #{mansf_forward.1} parent=31 // pred_fallthru
        _
      // Predicated region
      $region101: #{mansf_forward.1} parent=31 // pred_check
        %p982 = pneg %p527
      $region102: #{mansf_forward.1} parent=31 // pred_check_branch
        %984 = sbr.rel (%p982) target = $region104
      $region103: #{mansf_forward.1} parent=31 // pred_region
        %p985 = scmp.lt.s32.totalorder %s65, 2
        %s986 = scalar_select %p985, %s65, 2
        %s987 = smul.addr %s986, 4
        %s988 = smul.addr %s987, 8
        %s989 = scalar_lea.vmem %s35, %s988
      $region104: #{mansf_forward.1} parent=31 // pred_fallthru
        _
      // Predicated region
      $region105: #{mansf_forward.1} parent=31 // pred_check
        %p990 = pneg %p553
      $region106: #{mansf_forward.1} parent=31 // pred_check_branch
        %992 = sbr.rel (%p990) target = $region108
      $region107: #{mansf_forward.1} parent=31 // pred_region
        %p993 = scmp.lt.s32.totalorder %s65, 2
        %s994 = scalar_select %p993, %s65, 2
        %s995 = smul.addr %s994, 2
        %s996 = scalar_lea.vmem %s37, %s995
      $region108: #{mansf_forward.1} parent=31 // pred_fallthru
        _
      // Predicated region
      $region109: #{mansf_forward.1} parent=31 // pred_check
        %p997 = pneg %p579
      $region110: #{mansf_forward.1} parent=31 // pred_check_branch
        %999 = sbr.rel (%p997) target = $region112
      $region111: #{mansf_forward.1} parent=31 // pred_region
        %p1000 = scmp.lt.s32.totalorder %s65, 2
        %s1001 = scalar_select %p1000, %s65, 2
        %s1002 = smul.addr %s1001, 4
        %s1003 = smul.addr %s1002, 8
        %s1004 = scalar_lea.vmem %s39, %s1003
      $region112: #{mansf_forward.1} parent=31 // pred_fallthru
        _
      // Predicated region
      $region113: #{mansf_forward.1} parent=31 // pred_check
        %p1005 = pneg %p605
      $region114: #{mansf_forward.1} parent=31 // pred_check_branch
        %1007 = sbr.rel (%p1005) target = $region116
      $region115: #{mansf_forward.1} parent=31 // pred_region
        %p1008 = scmp.lt.s32.totalorder %s65, 2
        %s1009 = scalar_select %p1008, %s65, 2
        %s1010 = smul.addr %s1009, 4
        %s1011 = smul.addr %s1010, 8
        %s1012 = scalar_lea.vmem %s41, %s1011
      $region116: #{mansf_forward.1} parent=31 // pred_fallthru
        _
      // Predicated region
      $region117: #{mansf_forward.1} parent=31 // pred_check
        %p1013 = pneg %p631
      $region118: #{mansf_forward.1} parent=31 // pred_check_branch
        %1015 = sbr.rel (%p1013) target = $region120
      $region119: #{mansf_forward.1} parent=31 // pred_region
        %p1016 = scmp.lt.s32.totalorder %s65, 2
        %s1017 = scalar_select %p1016, %s65, 2
        %s1018 = scalar_lea.vmem %s43, %s1017
      $region120: #{mansf_forward.1} parent=31 // pred_fallthru
        _
      // Predicated region
      $region121: #{mansf_forward.1} parent=31 // pred_check
        %p1019 = pneg %p657
      $region122: #{mansf_forward.1} parent=31 // pred_check_branch
        %1021 = sbr.rel (%p1019) target = $region124
      $region123: #{mansf_forward.1} parent=31 // pred_region
        %p1022 = scmp.lt.s32.totalorder %s65, 2
        %s1023 = scalar_select %p1022, %s65, 2
        %s1024 = smul.addr %s1023, 4
        %s1025 = scalar_lea.vmem %s45, %s1024
      $region124: #{mansf_forward.1} parent=31 // pred_fallthru
        _
      // Predicated region
      $region125: #{mansf_forward.1} parent=31 // pred_check
        %p1026 = pneg %p683
      $region126: #{mansf_forward.1} parent=31 // pred_check_branch
        %1028 = sbr.rel (%p1026) target = $region128
      $region127: #{mansf_forward.1} parent=31 // pred_region
        %p1029 = scmp.lt.s32.totalorder %s65, 2
        %s1030 = scalar_select %p1029, %s65, 2
        %s1031 = smul.addr %s1030, 128
        %s1032 = smul.addr %s1031, 8
        %s1033 = scalar_lea.vmem %s47, %s1032
      $region128: #{mansf_forward.1} parent=31 // pred_fallthru
        _
      // Predicated region
      $region129: #{mansf_forward.1} parent=31 // pred_check
        %p1034 = pneg %p709
      $region130: #{mansf_forward.1} parent=31 // pred_check_branch
        %1036 = sbr.rel (%p1034) target = $region132
      $region131: #{mansf_forward.1} parent=31 // pred_region
        %p1037 = scmp.lt.s32.totalorder %s65, 2
        %s1038 = scalar_select %p1037, %s65, 2
        %s1039 = scalar_lea.vmem %s49, %s1038
      $region132: #{mansf_forward.1} parent=31 // pred_fallthru
        _
    $region32: #{mansf_forward.1} parent=5 // pred_fallthru
      _
    %p1040 = scmp.le.s32.totalorder 1, %s65
    %p1041 = scmp.lt.s32.totalorder %s65, 4
    %p1042 = pnand %p1040, %p1041
    %p1043 = pneg %p1042
    // Predicated region
    $region133: #{mansf_forward.1} parent=5 // pred_check
      _
    $region134: #{mansf_forward.1} parent=5 // pred_check_branch
      %1045 = sbr.rel (%p1042) target = $region136
    $region135: #{mansf_forward.1} parent=5 // pred_region
      %s1046 = ssub.s32 %s65, 1
      %p1047 = scmp.lt.s32.totalorder %s70, 2
      %s1048 = scalar_select %p1047, %s70, 2
      %s1049 = smul.addr %s1048, 3
      %s1050 = smul.addr %s1049, 8
      %s1051 = scalar_lea.vmem %s1, %s1050
      %p1052 = pneg %p91
      %p1053 = pneg %p88
      %p1054 = scmp.lt.s32.totalorder %s70, 2
      %s1055 = scalar_select %p1054, %s70, 2
      %s1056 = smul.addr %s1055, 4
      %s1057 = scalar_lea.vmem %s3, %s1056
      %p1058 = pneg %p117
      %p1059 = pneg %p114
      %p1060 = scmp.lt.s32.totalorder %s70, 2
      %s1061 = scalar_select %p1060, %s70, 2
      %s1062 = smul.addr %s1061, 4
      %s1063 = scalar_lea.vmem %s5, %s1062
      %p1064 = pneg %p143
      %p1065 = pneg %p140
      %p1066 = scmp.lt.s32.totalorder %s70, 2
      %s1067 = scalar_select %p1066, %s70, 2
      %s1068 = smul.addr %s1067, 4
      %s1069 = smul.addr %s1068, 8
      %s1070 = scalar_lea.vmem %s7, %s1069
      %p1071 = pneg %p169
      %p1072 = pneg %p166
      %p1073 = scmp.lt.s32.totalorder %s70, 2
      %s1074 = scalar_select %p1073, %s70, 2
      %s1075 = smul.addr %s1074, 2
      %s1076 = scalar_lea.vmem %s9, %s1075
      %p1077 = pneg %p195
      %p1078 = pneg %p192
      %p1079 = scmp.lt.s32.totalorder %s70, 2
      %s1080 = scalar_select %p1079, %s70, 2
      %s1081 = smul.addr %s1080, 4
      %s1082 = smul.addr %s1081, 8
      %s1083 = scalar_lea.vmem %s11, %s1082
      %p1084 = pneg %p221
      %p1085 = pneg %p218
      %p1086 = scmp.lt.s32.totalorder %s70, 2
      %s1087 = scalar_select %p1086, %s70, 2
      %s1088 = smul.addr %s1087, 4
      %s1089 = smul.addr %s1088, 8
      %s1090 = scalar_lea.vmem %s13, %s1089
      %p1091 = pneg %p247
      %p1092 = pneg %p244
      %p1093 = scmp.lt.s32.totalorder %s70, 2
      %s1094 = scalar_select %p1093, %s70, 2
      %s1095 = scalar_lea.vmem %s15, %s1094
      %p1096 = pneg %p273
      %p1097 = pneg %p270
      %p1098 = scmp.lt.s32.totalorder %s70, 2
      %s1099 = scalar_select %p1098, %s70, 2
      %s1100 = smul.addr %s1099, 4
      %s1101 = scalar_lea.vmem %s17, %s1100
      %p1102 = pneg %p299
      %p1103 = pneg %p296
      %p1104 = scmp.lt.s32.totalorder %s70, 2
      %s1105 = scalar_select %p1104, %s70, 2
      %s1106 = smul.addr %s1105, 2
      %s1107 = smul.addr %s1106, 8
      %s1108 = scalar_lea.vmem %s19, %s1107
      %p1109 = pneg %p325
      %p1110 = pneg %p322
      %p1111 = scmp.lt.s32.totalorder %s70, 2
      %s1112 = scalar_select %p1111, %s70, 2
      %s1113 = smul.addr %s1112, 4
      %s1114 = smul.addr %s1113, 8
      %s1115 = scalar_lea.vmem %s21, %s1114
      %p1116 = pneg %p351
      %p1117 = pneg %p348
      %p1118 = scmp.lt.s32.totalorder %s70, 2
      %s1119 = scalar_select %p1118, %s70, 2
      %s1120 = smul.addr %s1119, 2
      %s1121 = scalar_lea.vmem %s23, %s1120
      %p1122 = pneg %p377
      %p1123 = pneg %p374
      %p1124 = scmp.lt.s32.totalorder %s70, 2
      %s1125 = scalar_select %p1124, %s70, 2
      %s1126 = smul.addr %s1125, 4
      %s1127 = smul.addr %s1126, 8
      %s1128 = scalar_lea.vmem %s25, %s1127
      %p1129 = pneg %p403
      %p1130 = pneg %p400
      %p1131 = scmp.lt.s32.totalorder %s70, 2
      %s1132 = scalar_select %p1131, %s70, 2
      %s1133 = smul.addr %s1132, 4
      %s1134 = smul.addr %s1133, 8
      %s1135 = scalar_lea.vmem %s27, %s1134
      %p1136 = pneg %p429
      %p1137 = pneg %p426
      %p1138 = scmp.lt.s32.totalorder %s70, 2
      %s1139 = scalar_select %p1138, %s70, 2
      %s1140 = scalar_lea.vmem %s29, %s1139
      %p1141 = pneg %p455
      %p1142 = pneg %p452
      %p1143 = scmp.lt.s32.totalorder %s70, 2
      %s1144 = scalar_select %p1143, %s70, 2
      %s1145 = smul.addr %s1144, 4
      %s1146 = scalar_lea.vmem %s31, %s1145
      %p1147 = pneg %p481
      %p1148 = pneg %p478
      %p1149 = scmp.lt.s32.totalorder %s70, 2
      %s1150 = scalar_select %p1149, %s70, 2
      %s1151 = smul.addr %s1150, 4
      %s1152 = smul.addr %s1151, 8
      %s1153 = scalar_lea.vmem %s33, %s1152
      %p1154 = pneg %p507
      %p1155 = pneg %p504
      %p1156 = scmp.lt.s32.totalorder %s70, 2
      %s1157 = scalar_select %p1156, %s70, 2
      %s1158 = smul.addr %s1157, 4
      %s1159 = smul.addr %s1158, 8
      %s1160 = scalar_lea.vmem %s35, %s1159
      %p1161 = pneg %p533
      %p1162 = pneg %p530
      %p1163 = scmp.lt.s32.totalorder %s70, 2
      %s1164 = scalar_select %p1163, %s70, 2
      %s1165 = smul.addr %s1164, 2
      %s1166 = scalar_lea.vmem %s37, %s1165
      %p1167 = pneg %p559
      %p1168 = pneg %p556
      %p1169 = scmp.lt.s32.totalorder %s70, 2
      %s1170 = scalar_select %p1169, %s70, 2
      %s1171 = smul.addr %s1170, 4
      %s1172 = smul.addr %s1171, 8
      %s1173 = scalar_lea.vmem %s39, %s1172
      %p1174 = pneg %p585
      %p1175 = pneg %p582
      %p1176 = scmp.lt.s32.totalorder %s70, 2
      %s1177 = scalar_select %p1176, %s70, 2
      %s1178 = smul.addr %s1177, 4
      %s1179 = smul.addr %s1178, 8
      %s1180 = scalar_lea.vmem %s41, %s1179
      %p1181 = pneg %p611
      %p1182 = pneg %p608
      %p1183 = scmp.lt.s32.totalorder %s70, 2
      %s1184 = scalar_select %p1183, %s70, 2
      %s1185 = scalar_lea.vmem %s43, %s1184
      %p1186 = pneg %p637
      %p1187 = pneg %p634
      %p1188 = scmp.lt.s32.totalorder %s70, 2
      %s1189 = scalar_select %p1188, %s70, 2
      %s1190 = smul.addr %s1189, 4
      %s1191 = scalar_lea.vmem %s45, %s1190
      %p1192 = pneg %p663
      %p1193 = pneg %p660
      %p1194 = scmp.lt.s32.totalorder %s70, 2
      %s1195 = scalar_select %p1194, %s70, 2
      %s1196 = smul.addr %s1195, 128
      %s1197 = smul.addr %s1196, 8
      %s1198 = scalar_lea.vmem %s47, %s1197
      %p1199 = pneg %p689
      %p1200 = pneg %p686
      %p1201 = scmp.lt.s32.totalorder %s70, 2
      %s1202 = scalar_select %p1201, %s70, 2
      %s1203 = scalar_lea.vmem %s49, %s1202
      %p1204 = pneg %p715
      %p1205 = pneg %p712
      %p1206 = pneg %p736
      %p1207 = pneg %p733
      %p1208 = pneg %p757
      %p1209 = pneg %p754
      %p1210 = pneg %p778
      %p1211 = pneg %p775
      %p1212 = pneg %p799
      %p1213 = pneg %p796
      %p1214 = pneg %p825
      %p1215 = pneg %p822
      %p1216 = scmp.lt.s32.totalorder %s70, 2
      %s1217 = scalar_select %p1216, %s70, 2
      %s1218 = scalar_lea.vmem %s59, %s1217
      %p1219 = scmp.lt.s32.totalorder %s70, 2
      %s1220 = scalar_select %p1219, %s70, 2
      %s1221 = smul.addr %s1220, 3
      %s1222 = smul.addr %s1221, 8
      %s1223 = scalar_lea.vmem %s1, %s1222
      %p1224 = scmp.lt.s32.totalorder %s70, 2
      %s1225 = scalar_select %p1224, %s70, 2
      %s1226 = smul.addr %s1225, 4
      %s1227 = scalar_lea.vmem %s3, %s1226
      %p1228 = scmp.lt.s32.totalorder %s70, 2
      %s1229 = scalar_select %p1228, %s70, 2
      %s1230 = smul.addr %s1229, 4
      %s1231 = scalar_lea.vmem %s5, %s1230
      %p1232 = scmp.lt.s32.totalorder %s70, 2
      %s1233 = scalar_select %p1232, %s70, 2
      %s1234 = smul.addr %s1233, 4
      %s1235 = smul.addr %s1234, 8
      %s1236 = scalar_lea.vmem %s7, %s1235
      %p1237 = scmp.lt.s32.totalorder %s70, 2
      %s1238 = scalar_select %p1237, %s70, 2
      %s1239 = smul.addr %s1238, 2
      %s1240 = scalar_lea.vmem %s9, %s1239
      %p1241 = scmp.lt.s32.totalorder %s70, 2
      %s1242 = scalar_select %p1241, %s70, 2
      %s1243 = smul.addr %s1242, 4
      %s1244 = smul.addr %s1243, 8
      %s1245 = scalar_lea.vmem %s11, %s1244
      %p1246 = scmp.lt.s32.totalorder %s70, 2
      %s1247 = scalar_select %p1246, %s70, 2
      %s1248 = smul.addr %s1247, 4
      %s1249 = smul.addr %s1248, 8
      %s1250 = scalar_lea.vmem %s13, %s1249
      %p1251 = scmp.lt.s32.totalorder %s70, 2
      %s1252 = scalar_select %p1251, %s70, 2
      %s1253 = scalar_lea.vmem %s15, %s1252
      %p1254 = scmp.lt.s32.totalorder %s70, 2
      %s1255 = scalar_select %p1254, %s70, 2
      %s1256 = smul.addr %s1255, 4
      %s1257 = scalar_lea.vmem %s17, %s1256
      %p1258 = scmp.lt.s32.totalorder %s70, 2
      %s1259 = scalar_select %p1258, %s70, 2
      %s1260 = smul.addr %s1259, 2
      %s1261 = smul.addr %s1260, 8
      %s1262 = scalar_lea.vmem %s19, %s1261
      %p1263 = scmp.lt.s32.totalorder %s70, 2
      %s1264 = scalar_select %p1263, %s70, 2
      %s1265 = smul.addr %s1264, 4
      %s1266 = smul.addr %s1265, 8
      %s1267 = scalar_lea.vmem %s21, %s1266
      %p1268 = scmp.lt.s32.totalorder %s70, 2
      %s1269 = scalar_select %p1268, %s70, 2
      %s1270 = smul.addr %s1269, 2
      %s1271 = scalar_lea.vmem %s23, %s1270
      %p1272 = scmp.lt.s32.totalorder %s70, 2
      %s1273 = scalar_select %p1272, %s70, 2
      %s1274 = smul.addr %s1273, 4
      %s1275 = smul.addr %s1274, 8
      %s1276 = scalar_lea.vmem %s25, %s1275
      %p1277 = scmp.lt.s32.totalorder %s70, 2
      %s1278 = scalar_select %p1277, %s70, 2
      %s1279 = smul.addr %s1278, 4
      %s1280 = smul.addr %s1279, 8
      %s1281 = scalar_lea.vmem %s27, %s1280
      %p1282 = scmp.lt.s32.totalorder %s70, 2
      %s1283 = scalar_select %p1282, %s70, 2
      %s1284 = scalar_lea.vmem %s29, %s1283
      %p1285 = scmp.lt.s32.totalorder %s70, 2
      %s1286 = scalar_select %p1285, %s70, 2
      %s1287 = smul.addr %s1286, 4
      %s1288 = scalar_lea.vmem %s31, %s1287
      %p1289 = scmp.lt.s32.totalorder %s70, 2
      %s1290 = scalar_select %p1289, %s70, 2
      %s1291 = smul.addr %s1290, 4
      %s1292 = smul.addr %s1291, 8
      %s1293 = scalar_lea.vmem %s33, %s1292
      %p1294 = scmp.lt.s32.totalorder %s70, 2
      %s1295 = scalar_select %p1294, %s70, 2
      %s1296 = smul.addr %s1295, 4
      %s1297 = smul.addr %s1296, 8
      %s1298 = scalar_lea.vmem %s35, %s1297
      %p1299 = scmp.lt.s32.totalorder %s70, 2
      %s1300 = scalar_select %p1299, %s70, 2
      %s1301 = smul.addr %s1300, 2
      %s1302 = scalar_lea.vmem %s37, %s1301
      %p1303 = scmp.lt.s32.totalorder %s70, 2
      %s1304 = scalar_select %p1303, %s70, 2
      %s1305 = smul.addr %s1304, 4
      %s1306 = smul.addr %s1305, 8
      %s1307 = scalar_lea.vmem %s39, %s1306
      %p1308 = scmp.lt.s32.totalorder %s70, 2
      %s1309 = scalar_select %p1308, %s70, 2
      %s1310 = smul.addr %s1309, 4
      %s1311 = smul.addr %s1310, 8
      %s1312 = scalar_lea.vmem %s41, %s1311
      %p1313 = scmp.lt.s32.totalorder %s70, 2
      %s1314 = scalar_select %p1313, %s70, 2
      %s1315 = scalar_lea.vmem %s43, %s1314
      %p1316 = scmp.lt.s32.totalorder %s70, 2
      %s1317 = scalar_select %p1316, %s70, 2
      %s1318 = smul.addr %s1317, 4
      %s1319 = scalar_lea.vmem %s45, %s1318
      %p1320 = scmp.lt.s32.totalorder %s70, 2
      %s1321 = scalar_select %p1320, %s70, 2
      %s1322 = smul.addr %s1321, 128
      %s1323 = smul.addr %s1322, 8
      %s1324 = scalar_lea.vmem %s47, %s1323
      %p1325 = scmp.lt.s32.totalorder %s70, 2
      %s1326 = scalar_select %p1325, %s70, 2
      %s1327 = scalar_lea.vmem %s49, %s1326
      %p1328 = scmp.lt.s32.totalorder %s70, 2
      %s1329 = scalar_select %p1328, %s70, 2
      %s1330 = scalar_lea.vmem %s59, %s1329
      %v1331 = vld [vmem:[%s1227] sm:$0xf]
      %v1332 = vld [vmem:[%s1231] sm:$0x7]
      %v1333 = vld [vmem:[%s1236] sm:$0xff]
      %v1334 = vld [vmem:[%s1236 + $0x8] sm:$0xff]
      %v1335 = vld [vmem:[%s1236 + $0x10] sm:$0xff]
      %v1336 = vld [vmem:[%s1236 + $0x18] sm:$0xff]
      %v1337 = vld [vmem:[%s1240] sm:$0x1]
      %v1338 = vlaneseq
      %v1339 = vshrl.u32 %v1338, 7
      %v1340 = vsub.s32 0, %v1339
      %v1341 = vrot.slane %v1337, %v1340
      %vm1342 = vcmask 23552
      %v1344 = vsel %vm1342, %v1331, 0
      %vm1346 = vcmask 1042432
      %v1348 = vsel %vm1346, %v1332, 0
      %1350 = vmatprep.subr.mxu0 0.0
      %1351 = vmatpush1.msra.mxu0 0.0
      %1352 = vmatprep.subr.mxu0 0.0
      %1353 = vmatpush1.msra.mxu0 0.0
      %1354 = vmatprep.subr.mxu0 0.0
      %1355 = vmatpush1.msra.mxu0 0.0
      %1356 = vmatprep.subr.mxu0 0.0
      %1357 = vmatpush1.msra.mxu0 0.0
      %1358 = vmatprep.subr.mxu0 0.0
      %1359 = vmatpush1.msra.mxu0 0.0
      %1360 = vmatprep.subr.mxu0 0.0
      %1361 = vmatpush1.msra.mxu0 0.0
      %1362 = vmatprep.subr.mxu0 0.0
      %1363 = vmatpush1.msra.mxu0 0.0
      %1364 = vmatprep.subr.mxu0 0.0
      %1365 = vmatpush1.msra.mxu0 0.0
      %1366 = vmatprep.subr.mxu0 0.0
      %1367 = vmatpush1.msra.mxu0 0.0
      %1368 = vmatprep.subr.mxu0 0.0
      %1369 = vmatpush1.msra.mxu0 0.0
      %1370 = vmatprep.subr.mxu0 0.0
      %1371 = vmatpush1.msra.mxu0 0.0
      %1372 = vmatprep.subr.mxu0 0.0
      %1373 = vmatpush1.msra.mxu0 0.0
      %1374 = vmatprep.subr.mxu0 0.0
      %1375 = vmatpush1.msra.mxu0 0.0
      %1376 = vmatprep.subr.mxu0 0.0
      %1377 = vmatpush1.msra.mxu0 0.0
      %1378 = vmatprep.subr.mxu0 0.0
      %1379 = vmatpush1.msra.mxu0 0.0
      %1380 = vmatprep.subr.mxu0 0.0
      %1381 = vmatpush1.msra.mxu0 %v1348
      %1382 = vmatprep.subr.mxu0 0.0
      %1383 = vmatpush2.msra.mxu0 0.0
      %1384 = vmatprep.subr.mxu0 0.0
      %1385 = vmatpush2.msra.mxu0 0.0
      %1386 = vmatprep.subr.mxu0 0.0
      %1387 = vmatpush2.msra.mxu0 0.0
      %1388 = vmatprep.subr.mxu0 0.0
      %1389 = vmatpush2.msra.mxu0 0.0
      %1390 = vmatprep.subr.mxu0 0.0
      %1391 = vmatpush2.msra.mxu0 0.0
      %1392 = vmatprep.subr.mxu0 0.0
      %1393 = vmatpush2.msra.mxu0 0.0
      %1394 = vmatprep.subr.mxu0 0.0
      %1395 = vmatpush2.msra.mxu0 0.0
      %1396 = vmatprep.subr.mxu0 0.0
      %1397 = vmatpush2.msra.mxu0 0.0
      %1398 = vmatprep.subr.mxu0 0.0
      %1399 = vmatpush2.msra.mxu0 0.0
      %1400 = vmatprep.subr.mxu0 0.0
      %1401 = vmatpush2.msra.mxu0 0.0
      %1402 = vmatprep.subr.mxu0 0.0
      %1403 = vmatpush2.msra.mxu0 0.0
      %1404 = vmatprep.subr.mxu0 0.0
      %1405 = vmatpush2.msra.mxu0 0.0
      %1406 = vmatprep.subr.mxu0 0.0
      %1407 = vmatpush2.msra.mxu0 0.0
      %1408 = vmatprep.subr.mxu0 0.0
      %1409 = vmatpush2.msra.mxu0 0.0
      %1410 = vmatprep.subr.mxu0 0.0
      %1411 = vmatpush2.msra.mxu0 0.0
      %1412 = vmatprep.subr.mxu0 0.0
      %1413 = vmatpush2.msra.mxu0 0.0
      %1414 = vmatprep.mubr.f32.mxu0 0.0
      %1415 = vmatmul.mubr.f32.gmra.mxu0 %v1344
      %v1416 = vpop.f32.mrf.mxu0
      %v1417 = vadd.f32 %v1341, %v1416
      %v1418 = vpop.f32.mrf.mxu0
      %1419 = vdwg.mxu0
      %v1420 = vld [vmem:[%s1240 + $0x1] sm:$0x1]
      %vm1421 = vcmask 261120
      %v1423 = vsel %vm1421, 0.0, 0
      %1425 = vmatprep.subr.mxu0 0.0
      %1426 = vmatpush1.msra.mxu0 0.0
      %1427 = vmatprep.subr.mxu0 0.0
      %1428 = vmatpush1.msra.mxu0 0.0
      %1429 = vmatprep.subr.mxu0 0.0
      %1430 = vmatpush1.msra.mxu0 0.0
      %1431 = vmatprep.subr.mxu0 0.0
      %1432 = vmatpush1.msra.mxu0 0.0
      %1433 = vmatprep.subr.mxu0 0.0
      %1434 = vmatpush1.msra.mxu0 0.0
      %1435 = vmatprep.subr.mxu0 0.0
      %1436 = vmatpush1.msra.mxu0 0.0
      %1437 = vmatprep.subr.mxu0 0.0
      %1438 = vmatpush1.msra.mxu0 0.0
      %1439 = vmatprep.subr.mxu0 0.0
      %1440 = vmatpush1.msra.mxu0 0.0
      %1441 = vmatprep.subr.mxu0 0.0
      %1442 = vmatpush1.msra.mxu0 0.0
      %1443 = vmatprep.subr.mxu0 0.0
      %1444 = vmatpush1.msra.mxu0 0.0
      %1445 = vmatprep.subr.mxu0 0.0
      %1446 = vmatpush1.msra.mxu0 0.0
      %1447 = vmatprep.subr.mxu0 0.0
      %1448 = vmatpush1.msra.mxu0 0.0
      %1449 = vmatprep.subr.mxu0 0.0
      %1450 = vmatpush1.msra.mxu0 %v1336
      %1451 = vmatprep.subr.mxu0 0.0
      %1452 = vmatpush1.msra.mxu0 %v1335
      %1453 = vmatprep.subr.mxu0 0.0
      %1454 = vmatpush1.msra.mxu0 %v1334
      %1455 = vmatprep.subr.mxu0 0.0
      %1456 = vmatpush1.msra.mxu0 %v1333
      %1457 = vmatprep.subr.mxu0 0.0
      %1458 = vmatpush2.msra.mxu0 0.0
      %1459 = vmatprep.subr.mxu0 0.0
      %1460 = vmatpush2.msra.mxu0 0.0
      %1461 = vmatprep.subr.mxu0 0.0
      %1462 = vmatpush2.msra.mxu0 0.0
      %1463 = vmatprep.subr.mxu0 0.0
      %1464 = vmatpush2.msra.mxu0 0.0
      %1465 = vmatprep.subr.mxu0 0.0
      %1466 = vmatpush2.msra.mxu0 0.0
      %1467 = vmatprep.subr.mxu0 0.0
      %1468 = vmatpush2.msra.mxu0 0.0
      %1469 = vmatprep.subr.mxu0 0.0
      %1470 = vmatpush2.msra.mxu0 0.0
      %1471 = vmatprep.subr.mxu0 0.0
      %1472 = vmatpush2.msra.mxu0 0.0
      %1473 = vmatprep.subr.mxu0 0.0
      %1474 = vmatpush2.msra.mxu0 0.0
      %1475 = vmatprep.subr.mxu0 0.0
      %1476 = vmatpush2.msra.mxu0 0.0
      %1477 = vmatprep.subr.mxu0 0.0
      %1478 = vmatpush2.msra.mxu0 0.0
      %1479 = vmatprep.subr.mxu0 0.0
      %1480 = vmatpush2.msra.mxu0 0.0
      %1481 = vmatprep.subr.mxu0 0.0
      %1482 = vmatpush2.msra.mxu0 0.0
      %1483 = vmatprep.subr.mxu0 0.0
      %1484 = vmatpush2.msra.mxu0 0.0
      %1485 = vmatprep.subr.mxu0 0.0
      %1486 = vmatpush2.msra.mxu0 0.0
      %1487 = vmatprep.subr.mxu0 0.0
      %1488 = vmatpush2.msra.mxu0 0.0
      %1489 = vmatprep.mubr.f32.mxu0 0.0
      %1490 = vmatmul.mubr.f32.gmra.mxu0 %v1423
      %v1491 = vpop.f32.mrf.mxu0
      %v1492 = vadd.f32 %v1420, %v1491
      %v1493 = vpop.f32.mrf.mxu0
      %1494 = vdwg.mxu0
      %v1495 = vadd.f32 %v1417, %v1492
      %v1496 = vxor.u32 %v1495, 2147483648
      %v1497 = vmul.f32 %v1496, 1.442695
      %v1498 = vpow.pop %v1497
      %v1499 = vadd.f32 %v1498, 1.0
      %v1500 = vrcp.pop %v1499
      %v1501 = vmul.f32 1.0, %v1500
      %1503 = vrot.lane.b32.xlu0 %v1492, 64
      %v1504 = vpop.permute.xlu0 %1503
      %v1506 = vmul.f32 %v1501, %v1504
      %1508 = vrot.lane.b32.xlu0 %v1506, 64
      %v1509 = vpop.permute.xlu0 %1508
      %v1511 = vadd.f32 %v1417, %v1509
      %v1512 = vtanh.pop %v1511
      %v1513 = vsub.f32 1.0, %v1501
      %1515 = vrot.lane.b32.xlu0 %v1512, 96
      %v1516 = vpop.permute.xlu0 %1515
      %v1518 = vmul.f32 %v1513, %v1516
      %v1519 = vmul.f32 %v1501, 0.0
      %v1520 = vadd.f32 %v1518, %v1519
      %1522 = vrot.lane.b32.xlu0 %v1520, 96
      %v1523 = vpop.permute.xlu0 %1522
      %v1524 = vsel %vm1421, %v1523, 0
      %1526 = vmatprep.subr.mxu0 0.0
      %1527 = vmatpush1.msra.mxu0 0.0
      %1528 = vmatprep.subr.mxu0 0.0
      %1529 = vmatpush1.msra.mxu0 0.0
      %1530 = vmatprep.subr.mxu0 0.0
      %1531 = vmatpush1.msra.mxu0 0.0
      %1532 = vmatprep.subr.mxu0 0.0
      %1533 = vmatpush1.msra.mxu0 0.0
      %1534 = vmatprep.subr.mxu0 0.0
      %1535 = vmatpush1.msra.mxu0 0.0
      %1536 = vmatprep.subr.mxu0 0.0
      %1537 = vmatpush1.msra.mxu0 0.0
      %1538 = vmatprep.subr.mxu0 0.0
      %1539 = vmatpush1.msra.mxu0 0.0
      %1540 = vmatprep.subr.mxu0 0.0
      %1541 = vmatpush1.msra.mxu0 0.0
      %1542 = vmatprep.subr.mxu0 0.0
      %1543 = vmatpush1.msra.mxu0 0.0
      %1544 = vmatprep.subr.mxu0 0.0
      %1545 = vmatpush1.msra.mxu0 0.0
      %1546 = vmatprep.subr.mxu0 0.0
      %1547 = vmatpush1.msra.mxu0 0.0
      %1548 = vmatprep.subr.mxu0 0.0
      %1549 = vmatpush1.msra.mxu0 0.0
      %1550 = vmatprep.subr.mxu0 0.0
      %1551 = vmatpush1.msra.mxu0 %v1336
      %1552 = vmatprep.subr.mxu0 0.0
      %1553 = vmatpush1.msra.mxu0 %v1335
      %1554 = vmatprep.subr.mxu0 0.0
      %1555 = vmatpush1.msra.mxu0 %v1334
      %1556 = vmatprep.subr.mxu0 0.0
      %1557 = vmatpush1.msra.mxu0 %v1333
      %1558 = vmatprep.subr.mxu0 0.0
      %1559 = vmatpush2.msra.mxu0 0.0
      %1560 = vmatprep.subr.mxu0 0.0
      %1561 = vmatpush2.msra.mxu0 0.0
      %1562 = vmatprep.subr.mxu0 0.0
      %1563 = vmatpush2.msra.mxu0 0.0
      %1564 = vmatprep.subr.mxu0 0.0
      %1565 = vmatpush2.msra.mxu0 0.0
      %1566 = vmatprep.subr.mxu0 0.0
      %1567 = vmatpush2.msra.mxu0 0.0
      %1568 = vmatprep.subr.mxu0 0.0
      %1569 = vmatpush2.msra.mxu0 0.0
      %1570 = vmatprep.subr.mxu0 0.0
      %1571 = vmatpush2.msra.mxu0 0.0
      %1572 = vmatprep.subr.mxu0 0.0
      %1573 = vmatpush2.msra.mxu0 0.0
      %1574 = vmatprep.subr.mxu0 0.0
      %1575 = vmatpush2.msra.mxu0 0.0
      %1576 = vmatprep.subr.mxu0 0.0
      %1577 = vmatpush2.msra.mxu0 0.0
      %1578 = vmatprep.subr.mxu0 0.0
      %1579 = vmatpush2.msra.mxu0 0.0
      %1580 = vmatprep.subr.mxu0 0.0
      %1581 = vmatpush2.msra.mxu0 0.0
      %1582 = vmatprep.subr.mxu0 0.0
      %1583 = vmatpush2.msra.mxu0 0.0
      %1584 = vmatprep.subr.mxu0 0.0
      %1585 = vmatpush2.msra.mxu0 0.0
      %1586 = vmatprep.subr.mxu0 0.0
      %1587 = vmatpush2.msra.mxu0 0.0
      %1588 = vmatprep.subr.mxu0 0.0
      %1589 = vmatpush2.msra.mxu0 0.0
      %1590 = vmatprep.mubr.f32.mxu0 0.0
      %1591 = vmatmul.mubr.f32.gmra.mxu0 %v1524
      %v1592 = vpop.f32.mrf.mxu0
      %v1593 = vadd.f32 %v1420, %v1592
      %v1594 = vpop.f32.mrf.mxu0
      %1595 = vdwg.mxu0
      %v1597 = vrot.slane %v1593, 7
      %v1599 = vadd.f32 %v1417, %v1597
      %v1600 = vxor.u32 %v1599, 2147483648
      %v1601 = vmul.f32 %v1600, 1.442695
      %v1602 = vpow.pop %v1601
      %v1603 = vadd.f32 %v1602, 1.0
      %v1604 = vrcp.pop %v1603
      %v1605 = vmul.f32 1.0, %v1604
      %1606 = vrot.lane.b32.xlu0 %v1597, 64
      %v1607 = vpop.permute.xlu0 %1606
      %v1609 = vmul.f32 %v1605, %v1607
      %1611 = vrot.lane.b32.xlu0 %v1609, 64
      %v1612 = vpop.permute.xlu0 %1611
      %v1614 = vadd.f32 %v1417, %v1612
      %v1615 = vtanh.pop %v1614
      %v1616 = vsub.f32 1.0, %v1605
      %1618 = vrot.lane.b32.xlu0 %v1615, 96
      %v1619 = vpop.permute.xlu0 %1618
      %v1621 = vmul.f32 %v1616, %v1619
      %v1622 = vrot.slane %v1520, 7
      %v1624 = vmul.f32 %v1605, %v1622
      %v1625 = vadd.f32 %v1621, %v1624
      %v1627 = vrot.slane %v1625, 1
      %1628 = vrot.lane.b32.xlu0 %v1627, 96
      %v1629 = vpop.permute.xlu0 %1628
      %v1630 = vsel %vm1421, %v1629, 0
      %1632 = vmatprep.subr.mxu0 0.0
      %1633 = vmatpush1.msra.mxu0 0.0
      %1634 = vmatprep.subr.mxu0 0.0
      %1635 = vmatpush1.msra.mxu0 0.0
      %1636 = vmatprep.subr.mxu0 0.0
      %1637 = vmatpush1.msra.mxu0 0.0
      %1638 = vmatprep.subr.mxu0 0.0
      %1639 = vmatpush1.msra.mxu0 0.0
      %1640 = vmatprep.subr.mxu0 0.0
      %1641 = vmatpush1.msra.mxu0 0.0
      %1642 = vmatprep.subr.mxu0 0.0
      %1643 = vmatpush1.msra.mxu0 0.0
      %1644 = vmatprep.subr.mxu0 0.0
      %1645 = vmatpush1.msra.mxu0 0.0
      %1646 = vmatprep.subr.mxu0 0.0
      %1647 = vmatpush1.msra.mxu0 0.0
      %1648 = vmatprep.subr.mxu0 0.0
      %1649 = vmatpush1.msra.mxu0 0.0
      %1650 = vmatprep.subr.mxu0 0.0
      %1651 = vmatpush1.msra.mxu0 0.0
      %1652 = vmatprep.subr.mxu0 0.0
      %1653 = vmatpush1.msra.mxu0 0.0
      %1654 = vmatprep.subr.mxu0 0.0
      %1655 = vmatpush1.msra.mxu0 0.0
      %1656 = vmatprep.subr.mxu0 0.0
      %1657 = vmatpush1.msra.mxu0 %v1336
      %1658 = vmatprep.subr.mxu0 0.0
      %1659 = vmatpush1.msra.mxu0 %v1335
      %1660 = vmatprep.subr.mxu0 0.0
      %1661 = vmatpush1.msra.mxu0 %v1334
      %1662 = vmatprep.subr.mxu0 0.0
      %1663 = vmatpush1.msra.mxu0 %v1333
      %1664 = vmatprep.subr.mxu0 0.0
      %1665 = vmatpush2.msra.mxu0 0.0
      %1666 = vmatprep.subr.mxu0 0.0
      %1667 = vmatpush2.msra.mxu0 0.0
      %1668 = vmatprep.subr.mxu0 0.0
      %1669 = vmatpush2.msra.mxu0 0.0
      %1670 = vmatprep.subr.mxu0 0.0
      %1671 = vmatpush2.msra.mxu0 0.0
      %1672 = vmatprep.subr.mxu0 0.0
      %1673 = vmatpush2.msra.mxu0 0.0
      %1674 = vmatprep.subr.mxu0 0.0
      %1675 = vmatpush2.msra.mxu0 0.0
      %1676 = vmatprep.subr.mxu0 0.0
      %1677 = vmatpush2.msra.mxu0 0.0
      %1678 = vmatprep.subr.mxu0 0.0
      %1679 = vmatpush2.msra.mxu0 0.0
      %1680 = vmatprep.subr.mxu0 0.0
      %1681 = vmatpush2.msra.mxu0 0.0
      %1682 = vmatprep.subr.mxu0 0.0
      %1683 = vmatpush2.msra.mxu0 0.0
      %1684 = vmatprep.subr.mxu0 0.0
      %1685 = vmatpush2.msra.mxu0 0.0
      %1686 = vmatprep.subr.mxu0 0.0
      %1687 = vmatpush2.msra.mxu0 0.0
      %1688 = vmatprep.subr.mxu0 0.0
      %1689 = vmatpush2.msra.mxu0 0.0
      %1690 = vmatprep.subr.mxu0 0.0
      %1691 = vmatpush2.msra.mxu0 0.0
      %1692 = vmatprep.subr.mxu0 0.0
      %1693 = vmatpush2.msra.mxu0 0.0
      %1694 = vmatprep.subr.mxu0 0.0
      %1695 = vmatpush2.msra.mxu0 0.0
      %1696 = vmatprep.mubr.f32.mxu0 0.0
      %1697 = vmatmul.mubr.f32.gmra.mxu0 %v1630
      %v1698 = vpop.f32.mrf.mxu0
      %v1699 = vadd.f32 %v1420, %v1698
      %v1700 = vpop.f32.mrf.mxu0
      %1701 = vdwg.mxu0
      %v1703 = vrot.slane %v1699, 6
      %v1705 = vadd.f32 %v1417, %v1703
      %v1706 = vxor.u32 %v1705, 2147483648
      %v1707 = vmul.f32 %v1706, 1.442695
      %v1708 = vpow.pop %v1707
      %v1709 = vadd.f32 %v1708, 1.0
      %v1710 = vrcp.pop %v1709
      %v1711 = vmul.f32 1.0, %v1710
      %1712 = vrot.lane.b32.xlu0 %v1703, 64
      %v1713 = vpop.permute.xlu0 %1712
      %v1715 = vmul.f32 %v1711, %v1713
      %1717 = vrot.lane.b32.xlu0 %v1715, 64
      %v1718 = vpop.permute.xlu0 %1717
      %v1720 = vadd.f32 %v1417, %v1718
      %v1721 = vtanh.pop %v1720
      %v1722 = vsub.f32 1.0, %v1711
      %1724 = vrot.lane.b32.xlu0 %v1721, 96
      %v1725 = vpop.permute.xlu0 %1724
      %v1727 = vmul.f32 %v1722, %v1725
      %v1728 = vrot.slane %v1625, 7
      %v1730 = vmul.f32 %v1711, %v1728
      %v1731 = vadd.f32 %v1727, %v1730
      %v1733 = vrot.slane %v1731, 2
      %1734 = vrot.lane.b32.xlu0 %v1733, 96
      %v1735 = vpop.permute.xlu0 %1734
      %v1736 = vsel %vm1421, %v1735, 0
      %1738 = vmatprep.subr.mxu0 0.0
      %1739 = vmatpush1.msra.mxu0 0.0
      %1740 = vmatprep.subr.mxu0 0.0
      %1741 = vmatpush1.msra.mxu0 0.0
      %1742 = vmatprep.subr.mxu0 0.0
      %1743 = vmatpush1.msra.mxu0 0.0
      %1744 = vmatprep.subr.mxu0 0.0
      %1745 = vmatpush1.msra.mxu0 0.0
      %1746 = vmatprep.subr.mxu0 0.0
      %1747 = vmatpush1.msra.mxu0 0.0
      %1748 = vmatprep.subr.mxu0 0.0
      %1749 = vmatpush1.msra.mxu0 0.0
      %1750 = vmatprep.subr.mxu0 0.0
      %1751 = vmatpush1.msra.mxu0 0.0
      %1752 = vmatprep.subr.mxu0 0.0
      %1753 = vmatpush1.msra.mxu0 0.0
      %1754 = vmatprep.subr.mxu0 0.0
      %1755 = vmatpush1.msra.mxu0 0.0
      %1756 = vmatprep.subr.mxu0 0.0
      %1757 = vmatpush1.msra.mxu0 0.0
      %1758 = vmatprep.subr.mxu0 0.0
      %1759 = vmatpush1.msra.mxu0 0.0
      %1760 = vmatprep.subr.mxu0 0.0
      %1761 = vmatpush1.msra.mxu0 0.0
      %1762 = vmatprep.subr.mxu0 0.0
      %1763 = vmatpush1.msra.mxu0 %v1336
      %1764 = vmatprep.subr.mxu0 0.0
      %1765 = vmatpush1.msra.mxu0 %v1335
      %1766 = vmatprep.subr.mxu0 0.0
      %1767 = vmatpush1.msra.mxu0 %v1334
      %1768 = vmatprep.subr.mxu0 0.0
      %1769 = vmatpush1.msra.mxu0 %v1333
      %1770 = vmatprep.subr.mxu0 0.0
      %1771 = vmatpush2.msra.mxu0 0.0
      %1772 = vmatprep.subr.mxu0 0.0
      %1773 = vmatpush2.msra.mxu0 0.0
      %1774 = vmatprep.subr.mxu0 0.0
      %1775 = vmatpush2.msra.mxu0 0.0
      %1776 = vmatprep.subr.mxu0 0.0
      %1777 = vmatpush2.msra.mxu0 0.0
      %1778 = vmatprep.subr.mxu0 0.0
      %1779 = vmatpush2.msra.mxu0 0.0
      %1780 = vmatprep.subr.mxu0 0.0
      %1781 = vmatpush2.msra.mxu0 0.0
      %1782 = vmatprep.subr.mxu0 0.0
      %1783 = vmatpush2.msra.mxu0 0.0
      %1784 = vmatprep.subr.mxu0 0.0
      %1785 = vmatpush2.msra.mxu0 0.0
      %1786 = vmatprep.subr.mxu0 0.0
      %1787 = vmatpush2.msra.mxu0 0.0
      %1788 = vmatprep.subr.mxu0 0.0
      %1789 = vmatpush2.msra.mxu0 0.0
      %1790 = vmatprep.subr.mxu0 0.0
      %1791 = vmatpush2.msra.mxu0 0.0
      %1792 = vmatprep.subr.mxu0 0.0
      %1793 = vmatpush2.msra.mxu0 0.0
      %1794 = vmatprep.subr.mxu0 0.0
      %1795 = vmatpush2.msra.mxu0 0.0
      %1796 = vmatprep.subr.mxu0 0.0
      %1797 = vmatpush2.msra.mxu0 0.0
      %1798 = vmatprep.subr.mxu0 0.0
      %1799 = vmatpush2.msra.mxu0 0.0
      %1800 = vmatprep.subr.mxu0 0.0
      %1801 = vmatpush2.msra.mxu0 0.0
      %1802 = vmatprep.mubr.f32.mxu0 0.0
      %1803 = vmatmul.mubr.f32.gmra.mxu0 %v1736
      %v1804 = vpop.f32.mrf.mxu0
      %v1805 = vadd.f32 %v1420, %v1804
      %v1806 = vpop.f32.mrf.mxu0
      %1807 = vdwg.mxu0
      %v1809 = vrot.slane %v1805, 5
      %v1811 = vadd.f32 %v1417, %v1809
      %v1812 = vxor.u32 %v1811, 2147483648
      %v1813 = vmul.f32 %v1812, 1.442695
      %v1814 = vpow.pop %v1813
      %v1815 = vadd.f32 %v1814, 1.0
      %v1816 = vrcp.pop %v1815
      %v1817 = vmul.f32 1.0, %v1816
      %1818 = vrot.lane.b32.xlu0 %v1809, 64
      %v1819 = vpop.permute.xlu0 %1818
      %v1821 = vmul.f32 %v1817, %v1819
      %1823 = vrot.lane.b32.xlu0 %v1821, 64
      %v1824 = vpop.permute.xlu0 %1823
      %v1826 = vadd.f32 %v1417, %v1824
      %v1827 = vtanh.pop %v1826
      %v1828 = vsub.f32 1.0, %v1817
      %1830 = vrot.lane.b32.xlu0 %v1827, 96
      %v1831 = vpop.permute.xlu0 %1830
      %v1833 = vmul.f32 %v1828, %v1831
      %v1834 = vrot.slane %v1731, 7
      %v1836 = vmul.f32 %v1817, %v1834
      %v1837 = vadd.f32 %v1833, %v1836
      %v1838 = vld [vmem:[%s1250] sm:$0xff]
      %v1839 = vld [vmem:[%s1250 + $0x8] sm:$0xff]
      %v1840 = vld [vmem:[%s1250 + $0x10] sm:$0xff]
      %v1841 = vld [vmem:[%s1250 + $0x18] sm:$0xff]
      %v1842 = vld [vmem:[%s1253] sm:$0x1]
      %v1843 = vld [vmem:[%s1257 + $0x1] sm:$0x1]
      %v1844 = vld [vmem:[%s1257 + $0x2] sm:$0x1]
      %v1845 = vld [vmem:[%s1245] sm:$0xff]
      %v1846 = vld [vmem:[%s1245 + $0x8] sm:$0xff]
      %v1847 = vld [vmem:[%s1245 + $0x10] sm:$0xff]
      %v1848 = vld [vmem:[%s1245 + $0x18] sm:$0xff]
      %v1849 = vld [vmem:[%s1257] sm:$0x1]
      %v1851 = vrot.slane %v1837, 3
      %1852 = vrot.lane.b32.xlu0 %v1851, 96
      %v1853 = vpop.permute.xlu0 %1852
      %v1854 = vsel %vm1421, %v1853, 0
      %1856 = vmatprep.subr.mxu0 0.0
      %1857 = vmatpush1.msra.mxu0 0.0
      %1858 = vmatprep.subr.mxu0 0.0
      %1859 = vmatpush1.msra.mxu0 0.0
      %1860 = vmatprep.subr.mxu0 0.0
      %1861 = vmatpush1.msra.mxu0 0.0
      %1862 = vmatprep.subr.mxu0 0.0
      %1863 = vmatpush1.msra.mxu0 0.0
      %1864 = vmatprep.subr.mxu0 0.0
      %1865 = vmatpush1.msra.mxu0 0.0
      %1866 = vmatprep.subr.mxu0 0.0
      %1867 = vmatpush1.msra.mxu0 0.0
      %1868 = vmatprep.subr.mxu0 0.0
      %1869 = vmatpush1.msra.mxu0 0.0
      %1870 = vmatprep.subr.mxu0 0.0
      %1871 = vmatpush1.msra.mxu0 0.0
      %1872 = vmatprep.subr.mxu0 0.0
      %1873 = vmatpush1.msra.mxu0 0.0
      %1874 = vmatprep.subr.mxu0 0.0
      %1875 = vmatpush1.msra.mxu0 0.0
      %1876 = vmatprep.subr.mxu0 0.0
      %1877 = vmatpush1.msra.mxu0 0.0
      %1878 = vmatprep.subr.mxu0 0.0
      %1879 = vmatpush1.msra.mxu0 0.0
      %1880 = vmatprep.subr.mxu0 0.0
      %1881 = vmatpush1.msra.mxu0 %v1848
      %1882 = vmatprep.subr.mxu0 0.0
      %1883 = vmatpush1.msra.mxu0 %v1847
      %1884 = vmatprep.subr.mxu0 0.0
      %1885 = vmatpush1.msra.mxu0 %v1846
      %1886 = vmatprep.subr.mxu0 0.0
      %1887 = vmatpush1.msra.mxu0 %v1845
      %1888 = vmatprep.subr.mxu0 0.0
      %1889 = vmatpush2.msra.mxu0 0.0
      %1890 = vmatprep.subr.mxu0 0.0
      %1891 = vmatpush2.msra.mxu0 0.0
      %1892 = vmatprep.subr.mxu0 0.0
      %1893 = vmatpush2.msra.mxu0 0.0
      %1894 = vmatprep.subr.mxu0 0.0
      %1895 = vmatpush2.msra.mxu0 0.0
      %1896 = vmatprep.subr.mxu0 0.0
      %1897 = vmatpush2.msra.mxu0 0.0
      %1898 = vmatprep.subr.mxu0 0.0
      %1899 = vmatpush2.msra.mxu0 0.0
      %1900 = vmatprep.subr.mxu0 0.0
      %1901 = vmatpush2.msra.mxu0 0.0
      %1902 = vmatprep.subr.mxu0 0.0
      %1903 = vmatpush2.msra.mxu0 0.0
      %1904 = vmatprep.subr.mxu0 0.0
      %1905 = vmatpush2.msra.mxu0 0.0
      %1906 = vmatprep.subr.mxu0 0.0
      %1907 = vmatpush2.msra.mxu0 0.0
      %1908 = vmatprep.subr.mxu0 0.0
      %1909 = vmatpush2.msra.mxu0 0.0
      %1910 = vmatprep.subr.mxu0 0.0
      %1911 = vmatpush2.msra.mxu0 0.0
      %1912 = vmatprep.subr.mxu0 0.0
      %1913 = vmatpush2.msra.mxu0 0.0
      %1914 = vmatprep.subr.mxu0 0.0
      %1915 = vmatpush2.msra.mxu0 0.0
      %1916 = vmatprep.subr.mxu0 0.0
      %1917 = vmatpush2.msra.mxu0 0.0
      %1918 = vmatprep.subr.mxu0 0.0
      %1919 = vmatpush2.msra.mxu0 0.0
      %1920 = vmatprep.mubr.f32.mxu0 0.0
      %1921 = vmatmul.mubr.f32.gmra.mxu0 %v1854
      %v1922 = vpop.f32.mrf.mxu0
      %v1923 = vadd.f32 %v1849, %v1922
      %v1924 = vpop.f32.mrf.mxu0
      %1925 = vdwg.mxu0
      %1926 = vmatprep.subr.mxu0 0.0
      %1927 = vmatpush1.msra.mxu0 0.0
      %1928 = vmatprep.subr.mxu0 0.0
      %1929 = vmatpush1.msra.mxu0 0.0
      %1930 = vmatprep.subr.mxu0 0.0
      %1931 = vmatpush1.msra.mxu0 0.0
      %1932 = vmatprep.subr.mxu0 0.0
      %1933 = vmatpush1.msra.mxu0 0.0
      %1934 = vmatprep.subr.mxu0 0.0
      %1935 = vmatpush1.msra.mxu0 0.0
      %1936 = vmatprep.subr.mxu0 0.0
      %1937 = vmatpush1.msra.mxu0 0.0
      %1938 = vmatprep.subr.mxu0 0.0
      %1939 = vmatpush1.msra.mxu0 0.0
      %1940 = vmatprep.subr.mxu0 0.0
      %1941 = vmatpush1.msra.mxu0 0.0
      %1942 = vmatprep.subr.mxu0 0.0
      %1943 = vmatpush1.msra.mxu0 0.0
      %1944 = vmatprep.subr.mxu0 0.0
      %1945 = vmatpush1.msra.mxu0 0.0
      %1946 = vmatprep.subr.mxu0 0.0
      %1947 = vmatpush1.msra.mxu0 0.0
      %1948 = vmatprep.subr.mxu0 0.0
      %1949 = vmatpush1.msra.mxu0 0.0
      %1950 = vmatprep.subr.mxu0 0.0
      %1951 = vmatpush1.msra.mxu0 %v1841
      %1952 = vmatprep.subr.mxu0 0.0
      %1953 = vmatpush1.msra.mxu0 %v1840
      %1954 = vmatprep.subr.mxu0 0.0
      %1955 = vmatpush1.msra.mxu0 %v1839
      %1956 = vmatprep.subr.mxu0 0.0
      %1957 = vmatpush1.msra.mxu0 %v1838
      %1958 = vmatprep.subr.mxu0 0.0
      %1959 = vmatpush2.msra.mxu0 0.0
      %1960 = vmatprep.subr.mxu0 0.0
      %1961 = vmatpush2.msra.mxu0 0.0
      %1962 = vmatprep.subr.mxu0 0.0
      %1963 = vmatpush2.msra.mxu0 0.0
      %1964 = vmatprep.subr.mxu0 0.0
      %1965 = vmatpush2.msra.mxu0 0.0
      %1966 = vmatprep.subr.mxu0 0.0
      %1967 = vmatpush2.msra.mxu0 0.0
      %1968 = vmatprep.subr.mxu0 0.0
      %1969 = vmatpush2.msra.mxu0 0.0
      %1970 = vmatprep.subr.mxu0 0.0
      %1971 = vmatpush2.msra.mxu0 0.0
      %1972 = vmatprep.subr.mxu0 0.0
      %1973 = vmatpush2.msra.mxu0 0.0
      %1974 = vmatprep.subr.mxu0 0.0
      %1975 = vmatpush2.msra.mxu0 0.0
      %1976 = vmatprep.subr.mxu0 0.0
      %1977 = vmatpush2.msra.mxu0 0.0
      %1978 = vmatprep.subr.mxu0 0.0
      %1979 = vmatpush2.msra.mxu0 0.0
      %1980 = vmatprep.subr.mxu0 0.0
      %1981 = vmatpush2.msra.mxu0 0.0
      %1982 = vmatprep.subr.mxu0 0.0
      %1983 = vmatpush2.msra.mxu0 0.0
      %1984 = vmatprep.subr.mxu0 0.0
      %1985 = vmatpush2.msra.mxu0 0.0
      %1986 = vmatprep.subr.mxu0 0.0
      %1987 = vmatpush2.msra.mxu0 0.0
      %1988 = vmatprep.subr.mxu0 0.0
      %1989 = vmatpush2.msra.mxu0 0.0
      %1990 = vmatprep.mubr.f32.mxu0 0.0
      %1991 = vmatmul.mubr.f32.gmra.mxu0 %v1524
      %v1992 = vpop.f32.mrf.mxu0
      %v1993 = vadd.f32 0.0, %v1992
      %v1994 = vpop.f32.mrf.mxu0
      %1995 = vdwg.mxu0
      %v1996 = vadd.f32 %v1923, %v1993
      %v1997 = vadd.f32 %v1996, %v1843
      %v1998 = vtanh.pop %v1997
      %v1999 = vmul.f32 %v1998, %v1842
      %vm2000 = vcmask 253952
      %v2001 = vsel %vm2000, %v1999, 0.0
      %2002 = vadd.xlane.f32.xlu0 %v2001
      %v2003 = vpop.xlane.xlu0 %2002
      %v2004 = vadd.f32 %v2003, %v1844
      %2005 = vmatprep.subr.mxu0 0.0
      %2006 = vmatpush1.msra.mxu0 0.0
      %2007 = vmatprep.subr.mxu0 0.0
      %2008 = vmatpush1.msra.mxu0 0.0
      %2009 = vmatprep.subr.mxu0 0.0
      %2010 = vmatpush1.msra.mxu0 0.0
      %2011 = vmatprep.subr.mxu0 0.0
      %2012 = vmatpush1.msra.mxu0 0.0
      %2013 = vmatprep.subr.mxu0 0.0
      %2014 = vmatpush1.msra.mxu0 0.0
      %2015 = vmatprep.subr.mxu0 0.0
      %2016 = vmatpush1.msra.mxu0 0.0
      %2017 = vmatprep.subr.mxu0 0.0
      %2018 = vmatpush1.msra.mxu0 0.0
      %2019 = vmatprep.subr.mxu0 0.0
      %2020 = vmatpush1.msra.mxu0 0.0
      %2021 = vmatprep.subr.mxu0 0.0
      %2022 = vmatpush1.msra.mxu0 0.0
      %2023 = vmatprep.subr.mxu0 0.0
      %2024 = vmatpush1.msra.mxu0 0.0
      %2025 = vmatprep.subr.mxu0 0.0
      %2026 = vmatpush1.msra.mxu0 0.0
      %2027 = vmatprep.subr.mxu0 0.0
      %2028 = vmatpush1.msra.mxu0 0.0
      %2029 = vmatprep.subr.mxu0 0.0
      %2030 = vmatpush1.msra.mxu0 %v1841
      %2031 = vmatprep.subr.mxu0 0.0
      %2032 = vmatpush1.msra.mxu0 %v1840
      %2033 = vmatprep.subr.mxu0 0.0
      %2034 = vmatpush1.msra.mxu0 %v1839
      %2035 = vmatprep.subr.mxu0 0.0
      %2036 = vmatpush1.msra.mxu0 %v1838
      %2037 = vmatprep.subr.mxu0 0.0
      %2038 = vmatpush2.msra.mxu0 0.0
      %2039 = vmatprep.subr.mxu0 0.0
      %2040 = vmatpush2.msra.mxu0 0.0
      %2041 = vmatprep.subr.mxu0 0.0
      %2042 = vmatpush2.msra.mxu0 0.0
      %2043 = vmatprep.subr.mxu0 0.0
      %2044 = vmatpush2.msra.mxu0 0.0
      %2045 = vmatprep.subr.mxu0 0.0
      %2046 = vmatpush2.msra.mxu0 0.0
      %2047 = vmatprep.subr.mxu0 0.0
      %2048 = vmatpush2.msra.mxu0 0.0
      %2049 = vmatprep.subr.mxu0 0.0
      %2050 = vmatpush2.msra.mxu0 0.0
      %2051 = vmatprep.subr.mxu0 0.0
      %2052 = vmatpush2.msra.mxu0 0.0
      %2053 = vmatprep.subr.mxu0 0.0
      %2054 = vmatpush2.msra.mxu0 0.0
      %2055 = vmatprep.subr.mxu0 0.0
      %2056 = vmatpush2.msra.mxu0 0.0
      %2057 = vmatprep.subr.mxu0 0.0
      %2058 = vmatpush2.msra.mxu0 0.0
      %2059 = vmatprep.subr.mxu0 0.0
      %2060 = vmatpush2.msra.mxu0 0.0
      %2061 = vmatprep.subr.mxu0 0.0
      %2062 = vmatpush2.msra.mxu0 0.0
      %2063 = vmatprep.subr.mxu0 0.0
      %2064 = vmatpush2.msra.mxu0 0.0
      %2065 = vmatprep.subr.mxu0 0.0
      %2066 = vmatpush2.msra.mxu0 0.0
      %2067 = vmatprep.subr.mxu0 0.0
      %2068 = vmatpush2.msra.mxu0 0.0
      %2069 = vmatprep.mubr.f32.mxu0 0.0
      %2070 = vmatmul.mubr.f32.gmra.mxu0 %v1630
      %v2071 = vpop.f32.mrf.mxu0
      %v2072 = vadd.f32 0.0, %v2071
      %v2073 = vpop.f32.mrf.mxu0
      %2074 = vdwg.mxu0
      %v2075 = vadd.f32 %v1923, %v2072
      %v2076 = vadd.f32 %v2075, %v1843
      %v2077 = vtanh.pop %v2076
      %v2078 = vmul.f32 %v2077, %v1842
      %v2079 = vsel %vm2000, %v2078, 0.0
      %2080 = vadd.xlane.f32.xlu0 %v2079
      %v2081 = vpop.xlane.xlu0 %2080
      %v2082 = vadd.f32 %v2081, %v1844
      %2083 = vmatprep.subr.mxu0 0.0
      %2084 = vmatpush1.msra.mxu0 0.0
      %2085 = vmatprep.subr.mxu0 0.0
      %2086 = vmatpush1.msra.mxu0 0.0
      %2087 = vmatprep.subr.mxu0 0.0
      %2088 = vmatpush1.msra.mxu0 0.0
      %2089 = vmatprep.subr.mxu0 0.0
      %2090 = vmatpush1.msra.mxu0 0.0
      %2091 = vmatprep.subr.mxu0 0.0
      %2092 = vmatpush1.msra.mxu0 0.0
      %2093 = vmatprep.subr.mxu0 0.0
      %2094 = vmatpush1.msra.mxu0 0.0
      %2095 = vmatprep.subr.mxu0 0.0
      %2096 = vmatpush1.msra.mxu0 0.0
      %2097 = vmatprep.subr.mxu0 0.0
      %2098 = vmatpush1.msra.mxu0 0.0
      %2099 = vmatprep.subr.mxu0 0.0
      %2100 = vmatpush1.msra.mxu0 0.0
      %2101 = vmatprep.subr.mxu0 0.0
      %2102 = vmatpush1.msra.mxu0 0.0
      %2103 = vmatprep.subr.mxu0 0.0
      %2104 = vmatpush1.msra.mxu0 0.0
      %2105 = vmatprep.subr.mxu0 0.0
      %2106 = vmatpush1.msra.mxu0 0.0
      %2107 = vmatprep.subr.mxu0 0.0
      %2108 = vmatpush1.msra.mxu0 %v1841
      %2109 = vmatprep.subr.mxu0 0.0
      %2110 = vmatpush1.msra.mxu0 %v1840
      %2111 = vmatprep.subr.mxu0 0.0
      %2112 = vmatpush1.msra.mxu0 %v1839
      %2113 = vmatprep.subr.mxu0 0.0
      %2114 = vmatpush1.msra.mxu0 %v1838
      %2115 = vmatprep.subr.mxu0 0.0
      %2116 = vmatpush2.msra.mxu0 0.0
      %2117 = vmatprep.subr.mxu0 0.0
      %2118 = vmatpush2.msra.mxu0 0.0
      %2119 = vmatprep.subr.mxu0 0.0
      %2120 = vmatpush2.msra.mxu0 0.0
      %2121 = vmatprep.subr.mxu0 0.0
      %2122 = vmatpush2.msra.mxu0 0.0
      %2123 = vmatprep.subr.mxu0 0.0
      %2124 = vmatpush2.msra.mxu0 0.0
      %2125 = vmatprep.subr.mxu0 0.0
      %2126 = vmatpush2.msra.mxu0 0.0
      %2127 = vmatprep.subr.mxu0 0.0
      %2128 = vmatpush2.msra.mxu0 0.0
      %2129 = vmatprep.subr.mxu0 0.0
      %2130 = vmatpush2.msra.mxu0 0.0
      %2131 = vmatprep.subr.mxu0 0.0
      %2132 = vmatpush2.msra.mxu0 0.0
      %2133 = vmatprep.subr.mxu0 0.0
      %2134 = vmatpush2.msra.mxu0 0.0
      %2135 = vmatprep.subr.mxu0 0.0
      %2136 = vmatpush2.msra.mxu0 0.0
      %2137 = vmatprep.subr.mxu0 0.0
      %2138 = vmatpush2.msra.mxu0 0.0
      %2139 = vmatprep.subr.mxu0 0.0
      %2140 = vmatpush2.msra.mxu0 0.0
      %2141 = vmatprep.subr.mxu0 0.0
      %2142 = vmatpush2.msra.mxu0 0.0
      %2143 = vmatprep.subr.mxu0 0.0
      %2144 = vmatpush2.msra.mxu0 0.0
      %2145 = vmatprep.subr.mxu0 0.0
      %2146 = vmatpush2.msra.mxu0 0.0
      %2147 = vmatprep.mubr.f32.mxu0 0.0
      %2148 = vmatmul.mubr.f32.gmra.mxu0 %v1736
      %v2149 = vpop.f32.mrf.mxu0
      %v2150 = vadd.f32 0.0, %v2149
      %v2151 = vpop.f32.mrf.mxu0
      %2152 = vdwg.mxu0
      %v2153 = vadd.f32 %v1923, %v2150
      %v2154 = vadd.f32 %v2153, %v1843
      %v2155 = vtanh.pop %v2154
      %v2156 = vmul.f32 %v2155, %v1842
      %v2157 = vsel %vm2000, %v2156, 0.0
      %2158 = vadd.xlane.f32.xlu0 %v2157
      %v2159 = vpop.xlane.xlu0 %2158
      %v2160 = vadd.f32 %v2159, %v1844
      %2161 = vmatprep.subr.mxu0 0.0
      %2162 = vmatpush1.msra.mxu0 0.0
      %2163 = vmatprep.subr.mxu0 0.0
      %2164 = vmatpush1.msra.mxu0 0.0
      %2165 = vmatprep.subr.mxu0 0.0
      %2166 = vmatpush1.msra.mxu0 0.0
      %2167 = vmatprep.subr.mxu0 0.0
      %2168 = vmatpush1.msra.mxu0 0.0
      %2169 = vmatprep.subr.mxu0 0.0
      %2170 = vmatpush1.msra.mxu0 0.0
      %2171 = vmatprep.subr.mxu0 0.0
      %2172 = vmatpush1.msra.mxu0 0.0
      %2173 = vmatprep.subr.mxu0 0.0
      %2174 = vmatpush1.msra.mxu0 0.0
      %2175 = vmatprep.subr.mxu0 0.0
      %2176 = vmatpush1.msra.mxu0 0.0
      %2177 = vmatprep.subr.mxu0 0.0
      %2178 = vmatpush1.msra.mxu0 0.0
      %2179 = vmatprep.subr.mxu0 0.0
      %2180 = vmatpush1.msra.mxu0 0.0
      %2181 = vmatprep.subr.mxu0 0.0
      %2182 = vmatpush1.msra.mxu0 0.0
      %2183 = vmatprep.subr.mxu0 0.0
      %2184 = vmatpush1.msra.mxu0 0.0
      %2185 = vmatprep.subr.mxu0 0.0
      %2186 = vmatpush1.msra.mxu0 %v1841
      %2187 = vmatprep.subr.mxu0 0.0
      %2188 = vmatpush1.msra.mxu0 %v1840
      %2189 = vmatprep.subr.mxu0 0.0
      %2190 = vmatpush1.msra.mxu0 %v1839
      %2191 = vmatprep.subr.mxu0 0.0
      %2192 = vmatpush1.msra.mxu0 %v1838
      %2193 = vmatprep.subr.mxu0 0.0
      %2194 = vmatpush2.msra.mxu0 0.0
      %2195 = vmatprep.subr.mxu0 0.0
      %2196 = vmatpush2.msra.mxu0 0.0
      %2197 = vmatprep.subr.mxu0 0.0
      %2198 = vmatpush2.msra.mxu0 0.0
      %2199 = vmatprep.subr.mxu0 0.0
      %2200 = vmatpush2.msra.mxu0 0.0
      %2201 = vmatprep.subr.mxu0 0.0
      %2202 = vmatpush2.msra.mxu0 0.0
      %2203 = vmatprep.subr.mxu0 0.0
      %2204 = vmatpush2.msra.mxu0 0.0
      %2205 = vmatprep.subr.mxu0 0.0
      %2206 = vmatpush2.msra.mxu0 0.0
      %2207 = vmatprep.subr.mxu0 0.0
      %2208 = vmatpush2.msra.mxu0 0.0
      %2209 = vmatprep.subr.mxu0 0.0
      %2210 = vmatpush2.msra.mxu0 0.0
      %2211 = vmatprep.subr.mxu0 0.0
      %2212 = vmatpush2.msra.mxu0 0.0
      %2213 = vmatprep.subr.mxu0 0.0
      %2214 = vmatpush2.msra.mxu0 0.0
      %2215 = vmatprep.subr.mxu0 0.0
      %2216 = vmatpush2.msra.mxu0 0.0
      %2217 = vmatprep.subr.mxu0 0.0
      %2218 = vmatpush2.msra.mxu0 0.0
      %2219 = vmatprep.subr.mxu0 0.0
      %2220 = vmatpush2.msra.mxu0 0.0
      %2221 = vmatprep.subr.mxu0 0.0
      %2222 = vmatpush2.msra.mxu0 0.0
      %2223 = vmatprep.subr.mxu0 0.0
      %2224 = vmatpush2.msra.mxu0 0.0
      %2225 = vmatprep.mubr.f32.mxu0 0.0
      %2226 = vmatmul.mubr.f32.gmra.mxu0 %v1854
      %v2227 = vpop.f32.mrf.mxu0
      %v2228 = vadd.f32 0.0, %v2227
      %v2229 = vpop.f32.mrf.mxu0
      %2230 = vdwg.mxu0
      %v2231 = vadd.f32 %v1923, %v2228
      %v2232 = vadd.f32 %v2231, %v1843
      %v2233 = vtanh.pop %v2232
      %v2234 = vmul.f32 %v2233, %v1842
      %v2235 = vsel %vm2000, %v2234, 0.0
      %2236 = vadd.xlane.f32.xlu0 %v2235
      %v2237 = vpop.xlane.xlu0 %2236
      %v2238 = vadd.f32 %v2237, %v1844
      %v2239 = vmax.f32 %v2004, %v2082
      %v2240 = vmax.f32 %v2239, %v2160
      %v2241 = vmax.f32 %v2240, %v2238
      %v2242 = vsub.f32 %v2004, %v2241
      %v2243 = vmul.f32 %v2242, 1.442695
      %v2244 = vpow.pop %v2243
      %v2245 = vsub.f32 %v2082, %v2241
      %v2246 = vmul.f32 %v2245, 1.442695
      %v2247 = vpow.pop %v2246
      %v2248 = vsub.f32 %v2160, %v2241
      %v2249 = vmul.f32 %v2248, 1.442695
      %v2250 = vpow.pop %v2249
      %v2251 = vsub.f32 %v2238, %v2241
      %v2252 = vmul.f32 %v2251, 1.442695
      %v2253 = vpow.pop %v2252
      %v2254 = vadd.f32 %v2244, %v2247
      %v2255 = vadd.f32 %v2254, %v2250
      %v2256 = vadd.f32 %v2255, %v2253
      %v2257 = vrcp.pop %v2256
      %v2258 = vmul.f32 1.0, %v2257
      %v2259 = vmul.f32 %v2244, %v2258
      %2261 = vset.pattern.permute.xlu0 0
      %2262 = vperm.xlu0 %2261, %v2259
      %v2263 = vpop.permute.xlu0 %2262
      %v2265 = vmul.f32 %v2263, %v1520
      %v2266 = vadd.f32 %v2265, 0.0
      %v2267 = vmul.f32 %v2247, %v2258
      %2269 = vset.pattern.permute.xlu0 0
      %2270 = vperm.xlu0 %2269, %v2267
      %v2271 = vpop.permute.xlu0 %2270
      %v2274 = vmul.f32 %v2271, %v1629
      %2276 = vrot.lane.b32.xlu0 %v2274, 32
      %v2277 = vpop.permute.xlu0 %2276
      %v2279 = vadd.f32 %v2266, %v2277
      %v2280 = vmul.f32 %v2250, %v2258
      %2282 = vset.pattern.permute.xlu0 0
      %2283 = vperm.xlu0 %2282, %v2280
      %v2284 = vpop.permute.xlu0 %2283
      %v2287 = vmul.f32 %v2284, %v1735
      %2289 = vrot.lane.b32.xlu0 %v2287, 32
      %v2290 = vpop.permute.xlu0 %2289
      %v2292 = vadd.f32 %v2279, %v2290
      %v2293 = vmul.f32 %v2253, %v2258
      %2295 = vset.pattern.permute.xlu0 0
      %2296 = vperm.xlu0 %2295, %v2293
      %v2297 = vpop.permute.xlu0 %2296
      %v2300 = vmul.f32 %v2297, %v1853
      %2302 = vrot.lane.b32.xlu0 %v2300, 32
      %v2303 = vpop.permute.xlu0 %2302
      %v2305 = vadd.f32 %v2292, %v2303
      %v2306 = vld [vmem:[%s1223] sm:$0xff]
      %v2307 = vld [vmem:[%s1223 + $0x8] sm:$0xff]
      %v2308 = vld [vmem:[%s1223 + $0x10] sm:$0xf]
      %v2309 = vld [vmem:[%s1262] sm:$0xff]
      %v2310 = vld [vmem:[%s1262 + $0x8] sm:$0xff]
      %v2311 = vld [vmem:[%s1267] sm:$0xff]
      %v2312 = vld [vmem:[%s1267 + $0x8] sm:$0xff]
      %v2313 = vld [vmem:[%s1267 + $0x10] sm:$0xff]
      %v2314 = vld [vmem:[%s1267 + $0x18] sm:$0xff]
      %v2315 = vld [vmem:[%s1271] sm:$0x1]
      %v2316 = vlaneseq
      %v2317 = vshrl.u32 %v2316, 7
      %v2318 = vsub.s32 0, %v2317
      %v2319 = vrot.slane %v2315, %v2318
      %vm2320 = vcmask 130048
      %v2322 = vsel %vm2320, %v2306, 0
      %v2325 = vsel %vm2320, %v2307, 0
      %v2328 = vsel %vm2320, %v2308, 0
      %2330 = vmatprep.subr.mxu0 0.0
      %2331 = vmatpush1.msra.mxu0 0.0
      %2332 = vmatprep.subr.mxu0 0.0
      %2333 = vmatpush1.msra.mxu0 0.0
      %2334 = vmatprep.subr.mxu0 0.0
      %2335 = vmatpush1.msra.mxu0 0.0
      %2336 = vmatprep.subr.mxu0 0.0
      %2337 = vmatpush1.msra.mxu0 0.0
      %2338 = vmatprep.subr.mxu0 0.0
      %2339 = vmatpush1.msra.mxu0 0.0
      %2340 = vmatprep.subr.mxu0 0.0
      %2341 = vmatpush1.msra.mxu0 0.0
      %2342 = vmatprep.subr.mxu0 0.0
      %2343 = vmatpush1.msra.mxu0 0.0
      %2344 = vmatprep.subr.mxu0 0.0
      %2345 = vmatpush1.msra.mxu0 0.0
      %2346 = vmatprep.subr.mxu0 0.0
      %2347 = vmatpush1.msra.mxu0 0.0
      %2348 = vmatprep.subr.mxu0 0.0
      %2349 = vmatpush1.msra.mxu0 0.0
      %2350 = vmatprep.subr.mxu0 0.0
      %2351 = vmatpush1.msra.mxu0 0.0
      %2352 = vmatprep.subr.mxu0 0.0
      %2353 = vmatpush1.msra.mxu0 0.0
      %2354 = vmatprep.subr.mxu0 0.0
      %2355 = vmatpush1.msra.mxu0 0.0
      %2356 = vmatprep.subr.mxu0 0.0
      %2357 = vmatpush1.msra.mxu0 0.0
      %2358 = vmatprep.subr.mxu0 0.0
      %2359 = vmatpush1.msra.mxu0 %v2310
      %2360 = vmatprep.subr.mxu0 0.0
      %2361 = vmatpush1.msra.mxu0 %v2309
      %2362 = vmatprep.subr.mxu0 0.0
      %2363 = vmatpush2.msra.mxu0 0.0
      %2364 = vmatprep.subr.mxu0 0.0
      %2365 = vmatpush2.msra.mxu0 0.0
      %2366 = vmatprep.subr.mxu0 0.0
      %2367 = vmatpush2.msra.mxu0 0.0
      %2368 = vmatprep.subr.mxu0 0.0
      %2369 = vmatpush2.msra.mxu0 0.0
      %2370 = vmatprep.subr.mxu0 0.0
      %2371 = vmatpush2.msra.mxu0 0.0
      %2372 = vmatprep.subr.mxu0 0.0
      %2373 = vmatpush2.msra.mxu0 0.0
      %2374 = vmatprep.subr.mxu0 0.0
      %2375 = vmatpush2.msra.mxu0 0.0
      %2376 = vmatprep.subr.mxu0 0.0
      %2377 = vmatpush2.msra.mxu0 0.0
      %2378 = vmatprep.subr.mxu0 0.0
      %2379 = vmatpush2.msra.mxu0 0.0
      %2380 = vmatprep.subr.mxu0 0.0
      %2381 = vmatpush2.msra.mxu0 0.0
      %2382 = vmatprep.subr.mxu0 0.0
      %2383 = vmatpush2.msra.mxu0 0.0
      %2384 = vmatprep.subr.mxu0 0.0
      %2385 = vmatpush2.msra.mxu0 0.0
      %2386 = vmatprep.subr.mxu0 0.0
      %2387 = vmatpush2.msra.mxu0 0.0
      %2388 = vmatprep.subr.mxu0 0.0
      %2389 = vmatpush2.msra.mxu0 0.0
      %2390 = vmatprep.subr.mxu0 0.0
      %2391 = vmatpush2.msra.mxu0 0.0
      %2392 = vmatprep.subr.mxu0 0.0
      %2393 = vmatpush2.msra.mxu0 0.0
      %2394 = vmatprep.mubr.f32.mxu0 0.0
      %2395 = vmatmul.mubr.f32.gmra.mxu0 %v2322
      %v2396 = vpop.f32.mrf.mxu0
      %v2397 = vadd.f32 %v2319, %v2396
      %v2398 = vpop.f32.mrf.mxu0
      %2399 = vmatprep.mubr.f32.mxu0 0.0
      %2400 = vmatmul.mubr.f32.gmra.mxu0 %v2325
      %v2401 = vpop.f32.mrf.mxu0
      %v2402 = vadd.f32 %v2319, %v2401
      %v2403 = vpop.f32.mrf.mxu0
      %2404 = vmatprep.mubr.f32.mxu0 0.0
      %2405 = vmatmul.mubr.f32.gmra.mxu0 %v2328
      %v2406 = vpop.f32.mrf.mxu0
      %v2407 = vadd.f32 %v2319, %v2406
      %v2408 = vpop.f32.mrf.mxu0
      %2409 = vdwg.mxu0
      %v2410 = vld [vmem:[%s1271 + $0x1] sm:$0x1]
      %v2411 = vlaneseq
      %v2412 = vshrl.u32 %v2411, 7
      %v2413 = vsub.s32 0, %v2412
      %v2414 = vrot.slane %v2410, %v2413
      %2415 = vmatprep.subr.mxu0 0.0
      %2416 = vmatpush1.msra.mxu0 0.0
      %2417 = vmatprep.subr.mxu0 0.0
      %2418 = vmatpush1.msra.mxu0 0.0
      %2419 = vmatprep.subr.mxu0 0.0
      %2420 = vmatpush1.msra.mxu0 0.0
      %2421 = vmatprep.subr.mxu0 0.0
      %2422 = vmatpush1.msra.mxu0 0.0
      %2423 = vmatprep.subr.mxu0 0.0
      %2424 = vmatpush1.msra.mxu0 0.0
      %2425 = vmatprep.subr.mxu0 0.0
      %2426 = vmatpush1.msra.mxu0 0.0
      %2427 = vmatprep.subr.mxu0 0.0
      %2428 = vmatpush1.msra.mxu0 0.0
      %2429 = vmatprep.subr.mxu0 0.0
      %2430 = vmatpush1.msra.mxu0 0.0
      %2431 = vmatprep.subr.mxu0 0.0
      %2432 = vmatpush1.msra.mxu0 0.0
      %2433 = vmatprep.subr.mxu0 0.0
      %2434 = vmatpush1.msra.mxu0 0.0
      %2435 = vmatprep.subr.mxu0 0.0
      %2436 = vmatpush1.msra.mxu0 0.0
      %2437 = vmatprep.subr.mxu0 0.0
      %2438 = vmatpush1.msra.mxu0 0.0
      %2439 = vmatprep.subr.mxu0 0.0
      %2440 = vmatpush1.msra.mxu0 %v2314
      %2441 = vmatprep.subr.mxu0 0.0
      %2442 = vmatpush1.msra.mxu0 %v2313
      %2443 = vmatprep.subr.mxu0 0.0
      %2444 = vmatpush1.msra.mxu0 %v2312
      %2445 = vmatprep.subr.mxu0 0.0
      %2446 = vmatpush1.msra.mxu0 %v2311
      %2447 = vmatprep.subr.mxu0 0.0
      %2448 = vmatpush2.msra.mxu0 0.0
      %2449 = vmatprep.subr.mxu0 0.0
      %2450 = vmatpush2.msra.mxu0 0.0
      %2451 = vmatprep.subr.mxu0 0.0
      %2452 = vmatpush2.msra.mxu0 0.0
      %2453 = vmatprep.subr.mxu0 0.0
      %2454 = vmatpush2.msra.mxu0 0.0
      %2455 = vmatprep.subr.mxu0 0.0
      %2456 = vmatpush2.msra.mxu0 0.0
      %2457 = vmatprep.subr.mxu0 0.0
      %2458 = vmatpush2.msra.mxu0 0.0
      %2459 = vmatprep.subr.mxu0 0.0
      %2460 = vmatpush2.msra.mxu0 0.0
      %2461 = vmatprep.subr.mxu0 0.0
      %2462 = vmatpush2.msra.mxu0 0.0
      %2463 = vmatprep.subr.mxu0 0.0
      %2464 = vmatpush2.msra.mxu0 0.0
      %2465 = vmatprep.subr.mxu0 0.0
      %2466 = vmatpush2.msra.mxu0 0.0
      %2467 = vmatprep.subr.mxu0 0.0
      %2468 = vmatpush2.msra.mxu0 0.0
      %2469 = vmatprep.subr.mxu0 0.0
      %2470 = vmatpush2.msra.mxu0 0.0
      %2471 = vmatprep.subr.mxu0 0.0
      %2472 = vmatpush2.msra.mxu0 0.0
      %2473 = vmatprep.subr.mxu0 0.0
      %2474 = vmatpush2.msra.mxu0 0.0
      %2475 = vmatprep.subr.mxu0 0.0
      %2476 = vmatpush2.msra.mxu0 0.0
      %2477 = vmatprep.subr.mxu0 0.0
      %2478 = vmatpush2.msra.mxu0 0.0
      %2479 = vmatprep.mubr.f32.mxu0 0.0
      %2480 = vmatmul.mubr.f32.gmra.mxu0 %v1423
      %v2481 = vpop.f32.mrf.mxu0
      %v2482 = vadd.f32 %v2414, %v2481
      %v2483 = vpop.f32.mrf.mxu0
      %2484 = vdwg.mxu0
      %v2485 = vadd.f32 %v2397, %v2482
      %v2486 = vxor.u32 %v2485, 2147483648
      %v2487 = vmul.f32 %v2486, 1.442695
      %v2488 = vpow.pop %v2487
      %v2489 = vadd.f32 %v2488, 1.0
      %v2490 = vrcp.pop %v2489
      %v2491 = vmul.f32 1.0, %v2490
      %2493 = vrot.lane.b32.xlu0 %v2482, 64
      %v2494 = vpop.permute.xlu0 %2493
      %v2496 = vmul.f32 %v2491, %v2494
      %2498 = vrot.lane.b32.xlu0 %v2496, 64
      %v2499 = vpop.permute.xlu0 %2498
      %v2501 = vadd.f32 %v2397, %v2499
      %v2502 = vtanh.pop %v2501
      %v2503 = vsub.f32 1.0, %v2491
      %2505 = vrot.lane.b32.xlu0 %v2502, 96
      %v2506 = vpop.permute.xlu0 %2505
      %v2508 = vmul.f32 %v2503, %v2506
      %v2509 = vmul.f32 %v2491, 0.0
      %v2510 = vadd.f32 %v2508, %v2509
      %2512 = vrot.lane.b32.xlu0 %v2510, 96
      %v2513 = vpop.permute.xlu0 %2512
      %v2514 = vsel %vm1421, %v2513, 0
      %2516 = vmatprep.subr.mxu0 0.0
      %2517 = vmatpush1.msra.mxu0 0.0
      %2518 = vmatprep.subr.mxu0 0.0
      %2519 = vmatpush1.msra.mxu0 0.0
      %2520 = vmatprep.subr.mxu0 0.0
      %2521 = vmatpush1.msra.mxu0 0.0
      %2522 = vmatprep.subr.mxu0 0.0
      %2523 = vmatpush1.msra.mxu0 0.0
      %2524 = vmatprep.subr.mxu0 0.0
      %2525 = vmatpush1.msra.mxu0 0.0
      %2526 = vmatprep.subr.mxu0 0.0
      %2527 = vmatpush1.msra.mxu0 0.0
      %2528 = vmatprep.subr.mxu0 0.0
      %2529 = vmatpush1.msra.mxu0 0.0
      %2530 = vmatprep.subr.mxu0 0.0
      %2531 = vmatpush1.msra.mxu0 0.0
      %2532 = vmatprep.subr.mxu0 0.0
      %2533 = vmatpush1.msra.mxu0 0.0
      %2534 = vmatprep.subr.mxu0 0.0
      %2535 = vmatpush1.msra.mxu0 0.0
      %2536 = vmatprep.subr.mxu0 0.0
      %2537 = vmatpush1.msra.mxu0 0.0
      %2538 = vmatprep.subr.mxu0 0.0
      %2539 = vmatpush1.msra.mxu0 0.0
      %2540 = vmatprep.subr.mxu0 0.0
      %2541 = vmatpush1.msra.mxu0 %v2314
      %2542 = vmatprep.subr.mxu0 0.0
      %2543 = vmatpush1.msra.mxu0 %v2313
      %2544 = vmatprep.subr.mxu0 0.0
      %2545 = vmatpush1.msra.mxu0 %v2312
      %2546 = vmatprep.subr.mxu0 0.0
      %2547 = vmatpush1.msra.mxu0 %v2311
      %2548 = vmatprep.subr.mxu0 0.0
      %2549 = vmatpush2.msra.mxu0 0.0
      %2550 = vmatprep.subr.mxu0 0.0
      %2551 = vmatpush2.msra.mxu0 0.0
      %2552 = vmatprep.subr.mxu0 0.0
      %2553 = vmatpush2.msra.mxu0 0.0
      %2554 = vmatprep.subr.mxu0 0.0
      %2555 = vmatpush2.msra.mxu0 0.0
      %2556 = vmatprep.subr.mxu0 0.0
      %2557 = vmatpush2.msra.mxu0 0.0
      %2558 = vmatprep.subr.mxu0 0.0
      %2559 = vmatpush2.msra.mxu0 0.0
      %2560 = vmatprep.subr.mxu0 0.0
      %2561 = vmatpush2.msra.mxu0 0.0
      %2562 = vmatprep.subr.mxu0 0.0
      %2563 = vmatpush2.msra.mxu0 0.0
      %2564 = vmatprep.subr.mxu0 0.0
      %2565 = vmatpush2.msra.mxu0 0.0
      %2566 = vmatprep.subr.mxu0 0.0
      %2567 = vmatpush2.msra.mxu0 0.0
      %2568 = vmatprep.subr.mxu0 0.0
      %2569 = vmatpush2.msra.mxu0 0.0
      %2570 = vmatprep.subr.mxu0 0.0
      %2571 = vmatpush2.msra.mxu0 0.0
      %2572 = vmatprep.subr.mxu0 0.0
      %2573 = vmatpush2.msra.mxu0 0.0
      %2574 = vmatprep.subr.mxu0 0.0
      %2575 = vmatpush2.msra.mxu0 0.0
      %2576 = vmatprep.subr.mxu0 0.0
      %2577 = vmatpush2.msra.mxu0 0.0
      %2578 = vmatprep.subr.mxu0 0.0
      %2579 = vmatpush2.msra.mxu0 0.0
      %2580 = vmatprep.mubr.f32.mxu0 0.0
      %2581 = vmatmul.mubr.f32.gmra.mxu0 %v2514
      %v2582 = vpop.f32.mrf.mxu0
      %v2583 = vadd.f32 %v2414, %v2582
      %v2584 = vpop.f32.mrf.mxu0
      %2585 = vdwg.mxu0
      %v2587 = vrot.slane %v2583, 4
      %v2589 = vadd.f32 %v2397, %v2587
      %v2590 = vxor.u32 %v2589, 2147483648
      %v2591 = vmul.f32 %v2590, 1.442695
      %v2592 = vpow.pop %v2591
      %v2593 = vadd.f32 %v2592, 1.0
      %v2594 = vrcp.pop %v2593
      %v2595 = vmul.f32 1.0, %v2594
      %2596 = vrot.lane.b32.xlu0 %v2587, 64
      %v2597 = vpop.permute.xlu0 %2596
      %v2599 = vmul.f32 %v2595, %v2597
      %2601 = vrot.lane.b32.xlu0 %v2599, 64
      %v2602 = vpop.permute.xlu0 %2601
      %v2604 = vadd.f32 %v2397, %v2602
      %v2605 = vtanh.pop %v2604
      %v2606 = vsub.f32 1.0, %v2595
      %2608 = vrot.lane.b32.xlu0 %v2605, 96
      %v2609 = vpop.permute.xlu0 %2608
      %v2611 = vmul.f32 %v2606, %v2609
      %v2612 = vrot.slane %v2510, 4
      %v2614 = vmul.f32 %v2595, %v2612
      %v2615 = vadd.f32 %v2611, %v2614
      %v2617 = vrot.slane %v2615, 4
      %2618 = vrot.lane.b32.xlu0 %v2617, 96
      %v2619 = vpop.permute.xlu0 %2618
      %v2620 = vsel %vm1421, %v2619, 0
      %2622 = vmatprep.subr.mxu0 0.0
      %2623 = vmatpush1.msra.mxu0 0.0
      %2624 = vmatprep.subr.mxu0 0.0
      %2625 = vmatpush1.msra.mxu0 0.0
      %2626 = vmatprep.subr.mxu0 0.0
      %2627 = vmatpush1.msra.mxu0 0.0
      %2628 = vmatprep.subr.mxu0 0.0
      %2629 = vmatpush1.msra.mxu0 0.0
      %2630 = vmatprep.subr.mxu0 0.0
      %2631 = vmatpush1.msra.mxu0 0.0
      %2632 = vmatprep.subr.mxu0 0.0
      %2633 = vmatpush1.msra.mxu0 0.0
      %2634 = vmatprep.subr.mxu0 0.0
      %2635 = vmatpush1.msra.mxu0 0.0
      %2636 = vmatprep.subr.mxu0 0.0
      %2637 = vmatpush1.msra.mxu0 0.0
      %2638 = vmatprep.subr.mxu0 0.0
      %2639 = vmatpush1.msra.mxu0 0.0
      %2640 = vmatprep.subr.mxu0 0.0
      %2641 = vmatpush1.msra.mxu0 0.0
      %2642 = vmatprep.subr.mxu0 0.0
      %2643 = vmatpush1.msra.mxu0 0.0
      %2644 = vmatprep.subr.mxu0 0.0
      %2645 = vmatpush1.msra.mxu0 0.0
      %2646 = vmatprep.subr.mxu0 0.0
      %2647 = vmatpush1.msra.mxu0 %v2314
      %2648 = vmatprep.subr.mxu0 0.0
      %2649 = vmatpush1.msra.mxu0 %v2313
      %2650 = vmatprep.subr.mxu0 0.0
      %2651 = vmatpush1.msra.mxu0 %v2312
      %2652 = vmatprep.subr.mxu0 0.0
      %2653 = vmatpush1.msra.mxu0 %v2311
      %2654 = vmatprep.subr.mxu0 0.0
      %2655 = vmatpush2.msra.mxu0 0.0
      %2656 = vmatprep.subr.mxu0 0.0
      %2657 = vmatpush2.msra.mxu0 0.0
      %2658 = vmatprep.subr.mxu0 0.0
      %2659 = vmatpush2.msra.mxu0 0.0
      %2660 = vmatprep.subr.mxu0 0.0
      %2661 = vmatpush2.msra.mxu0 0.0
      %2662 = vmatprep.subr.mxu0 0.0
      %2663 = vmatpush2.msra.mxu0 0.0
      %2664 = vmatprep.subr.mxu0 0.0
      %2665 = vmatpush2.msra.mxu0 0.0
      %2666 = vmatprep.subr.mxu0 0.0
      %2667 = vmatpush2.msra.mxu0 0.0
      %2668 = vmatprep.subr.mxu0 0.0
      %2669 = vmatpush2.msra.mxu0 0.0
      %2670 = vmatprep.subr.mxu0 0.0
      %2671 = vmatpush2.msra.mxu0 0.0
      %2672 = vmatprep.subr.mxu0 0.0
      %2673 = vmatpush2.msra.mxu0 0.0
      %2674 = vmatprep.subr.mxu0 0.0
      %2675 = vmatpush2.msra.mxu0 0.0
      %2676 = vmatprep.subr.mxu0 0.0
      %2677 = vmatpush2.msra.mxu0 0.0
      %2678 = vmatprep.subr.mxu0 0.0
      %2679 = vmatpush2.msra.mxu0 0.0
      %2680 = vmatprep.subr.mxu0 0.0
      %2681 = vmatpush2.msra.mxu0 0.0
      %2682 = vmatprep.subr.mxu0 0.0
      %2683 = vmatpush2.msra.mxu0 0.0
      %2684 = vmatprep.subr.mxu0 0.0
      %2685 = vmatpush2.msra.mxu0 0.0
      %2686 = vmatprep.mubr.f32.mxu0 0.0
      %2687 = vmatmul.mubr.f32.gmra.mxu0 %v2620
      %v2688 = vpop.f32.mrf.mxu0
      %v2689 = vadd.f32 %v2414, %v2688
      %v2690 = vpop.f32.mrf.mxu0
      %2691 = vdwg.mxu0
      %v2692 = vadd.f32 %v2402, %v2689
      %v2693 = vxor.u32 %v2692, 2147483648
      %v2694 = vmul.f32 %v2693, 1.442695
      %v2695 = vpow.pop %v2694
      %v2696 = vadd.f32 %v2695, 1.0
      %v2697 = vrcp.pop %v2696
      %v2698 = vmul.f32 1.0, %v2697
      %2700 = vrot.lane.b32.xlu0 %v2689, 64
      %v2701 = vpop.permute.xlu0 %2700
      %v2703 = vmul.f32 %v2698, %v2701
      %2705 = vrot.lane.b32.xlu0 %v2703, 64
      %v2706 = vpop.permute.xlu0 %2705
      %v2708 = vadd.f32 %v2402, %v2706
      %v2709 = vtanh.pop %v2708
      %v2710 = vsub.f32 1.0, %v2698
      %2712 = vrot.lane.b32.xlu0 %v2709, 96
      %v2713 = vpop.permute.xlu0 %2712
      %v2715 = vmul.f32 %v2710, %v2713
      %v2717 = vmul.f32 %v2698, %v2617
      %v2718 = vadd.f32 %v2715, %v2717
      %2720 = vrot.lane.b32.xlu0 %v2718, 96
      %v2721 = vpop.permute.xlu0 %2720
      %v2722 = vsel %vm1421, %v2721, 0
      %2724 = vmatprep.subr.mxu0 0.0
      %2725 = vmatpush1.msra.mxu0 0.0
      %2726 = vmatprep.subr.mxu0 0.0
      %2727 = vmatpush1.msra.mxu0 0.0
      %2728 = vmatprep.subr.mxu0 0.0
      %2729 = vmatpush1.msra.mxu0 0.0
      %2730 = vmatprep.subr.mxu0 0.0
      %2731 = vmatpush1.msra.mxu0 0.0
      %2732 = vmatprep.subr.mxu0 0.0
      %2733 = vmatpush1.msra.mxu0 0.0
      %2734 = vmatprep.subr.mxu0 0.0
      %2735 = vmatpush1.msra.mxu0 0.0
      %2736 = vmatprep.subr.mxu0 0.0
      %2737 = vmatpush1.msra.mxu0 0.0
      %2738 = vmatprep.subr.mxu0 0.0
      %2739 = vmatpush1.msra.mxu0 0.0
      %2740 = vmatprep.subr.mxu0 0.0
      %2741 = vmatpush1.msra.mxu0 0.0
      %2742 = vmatprep.subr.mxu0 0.0
      %2743 = vmatpush1.msra.mxu0 0.0
      %2744 = vmatprep.subr.mxu0 0.0
      %2745 = vmatpush1.msra.mxu0 0.0
      %2746 = vmatprep.subr.mxu0 0.0
      %2747 = vmatpush1.msra.mxu0 0.0
      %2748 = vmatprep.subr.mxu0 0.0
      %2749 = vmatpush1.msra.mxu0 %v2314
      %2750 = vmatprep.subr.mxu0 0.0
      %2751 = vmatpush1.msra.mxu0 %v2313
      %2752 = vmatprep.subr.mxu0 0.0
      %2753 = vmatpush1.msra.mxu0 %v2312
      %2754 = vmatprep.subr.mxu0 0.0
      %2755 = vmatpush1.msra.mxu0 %v2311
      %2756 = vmatprep.subr.mxu0 0.0
      %2757 = vmatpush2.msra.mxu0 0.0
      %2758 = vmatprep.subr.mxu0 0.0
      %2759 = vmatpush2.msra.mxu0 0.0
      %2760 = vmatprep.subr.mxu0 0.0
      %2761 = vmatpush2.msra.mxu0 0.0
      %2762 = vmatprep.subr.mxu0 0.0
      %2763 = vmatpush2.msra.mxu0 0.0
      %2764 = vmatprep.subr.mxu0 0.0
      %2765 = vmatpush2.msra.mxu0 0.0
      %2766 = vmatprep.subr.mxu0 0.0
      %2767 = vmatpush2.msra.mxu0 0.0
      %2768 = vmatprep.subr.mxu0 0.0
      %2769 = vmatpush2.msra.mxu0 0.0
      %2770 = vmatprep.subr.mxu0 0.0
      %2771 = vmatpush2.msra.mxu0 0.0
      %2772 = vmatprep.subr.mxu0 0.0
      %2773 = vmatpush2.msra.mxu0 0.0
      %2774 = vmatprep.subr.mxu0 0.0
      %2775 = vmatpush2.msra.mxu0 0.0
      %2776 = vmatprep.subr.mxu0 0.0
      %2777 = vmatpush2.msra.mxu0 0.0
      %2778 = vmatprep.subr.mxu0 0.0
      %2779 = vmatpush2.msra.mxu0 0.0
      %2780 = vmatprep.subr.mxu0 0.0
      %2781 = vmatpush2.msra.mxu0 0.0
      %2782 = vmatprep.subr.mxu0 0.0
      %2783 = vmatpush2.msra.mxu0 0.0
      %2784 = vmatprep.subr.mxu0 0.0
      %2785 = vmatpush2.msra.mxu0 0.0
      %2786 = vmatprep.subr.mxu0 0.0
      %2787 = vmatpush2.msra.mxu0 0.0
      %2788 = vmatprep.mubr.f32.mxu0 0.0
      %2789 = vmatmul.mubr.f32.gmra.mxu0 %v2722
      %v2790 = vpop.f32.mrf.mxu0
      %v2791 = vadd.f32 %v2414, %v2790
      %v2792 = vpop.f32.mrf.mxu0
      %2793 = vdwg.mxu0
      %v2795 = vrot.slane %v2791, 4
      %v2797 = vadd.f32 %v2402, %v2795
      %v2798 = vxor.u32 %v2797, 2147483648
      %v2799 = vmul.f32 %v2798, 1.442695
      %v2800 = vpow.pop %v2799
      %v2801 = vadd.f32 %v2800, 1.0
      %v2802 = vrcp.pop %v2801
      %v2803 = vmul.f32 1.0, %v2802
      %2804 = vrot.lane.b32.xlu0 %v2795, 64
      %v2805 = vpop.permute.xlu0 %2804
      %v2807 = vmul.f32 %v2803, %v2805
      %2809 = vrot.lane.b32.xlu0 %v2807, 64
      %v2810 = vpop.permute.xlu0 %2809
      %v2812 = vadd.f32 %v2402, %v2810
      %v2813 = vtanh.pop %v2812
      %v2814 = vsub.f32 1.0, %v2803
      %2816 = vrot.lane.b32.xlu0 %v2813, 96
      %v2817 = vpop.permute.xlu0 %2816
      %v2819 = vmul.f32 %v2814, %v2817
      %v2820 = vrot.slane %v2718, 4
      %v2822 = vmul.f32 %v2803, %v2820
      %v2823 = vadd.f32 %v2819, %v2822
      %v2825 = vrot.slane %v2823, 4
      %2826 = vrot.lane.b32.xlu0 %v2825, 96
      %v2827 = vpop.permute.xlu0 %2826
      %v2828 = vsel %vm1421, %v2827, 0
      %2830 = vmatprep.subr.mxu0 0.0
      %2831 = vmatpush1.msra.mxu0 0.0
      %2832 = vmatprep.subr.mxu0 0.0
      %2833 = vmatpush1.msra.mxu0 0.0
      %2834 = vmatprep.subr.mxu0 0.0
      %2835 = vmatpush1.msra.mxu0 0.0
      %2836 = vmatprep.subr.mxu0 0.0
      %2837 = vmatpush1.msra.mxu0 0.0
      %2838 = vmatprep.subr.mxu0 0.0
      %2839 = vmatpush1.msra.mxu0 0.0
      %2840 = vmatprep.subr.mxu0 0.0
      %2841 = vmatpush1.msra.mxu0 0.0
      %2842 = vmatprep.subr.mxu0 0.0
      %2843 = vmatpush1.msra.mxu0 0.0
      %2844 = vmatprep.subr.mxu0 0.0
      %2845 = vmatpush1.msra.mxu0 0.0
      %2846 = vmatprep.subr.mxu0 0.0
      %2847 = vmatpush1.msra.mxu0 0.0
      %2848 = vmatprep.subr.mxu0 0.0
      %2849 = vmatpush1.msra.mxu0 0.0
      %2850 = vmatprep.subr.mxu0 0.0
      %2851 = vmatpush1.msra.mxu0 0.0
      %2852 = vmatprep.subr.mxu0 0.0
      %2853 = vmatpush1.msra.mxu0 0.0
      %2854 = vmatprep.subr.mxu0 0.0
      %2855 = vmatpush1.msra.mxu0 %v2314
      %2856 = vmatprep.subr.mxu0 0.0
      %2857 = vmatpush1.msra.mxu0 %v2313
      %2858 = vmatprep.subr.mxu0 0.0
      %2859 = vmatpush1.msra.mxu0 %v2312
      %2860 = vmatprep.subr.mxu0 0.0
      %2861 = vmatpush1.msra.mxu0 %v2311
      %2862 = vmatprep.subr.mxu0 0.0
      %2863 = vmatpush2.msra.mxu0 0.0
      %2864 = vmatprep.subr.mxu0 0.0
      %2865 = vmatpush2.msra.mxu0 0.0
      %2866 = vmatprep.subr.mxu0 0.0
      %2867 = vmatpush2.msra.mxu0 0.0
      %2868 = vmatprep.subr.mxu0 0.0
      %2869 = vmatpush2.msra.mxu0 0.0
      %2870 = vmatprep.subr.mxu0 0.0
      %2871 = vmatpush2.msra.mxu0 0.0
      %2872 = vmatprep.subr.mxu0 0.0
      %2873 = vmatpush2.msra.mxu0 0.0
      %2874 = vmatprep.subr.mxu0 0.0
      %2875 = vmatpush2.msra.mxu0 0.0
      %2876 = vmatprep.subr.mxu0 0.0
      %2877 = vmatpush2.msra.mxu0 0.0
      %2878 = vmatprep.subr.mxu0 0.0
      %2879 = vmatpush2.msra.mxu0 0.0
      %2880 = vmatprep.subr.mxu0 0.0
      %2881 = vmatpush2.msra.mxu0 0.0
      %2882 = vmatprep.subr.mxu0 0.0
      %2883 = vmatpush2.msra.mxu0 0.0
      %2884 = vmatprep.subr.mxu0 0.0
      %2885 = vmatpush2.msra.mxu0 0.0
      %2886 = vmatprep.subr.mxu0 0.0
      %2887 = vmatpush2.msra.mxu0 0.0
      %2888 = vmatprep.subr.mxu0 0.0
      %2889 = vmatpush2.msra.mxu0 0.0
      %2890 = vmatprep.subr.mxu0 0.0
      %2891 = vmatpush2.msra.mxu0 0.0
      %2892 = vmatprep.subr.mxu0 0.0
      %2893 = vmatpush2.msra.mxu0 0.0
      %2894 = vmatprep.mubr.f32.mxu0 0.0
      %2895 = vmatmul.mubr.f32.gmra.mxu0 %v2828
      %v2896 = vpop.f32.mrf.mxu0
      %v2897 = vadd.f32 %v2414, %v2896
      %v2898 = vpop.f32.mrf.mxu0
      %2899 = vdwg.mxu0
      %v2900 = vadd.f32 %v2407, %v2897
      %v2901 = vxor.u32 %v2900, 2147483648
      %v2902 = vmul.f32 %v2901, 1.442695
      %v2903 = vpow.pop %v2902
      %v2904 = vadd.f32 %v2903, 1.0
      %v2905 = vrcp.pop %v2904
      %v2906 = vmul.f32 1.0, %v2905
      %2908 = vrot.lane.b32.xlu0 %v2897, 64
      %v2909 = vpop.permute.xlu0 %2908
      %v2911 = vmul.f32 %v2906, %v2909
      %2913 = vrot.lane.b32.xlu0 %v2911, 64
      %v2914 = vpop.permute.xlu0 %2913
      %v2916 = vadd.f32 %v2407, %v2914
      %v2917 = vtanh.pop %v2916
      %v2918 = vsub.f32 1.0, %v2906
      %2920 = vrot.lane.b32.xlu0 %v2917, 96
      %v2921 = vpop.permute.xlu0 %2920
      %v2923 = vmul.f32 %v2918, %v2921
      %v2925 = vmul.f32 %v2906, %v2825
      %v2926 = vadd.f32 %v2923, %v2925
      %v2927 = vld [vmem:[%s1281] sm:$0xff]
      %v2928 = vld [vmem:[%s1281 + $0x8] sm:$0xff]
      %v2929 = vld [vmem:[%s1281 + $0x10] sm:$0xff]
      %v2930 = vld [vmem:[%s1281 + $0x18] sm:$0xff]
      %v2931 = vld [vmem:[%s1284] sm:$0x1]
      %v2932 = vld [vmem:[%s1288 + $0x1] sm:$0x1]
      %v2933 = vld [vmem:[%s1288 + $0x2] sm:$0x1]
      %v2934 = vld [vmem:[%s1276] sm:$0xff]
      %v2935 = vld [vmem:[%s1276 + $0x8] sm:$0xff]
      %v2936 = vld [vmem:[%s1276 + $0x10] sm:$0xff]
      %v2937 = vld [vmem:[%s1276 + $0x18] sm:$0xff]
      %v2938 = vld [vmem:[%s1288] sm:$0x1]
      %v2939 = vlaneseq
      %v2940 = vshrl.u32 %v2939, 7
      %v2941 = vsub.s32 0, %v2940
      %v2942 = vrot.slane %v2938, %v2941
      %2944 = vrot.lane.b32.xlu0 %v2926, 96
      %v2945 = vpop.permute.xlu0 %2944
      %v2946 = vsel %vm1421, %v2945, 0
      %2948 = vmatprep.subr.mxu0 0.0
      %2949 = vmatpush1.msra.mxu0 0.0
      %2950 = vmatprep.subr.mxu0 0.0
      %2951 = vmatpush1.msra.mxu0 0.0
      %2952 = vmatprep.subr.mxu0 0.0
      %2953 = vmatpush1.msra.mxu0 0.0
      %2954 = vmatprep.subr.mxu0 0.0
      %2955 = vmatpush1.msra.mxu0 0.0
      %2956 = vmatprep.subr.mxu0 0.0
      %2957 = vmatpush1.msra.mxu0 0.0
      %2958 = vmatprep.subr.mxu0 0.0
      %2959 = vmatpush1.msra.mxu0 0.0
      %2960 = vmatprep.subr.mxu0 0.0
      %2961 = vmatpush1.msra.mxu0 0.0
      %2962 = vmatprep.subr.mxu0 0.0
      %2963 = vmatpush1.msra.mxu0 0.0
      %2964 = vmatprep.subr.mxu0 0.0
      %2965 = vmatpush1.msra.mxu0 0.0
      %2966 = vmatprep.subr.mxu0 0.0
      %2967 = vmatpush1.msra.mxu0 0.0
      %2968 = vmatprep.subr.mxu0 0.0
      %2969 = vmatpush1.msra.mxu0 0.0
      %2970 = vmatprep.subr.mxu0 0.0
      %2971 = vmatpush1.msra.mxu0 0.0
      %2972 = vmatprep.subr.mxu0 0.0
      %2973 = vmatpush1.msra.mxu0 %v2937
      %2974 = vmatprep.subr.mxu0 0.0
      %2975 = vmatpush1.msra.mxu0 %v2936
      %2976 = vmatprep.subr.mxu0 0.0
      %2977 = vmatpush1.msra.mxu0 %v2935
      %2978 = vmatprep.subr.mxu0 0.0
      %2979 = vmatpush1.msra.mxu0 %v2934
      %2980 = vmatprep.subr.mxu0 0.0
      %2981 = vmatpush2.msra.mxu0 0.0
      %2982 = vmatprep.subr.mxu0 0.0
      %2983 = vmatpush2.msra.mxu0 0.0
      %2984 = vmatprep.subr.mxu0 0.0
      %2985 = vmatpush2.msra.mxu0 0.0
      %2986 = vmatprep.subr.mxu0 0.0
      %2987 = vmatpush2.msra.mxu0 0.0
      %2988 = vmatprep.subr.mxu0 0.0
      %2989 = vmatpush2.msra.mxu0 0.0
      %2990 = vmatprep.subr.mxu0 0.0
      %2991 = vmatpush2.msra.mxu0 0.0
      %2992 = vmatprep.subr.mxu0 0.0
      %2993 = vmatpush2.msra.mxu0 0.0
      %2994 = vmatprep.subr.mxu0 0.0
      %2995 = vmatpush2.msra.mxu0 0.0
      %2996 = vmatprep.subr.mxu0 0.0
      %2997 = vmatpush2.msra.mxu0 0.0
      %2998 = vmatprep.subr.mxu0 0.0
      %2999 = vmatpush2.msra.mxu0 0.0
      %3000 = vmatprep.subr.mxu0 0.0
      %3001 = vmatpush2.msra.mxu0 0.0
      %3002 = vmatprep.subr.mxu0 0.0
      %3003 = vmatpush2.msra.mxu0 0.0
      %3004 = vmatprep.subr.mxu0 0.0
      %3005 = vmatpush2.msra.mxu0 0.0
      %3006 = vmatprep.subr.mxu0 0.0
      %3007 = vmatpush2.msra.mxu0 0.0
      %3008 = vmatprep.subr.mxu0 0.0
      %3009 = vmatpush2.msra.mxu0 0.0
      %3010 = vmatprep.subr.mxu0 0.0
      %3011 = vmatpush2.msra.mxu0 0.0
      %3012 = vmatprep.mubr.f32.mxu0 0.0
      %3013 = vmatmul.mubr.f32.gmra.mxu0 %v2946
      %v3014 = vpop.f32.mrf.mxu0
      %v3015 = vadd.f32 %v2942, %v3014
      %v3016 = vpop.f32.mrf.mxu0
      %3017 = vdwg.mxu0
      %3018 = vmatprep.subr.mxu0 0.0
      %3019 = vmatpush1.msra.mxu0 0.0
      %3020 = vmatprep.subr.mxu0 0.0
      %3021 = vmatpush1.msra.mxu0 0.0
      %3022 = vmatprep.subr.mxu0 0.0
      %3023 = vmatpush1.msra.mxu0 0.0
      %3024 = vmatprep.subr.mxu0 0.0
      %3025 = vmatpush1.msra.mxu0 0.0
      %3026 = vmatprep.subr.mxu0 0.0
      %3027 = vmatpush1.msra.mxu0 0.0
      %3028 = vmatprep.subr.mxu0 0.0
      %3029 = vmatpush1.msra.mxu0 0.0
      %3030 = vmatprep.subr.mxu0 0.0
      %3031 = vmatpush1.msra.mxu0 0.0
      %3032 = vmatprep.subr.mxu0 0.0
      %3033 = vmatpush1.msra.mxu0 0.0
      %3034 = vmatprep.subr.mxu0 0.0
      %3035 = vmatpush1.msra.mxu0 0.0
      %3036 = vmatprep.subr.mxu0 0.0
      %3037 = vmatpush1.msra.mxu0 0.0
      %3038 = vmatprep.subr.mxu0 0.0
      %3039 = vmatpush1.msra.mxu0 0.0
      %3040 = vmatprep.subr.mxu0 0.0
      %3041 = vmatpush1.msra.mxu0 0.0
      %3042 = vmatprep.subr.mxu0 0.0
      %3043 = vmatpush1.msra.mxu0 %v2930
      %3044 = vmatprep.subr.mxu0 0.0
      %3045 = vmatpush1.msra.mxu0 %v2929
      %3046 = vmatprep.subr.mxu0 0.0
      %3047 = vmatpush1.msra.mxu0 %v2928
      %3048 = vmatprep.subr.mxu0 0.0
      %3049 = vmatpush1.msra.mxu0 %v2927
      %3050 = vmatprep.subr.mxu0 0.0
      %3051 = vmatpush2.msra.mxu0 0.0
      %3052 = vmatprep.subr.mxu0 0.0
      %3053 = vmatpush2.msra.mxu0 0.0
      %3054 = vmatprep.subr.mxu0 0.0
      %3055 = vmatpush2.msra.mxu0 0.0
      %3056 = vmatprep.subr.mxu0 0.0
      %3057 = vmatpush2.msra.mxu0 0.0
      %3058 = vmatprep.subr.mxu0 0.0
      %3059 = vmatpush2.msra.mxu0 0.0
      %3060 = vmatprep.subr.mxu0 0.0
      %3061 = vmatpush2.msra.mxu0 0.0
      %3062 = vmatprep.subr.mxu0 0.0
      %3063 = vmatpush2.msra.mxu0 0.0
      %3064 = vmatprep.subr.mxu0 0.0
      %3065 = vmatpush2.msra.mxu0 0.0
      %3066 = vmatprep.subr.mxu0 0.0
      %3067 = vmatpush2.msra.mxu0 0.0
      %3068 = vmatprep.subr.mxu0 0.0
      %3069 = vmatpush2.msra.mxu0 0.0
      %3070 = vmatprep.subr.mxu0 0.0
      %3071 = vmatpush2.msra.mxu0 0.0
      %3072 = vmatprep.subr.mxu0 0.0
      %3073 = vmatpush2.msra.mxu0 0.0
      %3074 = vmatprep.subr.mxu0 0.0
      %3075 = vmatpush2.msra.mxu0 0.0
      %3076 = vmatprep.subr.mxu0 0.0
      %3077 = vmatpush2.msra.mxu0 0.0
      %3078 = vmatprep.subr.mxu0 0.0
      %3079 = vmatpush2.msra.mxu0 0.0
      %3080 = vmatprep.subr.mxu0 0.0
      %3081 = vmatpush2.msra.mxu0 0.0
      %3082 = vmatprep.mubr.f32.mxu0 0.0
      %3083 = vmatmul.mubr.f32.gmra.mxu0 %v2514
      %v3084 = vpop.f32.mrf.mxu0
      %v3085 = vadd.f32 0.0, %v3084
      %v3086 = vpop.f32.mrf.mxu0
      %3087 = vdwg.mxu0
      %v3088 = vadd.f32 %v3015, %v3085
      %v3089 = vlaneseq
      %v3090 = vshrl.u32 %v3089, 7
      %v3091 = vsub.s32 0, %v3090
      %v3092 = vrot.slane %v2932, %v3091
      %v3093 = vadd.f32 %v3088, %v3092
      %v3094 = vtanh.pop %v3093
      %v3096 = vlaneseq
      %v3097 = vshrl.u32 %v3096, 7
      %v3098 = vsub.s32 0, %v3097
      %v3099 = vrot.slane %v2931, %v3098
      %v3101 = vmul.f32 %v3094, %v3099
      %vm3102 = vcmask 257024
      %v3103 = vsel %vm3102, %v3101, 0.0
      %3104 = vadd.xlane.f32.xlu0 %v3103
      %v3105 = vpop.xlane.xlu0 %3104
      %v3106 = vlaneseq
      %v3107 = vshrl.u32 %v3106, 7
      %v3108 = vsub.s32 0, %v3107
      %v3109 = vrot.slane %v2933, %v3108
      %v3110 = vadd.f32 %v3105, %v3109
      %3111 = vmatprep.subr.mxu0 0.0
      %3112 = vmatpush1.msra.mxu0 0.0
      %3113 = vmatprep.subr.mxu0 0.0
      %3114 = vmatpush1.msra.mxu0 0.0
      %3115 = vmatprep.subr.mxu0 0.0
      %3116 = vmatpush1.msra.mxu0 0.0
      %3117 = vmatprep.subr.mxu0 0.0
      %3118 = vmatpush1.msra.mxu0 0.0
      %3119 = vmatprep.subr.mxu0 0.0
      %3120 = vmatpush1.msra.mxu0 0.0
      %3121 = vmatprep.subr.mxu0 0.0
      %3122 = vmatpush1.msra.mxu0 0.0
      %3123 = vmatprep.subr.mxu0 0.0
      %3124 = vmatpush1.msra.mxu0 0.0
      %3125 = vmatprep.subr.mxu0 0.0
      %3126 = vmatpush1.msra.mxu0 0.0
      %3127 = vmatprep.subr.mxu0 0.0
      %3128 = vmatpush1.msra.mxu0 0.0
      %3129 = vmatprep.subr.mxu0 0.0
      %3130 = vmatpush1.msra.mxu0 0.0
      %3131 = vmatprep.subr.mxu0 0.0
      %3132 = vmatpush1.msra.mxu0 0.0
      %3133 = vmatprep.subr.mxu0 0.0
      %3134 = vmatpush1.msra.mxu0 0.0
      %3135 = vmatprep.subr.mxu0 0.0
      %3136 = vmatpush1.msra.mxu0 %v2930
      %3137 = vmatprep.subr.mxu0 0.0
      %3138 = vmatpush1.msra.mxu0 %v2929
      %3139 = vmatprep.subr.mxu0 0.0
      %3140 = vmatpush1.msra.mxu0 %v2928
      %3141 = vmatprep.subr.mxu0 0.0
      %3142 = vmatpush1.msra.mxu0 %v2927
      %3143 = vmatprep.subr.mxu0 0.0
      %3144 = vmatpush2.msra.mxu0 0.0
      %3145 = vmatprep.subr.mxu0 0.0
      %3146 = vmatpush2.msra.mxu0 0.0
      %3147 = vmatprep.subr.mxu0 0.0
      %3148 = vmatpush2.msra.mxu0 0.0
      %3149 = vmatprep.subr.mxu0 0.0
      %3150 = vmatpush2.msra.mxu0 0.0
      %3151 = vmatprep.subr.mxu0 0.0
      %3152 = vmatpush2.msra.mxu0 0.0
      %3153 = vmatprep.subr.mxu0 0.0
      %3154 = vmatpush2.msra.mxu0 0.0
      %3155 = vmatprep.subr.mxu0 0.0
      %3156 = vmatpush2.msra.mxu0 0.0
      %3157 = vmatprep.subr.mxu0 0.0
      %3158 = vmatpush2.msra.mxu0 0.0
      %3159 = vmatprep.subr.mxu0 0.0
      %3160 = vmatpush2.msra.mxu0 0.0
      %3161 = vmatprep.subr.mxu0 0.0
      %3162 = vmatpush2.msra.mxu0 0.0
      %3163 = vmatprep.subr.mxu0 0.0
      %3164 = vmatpush2.msra.mxu0 0.0
      %3165 = vmatprep.subr.mxu0 0.0
      %3166 = vmatpush2.msra.mxu0 0.0
      %3167 = vmatprep.subr.mxu0 0.0
      %3168 = vmatpush2.msra.mxu0 0.0
      %3169 = vmatprep.subr.mxu0 0.0
      %3170 = vmatpush2.msra.mxu0 0.0
      %3171 = vmatprep.subr.mxu0 0.0
      %3172 = vmatpush2.msra.mxu0 0.0
      %3173 = vmatprep.subr.mxu0 0.0
      %3174 = vmatpush2.msra.mxu0 0.0
      %3175 = vmatprep.mubr.f32.mxu0 0.0
      %3176 = vmatmul.mubr.f32.gmra.mxu0 %v2620
      %v3177 = vpop.f32.mrf.mxu0
      %v3178 = vadd.f32 0.0, %v3177
      %v3179 = vpop.f32.mrf.mxu0
      %3180 = vdwg.mxu0
      %v3181 = vadd.f32 %v3015, %v3178
      %v3182 = vadd.f32 %v3181, %v3092
      %v3183 = vtanh.pop %v3182
      %v3184 = vmul.f32 %v3183, %v3099
      %v3185 = vsel %vm3102, %v3184, 0.0
      %3186 = vadd.xlane.f32.xlu0 %v3185
      %v3187 = vpop.xlane.xlu0 %3186
      %v3188 = vadd.f32 %v3187, %v3109
      %3189 = vmatprep.subr.mxu0 0.0
      %3190 = vmatpush1.msra.mxu0 0.0
      %3191 = vmatprep.subr.mxu0 0.0
      %3192 = vmatpush1.msra.mxu0 0.0
      %3193 = vmatprep.subr.mxu0 0.0
      %3194 = vmatpush1.msra.mxu0 0.0
      %3195 = vmatprep.subr.mxu0 0.0
      %3196 = vmatpush1.msra.mxu0 0.0
      %3197 = vmatprep.subr.mxu0 0.0
      %3198 = vmatpush1.msra.mxu0 0.0
      %3199 = vmatprep.subr.mxu0 0.0
      %3200 = vmatpush1.msra.mxu0 0.0
      %3201 = vmatprep.subr.mxu0 0.0
      %3202 = vmatpush1.msra.mxu0 0.0
      %3203 = vmatprep.subr.mxu0 0.0
      %3204 = vmatpush1.msra.mxu0 0.0
      %3205 = vmatprep.subr.mxu0 0.0
      %3206 = vmatpush1.msra.mxu0 0.0
      %3207 = vmatprep.subr.mxu0 0.0
      %3208 = vmatpush1.msra.mxu0 0.0
      %3209 = vmatprep.subr.mxu0 0.0
      %3210 = vmatpush1.msra.mxu0 0.0
      %3211 = vmatprep.subr.mxu0 0.0
      %3212 = vmatpush1.msra.mxu0 0.0
      %3213 = vmatprep.subr.mxu0 0.0
      %3214 = vmatpush1.msra.mxu0 %v2930
      %3215 = vmatprep.subr.mxu0 0.0
      %3216 = vmatpush1.msra.mxu0 %v2929
      %3217 = vmatprep.subr.mxu0 0.0
      %3218 = vmatpush1.msra.mxu0 %v2928
      %3219 = vmatprep.subr.mxu0 0.0
      %3220 = vmatpush1.msra.mxu0 %v2927
      %3221 = vmatprep.subr.mxu0 0.0
      %3222 = vmatpush2.msra.mxu0 0.0
      %3223 = vmatprep.subr.mxu0 0.0
      %3224 = vmatpush2.msra.mxu0 0.0
      %3225 = vmatprep.subr.mxu0 0.0
      %3226 = vmatpush2.msra.mxu0 0.0
      %3227 = vmatprep.subr.mxu0 0.0
      %3228 = vmatpush2.msra.mxu0 0.0
      %3229 = vmatprep.subr.mxu0 0.0
      %3230 = vmatpush2.msra.mxu0 0.0
      %3231 = vmatprep.subr.mxu0 0.0
      %3232 = vmatpush2.msra.mxu0 0.0
      %3233 = vmatprep.subr.mxu0 0.0
      %3234 = vmatpush2.msra.mxu0 0.0
      %3235 = vmatprep.subr.mxu0 0.0
      %3236 = vmatpush2.msra.mxu0 0.0
      %3237 = vmatprep.subr.mxu0 0.0
      %3238 = vmatpush2.msra.mxu0 0.0
      %3239 = vmatprep.subr.mxu0 0.0
      %3240 = vmatpush2.msra.mxu0 0.0
      %3241 = vmatprep.subr.mxu0 0.0
      %3242 = vmatpush2.msra.mxu0 0.0
      %3243 = vmatprep.subr.mxu0 0.0
      %3244 = vmatpush2.msra.mxu0 0.0
      %3245 = vmatprep.subr.mxu0 0.0
      %3246 = vmatpush2.msra.mxu0 0.0
      %3247 = vmatprep.subr.mxu0 0.0
      %3248 = vmatpush2.msra.mxu0 0.0
      %3249 = vmatprep.subr.mxu0 0.0
      %3250 = vmatpush2.msra.mxu0 0.0
      %3251 = vmatprep.subr.mxu0 0.0
      %3252 = vmatpush2.msra.mxu0 0.0
      %3253 = vmatprep.mubr.f32.mxu0 0.0
      %3254 = vmatmul.mubr.f32.gmra.mxu0 %v2722
      %v3255 = vpop.f32.mrf.mxu0
      %v3256 = vadd.f32 0.0, %v3255
      %v3257 = vpop.f32.mrf.mxu0
      %3258 = vdwg.mxu0
      %v3259 = vadd.f32 %v3015, %v3256
      %v3260 = vadd.f32 %v3259, %v3092
      %v3261 = vtanh.pop %v3260
      %v3262 = vmul.f32 %v3261, %v3099
      %v3263 = vsel %vm3102, %v3262, 0.0
      %3264 = vadd.xlane.f32.xlu0 %v3263
      %v3265 = vpop.xlane.xlu0 %3264
      %v3266 = vadd.f32 %v3265, %v3109
      %3267 = vmatprep.subr.mxu0 0.0
      %3268 = vmatpush1.msra.mxu0 0.0
      %3269 = vmatprep.subr.mxu0 0.0
      %3270 = vmatpush1.msra.mxu0 0.0
      %3271 = vmatprep.subr.mxu0 0.0
      %3272 = vmatpush1.msra.mxu0 0.0
      %3273 = vmatprep.subr.mxu0 0.0
      %3274 = vmatpush1.msra.mxu0 0.0
      %3275 = vmatprep.subr.mxu0 0.0
      %3276 = vmatpush1.msra.mxu0 0.0
      %3277 = vmatprep.subr.mxu0 0.0
      %3278 = vmatpush1.msra.mxu0 0.0
      %3279 = vmatprep.subr.mxu0 0.0
      %3280 = vmatpush1.msra.mxu0 0.0
      %3281 = vmatprep.subr.mxu0 0.0
      %3282 = vmatpush1.msra.mxu0 0.0
      %3283 = vmatprep.subr.mxu0 0.0
      %3284 = vmatpush1.msra.mxu0 0.0
      %3285 = vmatprep.subr.mxu0 0.0
      %3286 = vmatpush1.msra.mxu0 0.0
      %3287 = vmatprep.subr.mxu0 0.0
      %3288 = vmatpush1.msra.mxu0 0.0
      %3289 = vmatprep.subr.mxu0 0.0
      %3290 = vmatpush1.msra.mxu0 0.0
      %3291 = vmatprep.subr.mxu0 0.0
      %3292 = vmatpush1.msra.mxu0 %v2930
      %3293 = vmatprep.subr.mxu0 0.0
      %3294 = vmatpush1.msra.mxu0 %v2929
      %3295 = vmatprep.subr.mxu0 0.0
      %3296 = vmatpush1.msra.mxu0 %v2928
      %3297 = vmatprep.subr.mxu0 0.0
      %3298 = vmatpush1.msra.mxu0 %v2927
      %3299 = vmatprep.subr.mxu0 0.0
      %3300 = vmatpush2.msra.mxu0 0.0
      %3301 = vmatprep.subr.mxu0 0.0
      %3302 = vmatpush2.msra.mxu0 0.0
      %3303 = vmatprep.subr.mxu0 0.0
      %3304 = vmatpush2.msra.mxu0 0.0
      %3305 = vmatprep.subr.mxu0 0.0
      %3306 = vmatpush2.msra.mxu0 0.0
      %3307 = vmatprep.subr.mxu0 0.0
      %3308 = vmatpush2.msra.mxu0 0.0
      %3309 = vmatprep.subr.mxu0 0.0
      %3310 = vmatpush2.msra.mxu0 0.0
      %3311 = vmatprep.subr.mxu0 0.0
      %3312 = vmatpush2.msra.mxu0 0.0
      %3313 = vmatprep.subr.mxu0 0.0
      %3314 = vmatpush2.msra.mxu0 0.0
      %3315 = vmatprep.subr.mxu0 0.0
      %3316 = vmatpush2.msra.mxu0 0.0
      %3317 = vmatprep.subr.mxu0 0.0
      %3318 = vmatpush2.msra.mxu0 0.0
      %3319 = vmatprep.subr.mxu0 0.0
      %3320 = vmatpush2.msra.mxu0 0.0
      %3321 = vmatprep.subr.mxu0 0.0
      %3322 = vmatpush2.msra.mxu0 0.0
      %3323 = vmatprep.subr.mxu0 0.0
      %3324 = vmatpush2.msra.mxu0 0.0
      %3325 = vmatprep.subr.mxu0 0.0
      %3326 = vmatpush2.msra.mxu0 0.0
      %3327 = vmatprep.subr.mxu0 0.0
      %3328 = vmatpush2.msra.mxu0 0.0
      %3329 = vmatprep.subr.mxu0 0.0
      %3330 = vmatpush2.msra.mxu0 0.0
      %3331 = vmatprep.mubr.f32.mxu0 0.0
      %3332 = vmatmul.mubr.f32.gmra.mxu0 %v2828
      %v3333 = vpop.f32.mrf.mxu0
      %v3334 = vadd.f32 0.0, %v3333
      %v3335 = vpop.f32.mrf.mxu0
      %3336 = vdwg.mxu0
      %v3337 = vadd.f32 %v3015, %v3334
      %v3338 = vadd.f32 %v3337, %v3092
      %v3339 = vtanh.pop %v3338
      %v3340 = vmul.f32 %v3339, %v3099
      %v3341 = vsel %vm3102, %v3340, 0.0
      %3342 = vadd.xlane.f32.xlu0 %v3341
      %v3343 = vpop.xlane.xlu0 %3342
      %v3344 = vadd.f32 %v3343, %v3109
      %3345 = vmatprep.subr.mxu0 0.0
      %3346 = vmatpush1.msra.mxu0 0.0
      %3347 = vmatprep.subr.mxu0 0.0
      %3348 = vmatpush1.msra.mxu0 0.0
      %3349 = vmatprep.subr.mxu0 0.0
      %3350 = vmatpush1.msra.mxu0 0.0
      %3351 = vmatprep.subr.mxu0 0.0
      %3352 = vmatpush1.msra.mxu0 0.0
      %3353 = vmatprep.subr.mxu0 0.0
      %3354 = vmatpush1.msra.mxu0 0.0
      %3355 = vmatprep.subr.mxu0 0.0
      %3356 = vmatpush1.msra.mxu0 0.0
      %3357 = vmatprep.subr.mxu0 0.0
      %3358 = vmatpush1.msra.mxu0 0.0
      %3359 = vmatprep.subr.mxu0 0.0
      %3360 = vmatpush1.msra.mxu0 0.0
      %3361 = vmatprep.subr.mxu0 0.0
      %3362 = vmatpush1.msra.mxu0 0.0
      %3363 = vmatprep.subr.mxu0 0.0
      %3364 = vmatpush1.msra.mxu0 0.0
      %3365 = vmatprep.subr.mxu0 0.0
      %3366 = vmatpush1.msra.mxu0 0.0
      %3367 = vmatprep.subr.mxu0 0.0
      %3368 = vmatpush1.msra.mxu0 0.0
      %3369 = vmatprep.subr.mxu0 0.0
      %3370 = vmatpush1.msra.mxu0 %v2930
      %3371 = vmatprep.subr.mxu0 0.0
      %3372 = vmatpush1.msra.mxu0 %v2929
      %3373 = vmatprep.subr.mxu0 0.0
      %3374 = vmatpush1.msra.mxu0 %v2928
      %3375 = vmatprep.subr.mxu0 0.0
      %3376 = vmatpush1.msra.mxu0 %v2927
      %3377 = vmatprep.subr.mxu0 0.0
      %3378 = vmatpush2.msra.mxu0 0.0
      %3379 = vmatprep.subr.mxu0 0.0
      %3380 = vmatpush2.msra.mxu0 0.0
      %3381 = vmatprep.subr.mxu0 0.0
      %3382 = vmatpush2.msra.mxu0 0.0
      %3383 = vmatprep.subr.mxu0 0.0
      %3384 = vmatpush2.msra.mxu0 0.0
      %3385 = vmatprep.subr.mxu0 0.0
      %3386 = vmatpush2.msra.mxu0 0.0
      %3387 = vmatprep.subr.mxu0 0.0
      %3388 = vmatpush2.msra.mxu0 0.0
      %3389 = vmatprep.subr.mxu0 0.0
      %3390 = vmatpush2.msra.mxu0 0.0
      %3391 = vmatprep.subr.mxu0 0.0
      %3392 = vmatpush2.msra.mxu0 0.0
      %3393 = vmatprep.subr.mxu0 0.0
      %3394 = vmatpush2.msra.mxu0 0.0
      %3395 = vmatprep.subr.mxu0 0.0
      %3396 = vmatpush2.msra.mxu0 0.0
      %3397 = vmatprep.subr.mxu0 0.0
      %3398 = vmatpush2.msra.mxu0 0.0
      %3399 = vmatprep.subr.mxu0 0.0
      %3400 = vmatpush2.msra.mxu0 0.0
      %3401 = vmatprep.subr.mxu0 0.0
      %3402 = vmatpush2.msra.mxu0 0.0
      %3403 = vmatprep.subr.mxu0 0.0
      %3404 = vmatpush2.msra.mxu0 0.0
      %3405 = vmatprep.subr.mxu0 0.0
      %3406 = vmatpush2.msra.mxu0 0.0
      %3407 = vmatprep.subr.mxu0 0.0
      %3408 = vmatpush2.msra.mxu0 0.0
      %3409 = vmatprep.mubr.f32.mxu0 0.0
      %3410 = vmatmul.mubr.f32.gmra.mxu0 %v2946
      %v3411 = vpop.f32.mrf.mxu0
      %v3412 = vadd.f32 0.0, %v3411
      %v3413 = vpop.f32.mrf.mxu0
      %3414 = vdwg.mxu0
      %v3415 = vadd.f32 %v3015, %v3412
      %v3416 = vadd.f32 %v3415, %v3092
      %v3417 = vtanh.pop %v3416
      %v3418 = vmul.f32 %v3417, %v3099
      %v3419 = vsel %vm3102, %v3418, 0.0
      %3420 = vadd.xlane.f32.xlu0 %v3419
      %v3421 = vpop.xlane.xlu0 %3420
      %v3422 = vadd.f32 %v3421, %v3109
      %v3423 = vmax.f32 %v3110, %v3188
      %v3424 = vmax.f32 %v3423, %v3266
      %v3425 = vmax.f32 %v3424, %v3344
      %v3426 = vmax.f32 %v3425, %v3422
      %v3427 = vsub.f32 %v3110, %v3426
      %v3428 = vmul.f32 %v3427, 1.442695
      %v3429 = vpow.pop %v3428
      %v3430 = vsub.f32 %v3188, %v3426
      %v3431 = vmul.f32 %v3430, 1.442695
      %v3432 = vpow.pop %v3431
      %v3433 = vsub.f32 %v3266, %v3426
      %v3434 = vmul.f32 %v3433, 1.442695
      %v3435 = vpow.pop %v3434
      %v3436 = vsub.f32 %v3344, %v3426
      %v3437 = vmul.f32 %v3436, 1.442695
      %v3438 = vpow.pop %v3437
      %v3439 = vsub.f32 %v3422, %v3426
      %v3440 = vmul.f32 %v3439, 1.442695
      %v3441 = vpow.pop %v3440
      %v3442 = vadd.f32 %v3429, %v3432
      %v3443 = vadd.f32 %v3442, %v3435
      %v3444 = vadd.f32 %v3443, %v3438
      %v3445 = vadd.f32 %v3444, %v3441
      %v3446 = vrcp.pop %v3445
      %v3447 = vmul.f32 1.0, %v3446
      %v3448 = vmul.f32 %v3429, %v3447
      %3450 = vset.pattern.permute.xlu0 0
      %3451 = vperm.xlu0 %3450, %v3448
      %v3452 = vpop.permute.xlu0 %3451
      %v3454 = vmul.f32 %v3452, %v2510
      %v3455 = vadd.f32 %v3454, 0.0
      %v3456 = vmul.f32 %v3432, %v3447
      %3458 = vset.pattern.permute.xlu0 0
      %3459 = vperm.xlu0 %3458, %v3456
      %v3460 = vpop.permute.xlu0 %3459
      %v3463 = vmul.f32 %v3460, %v2619
      %3465 = vrot.lane.b32.xlu0 %v3463, 32
      %v3466 = vpop.permute.xlu0 %3465
      %v3468 = vadd.f32 %v3455, %v3466
      %v3469 = vmul.f32 %v3435, %v3447
      %3471 = vset.pattern.permute.xlu0 0
      %3472 = vperm.xlu0 %3471, %v3469
      %v3473 = vpop.permute.xlu0 %3472
      %v3475 = vmul.f32 %v3473, %v2718
      %v3476 = vadd.f32 %v3468, %v3475
      %v3477 = vmul.f32 %v3438, %v3447
      %3479 = vset.pattern.permute.xlu0 0
      %3480 = vperm.xlu0 %3479, %v3477
      %v3481 = vpop.permute.xlu0 %3480
      %v3484 = vmul.f32 %v3481, %v2827
      %3486 = vrot.lane.b32.xlu0 %v3484, 32
      %v3487 = vpop.permute.xlu0 %3486
      %v3489 = vadd.f32 %v3476, %v3487
      %v3490 = vmul.f32 %v3441, %v3447
      %3492 = vset.pattern.permute.xlu0 0
      %3493 = vperm.xlu0 %3492, %v3490
      %v3494 = vpop.permute.xlu0 %3493
      %v3496 = vmul.f32 %v3494, %v2926
      %v3497 = vadd.f32 %v3489, %v3496
      %v3498 = vld [vmem:[%s1293] sm:$0xff]
      %v3499 = vld [vmem:[%s1293 + $0x8] sm:$0xff]
      %v3500 = vld [vmem:[%s1293 + $0x10] sm:$0xff]
      %v3501 = vld [vmem:[%s1293 + $0x18] sm:$0xff]
      %v3502 = vld [vmem:[%s1298] sm:$0xff]
      %v3503 = vld [vmem:[%s1298 + $0x8] sm:$0xff]
      %v3504 = vld [vmem:[%s1298 + $0x10] sm:$0xff]
      %v3505 = vld [vmem:[%s1298 + $0x18] sm:$0xff]
      %v3506 = vld [vmem:[%s1302] sm:$0x1]
      %v3507 = vlaneseq
      %v3508 = vshrl.u32 %v3507, 7
      %v3509 = vsub.s32 0, %v3508
      %v3510 = vrot.slane %v3506, %v3509
      %3512 = vrot.lane.b32.xlu0 %v3497, 96
      %v3513 = vpop.permute.xlu0 %3512
      %v3514 = vsel %vm1421, %v3513, 0
      %3516 = vmatprep.subr.mxu0 0.0
      %3517 = vmatpush1.msra.mxu0 0.0
      %3518 = vmatprep.subr.mxu0 0.0
      %3519 = vmatpush1.msra.mxu0 0.0
      %3520 = vmatprep.subr.mxu0 0.0
      %3521 = vmatpush1.msra.mxu0 0.0
      %3522 = vmatprep.subr.mxu0 0.0
      %3523 = vmatpush1.msra.mxu0 0.0
      %3524 = vmatprep.subr.mxu0 0.0
      %3525 = vmatpush1.msra.mxu0 0.0
      %3526 = vmatprep.subr.mxu0 0.0
      %3527 = vmatpush1.msra.mxu0 0.0
      %3528 = vmatprep.subr.mxu0 0.0
      %3529 = vmatpush1.msra.mxu0 0.0
      %3530 = vmatprep.subr.mxu0 0.0
      %3531 = vmatpush1.msra.mxu0 0.0
      %3532 = vmatprep.subr.mxu0 0.0
      %3533 = vmatpush1.msra.mxu0 0.0
      %3534 = vmatprep.subr.mxu0 0.0
      %3535 = vmatpush1.msra.mxu0 0.0
      %3536 = vmatprep.subr.mxu0 0.0
      %3537 = vmatpush1.msra.mxu0 0.0
      %3538 = vmatprep.subr.mxu0 0.0
      %3539 = vmatpush1.msra.mxu0 0.0
      %3540 = vmatprep.subr.mxu0 0.0
      %3541 = vmatpush1.msra.mxu0 %v3501
      %3542 = vmatprep.subr.mxu0 0.0
      %3543 = vmatpush1.msra.mxu0 %v3500
      %3544 = vmatprep.subr.mxu0 0.0
      %3545 = vmatpush1.msra.mxu0 %v3499
      %3546 = vmatprep.subr.mxu0 0.0
      %3547 = vmatpush1.msra.mxu0 %v3498
      %3548 = vmatprep.subr.mxu0 0.0
      %3549 = vmatpush2.msra.mxu0 0.0
      %3550 = vmatprep.subr.mxu0 0.0
      %3551 = vmatpush2.msra.mxu0 0.0
      %3552 = vmatprep.subr.mxu0 0.0
      %3553 = vmatpush2.msra.mxu0 0.0
      %3554 = vmatprep.subr.mxu0 0.0
      %3555 = vmatpush2.msra.mxu0 0.0
      %3556 = vmatprep.subr.mxu0 0.0
      %3557 = vmatpush2.msra.mxu0 0.0
      %3558 = vmatprep.subr.mxu0 0.0
      %3559 = vmatpush2.msra.mxu0 0.0
      %3560 = vmatprep.subr.mxu0 0.0
      %3561 = vmatpush2.msra.mxu0 0.0
      %3562 = vmatprep.subr.mxu0 0.0
      %3563 = vmatpush2.msra.mxu0 0.0
      %3564 = vmatprep.subr.mxu0 0.0
      %3565 = vmatpush2.msra.mxu0 0.0
      %3566 = vmatprep.subr.mxu0 0.0
      %3567 = vmatpush2.msra.mxu0 0.0
      %3568 = vmatprep.subr.mxu0 0.0
      %3569 = vmatpush2.msra.mxu0 0.0
      %3570 = vmatprep.subr.mxu0 0.0
      %3571 = vmatpush2.msra.mxu0 0.0
      %3572 = vmatprep.subr.mxu0 0.0
      %3573 = vmatpush2.msra.mxu0 0.0
      %3574 = vmatprep.subr.mxu0 0.0
      %3575 = vmatpush2.msra.mxu0 0.0
      %3576 = vmatprep.subr.mxu0 0.0
      %3577 = vmatpush2.msra.mxu0 0.0
      %3578 = vmatprep.subr.mxu0 0.0
      %3579 = vmatpush2.msra.mxu0 0.0
      %3580 = vmatprep.mubr.f32.mxu0 0.0
      %3581 = vmatmul.mubr.f32.gmra.mxu0 %v3514
      %v3582 = vpop.f32.mrf.mxu0
      %v3583 = vadd.f32 %v3510, %v3582
      %v3584 = vpop.f32.mrf.mxu0
      %3585 = vdwg.mxu0
      %v3586 = vld [vmem:[%s1302 + $0x1] sm:$0x1]
      %3587 = vmatprep.subr.mxu0 0.0
      %3588 = vmatpush1.msra.mxu0 0.0
      %3589 = vmatprep.subr.mxu0 0.0
      %3590 = vmatpush1.msra.mxu0 0.0
      %3591 = vmatprep.subr.mxu0 0.0
      %3592 = vmatpush1.msra.mxu0 0.0
      %3593 = vmatprep.subr.mxu0 0.0
      %3594 = vmatpush1.msra.mxu0 0.0
      %3595 = vmatprep.subr.mxu0 0.0
      %3596 = vmatpush1.msra.mxu0 0.0
      %3597 = vmatprep.subr.mxu0 0.0
      %3598 = vmatpush1.msra.mxu0 0.0
      %3599 = vmatprep.subr.mxu0 0.0
      %3600 = vmatpush1.msra.mxu0 0.0
      %3601 = vmatprep.subr.mxu0 0.0
      %3602 = vmatpush1.msra.mxu0 0.0
      %3603 = vmatprep.subr.mxu0 0.0
      %3604 = vmatpush1.msra.mxu0 0.0
      %3605 = vmatprep.subr.mxu0 0.0
      %3606 = vmatpush1.msra.mxu0 0.0
      %3607 = vmatprep.subr.mxu0 0.0
      %3608 = vmatpush1.msra.mxu0 0.0
      %3609 = vmatprep.subr.mxu0 0.0
      %3610 = vmatpush1.msra.mxu0 0.0
      %3611 = vmatprep.subr.mxu0 0.0
      %3612 = vmatpush1.msra.mxu0 %v3505
      %3613 = vmatprep.subr.mxu0 0.0
      %3614 = vmatpush1.msra.mxu0 %v3504
      %3615 = vmatprep.subr.mxu0 0.0
      %3616 = vmatpush1.msra.mxu0 %v3503
      %3617 = vmatprep.subr.mxu0 0.0
      %3618 = vmatpush1.msra.mxu0 %v3502
      %3619 = vmatprep.subr.mxu0 0.0
      %3620 = vmatpush2.msra.mxu0 0.0
      %3621 = vmatprep.subr.mxu0 0.0
      %3622 = vmatpush2.msra.mxu0 0.0
      %3623 = vmatprep.subr.mxu0 0.0
      %3624 = vmatpush2.msra.mxu0 0.0
      %3625 = vmatprep.subr.mxu0 0.0
      %3626 = vmatpush2.msra.mxu0 0.0
      %3627 = vmatprep.subr.mxu0 0.0
      %3628 = vmatpush2.msra.mxu0 0.0
      %3629 = vmatprep.subr.mxu0 0.0
      %3630 = vmatpush2.msra.mxu0 0.0
      %3631 = vmatprep.subr.mxu0 0.0
      %3632 = vmatpush2.msra.mxu0 0.0
      %3633 = vmatprep.subr.mxu0 0.0
      %3634 = vmatpush2.msra.mxu0 0.0
      %3635 = vmatprep.subr.mxu0 0.0
      %3636 = vmatpush2.msra.mxu0 0.0
      %3637 = vmatprep.subr.mxu0 0.0
      %3638 = vmatpush2.msra.mxu0 0.0
      %3639 = vmatprep.subr.mxu0 0.0
      %3640 = vmatpush2.msra.mxu0 0.0
      %3641 = vmatprep.subr.mxu0 0.0
      %3642 = vmatpush2.msra.mxu0 0.0
      %3643 = vmatprep.subr.mxu0 0.0
      %3644 = vmatpush2.msra.mxu0 0.0
      %3645 = vmatprep.subr.mxu0 0.0
      %3646 = vmatpush2.msra.mxu0 0.0
      %3647 = vmatprep.subr.mxu0 0.0
      %3648 = vmatpush2.msra.mxu0 0.0
      %3649 = vmatprep.subr.mxu0 0.0
      %3650 = vmatpush2.msra.mxu0 0.0
      %3651 = vmatprep.mubr.f32.mxu0 0.0
      %3652 = vmatmul.mubr.f32.gmra.mxu0 %v1423
      %v3653 = vpop.f32.mrf.mxu0
      %v3654 = vadd.f32 %v3586, %v3653
      %v3655 = vpop.f32.mrf.mxu0
      %3656 = vdwg.mxu0
      %v3657 = vadd.f32 %v3583, %v3654
      %v3658 = vxor.u32 %v3657, 2147483648
      %v3659 = vmul.f32 %v3658, 1.442695
      %v3660 = vpow.pop %v3659
      %v3661 = vadd.f32 %v3660, 1.0
      %v3662 = vrcp.pop %v3661
      %v3663 = vmul.f32 1.0, %v3662
      %3665 = vrot.lane.b32.xlu0 %v3654, 64
      %v3666 = vpop.permute.xlu0 %3665
      %v3668 = vmul.f32 %v3663, %v3666
      %3670 = vrot.lane.b32.xlu0 %v3668, 64
      %v3671 = vpop.permute.xlu0 %3670
      %v3673 = vadd.f32 %v3583, %v3671
      %v3674 = vtanh.pop %v3673
      %v3675 = vsub.f32 1.0, %v3663
      %3677 = vrot.lane.b32.xlu0 %v3674, 96
      %v3678 = vpop.permute.xlu0 %3677
      %v3680 = vmul.f32 %v3675, %v3678
      %v3681 = vmul.f32 %v3663, 0.0
      %v3682 = vadd.f32 %v3680, %v3681
      %3684 = vrot.lane.b32.xlu0 %v3682, 96
      %v3685 = vpop.permute.xlu0 %3684
      %v3686 = vsel %vm1421, %v3685, 0
      %3688 = vmatprep.subr.mxu0 0.0
      %3689 = vmatpush1.msra.mxu0 0.0
      %3690 = vmatprep.subr.mxu0 0.0
      %3691 = vmatpush1.msra.mxu0 0.0
      %3692 = vmatprep.subr.mxu0 0.0
      %3693 = vmatpush1.msra.mxu0 0.0
      %3694 = vmatprep.subr.mxu0 0.0
      %3695 = vmatpush1.msra.mxu0 0.0
      %3696 = vmatprep.subr.mxu0 0.0
      %3697 = vmatpush1.msra.mxu0 0.0
      %3698 = vmatprep.subr.mxu0 0.0
      %3699 = vmatpush1.msra.mxu0 0.0
      %3700 = vmatprep.subr.mxu0 0.0
      %3701 = vmatpush1.msra.mxu0 0.0
      %3702 = vmatprep.subr.mxu0 0.0
      %3703 = vmatpush1.msra.mxu0 0.0
      %3704 = vmatprep.subr.mxu0 0.0
      %3705 = vmatpush1.msra.mxu0 0.0
      %3706 = vmatprep.subr.mxu0 0.0
      %3707 = vmatpush1.msra.mxu0 0.0
      %3708 = vmatprep.subr.mxu0 0.0
      %3709 = vmatpush1.msra.mxu0 0.0
      %3710 = vmatprep.subr.mxu0 0.0
      %3711 = vmatpush1.msra.mxu0 0.0
      %3712 = vmatprep.subr.mxu0 0.0
      %3713 = vmatpush1.msra.mxu0 %v3505
      %3714 = vmatprep.subr.mxu0 0.0
      %3715 = vmatpush1.msra.mxu0 %v3504
      %3716 = vmatprep.subr.mxu0 0.0
      %3717 = vmatpush1.msra.mxu0 %v3503
      %3718 = vmatprep.subr.mxu0 0.0
      %3719 = vmatpush1.msra.mxu0 %v3502
      %3720 = vmatprep.subr.mxu0 0.0
      %3721 = vmatpush2.msra.mxu0 0.0
      %3722 = vmatprep.subr.mxu0 0.0
      %3723 = vmatpush2.msra.mxu0 0.0
      %3724 = vmatprep.subr.mxu0 0.0
      %3725 = vmatpush2.msra.mxu0 0.0
      %3726 = vmatprep.subr.mxu0 0.0
      %3727 = vmatpush2.msra.mxu0 0.0
      %3728 = vmatprep.subr.mxu0 0.0
      %3729 = vmatpush2.msra.mxu0 0.0
      %3730 = vmatprep.subr.mxu0 0.0
      %3731 = vmatpush2.msra.mxu0 0.0
      %3732 = vmatprep.subr.mxu0 0.0
      %3733 = vmatpush2.msra.mxu0 0.0
      %3734 = vmatprep.subr.mxu0 0.0
      %3735 = vmatpush2.msra.mxu0 0.0
      %3736 = vmatprep.subr.mxu0 0.0
      %3737 = vmatpush2.msra.mxu0 0.0
      %3738 = vmatprep.subr.mxu0 0.0
      %3739 = vmatpush2.msra.mxu0 0.0
      %3740 = vmatprep.subr.mxu0 0.0
      %3741 = vmatpush2.msra.mxu0 0.0
      %3742 = vmatprep.subr.mxu0 0.0
      %3743 = vmatpush2.msra.mxu0 0.0
      %3744 = vmatprep.subr.mxu0 0.0
      %3745 = vmatpush2.msra.mxu0 0.0
      %3746 = vmatprep.subr.mxu0 0.0
      %3747 = vmatpush2.msra.mxu0 0.0
      %3748 = vmatprep.subr.mxu0 0.0
      %3749 = vmatpush2.msra.mxu0 0.0
      %3750 = vmatprep.subr.mxu0 0.0
      %3751 = vmatpush2.msra.mxu0 0.0
      %3752 = vmatprep.mubr.f32.mxu0 0.0
      %3753 = vmatmul.mubr.f32.gmra.mxu0 %v3686
      %v3754 = vpop.f32.mrf.mxu0
      %v3755 = vadd.f32 %v3586, %v3754
      %v3756 = vpop.f32.mrf.mxu0
      %3757 = vdwg.mxu0
      %v3759 = vrot.slane %v3755, 7
      %v3761 = vadd.f32 %v3583, %v3759
      %v3762 = vxor.u32 %v3761, 2147483648
      %v3763 = vmul.f32 %v3762, 1.442695
      %v3764 = vpow.pop %v3763
      %v3765 = vadd.f32 %v3764, 1.0
      %v3766 = vrcp.pop %v3765
      %v3767 = vmul.f32 1.0, %v3766
      %3768 = vrot.lane.b32.xlu0 %v3759, 64
      %v3769 = vpop.permute.xlu0 %3768
      %v3771 = vmul.f32 %v3767, %v3769
      %3773 = vrot.lane.b32.xlu0 %v3771, 64
      %v3774 = vpop.permute.xlu0 %3773
      %v3776 = vadd.f32 %v3583, %v3774
      %v3777 = vtanh.pop %v3776
      %v3778 = vsub.f32 1.0, %v3767
      %3780 = vrot.lane.b32.xlu0 %v3777, 96
      %v3781 = vpop.permute.xlu0 %3780
      %v3783 = vmul.f32 %v3778, %v3781
      %v3784 = vrot.slane %v3682, 7
      %v3786 = vmul.f32 %v3767, %v3784
      %v3787 = vadd.f32 %v3783, %v3786
      %v3789 = vrot.slane %v3787, 1
      %3790 = vrot.lane.b32.xlu0 %v3789, 96
      %v3791 = vpop.permute.xlu0 %3790
      %v3792 = vsel %vm1421, %v3791, 0
      %3794 = vmatprep.subr.mxu0 0.0
      %3795 = vmatpush1.msra.mxu0 0.0
      %3796 = vmatprep.subr.mxu0 0.0
      %3797 = vmatpush1.msra.mxu0 0.0
      %3798 = vmatprep.subr.mxu0 0.0
      %3799 = vmatpush1.msra.mxu0 0.0
      %3800 = vmatprep.subr.mxu0 0.0
      %3801 = vmatpush1.msra.mxu0 0.0
      %3802 = vmatprep.subr.mxu0 0.0
      %3803 = vmatpush1.msra.mxu0 0.0
      %3804 = vmatprep.subr.mxu0 0.0
      %3805 = vmatpush1.msra.mxu0 0.0
      %3806 = vmatprep.subr.mxu0 0.0
      %3807 = vmatpush1.msra.mxu0 0.0
      %3808 = vmatprep.subr.mxu0 0.0
      %3809 = vmatpush1.msra.mxu0 0.0
      %3810 = vmatprep.subr.mxu0 0.0
      %3811 = vmatpush1.msra.mxu0 0.0
      %3812 = vmatprep.subr.mxu0 0.0
      %3813 = vmatpush1.msra.mxu0 0.0
      %3814 = vmatprep.subr.mxu0 0.0
      %3815 = vmatpush1.msra.mxu0 0.0
      %3816 = vmatprep.subr.mxu0 0.0
      %3817 = vmatpush1.msra.mxu0 0.0
      %3818 = vmatprep.subr.mxu0 0.0
      %3819 = vmatpush1.msra.mxu0 %v3505
      %3820 = vmatprep.subr.mxu0 0.0
      %3821 = vmatpush1.msra.mxu0 %v3504
      %3822 = vmatprep.subr.mxu0 0.0
      %3823 = vmatpush1.msra.mxu0 %v3503
      %3824 = vmatprep.subr.mxu0 0.0
      %3825 = vmatpush1.msra.mxu0 %v3502
      %3826 = vmatprep.subr.mxu0 0.0
      %3827 = vmatpush2.msra.mxu0 0.0
      %3828 = vmatprep.subr.mxu0 0.0
      %3829 = vmatpush2.msra.mxu0 0.0
      %3830 = vmatprep.subr.mxu0 0.0
      %3831 = vmatpush2.msra.mxu0 0.0
      %3832 = vmatprep.subr.mxu0 0.0
      %3833 = vmatpush2.msra.mxu0 0.0
      %3834 = vmatprep.subr.mxu0 0.0
      %3835 = vmatpush2.msra.mxu0 0.0
      %3836 = vmatprep.subr.mxu0 0.0
      %3837 = vmatpush2.msra.mxu0 0.0
      %3838 = vmatprep.subr.mxu0 0.0
      %3839 = vmatpush2.msra.mxu0 0.0
      %3840 = vmatprep.subr.mxu0 0.0
      %3841 = vmatpush2.msra.mxu0 0.0
      %3842 = vmatprep.subr.mxu0 0.0
      %3843 = vmatpush2.msra.mxu0 0.0
      %3844 = vmatprep.subr.mxu0 0.0
      %3845 = vmatpush2.msra.mxu0 0.0
      %3846 = vmatprep.subr.mxu0 0.0
      %3847 = vmatpush2.msra.mxu0 0.0
      %3848 = vmatprep.subr.mxu0 0.0
      %3849 = vmatpush2.msra.mxu0 0.0
      %3850 = vmatprep.subr.mxu0 0.0
      %3851 = vmatpush2.msra.mxu0 0.0
      %3852 = vmatprep.subr.mxu0 0.0
      %3853 = vmatpush2.msra.mxu0 0.0
      %3854 = vmatprep.subr.mxu0 0.0
      %3855 = vmatpush2.msra.mxu0 0.0
      %3856 = vmatprep.subr.mxu0 0.0
      %3857 = vmatpush2.msra.mxu0 0.0
      %3858 = vmatprep.mubr.f32.mxu0 0.0
      %3859 = vmatmul.mubr.f32.gmra.mxu0 %v3792
      %v3860 = vpop.f32.mrf.mxu0
      %v3861 = vadd.f32 %v3586, %v3860
      %v3862 = vpop.f32.mrf.mxu0
      %3863 = vdwg.mxu0
      %v3865 = vrot.slane %v3861, 6
      %v3867 = vadd.f32 %v3583, %v3865
      %v3868 = vxor.u32 %v3867, 2147483648
      %v3869 = vmul.f32 %v3868, 1.442695
      %v3870 = vpow.pop %v3869
      %v3871 = vadd.f32 %v3870, 1.0
      %v3872 = vrcp.pop %v3871
      %v3873 = vmul.f32 1.0, %v3872
      %3874 = vrot.lane.b32.xlu0 %v3865, 64
      %v3875 = vpop.permute.xlu0 %3874
      %v3877 = vmul.f32 %v3873, %v3875
      %3879 = vrot.lane.b32.xlu0 %v3877, 64
      %v3880 = vpop.permute.xlu0 %3879
      %v3882 = vadd.f32 %v3583, %v3880
      %v3883 = vtanh.pop %v3882
      %v3884 = vsub.f32 1.0, %v3873
      %3886 = vrot.lane.b32.xlu0 %v3883, 96
      %v3887 = vpop.permute.xlu0 %3886
      %v3889 = vmul.f32 %v3884, %v3887
      %v3890 = vrot.slane %v3787, 7
      %v3892 = vmul.f32 %v3873, %v3890
      %v3893 = vadd.f32 %v3889, %v3892
      %v3895 = vrot.slane %v3893, 2
      %3896 = vrot.lane.b32.xlu0 %v3895, 96
      %v3897 = vpop.permute.xlu0 %3896
      %v3898 = vsel %vm1421, %v3897, 0
      %3900 = vmatprep.subr.mxu0 0.0
      %3901 = vmatpush1.msra.mxu0 0.0
      %3902 = vmatprep.subr.mxu0 0.0
      %3903 = vmatpush1.msra.mxu0 0.0
      %3904 = vmatprep.subr.mxu0 0.0
      %3905 = vmatpush1.msra.mxu0 0.0
      %3906 = vmatprep.subr.mxu0 0.0
      %3907 = vmatpush1.msra.mxu0 0.0
      %3908 = vmatprep.subr.mxu0 0.0
      %3909 = vmatpush1.msra.mxu0 0.0
      %3910 = vmatprep.subr.mxu0 0.0
      %3911 = vmatpush1.msra.mxu0 0.0
      %3912 = vmatprep.subr.mxu0 0.0
      %3913 = vmatpush1.msra.mxu0 0.0
      %3914 = vmatprep.subr.mxu0 0.0
      %3915 = vmatpush1.msra.mxu0 0.0
      %3916 = vmatprep.subr.mxu0 0.0
      %3917 = vmatpush1.msra.mxu0 0.0
      %3918 = vmatprep.subr.mxu0 0.0
      %3919 = vmatpush1.msra.mxu0 0.0
      %3920 = vmatprep.subr.mxu0 0.0
      %3921 = vmatpush1.msra.mxu0 0.0
      %3922 = vmatprep.subr.mxu0 0.0
      %3923 = vmatpush1.msra.mxu0 0.0
      %3924 = vmatprep.subr.mxu0 0.0
      %3925 = vmatpush1.msra.mxu0 %v3505
      %3926 = vmatprep.subr.mxu0 0.0
      %3927 = vmatpush1.msra.mxu0 %v3504
      %3928 = vmatprep.subr.mxu0 0.0
      %3929 = vmatpush1.msra.mxu0 %v3503
      %3930 = vmatprep.subr.mxu0 0.0
      %3931 = vmatpush1.msra.mxu0 %v3502
      %3932 = vmatprep.subr.mxu0 0.0
      %3933 = vmatpush2.msra.mxu0 0.0
      %3934 = vmatprep.subr.mxu0 0.0
      %3935 = vmatpush2.msra.mxu0 0.0
      %3936 = vmatprep.subr.mxu0 0.0
      %3937 = vmatpush2.msra.mxu0 0.0
      %3938 = vmatprep.subr.mxu0 0.0
      %3939 = vmatpush2.msra.mxu0 0.0
      %3940 = vmatprep.subr.mxu0 0.0
      %3941 = vmatpush2.msra.mxu0 0.0
      %3942 = vmatprep.subr.mxu0 0.0
      %3943 = vmatpush2.msra.mxu0 0.0
      %3944 = vmatprep.subr.mxu0 0.0
      %3945 = vmatpush2.msra.mxu0 0.0
      %3946 = vmatprep.subr.mxu0 0.0
      %3947 = vmatpush2.msra.mxu0 0.0
      %3948 = vmatprep.subr.mxu0 0.0
      %3949 = vmatpush2.msra.mxu0 0.0
      %3950 = vmatprep.subr.mxu0 0.0
      %3951 = vmatpush2.msra.mxu0 0.0
      %3952 = vmatprep.subr.mxu0 0.0
      %3953 = vmatpush2.msra.mxu0 0.0
      %3954 = vmatprep.subr.mxu0 0.0
      %3955 = vmatpush2.msra.mxu0 0.0
      %3956 = vmatprep.subr.mxu0 0.0
      %3957 = vmatpush2.msra.mxu0 0.0
      %3958 = vmatprep.subr.mxu0 0.0
      %3959 = vmatpush2.msra.mxu0 0.0
      %3960 = vmatprep.subr.mxu0 0.0
      %3961 = vmatpush2.msra.mxu0 0.0
      %3962 = vmatprep.subr.mxu0 0.0
      %3963 = vmatpush2.msra.mxu0 0.0
      %3964 = vmatprep.mubr.f32.mxu0 0.0
      %3965 = vmatmul.mubr.f32.gmra.mxu0 %v3898
      %v3966 = vpop.f32.mrf.mxu0
      %v3967 = vadd.f32 %v3586, %v3966
      %v3968 = vpop.f32.mrf.mxu0
      %3969 = vdwg.mxu0
      %v3971 = vrot.slane %v3967, 5
      %v3973 = vadd.f32 %v3583, %v3971
      %v3974 = vxor.u32 %v3973, 2147483648
      %v3975 = vmul.f32 %v3974, 1.442695
      %v3976 = vpow.pop %v3975
      %v3977 = vadd.f32 %v3976, 1.0
      %v3978 = vrcp.pop %v3977
      %v3979 = vmul.f32 1.0, %v3978
      %3980 = vrot.lane.b32.xlu0 %v3971, 64
      %v3981 = vpop.permute.xlu0 %3980
      %v3983 = vmul.f32 %v3979, %v3981
      %3985 = vrot.lane.b32.xlu0 %v3983, 64
      %v3986 = vpop.permute.xlu0 %3985
      %v3988 = vadd.f32 %v3583, %v3986
      %v3989 = vtanh.pop %v3988
      %v3990 = vsub.f32 1.0, %v3979
      %3992 = vrot.lane.b32.xlu0 %v3989, 96
      %v3993 = vpop.permute.xlu0 %3992
      %v3995 = vmul.f32 %v3990, %v3993
      %v3996 = vrot.slane %v3893, 7
      %v3998 = vmul.f32 %v3979, %v3996
      %v3999 = vadd.f32 %v3995, %v3998
      %v4000 = vld [vmem:[%s1312] sm:$0xff]
      %v4001 = vld [vmem:[%s1312 + $0x8] sm:$0xff]
      %v4002 = vld [vmem:[%s1312 + $0x10] sm:$0xff]
      %v4003 = vld [vmem:[%s1312 + $0x18] sm:$0xff]
      %v4004 = vld [vmem:[%s1315] sm:$0x1]
      %v4005 = vld [vmem:[%s1319 + $0x1] sm:$0x1]
      %v4006 = vld [vmem:[%s1319 + $0x2] sm:$0x1]
      %v4007 = vld [vmem:[%s1307] sm:$0xff]
      %v4008 = vld [vmem:[%s1307 + $0x8] sm:$0xff]
      %v4009 = vld [vmem:[%s1307 + $0x10] sm:$0xff]
      %v4010 = vld [vmem:[%s1307 + $0x18] sm:$0xff]
      %v4011 = vld [vmem:[%s1319] sm:$0x1]
      %v4013 = vrot.slane %v3999, 3
      %4014 = vrot.lane.b32.xlu0 %v4013, 96
      %v4015 = vpop.permute.xlu0 %4014
      %v4016 = vsel %vm1421, %v4015, 0
      %4018 = vmatprep.subr.mxu0 0.0
      %4019 = vmatpush1.msra.mxu0 0.0
      %4020 = vmatprep.subr.mxu0 0.0
      %4021 = vmatpush1.msra.mxu0 0.0
      %4022 = vmatprep.subr.mxu0 0.0
      %4023 = vmatpush1.msra.mxu0 0.0
      %4024 = vmatprep.subr.mxu0 0.0
      %4025 = vmatpush1.msra.mxu0 0.0
      %4026 = vmatprep.subr.mxu0 0.0
      %4027 = vmatpush1.msra.mxu0 0.0
      %4028 = vmatprep.subr.mxu0 0.0
      %4029 = vmatpush1.msra.mxu0 0.0
      %4030 = vmatprep.subr.mxu0 0.0
      %4031 = vmatpush1.msra.mxu0 0.0
      %4032 = vmatprep.subr.mxu0 0.0
      %4033 = vmatpush1.msra.mxu0 0.0
      %4034 = vmatprep.subr.mxu0 0.0
      %4035 = vmatpush1.msra.mxu0 0.0
      %4036 = vmatprep.subr.mxu0 0.0
      %4037 = vmatpush1.msra.mxu0 0.0
      %4038 = vmatprep.subr.mxu0 0.0
      %4039 = vmatpush1.msra.mxu0 0.0
      %4040 = vmatprep.subr.mxu0 0.0
      %4041 = vmatpush1.msra.mxu0 0.0
      %4042 = vmatprep.subr.mxu0 0.0
      %4043 = vmatpush1.msra.mxu0 %v4010
      %4044 = vmatprep.subr.mxu0 0.0
      %4045 = vmatpush1.msra.mxu0 %v4009
      %4046 = vmatprep.subr.mxu0 0.0
      %4047 = vmatpush1.msra.mxu0 %v4008
      %4048 = vmatprep.subr.mxu0 0.0
      %4049 = vmatpush1.msra.mxu0 %v4007
      %4050 = vmatprep.subr.mxu0 0.0
      %4051 = vmatpush2.msra.mxu0 0.0
      %4052 = vmatprep.subr.mxu0 0.0
      %4053 = vmatpush2.msra.mxu0 0.0
      %4054 = vmatprep.subr.mxu0 0.0
      %4055 = vmatpush2.msra.mxu0 0.0
      %4056 = vmatprep.subr.mxu0 0.0
      %4057 = vmatpush2.msra.mxu0 0.0
      %4058 = vmatprep.subr.mxu0 0.0
      %4059 = vmatpush2.msra.mxu0 0.0
      %4060 = vmatprep.subr.mxu0 0.0
      %4061 = vmatpush2.msra.mxu0 0.0
      %4062 = vmatprep.subr.mxu0 0.0
      %4063 = vmatpush2.msra.mxu0 0.0
      %4064 = vmatprep.subr.mxu0 0.0
      %4065 = vmatpush2.msra.mxu0 0.0
      %4066 = vmatprep.subr.mxu0 0.0
      %4067 = vmatpush2.msra.mxu0 0.0
      %4068 = vmatprep.subr.mxu0 0.0
      %4069 = vmatpush2.msra.mxu0 0.0
      %4070 = vmatprep.subr.mxu0 0.0
      %4071 = vmatpush2.msra.mxu0 0.0
      %4072 = vmatprep.subr.mxu0 0.0
      %4073 = vmatpush2.msra.mxu0 0.0
      %4074 = vmatprep.subr.mxu0 0.0
      %4075 = vmatpush2.msra.mxu0 0.0
      %4076 = vmatprep.subr.mxu0 0.0
      %4077 = vmatpush2.msra.mxu0 0.0
      %4078 = vmatprep.subr.mxu0 0.0
      %4079 = vmatpush2.msra.mxu0 0.0
      %4080 = vmatprep.subr.mxu0 0.0
      %4081 = vmatpush2.msra.mxu0 0.0
      %4082 = vmatprep.mubr.f32.mxu0 0.0
      %4083 = vmatmul.mubr.f32.gmra.mxu0 %v4016
      %v4084 = vpop.f32.mrf.mxu0
      %v4085 = vadd.f32 %v4011, %v4084
      %v4086 = vpop.f32.mrf.mxu0
      %4087 = vdwg.mxu0
      %4088 = vmatprep.subr.mxu0 0.0
      %4089 = vmatpush1.msra.mxu0 0.0
      %4090 = vmatprep.subr.mxu0 0.0
      %4091 = vmatpush1.msra.mxu0 0.0
      %4092 = vmatprep.subr.mxu0 0.0
      %4093 = vmatpush1.msra.mxu0 0.0
      %4094 = vmatprep.subr.mxu0 0.0
      %4095 = vmatpush1.msra.mxu0 0.0
      %4096 = vmatprep.subr.mxu0 0.0
      %4097 = vmatpush1.msra.mxu0 0.0
      %4098 = vmatprep.subr.mxu0 0.0
      %4099 = vmatpush1.msra.mxu0 0.0
      %4100 = vmatprep.subr.mxu0 0.0
      %4101 = vmatpush1.msra.mxu0 0.0
      %4102 = vmatprep.subr.mxu0 0.0
      %4103 = vmatpush1.msra.mxu0 0.0
      %4104 = vmatprep.subr.mxu0 0.0
      %4105 = vmatpush1.msra.mxu0 0.0
      %4106 = vmatprep.subr.mxu0 0.0
      %4107 = vmatpush1.msra.mxu0 0.0
      %4108 = vmatprep.subr.mxu0 0.0
      %4109 = vmatpush1.msra.mxu0 0.0
      %4110 = vmatprep.subr.mxu0 0.0
      %4111 = vmatpush1.msra.mxu0 0.0
      %4112 = vmatprep.subr.mxu0 0.0
      %4113 = vmatpush1.msra.mxu0 %v4003
      %4114 = vmatprep.subr.mxu0 0.0
      %4115 = vmatpush1.msra.mxu0 %v4002
      %4116 = vmatprep.subr.mxu0 0.0
      %4117 = vmatpush1.msra.mxu0 %v4001
      %4118 = vmatprep.subr.mxu0 0.0
      %4119 = vmatpush1.msra.mxu0 %v4000
      %4120 = vmatprep.subr.mxu0 0.0
      %4121 = vmatpush2.msra.mxu0 0.0
      %4122 = vmatprep.subr.mxu0 0.0
      %4123 = vmatpush2.msra.mxu0 0.0
      %4124 = vmatprep.subr.mxu0 0.0
      %4125 = vmatpush2.msra.mxu0 0.0
      %4126 = vmatprep.subr.mxu0 0.0
      %4127 = vmatpush2.msra.mxu0 0.0
      %4128 = vmatprep.subr.mxu0 0.0
      %4129 = vmatpush2.msra.mxu0 0.0
      %4130 = vmatprep.subr.mxu0 0.0
      %4131 = vmatpush2.msra.mxu0 0.0
      %4132 = vmatprep.subr.mxu0 0.0
      %4133 = vmatpush2.msra.mxu0 0.0
      %4134 = vmatprep.subr.mxu0 0.0
      %4135 = vmatpush2.msra.mxu0 0.0
      %4136 = vmatprep.subr.mxu0 0.0
      %4137 = vmatpush2.msra.mxu0 0.0
      %4138 = vmatprep.subr.mxu0 0.0
      %4139 = vmatpush2.msra.mxu0 0.0
      %4140 = vmatprep.subr.mxu0 0.0
      %4141 = vmatpush2.msra.mxu0 0.0
      %4142 = vmatprep.subr.mxu0 0.0
      %4143 = vmatpush2.msra.mxu0 0.0
      %4144 = vmatprep.subr.mxu0 0.0
      %4145 = vmatpush2.msra.mxu0 0.0
      %4146 = vmatprep.subr.mxu0 0.0
      %4147 = vmatpush2.msra.mxu0 0.0
      %4148 = vmatprep.subr.mxu0 0.0
      %4149 = vmatpush2.msra.mxu0 0.0
      %4150 = vmatprep.subr.mxu0 0.0
      %4151 = vmatpush2.msra.mxu0 0.0
      %4152 = vmatprep.mubr.f32.mxu0 0.0
      %4153 = vmatmul.mubr.f32.gmra.mxu0 %v3686
      %v4154 = vpop.f32.mrf.mxu0
      %v4155 = vadd.f32 0.0, %v4154
      %v4156 = vpop.f32.mrf.mxu0
      %4157 = vdwg.mxu0
      %v4158 = vadd.f32 %v4085, %v4155
      %v4159 = vadd.f32 %v4158, %v4005
      %v4160 = vtanh.pop %v4159
      %v4161 = vmul.f32 %v4160, %v4004
      %v4162 = vsel %vm2000, %v4161, 0.0
      %4163 = vadd.xlane.f32.xlu0 %v4162
      %v4164 = vpop.xlane.xlu0 %4163
      %v4165 = vadd.f32 %v4164, %v4006
      %4166 = vmatprep.subr.mxu0 0.0
      %4167 = vmatpush1.msra.mxu0 0.0
      %4168 = vmatprep.subr.mxu0 0.0
      %4169 = vmatpush1.msra.mxu0 0.0
      %4170 = vmatprep.subr.mxu0 0.0
      %4171 = vmatpush1.msra.mxu0 0.0
      %4172 = vmatprep.subr.mxu0 0.0
      %4173 = vmatpush1.msra.mxu0 0.0
      %4174 = vmatprep.subr.mxu0 0.0
      %4175 = vmatpush1.msra.mxu0 0.0
      %4176 = vmatprep.subr.mxu0 0.0
      %4177 = vmatpush1.msra.mxu0 0.0
      %4178 = vmatprep.subr.mxu0 0.0
      %4179 = vmatpush1.msra.mxu0 0.0
      %4180 = vmatprep.subr.mxu0 0.0
      %4181 = vmatpush1.msra.mxu0 0.0
      %4182 = vmatprep.subr.mxu0 0.0
      %4183 = vmatpush1.msra.mxu0 0.0
      %4184 = vmatprep.subr.mxu0 0.0
      %4185 = vmatpush1.msra.mxu0 0.0
      %4186 = vmatprep.subr.mxu0 0.0
      %4187 = vmatpush1.msra.mxu0 0.0
      %4188 = vmatprep.subr.mxu0 0.0
      %4189 = vmatpush1.msra.mxu0 0.0
      %4190 = vmatprep.subr.mxu0 0.0
      %4191 = vmatpush1.msra.mxu0 %v4003
      %4192 = vmatprep.subr.mxu0 0.0
      %4193 = vmatpush1.msra.mxu0 %v4002
      %4194 = vmatprep.subr.mxu0 0.0
      %4195 = vmatpush1.msra.mxu0 %v4001
      %4196 = vmatprep.subr.mxu0 0.0
      %4197 = vmatpush1.msra.mxu0 %v4000
      %4198 = vmatprep.subr.mxu0 0.0
      %4199 = vmatpush2.msra.mxu0 0.0
      %4200 = vmatprep.subr.mxu0 0.0
      %4201 = vmatpush2.msra.mxu0 0.0
      %4202 = vmatprep.subr.mxu0 0.0
      %4203 = vmatpush2.msra.mxu0 0.0
      %4204 = vmatprep.subr.mxu0 0.0
      %4205 = vmatpush2.msra.mxu0 0.0
      %4206 = vmatprep.subr.mxu0 0.0
      %4207 = vmatpush2.msra.mxu0 0.0
      %4208 = vmatprep.subr.mxu0 0.0
      %4209 = vmatpush2.msra.mxu0 0.0
      %4210 = vmatprep.subr.mxu0 0.0
      %4211 = vmatpush2.msra.mxu0 0.0
      %4212 = vmatprep.subr.mxu0 0.0
      %4213 = vmatpush2.msra.mxu0 0.0
      %4214 = vmatprep.subr.mxu0 0.0
      %4215 = vmatpush2.msra.mxu0 0.0
      %4216 = vmatprep.subr.mxu0 0.0
      %4217 = vmatpush2.msra.mxu0 0.0
      %4218 = vmatprep.subr.mxu0 0.0
      %4219 = vmatpush2.msra.mxu0 0.0
      %4220 = vmatprep.subr.mxu0 0.0
      %4221 = vmatpush2.msra.mxu0 0.0
      %4222 = vmatprep.subr.mxu0 0.0
      %4223 = vmatpush2.msra.mxu0 0.0
      %4224 = vmatprep.subr.mxu0 0.0
      %4225 = vmatpush2.msra.mxu0 0.0
      %4226 = vmatprep.subr.mxu0 0.0
      %4227 = vmatpush2.msra.mxu0 0.0
      %4228 = vmatprep.subr.mxu0 0.0
      %4229 = vmatpush2.msra.mxu0 0.0
      %4230 = vmatprep.mubr.f32.mxu0 0.0
      %4231 = vmatmul.mubr.f32.gmra.mxu0 %v3792
      %v4232 = vpop.f32.mrf.mxu0
      %v4233 = vadd.f32 0.0, %v4232
      %v4234 = vpop.f32.mrf.mxu0
      %4235 = vdwg.mxu0
      %v4236 = vadd.f32 %v4085, %v4233
      %v4237 = vadd.f32 %v4236, %v4005
      %v4238 = vtanh.pop %v4237
      %v4239 = vmul.f32 %v4238, %v4004
      %v4240 = vsel %vm2000, %v4239, 0.0
      %4241 = vadd.xlane.f32.xlu0 %v4240
      %v4242 = vpop.xlane.xlu0 %4241
      %v4243 = vadd.f32 %v4242, %v4006
      %4244 = vmatprep.subr.mxu0 0.0
      %4245 = vmatpush1.msra.mxu0 0.0
      %4246 = vmatprep.subr.mxu0 0.0
      %4247 = vmatpush1.msra.mxu0 0.0
      %4248 = vmatprep.subr.mxu0 0.0
      %4249 = vmatpush1.msra.mxu0 0.0
      %4250 = vmatprep.subr.mxu0 0.0
      %4251 = vmatpush1.msra.mxu0 0.0
      %4252 = vmatprep.subr.mxu0 0.0
      %4253 = vmatpush1.msra.mxu0 0.0
      %4254 = vmatprep.subr.mxu0 0.0
      %4255 = vmatpush1.msra.mxu0 0.0
      %4256 = vmatprep.subr.mxu0 0.0
      %4257 = vmatpush1.msra.mxu0 0.0
      %4258 = vmatprep.subr.mxu0 0.0
      %4259 = vmatpush1.msra.mxu0 0.0
      %4260 = vmatprep.subr.mxu0 0.0
      %4261 = vmatpush1.msra.mxu0 0.0
      %4262 = vmatprep.subr.mxu0 0.0
      %4263 = vmatpush1.msra.mxu0 0.0
      %4264 = vmatprep.subr.mxu0 0.0
      %4265 = vmatpush1.msra.mxu0 0.0
      %4266 = vmatprep.subr.mxu0 0.0
      %4267 = vmatpush1.msra.mxu0 0.0
      %4268 = vmatprep.subr.mxu0 0.0
      %4269 = vmatpush1.msra.mxu0 %v4003
      %4270 = vmatprep.subr.mxu0 0.0
      %4271 = vmatpush1.msra.mxu0 %v4002
      %4272 = vmatprep.subr.mxu0 0.0
      %4273 = vmatpush1.msra.mxu0 %v4001
      %4274 = vmatprep.subr.mxu0 0.0
      %4275 = vmatpush1.msra.mxu0 %v4000
      %4276 = vmatprep.subr.mxu0 0.0
      %4277 = vmatpush2.msra.mxu0 0.0
      %4278 = vmatprep.subr.mxu0 0.0
      %4279 = vmatpush2.msra.mxu0 0.0
      %4280 = vmatprep.subr.mxu0 0.0
      %4281 = vmatpush2.msra.mxu0 0.0
      %4282 = vmatprep.subr.mxu0 0.0
      %4283 = vmatpush2.msra.mxu0 0.0
      %4284 = vmatprep.subr.mxu0 0.0
      %4285 = vmatpush2.msra.mxu0 0.0
      %4286 = vmatprep.subr.mxu0 0.0
      %4287 = vmatpush2.msra.mxu0 0.0
      %4288 = vmatprep.subr.mxu0 0.0
      %4289 = vmatpush2.msra.mxu0 0.0
      %4290 = vmatprep.subr.mxu0 0.0
      %4291 = vmatpush2.msra.mxu0 0.0
      %4292 = vmatprep.subr.mxu0 0.0
      %4293 = vmatpush2.msra.mxu0 0.0
      %4294 = vmatprep.subr.mxu0 0.0
      %4295 = vmatpush2.msra.mxu0 0.0
      %4296 = vmatprep.subr.mxu0 0.0
      %4297 = vmatpush2.msra.mxu0 0.0
      %4298 = vmatprep.subr.mxu0 0.0
      %4299 = vmatpush2.msra.mxu0 0.0
      %4300 = vmatprep.subr.mxu0 0.0
      %4301 = vmatpush2.msra.mxu0 0.0
      %4302 = vmatprep.subr.mxu0 0.0
      %4303 = vmatpush2.msra.mxu0 0.0
      %4304 = vmatprep.subr.mxu0 0.0
      %4305 = vmatpush2.msra.mxu0 0.0
      %4306 = vmatprep.subr.mxu0 0.0
      %4307 = vmatpush2.msra.mxu0 0.0
      %4308 = vmatprep.mubr.f32.mxu0 0.0
      %4309 = vmatmul.mubr.f32.gmra.mxu0 %v3898
      %v4310 = vpop.f32.mrf.mxu0
      %v4311 = vadd.f32 0.0, %v4310
      %v4312 = vpop.f32.mrf.mxu0
      %4313 = vdwg.mxu0
      %v4314 = vadd.f32 %v4085, %v4311
      %v4315 = vadd.f32 %v4314, %v4005
      %v4316 = vtanh.pop %v4315
      %v4317 = vmul.f32 %v4316, %v4004
      %v4318 = vsel %vm2000, %v4317, 0.0
      %4319 = vadd.xlane.f32.xlu0 %v4318
      %v4320 = vpop.xlane.xlu0 %4319
      %v4321 = vadd.f32 %v4320, %v4006
      %4322 = vmatprep.subr.mxu0 0.0
      %4323 = vmatpush1.msra.mxu0 0.0
      %4324 = vmatprep.subr.mxu0 0.0
      %4325 = vmatpush1.msra.mxu0 0.0
      %4326 = vmatprep.subr.mxu0 0.0
      %4327 = vmatpush1.msra.mxu0 0.0
      %4328 = vmatprep.subr.mxu0 0.0
      %4329 = vmatpush1.msra.mxu0 0.0
      %4330 = vmatprep.subr.mxu0 0.0
      %4331 = vmatpush1.msra.mxu0 0.0
      %4332 = vmatprep.subr.mxu0 0.0
      %4333 = vmatpush1.msra.mxu0 0.0
      %4334 = vmatprep.subr.mxu0 0.0
      %4335 = vmatpush1.msra.mxu0 0.0
      %4336 = vmatprep.subr.mxu0 0.0
      %4337 = vmatpush1.msra.mxu0 0.0
      %4338 = vmatprep.subr.mxu0 0.0
      %4339 = vmatpush1.msra.mxu0 0.0
      %4340 = vmatprep.subr.mxu0 0.0
      %4341 = vmatpush1.msra.mxu0 0.0
      %4342 = vmatprep.subr.mxu0 0.0
      %4343 = vmatpush1.msra.mxu0 0.0
      %4344 = vmatprep.subr.mxu0 0.0
      %4345 = vmatpush1.msra.mxu0 0.0
      %4346 = vmatprep.subr.mxu0 0.0
      %4347 = vmatpush1.msra.mxu0 %v4003
      %4348 = vmatprep.subr.mxu0 0.0
      %4349 = vmatpush1.msra.mxu0 %v4002
      %4350 = vmatprep.subr.mxu0 0.0
      %4351 = vmatpush1.msra.mxu0 %v4001
      %4352 = vmatprep.subr.mxu0 0.0
      %4353 = vmatpush1.msra.mxu0 %v4000
      %4354 = vmatprep.subr.mxu0 0.0
      %4355 = vmatpush2.msra.mxu0 0.0
      %4356 = vmatprep.subr.mxu0 0.0
      %4357 = vmatpush2.msra.mxu0 0.0
      %4358 = vmatprep.subr.mxu0 0.0
      %4359 = vmatpush2.msra.mxu0 0.0
      %4360 = vmatprep.subr.mxu0 0.0
      %4361 = vmatpush2.msra.mxu0 0.0
      %4362 = vmatprep.subr.mxu0 0.0
      %4363 = vmatpush2.msra.mxu0 0.0
      %4364 = vmatprep.subr.mxu0 0.0
      %4365 = vmatpush2.msra.mxu0 0.0
      %4366 = vmatprep.subr.mxu0 0.0
      %4367 = vmatpush2.msra.mxu0 0.0
      %4368 = vmatprep.subr.mxu0 0.0
      %4369 = vmatpush2.msra.mxu0 0.0
      %4370 = vmatprep.subr.mxu0 0.0
      %4371 = vmatpush2.msra.mxu0 0.0
      %4372 = vmatprep.subr.mxu0 0.0
      %4373 = vmatpush2.msra.mxu0 0.0
      %4374 = vmatprep.subr.mxu0 0.0
      %4375 = vmatpush2.msra.mxu0 0.0
      %4376 = vmatprep.subr.mxu0 0.0
      %4377 = vmatpush2.msra.mxu0 0.0
      %4378 = vmatprep.subr.mxu0 0.0
      %4379 = vmatpush2.msra.mxu0 0.0
      %4380 = vmatprep.subr.mxu0 0.0
      %4381 = vmatpush2.msra.mxu0 0.0
      %4382 = vmatprep.subr.mxu0 0.0
      %4383 = vmatpush2.msra.mxu0 0.0
      %4384 = vmatprep.subr.mxu0 0.0
      %4385 = vmatpush2.msra.mxu0 0.0
      %4386 = vmatprep.mubr.f32.mxu0 0.0
      %4387 = vmatmul.mubr.f32.gmra.mxu0 %v4016
      %v4388 = vpop.f32.mrf.mxu0
      %v4389 = vadd.f32 0.0, %v4388
      %v4390 = vpop.f32.mrf.mxu0
      %4391 = vdwg.mxu0
      %v4392 = vadd.f32 %v4085, %v4389
      %v4393 = vadd.f32 %v4392, %v4005
      %v4394 = vtanh.pop %v4393
      %v4395 = vmul.f32 %v4394, %v4004
      %v4396 = vsel %vm2000, %v4395, 0.0
      %4397 = vadd.xlane.f32.xlu0 %v4396
      %v4398 = vpop.xlane.xlu0 %4397
      %v4399 = vadd.f32 %v4398, %v4006
      %v4400 = vmax.f32 %v4165, %v4243
      %v4401 = vmax.f32 %v4400, %v4321
      %v4402 = vmax.f32 %v4401, %v4399
      %v4403 = vsub.f32 %v4165, %v4402
      %v4404 = vmul.f32 %v4403, 1.442695
      %v4405 = vpow.pop %v4404
      %v4406 = vsub.f32 %v4243, %v4402
      %v4407 = vmul.f32 %v4406, 1.442695
      %v4408 = vpow.pop %v4407
      %v4409 = vsub.f32 %v4321, %v4402
      %v4410 = vmul.f32 %v4409, 1.442695
      %v4411 = vpow.pop %v4410
      %v4412 = vsub.f32 %v4399, %v4402
      %v4413 = vmul.f32 %v4412, 1.442695
      %v4414 = vpow.pop %v4413
      %v4415 = vadd.f32 %v4405, %v4408
      %v4416 = vadd.f32 %v4415, %v4411
      %v4417 = vadd.f32 %v4416, %v4414
      %v4418 = vrcp.pop %v4417
      %v4419 = vmul.f32 1.0, %v4418
      %v4420 = vmul.f32 %v4405, %v4419
      %4422 = vset.pattern.permute.xlu0 0
      %4423 = vperm.xlu0 %4422, %v4420
      %v4424 = vpop.permute.xlu0 %4423
      %v4426 = vmul.f32 %v4424, %v3682
      %v4427 = vadd.f32 %v4426, 0.0
      %v4428 = vmul.f32 %v4408, %v4419
      %4430 = vset.pattern.permute.xlu0 0
      %4431 = vperm.xlu0 %4430, %v4428
      %v4432 = vpop.permute.xlu0 %4431
      %v4435 = vmul.f32 %v4432, %v3791
      %4437 = vrot.lane.b32.xlu0 %v4435, 32
      %v4438 = vpop.permute.xlu0 %4437
      %v4440 = vadd.f32 %v4427, %v4438
      %v4441 = vmul.f32 %v4411, %v4419
      %4443 = vset.pattern.permute.xlu0 0
      %4444 = vperm.xlu0 %4443, %v4441
      %v4445 = vpop.permute.xlu0 %4444
      %v4448 = vmul.f32 %v4445, %v3897
      %4450 = vrot.lane.b32.xlu0 %v4448, 32
      %v4451 = vpop.permute.xlu0 %4450
      %v4453 = vadd.f32 %v4440, %v4451
      %v4454 = vmul.f32 %v4414, %v4419
      %4456 = vset.pattern.permute.xlu0 0
      %4457 = vperm.xlu0 %4456, %v4454
      %v4458 = vpop.permute.xlu0 %4457
      %v4461 = vmul.f32 %v4458, %v4015
      %4463 = vrot.lane.b32.xlu0 %v4461, 32
      %v4464 = vpop.permute.xlu0 %4463
      %v4466 = vadd.f32 %v4453, %v4464
      %v4467 = vld [vmem:[%s51] sm:$0xff]
      %v4468 = vld [vmem:[%s51 + $0x8] sm:$0xff]
      %v4469 = vld [vmem:[%s51 + $0x10] sm:$0xff]
      %v4470 = vld [vmem:[%s51 + $0x18] sm:$0xff]
      %v4471 = vld [vmem:[%s51 + $0x20] sm:$0xff]
      %v4472 = vld [vmem:[%s51 + $0x28] sm:$0xff]
      %v4473 = vld [vmem:[%s51 + $0x30] sm:$0xff]
      %v4474 = vld [vmem:[%s51 + $0x38] sm:$0xff]
      %v4475 = vld [vmem:[%s51 + $0x40] sm:$0xff]
      %v4476 = vld [vmem:[%s51 + $0x48] sm:$0xff]
      %v4477 = vld [vmem:[%s51 + $0x50] sm:$0xff]
      %v4478 = vld [vmem:[%s51 + $0x58] sm:$0xff]
      %v4479 = vld [vmem:[%s51 + $0x60] sm:$0xff]
      %v4480 = vld [vmem:[%s51 + $0x68] sm:$0xff]
      %v4481 = vld [vmem:[%s51 + $0x70] sm:$0xff]
      %v4482 = vld [vmem:[%s51 + $0x78] sm:$0xff]
      %v4483 = vld [vmem:[%s51 + $0x80] sm:$0xff]
      %v4484 = vld [vmem:[%s51 + $0x88] sm:$0xff]
      %v4485 = vld [vmem:[%s51 + $0x90] sm:$0xff]
      %v4486 = vld [vmem:[%s51 + $0x98] sm:$0xff]
      %v4487 = vld [vmem:[%s51 + $0xa0] sm:$0xff]
      %v4488 = vld [vmem:[%s51 + $0xa8] sm:$0xff]
      %v4489 = vld [vmem:[%s51 + $0xb0] sm:$0xff]
      %v4490 = vld [vmem:[%s51 + $0xb8] sm:$0xff]
      %v4491 = vld [vmem:[%s51 + $0xc0] sm:$0xff]
      %v4492 = vld [vmem:[%s51 + $0xc8] sm:$0xff]
      %v4493 = vld [vmem:[%s51 + $0xd0] sm:$0xff]
      %v4494 = vld [vmem:[%s51 + $0xd8] sm:$0xff]
      %v4495 = vld [vmem:[%s51 + $0xe0] sm:$0xff]
      %v4496 = vld [vmem:[%s51 + $0xe8] sm:$0xff]
      %v4497 = vld [vmem:[%s51 + $0xf0] sm:$0xff]
      %v4498 = vld [vmem:[%s51 + $0xf8] sm:$0xff]
      %4500 = vrot.lane.b32.xlu0 %v4466, 96
      %v4501 = vpop.permute.xlu0 %4500
      %v4502 = vsel %vm1421, %v4501, 0
      %4504 = vmatprep.subr.mxu0 0.0
      %4505 = vmatpush1.msra.mxu0 0.0
      %4506 = vmatprep.subr.mxu0 0.0
      %4507 = vmatpush1.msra.mxu0 0.0
      %4508 = vmatprep.subr.mxu0 0.0
      %4509 = vmatpush1.msra.mxu0 0.0
      %4510 = vmatprep.subr.mxu0 0.0
      %4511 = vmatpush1.msra.mxu0 0.0
      %4512 = vmatprep.subr.mxu0 0.0
      %4513 = vmatpush1.msra.mxu0 0.0
      %4514 = vmatprep.subr.mxu0 0.0
      %4515 = vmatpush1.msra.mxu0 0.0
      %4516 = vmatprep.subr.mxu0 0.0
      %4517 = vmatpush1.msra.mxu0 0.0
      %4518 = vmatprep.subr.mxu0 0.0
      %4519 = vmatpush1.msra.mxu0 0.0
      %4520 = vmatprep.subr.mxu0 0.0
      %4521 = vmatpush1.msra.mxu0 0.0
      %4522 = vmatprep.subr.mxu0 0.0
      %4523 = vmatpush1.msra.mxu0 0.0
      %4524 = vmatprep.subr.mxu0 0.0
      %4525 = vmatpush1.msra.mxu0 0.0
      %4526 = vmatprep.subr.mxu0 0.0
      %4527 = vmatpush1.msra.mxu0 0.0
      %4528 = vmatprep.subr.mxu0 %v4492
      %4529 = vmatpush1.msra.mxu0 %v4491
      %4530 = vmatprep.subr.mxu0 %v4484
      %4531 = vmatpush1.msra.mxu0 %v4483
      %4532 = vmatprep.subr.mxu0 %v4476
      %4533 = vmatpush1.msra.mxu0 %v4475
      %4534 = vmatprep.subr.mxu0 %v4468
      %4535 = vmatpush1.msra.mxu0 %v4467
      %4536 = vmatprep.subr.mxu0 0.0
      %4537 = vmatpush2.msra.mxu0 0.0
      %4538 = vmatprep.subr.mxu0 0.0
      %4539 = vmatpush2.msra.mxu0 0.0
      %4540 = vmatprep.subr.mxu0 0.0
      %4541 = vmatpush2.msra.mxu0 0.0
      %4542 = vmatprep.subr.mxu0 0.0
      %4543 = vmatpush2.msra.mxu0 0.0
      %4544 = vmatprep.subr.mxu0 0.0
      %4545 = vmatpush2.msra.mxu0 0.0
      %4546 = vmatprep.subr.mxu0 0.0
      %4547 = vmatpush2.msra.mxu0 0.0
      %4548 = vmatprep.subr.mxu0 0.0
      %4549 = vmatpush2.msra.mxu0 0.0
      %4550 = vmatprep.subr.mxu0 0.0
      %4551 = vmatpush2.msra.mxu0 0.0
      %4552 = vmatprep.subr.mxu0 0.0
      %4553 = vmatpush2.msra.mxu0 0.0
      %4554 = vmatprep.subr.mxu0 0.0
      %4555 = vmatpush2.msra.mxu0 0.0
      %4556 = vmatprep.subr.mxu0 0.0
      %4557 = vmatpush2.msra.mxu0 0.0
      %4558 = vmatprep.subr.mxu0 0.0
      %4559 = vmatpush2.msra.mxu0 0.0
      %4560 = vmatprep.subr.mxu0 0.0
      %4561 = vmatpush2.msra.mxu0 0.0
      %4562 = vmatprep.subr.mxu0 0.0
      %4563 = vmatpush2.msra.mxu0 0.0
      %4564 = vmatprep.subr.mxu0 0.0
      %4565 = vmatpush2.msra.mxu0 0.0
      %4566 = vmatprep.subr.mxu0 0.0
      %4567 = vmatpush2.msra.mxu0 0.0
      %4568 = vmatprep.mubr.f32.mxu0 0.0
      %4569 = vmatmul.mubr.f32.gmra.mxu0 %v4502
      %v4570 = vpop.f32.mrf.mxu0
      %v4571 = vadd.f32 0.0, %v4570
      %v4572 = vpop.f32.mrf.mxu0
      %v4573 = vadd.f32 0.0, %v4572
      %4574 = vdwg.mxu0
      %4575 = vmatprep.subr.mxu0 0.0
      %4576 = vmatpush1.msra.mxu0 0.0
      %4577 = vmatprep.subr.mxu0 0.0
      %4578 = vmatpush1.msra.mxu0 0.0
      %4579 = vmatprep.subr.mxu0 0.0
      %4580 = vmatpush1.msra.mxu0 0.0
      %4581 = vmatprep.subr.mxu0 0.0
      %4582 = vmatpush1.msra.mxu0 0.0
      %4583 = vmatprep.subr.mxu0 0.0
      %4584 = vmatpush1.msra.mxu0 0.0
      %4585 = vmatprep.subr.mxu0 0.0
      %4586 = vmatpush1.msra.mxu0 0.0
      %4587 = vmatprep.subr.mxu0 0.0
      %4588 = vmatpush1.msra.mxu0 0.0
      %4589 = vmatprep.subr.mxu0 0.0
      %4590 = vmatpush1.msra.mxu0 0.0
      %4591 = vmatprep.subr.mxu0 0.0
      %4592 = vmatpush1.msra.mxu0 0.0
      %4593 = vmatprep.subr.mxu0 0.0
      %4594 = vmatpush1.msra.mxu0 0.0
      %4595 = vmatprep.subr.mxu0 0.0
      %4596 = vmatpush1.msra.mxu0 0.0
      %4597 = vmatprep.subr.mxu0 0.0
      %4598 = vmatpush1.msra.mxu0 0.0
      %4599 = vmatprep.subr.mxu0 %v4494
      %4600 = vmatpush1.msra.mxu0 %v4493
      %4601 = vmatprep.subr.mxu0 %v4486
      %4602 = vmatpush1.msra.mxu0 %v4485
      %4603 = vmatprep.subr.mxu0 %v4478
      %4604 = vmatpush1.msra.mxu0 %v4477
      %4605 = vmatprep.subr.mxu0 %v4470
      %4606 = vmatpush1.msra.mxu0 %v4469
      %4607 = vmatprep.subr.mxu0 0.0
      %4608 = vmatpush2.msra.mxu0 0.0
      %4609 = vmatprep.subr.mxu0 0.0
      %4610 = vmatpush2.msra.mxu0 0.0
      %4611 = vmatprep.subr.mxu0 0.0
      %4612 = vmatpush2.msra.mxu0 0.0
      %4613 = vmatprep.subr.mxu0 0.0
      %4614 = vmatpush2.msra.mxu0 0.0
      %4615 = vmatprep.subr.mxu0 0.0
      %4616 = vmatpush2.msra.mxu0 0.0
      %4617 = vmatprep.subr.mxu0 0.0
      %4618 = vmatpush2.msra.mxu0 0.0
      %4619 = vmatprep.subr.mxu0 0.0
      %4620 = vmatpush2.msra.mxu0 0.0
      %4621 = vmatprep.subr.mxu0 0.0
      %4622 = vmatpush2.msra.mxu0 0.0
      %4623 = vmatprep.subr.mxu0 0.0
      %4624 = vmatpush2.msra.mxu0 0.0
      %4625 = vmatprep.subr.mxu0 0.0
      %4626 = vmatpush2.msra.mxu0 0.0
      %4627 = vmatprep.subr.mxu0 0.0
      %4628 = vmatpush2.msra.mxu0 0.0
      %4629 = vmatprep.subr.mxu0 0.0
      %4630 = vmatpush2.msra.mxu0 0.0
      %4631 = vmatprep.subr.mxu0 0.0
      %4632 = vmatpush2.msra.mxu0 0.0
      %4633 = vmatprep.subr.mxu0 0.0
      %4634 = vmatpush2.msra.mxu0 0.0
      %4635 = vmatprep.subr.mxu0 0.0
      %4636 = vmatpush2.msra.mxu0 0.0
      %4637 = vmatprep.subr.mxu0 0.0
      %4638 = vmatpush2.msra.mxu0 0.0
      %4639 = vmatprep.mubr.f32.mxu0 0.0
      %4640 = vmatmul.mubr.f32.gmra.mxu0 %v4502
      %v4641 = vpop.f32.mrf.mxu0
      %v4642 = vadd.f32 0.0, %v4641
      %v4643 = vpop.f32.mrf.mxu0
      %v4644 = vadd.f32 0.0, %v4643
      %4645 = vdwg.mxu0
      %4646 = vmatprep.subr.mxu0 0.0
      %4647 = vmatpush1.msra.mxu0 0.0
      %4648 = vmatprep.subr.mxu0 0.0
      %4649 = vmatpush1.msra.mxu0 0.0
      %4650 = vmatprep.subr.mxu0 0.0
      %4651 = vmatpush1.msra.mxu0 0.0
      %4652 = vmatprep.subr.mxu0 0.0
      %4653 = vmatpush1.msra.mxu0 0.0
      %4654 = vmatprep.subr.mxu0 0.0
      %4655 = vmatpush1.msra.mxu0 0.0
      %4656 = vmatprep.subr.mxu0 0.0
      %4657 = vmatpush1.msra.mxu0 0.0
      %4658 = vmatprep.subr.mxu0 0.0
      %4659 = vmatpush1.msra.mxu0 0.0
      %4660 = vmatprep.subr.mxu0 0.0
      %4661 = vmatpush1.msra.mxu0 0.0
      %4662 = vmatprep.subr.mxu0 0.0
      %4663 = vmatpush1.msra.mxu0 0.0
      %4664 = vmatprep.subr.mxu0 0.0
      %4665 = vmatpush1.msra.mxu0 0.0
      %4666 = vmatprep.subr.mxu0 0.0
      %4667 = vmatpush1.msra.mxu0 0.0
      %4668 = vmatprep.subr.mxu0 0.0
      %4669 = vmatpush1.msra.mxu0 0.0
      %4670 = vmatprep.subr.mxu0 %v4496
      %4671 = vmatpush1.msra.mxu0 %v4495
      %4672 = vmatprep.subr.mxu0 %v4488
      %4673 = vmatpush1.msra.mxu0 %v4487
      %4674 = vmatprep.subr.mxu0 %v4480
      %4675 = vmatpush1.msra.mxu0 %v4479
      %4676 = vmatprep.subr.mxu0 %v4472
      %4677 = vmatpush1.msra.mxu0 %v4471
      %4678 = vmatprep.subr.mxu0 0.0
      %4679 = vmatpush2.msra.mxu0 0.0
      %4680 = vmatprep.subr.mxu0 0.0
      %4681 = vmatpush2.msra.mxu0 0.0
      %4682 = vmatprep.subr.mxu0 0.0
      %4683 = vmatpush2.msra.mxu0 0.0
      %4684 = vmatprep.subr.mxu0 0.0
      %4685 = vmatpush2.msra.mxu0 0.0
      %4686 = vmatprep.subr.mxu0 0.0
      %4687 = vmatpush2.msra.mxu0 0.0
      %4688 = vmatprep.subr.mxu0 0.0
      %4689 = vmatpush2.msra.mxu0 0.0
      %4690 = vmatprep.subr.mxu0 0.0
      %4691 = vmatpush2.msra.mxu0 0.0
      %4692 = vmatprep.subr.mxu0 0.0
      %4693 = vmatpush2.msra.mxu0 0.0
      %4694 = vmatprep.subr.mxu0 0.0
      %4695 = vmatpush2.msra.mxu0 0.0
      %4696 = vmatprep.subr.mxu0 0.0
      %4697 = vmatpush2.msra.mxu0 0.0
      %4698 = vmatprep.subr.mxu0 0.0
      %4699 = vmatpush2.msra.mxu0 0.0
      %4700 = vmatprep.subr.mxu0 0.0
      %4701 = vmatpush2.msra.mxu0 0.0
      %4702 = vmatprep.subr.mxu0 0.0
      %4703 = vmatpush2.msra.mxu0 0.0
      %4704 = vmatprep.subr.mxu0 0.0
      %4705 = vmatpush2.msra.mxu0 0.0
      %4706 = vmatprep.subr.mxu0 0.0
      %4707 = vmatpush2.msra.mxu0 0.0
      %4708 = vmatprep.subr.mxu0 0.0
      %4709 = vmatpush2.msra.mxu0 0.0
      %4710 = vmatprep.mubr.f32.mxu0 0.0
      %4711 = vmatmul.mubr.f32.gmra.mxu0 %v4502
      %v4712 = vpop.f32.mrf.mxu0
      %v4713 = vadd.f32 0.0, %v4712
      %v4714 = vpop.f32.mrf.mxu0
      %v4715 = vadd.f32 0.0, %v4714
      %4716 = vdwg.mxu0
      %4717 = vmatprep.subr.mxu0 0.0
      %4718 = vmatpush1.msra.mxu0 0.0
      %4719 = vmatprep.subr.mxu0 0.0
      %4720 = vmatpush1.msra.mxu0 0.0
      %4721 = vmatprep.subr.mxu0 0.0
      %4722 = vmatpush1.msra.mxu0 0.0
      %4723 = vmatprep.subr.mxu0 0.0
      %4724 = vmatpush1.msra.mxu0 0.0
      %4725 = vmatprep.subr.mxu0 0.0
      %4726 = vmatpush1.msra.mxu0 0.0
      %4727 = vmatprep.subr.mxu0 0.0
      %4728 = vmatpush1.msra.mxu0 0.0
      %4729 = vmatprep.subr.mxu0 0.0
      %4730 = vmatpush1.msra.mxu0 0.0
      %4731 = vmatprep.subr.mxu0 0.0
      %4732 = vmatpush1.msra.mxu0 0.0
      %4733 = vmatprep.subr.mxu0 0.0
      %4734 = vmatpush1.msra.mxu0 0.0
      %4735 = vmatprep.subr.mxu0 0.0
      %4736 = vmatpush1.msra.mxu0 0.0
      %4737 = vmatprep.subr.mxu0 0.0
      %4738 = vmatpush1.msra.mxu0 0.0
      %4739 = vmatprep.subr.mxu0 0.0
      %4740 = vmatpush1.msra.mxu0 0.0
      %4741 = vmatprep.subr.mxu0 %v4498
      %4742 = vmatpush1.msra.mxu0 %v4497
      %4743 = vmatprep.subr.mxu0 %v4490
      %4744 = vmatpush1.msra.mxu0 %v4489
      %4745 = vmatprep.subr.mxu0 %v4482
      %4746 = vmatpush1.msra.mxu0 %v4481
      %4747 = vmatprep.subr.mxu0 %v4474
      %4748 = vmatpush1.msra.mxu0 %v4473
      %4749 = vmatprep.subr.mxu0 0.0
      %4750 = vmatpush2.msra.mxu0 0.0
      %4751 = vmatprep.subr.mxu0 0.0
      %4752 = vmatpush2.msra.mxu0 0.0
      %4753 = vmatprep.subr.mxu0 0.0
      %4754 = vmatpush2.msra.mxu0 0.0
      %4755 = vmatprep.subr.mxu0 0.0
      %4756 = vmatpush2.msra.mxu0 0.0
      %4757 = vmatprep.subr.mxu0 0.0
      %4758 = vmatpush2.msra.mxu0 0.0
      %4759 = vmatprep.subr.mxu0 0.0
      %4760 = vmatpush2.msra.mxu0 0.0
      %4761 = vmatprep.subr.mxu0 0.0
      %4762 = vmatpush2.msra.mxu0 0.0
      %4763 = vmatprep.subr.mxu0 0.0
      %4764 = vmatpush2.msra.mxu0 0.0
      %4765 = vmatprep.subr.mxu0 0.0
      %4766 = vmatpush2.msra.mxu0 0.0
      %4767 = vmatprep.subr.mxu0 0.0
      %4768 = vmatpush2.msra.mxu0 0.0
      %4769 = vmatprep.subr.mxu0 0.0
      %4770 = vmatpush2.msra.mxu0 0.0
      %4771 = vmatprep.subr.mxu0 0.0
      %4772 = vmatpush2.msra.mxu0 0.0
      %4773 = vmatprep.subr.mxu0 0.0
      %4774 = vmatpush2.msra.mxu0 0.0
      %4775 = vmatprep.subr.mxu0 0.0
      %4776 = vmatpush2.msra.mxu0 0.0
      %4777 = vmatprep.subr.mxu0 0.0
      %4778 = vmatpush2.msra.mxu0 0.0
      %4779 = vmatprep.subr.mxu0 0.0
      %4780 = vmatpush2.msra.mxu0 0.0
      %4781 = vmatprep.mubr.f32.mxu0 0.0
      %4782 = vmatmul.mubr.f32.gmra.mxu0 %v4502
      %v4783 = vpop.f32.mrf.mxu0
      %v4784 = vadd.f32 0.0, %v4783
      %v4785 = vpop.f32.mrf.mxu0
      %v4786 = vadd.f32 0.0, %v4785
      %4787 = vdwg.mxu0
      %v4788 = vld [vmem:[%s53] sm:$0xff]
      %v4789 = vld [vmem:[%s53 + $0x8] sm:$0xff]
      %v4790 = vld [vmem:[%s53 + $0x10] sm:$0xff]
      %v4791 = vld [vmem:[%s53 + $0x18] sm:$0xff]
      %v4792 = vld [vmem:[%s53 + $0x20] sm:$0xff]
      %v4793 = vld [vmem:[%s53 + $0x28] sm:$0xff]
      %v4794 = vld [vmem:[%s53 + $0x30] sm:$0xff]
      %v4795 = vld [vmem:[%s53 + $0x38] sm:$0xff]
      %v4796 = vld [vmem:[%s53 + $0x40] sm:$0xff]
      %v4797 = vld [vmem:[%s53 + $0x48] sm:$0xff]
      %v4798 = vld [vmem:[%s53 + $0x50] sm:$0xff]
      %v4799 = vld [vmem:[%s53 + $0x58] sm:$0xff]
      %v4800 = vld [vmem:[%s53 + $0x60] sm:$0xff]
      %v4801 = vld [vmem:[%s53 + $0x68] sm:$0xff]
      %v4802 = vld [vmem:[%s53 + $0x70] sm:$0xff]
      %v4803 = vld [vmem:[%s53 + $0x78] sm:$0xff]
      %v4804 = vld [vmem:[%s53 + $0x80] sm:$0xff]
      %v4805 = vld [vmem:[%s53 + $0x88] sm:$0xff]
      %v4806 = vld [vmem:[%s53 + $0x90] sm:$0xff]
      %v4807 = vld [vmem:[%s53 + $0x98] sm:$0xff]
      %v4808 = vld [vmem:[%s53 + $0xa0] sm:$0xff]
      %v4809 = vld [vmem:[%s53 + $0xa8] sm:$0xff]
      %v4810 = vld [vmem:[%s53 + $0xb0] sm:$0xff]
      %v4811 = vld [vmem:[%s53 + $0xb8] sm:$0xff]
      %v4812 = vld [vmem:[%s53 + $0xc0] sm:$0xff]
      %v4813 = vld [vmem:[%s53 + $0xc8] sm:$0xff]
      %v4814 = vld [vmem:[%s53 + $0xd0] sm:$0xff]
      %v4815 = vld [vmem:[%s53 + $0xd8] sm:$0xff]
      %v4816 = vld [vmem:[%s53 + $0xe0] sm:$0xff]
      %v4817 = vld [vmem:[%s53 + $0xe8] sm:$0xff]
      %v4818 = vld [vmem:[%s53 + $0xf0] sm:$0xff]
      %v4819 = vld [vmem:[%s53 + $0xf8] sm:$0xff]
      %4821 = vrot.lane.b32.xlu0 %v2305, 96
      %v4822 = vpop.permute.xlu0 %4821
      %v4823 = vsel %vm1421, %v4822, 0
      %4825 = vmatprep.subr.mxu0 0.0
      %4826 = vmatpush1.msra.mxu0 0.0
      %4827 = vmatprep.subr.mxu0 0.0
      %4828 = vmatpush1.msra.mxu0 0.0
      %4829 = vmatprep.subr.mxu0 0.0
      %4830 = vmatpush1.msra.mxu0 0.0
      %4831 = vmatprep.subr.mxu0 0.0
      %4832 = vmatpush1.msra.mxu0 0.0
      %4833 = vmatprep.subr.mxu0 0.0
      %4834 = vmatpush1.msra.mxu0 0.0
      %4835 = vmatprep.subr.mxu0 0.0
      %4836 = vmatpush1.msra.mxu0 0.0
      %4837 = vmatprep.subr.mxu0 0.0
      %4838 = vmatpush1.msra.mxu0 0.0
      %4839 = vmatprep.subr.mxu0 0.0
      %4840 = vmatpush1.msra.mxu0 0.0
      %4841 = vmatprep.subr.mxu0 0.0
      %4842 = vmatpush1.msra.mxu0 0.0
      %4843 = vmatprep.subr.mxu0 0.0
      %4844 = vmatpush1.msra.mxu0 0.0
      %4845 = vmatprep.subr.mxu0 0.0
      %4846 = vmatpush1.msra.mxu0 0.0
      %4847 = vmatprep.subr.mxu0 0.0
      %4848 = vmatpush1.msra.mxu0 0.0
      %4849 = vmatprep.subr.mxu0 %v4813
      %4850 = vmatpush1.msra.mxu0 %v4812
      %4851 = vmatprep.subr.mxu0 %v4805
      %4852 = vmatpush1.msra.mxu0 %v4804
      %4853 = vmatprep.subr.mxu0 %v4797
      %4854 = vmatpush1.msra.mxu0 %v4796
      %4855 = vmatprep.subr.mxu0 %v4789
      %4856 = vmatpush1.msra.mxu0 %v4788
      %4857 = vmatprep.subr.mxu0 0.0
      %4858 = vmatpush2.msra.mxu0 0.0
      %4859 = vmatprep.subr.mxu0 0.0
      %4860 = vmatpush2.msra.mxu0 0.0
      %4861 = vmatprep.subr.mxu0 0.0
      %4862 = vmatpush2.msra.mxu0 0.0
      %4863 = vmatprep.subr.mxu0 0.0
      %4864 = vmatpush2.msra.mxu0 0.0
      %4865 = vmatprep.subr.mxu0 0.0
      %4866 = vmatpush2.msra.mxu0 0.0
      %4867 = vmatprep.subr.mxu0 0.0
      %4868 = vmatpush2.msra.mxu0 0.0
      %4869 = vmatprep.subr.mxu0 0.0
      %4870 = vmatpush2.msra.mxu0 0.0
      %4871 = vmatprep.subr.mxu0 0.0
      %4872 = vmatpush2.msra.mxu0 0.0
      %4873 = vmatprep.subr.mxu0 0.0
      %4874 = vmatpush2.msra.mxu0 0.0
      %4875 = vmatprep.subr.mxu0 0.0
      %4876 = vmatpush2.msra.mxu0 0.0
      %4877 = vmatprep.subr.mxu0 0.0
      %4878 = vmatpush2.msra.mxu0 0.0
      %4879 = vmatprep.subr.mxu0 0.0
      %4880 = vmatpush2.msra.mxu0 0.0
      %4881 = vmatprep.subr.mxu0 0.0
      %4882 = vmatpush2.msra.mxu0 0.0
      %4883 = vmatprep.subr.mxu0 0.0
      %4884 = vmatpush2.msra.mxu0 0.0
      %4885 = vmatprep.subr.mxu0 0.0
      %4886 = vmatpush2.msra.mxu0 0.0
      %4887 = vmatprep.subr.mxu0 0.0
      %4888 = vmatpush2.msra.mxu0 0.0
      %4889 = vmatprep.mubr.f32.mxu0 0.0
      %4890 = vmatmul.mubr.f32.gmra.mxu0 %v4823
      %v4891 = vpop.f32.mrf.mxu0
      %v4892 = vadd.f32 0.0, %v4891
      %v4893 = vpop.f32.mrf.mxu0
      %v4894 = vadd.f32 0.0, %v4893
      %4895 = vdwg.mxu0
      %4896 = vmatprep.subr.mxu0 0.0
      %4897 = vmatpush1.msra.mxu0 0.0
      %4898 = vmatprep.subr.mxu0 0.0
      %4899 = vmatpush1.msra.mxu0 0.0
      %4900 = vmatprep.subr.mxu0 0.0
      %4901 = vmatpush1.msra.mxu0 0.0
      %4902 = vmatprep.subr.mxu0 0.0
      %4903 = vmatpush1.msra.mxu0 0.0
      %4904 = vmatprep.subr.mxu0 0.0
      %4905 = vmatpush1.msra.mxu0 0.0
      %4906 = vmatprep.subr.mxu0 0.0
      %4907 = vmatpush1.msra.mxu0 0.0
      %4908 = vmatprep.subr.mxu0 0.0
      %4909 = vmatpush1.msra.mxu0 0.0
      %4910 = vmatprep.subr.mxu0 0.0
      %4911 = vmatpush1.msra.mxu0 0.0
      %4912 = vmatprep.subr.mxu0 0.0
      %4913 = vmatpush1.msra.mxu0 0.0
      %4914 = vmatprep.subr.mxu0 0.0
      %4915 = vmatpush1.msra.mxu0 0.0
      %4916 = vmatprep.subr.mxu0 0.0
      %4917 = vmatpush1.msra.mxu0 0.0
      %4918 = vmatprep.subr.mxu0 0.0
      %4919 = vmatpush1.msra.mxu0 0.0
      %4920 = vmatprep.subr.mxu0 %v4815
      %4921 = vmatpush1.msra.mxu0 %v4814
      %4922 = vmatprep.subr.mxu0 %v4807
      %4923 = vmatpush1.msra.mxu0 %v4806
      %4924 = vmatprep.subr.mxu0 %v4799
      %4925 = vmatpush1.msra.mxu0 %v4798
      %4926 = vmatprep.subr.mxu0 %v4791
      %4927 = vmatpush1.msra.mxu0 %v4790
      %4928 = vmatprep.subr.mxu0 0.0
      %4929 = vmatpush2.msra.mxu0 0.0
      %4930 = vmatprep.subr.mxu0 0.0
      %4931 = vmatpush2.msra.mxu0 0.0
      %4932 = vmatprep.subr.mxu0 0.0
      %4933 = vmatpush2.msra.mxu0 0.0
      %4934 = vmatprep.subr.mxu0 0.0
      %4935 = vmatpush2.msra.mxu0 0.0
      %4936 = vmatprep.subr.mxu0 0.0
      %4937 = vmatpush2.msra.mxu0 0.0
      %4938 = vmatprep.subr.mxu0 0.0
      %4939 = vmatpush2.msra.mxu0 0.0
      %4940 = vmatprep.subr.mxu0 0.0
      %4941 = vmatpush2.msra.mxu0 0.0
      %4942 = vmatprep.subr.mxu0 0.0
      %4943 = vmatpush2.msra.mxu0 0.0
      %4944 = vmatprep.subr.mxu0 0.0
      %4945 = vmatpush2.msra.mxu0 0.0
      %4946 = vmatprep.subr.mxu0 0.0
      %4947 = vmatpush2.msra.mxu0 0.0
      %4948 = vmatprep.subr.mxu0 0.0
      %4949 = vmatpush2.msra.mxu0 0.0
      %4950 = vmatprep.subr.mxu0 0.0
      %4951 = vmatpush2.msra.mxu0 0.0
      %4952 = vmatprep.subr.mxu0 0.0
      %4953 = vmatpush2.msra.mxu0 0.0
      %4954 = vmatprep.subr.mxu0 0.0
      %4955 = vmatpush2.msra.mxu0 0.0
      %4956 = vmatprep.subr.mxu0 0.0
      %4957 = vmatpush2.msra.mxu0 0.0
      %4958 = vmatprep.subr.mxu0 0.0
      %4959 = vmatpush2.msra.mxu0 0.0
      %4960 = vmatprep.mubr.f32.mxu0 0.0
      %4961 = vmatmul.mubr.f32.gmra.mxu0 %v4823
      %v4962 = vpop.f32.mrf.mxu0
      %v4963 = vadd.f32 0.0, %v4962
      %v4964 = vpop.f32.mrf.mxu0
      %v4965 = vadd.f32 0.0, %v4964
      %4966 = vdwg.mxu0
      %4967 = vmatprep.subr.mxu0 0.0
      %4968 = vmatpush1.msra.mxu0 0.0
      %4969 = vmatprep.subr.mxu0 0.0
      %4970 = vmatpush1.msra.mxu0 0.0
      %4971 = vmatprep.subr.mxu0 0.0
      %4972 = vmatpush1.msra.mxu0 0.0
      %4973 = vmatprep.subr.mxu0 0.0
      %4974 = vmatpush1.msra.mxu0 0.0
      %4975 = vmatprep.subr.mxu0 0.0
      %4976 = vmatpush1.msra.mxu0 0.0
      %4977 = vmatprep.subr.mxu0 0.0
      %4978 = vmatpush1.msra.mxu0 0.0
      %4979 = vmatprep.subr.mxu0 0.0
      %4980 = vmatpush1.msra.mxu0 0.0
      %4981 = vmatprep.subr.mxu0 0.0
      %4982 = vmatpush1.msra.mxu0 0.0
      %4983 = vmatprep.subr.mxu0 0.0
      %4984 = vmatpush1.msra.mxu0 0.0
      %4985 = vmatprep.subr.mxu0 0.0
      %4986 = vmatpush1.msra.mxu0 0.0
      %4987 = vmatprep.subr.mxu0 0.0
      %4988 = vmatpush1.msra.mxu0 0.0
      %4989 = vmatprep.subr.mxu0 0.0
      %4990 = vmatpush1.msra.mxu0 0.0
      %4991 = vmatprep.subr.mxu0 %v4817
      %4992 = vmatpush1.msra.mxu0 %v4816
      %4993 = vmatprep.subr.mxu0 %v4809
      %4994 = vmatpush1.msra.mxu0 %v4808
      %4995 = vmatprep.subr.mxu0 %v4801
      %4996 = vmatpush1.msra.mxu0 %v4800
      %4997 = vmatprep.subr.mxu0 %v4793
      %4998 = vmatpush1.msra.mxu0 %v4792
      %4999 = vmatprep.subr.mxu0 0.0
      %5000 = vmatpush2.msra.mxu0 0.0
      %5001 = vmatprep.subr.mxu0 0.0
      %5002 = vmatpush2.msra.mxu0 0.0
      %5003 = vmatprep.subr.mxu0 0.0
      %5004 = vmatpush2.msra.mxu0 0.0
      %5005 = vmatprep.subr.mxu0 0.0
      %5006 = vmatpush2.msra.mxu0 0.0
      %5007 = vmatprep.subr.mxu0 0.0
      %5008 = vmatpush2.msra.mxu0 0.0
      %5009 = vmatprep.subr.mxu0 0.0
      %5010 = vmatpush2.msra.mxu0 0.0
      %5011 = vmatprep.subr.mxu0 0.0
      %5012 = vmatpush2.msra.mxu0 0.0
      %5013 = vmatprep.subr.mxu0 0.0
      %5014 = vmatpush2.msra.mxu0 0.0
      %5015 = vmatprep.subr.mxu0 0.0
      %5016 = vmatpush2.msra.mxu0 0.0
      %5017 = vmatprep.subr.mxu0 0.0
      %5018 = vmatpush2.msra.mxu0 0.0
      %5019 = vmatprep.subr.mxu0 0.0
      %5020 = vmatpush2.msra.mxu0 0.0
      %5021 = vmatprep.subr.mxu0 0.0
      %5022 = vmatpush2.msra.mxu0 0.0
      %5023 = vmatprep.subr.mxu0 0.0
      %5024 = vmatpush2.msra.mxu0 0.0
      %5025 = vmatprep.subr.mxu0 0.0
      %5026 = vmatpush2.msra.mxu0 0.0
      %5027 = vmatprep.subr.mxu0 0.0
      %5028 = vmatpush2.msra.mxu0 0.0
      %5029 = vmatprep.subr.mxu0 0.0
      %5030 = vmatpush2.msra.mxu0 0.0
      %5031 = vmatprep.mubr.f32.mxu0 0.0
      %5032 = vmatmul.mubr.f32.gmra.mxu0 %v4823
      %v5033 = vpop.f32.mrf.mxu0
      %v5034 = vadd.f32 0.0, %v5033
      %v5035 = vpop.f32.mrf.mxu0
      %v5036 = vadd.f32 0.0, %v5035
      %5037 = vdwg.mxu0
      %5038 = vmatprep.subr.mxu0 0.0
      %5039 = vmatpush1.msra.mxu0 0.0
      %5040 = vmatprep.subr.mxu0 0.0
      %5041 = vmatpush1.msra.mxu0 0.0
      %5042 = vmatprep.subr.mxu0 0.0
      %5043 = vmatpush1.msra.mxu0 0.0
      %5044 = vmatprep.subr.mxu0 0.0
      %5045 = vmatpush1.msra.mxu0 0.0
      %5046 = vmatprep.subr.mxu0 0.0
      %5047 = vmatpush1.msra.mxu0 0.0
      %5048 = vmatprep.subr.mxu0 0.0
      %5049 = vmatpush1.msra.mxu0 0.0
      %5050 = vmatprep.subr.mxu0 0.0
      %5051 = vmatpush1.msra.mxu0 0.0
      %5052 = vmatprep.subr.mxu0 0.0
      %5053 = vmatpush1.msra.mxu0 0.0
      %5054 = vmatprep.subr.mxu0 0.0
      %5055 = vmatpush1.msra.mxu0 0.0
      %5056 = vmatprep.subr.mxu0 0.0
      %5057 = vmatpush1.msra.mxu0 0.0
      %5058 = vmatprep.subr.mxu0 0.0
      %5059 = vmatpush1.msra.mxu0 0.0
      %5060 = vmatprep.subr.mxu0 0.0
      %5061 = vmatpush1.msra.mxu0 0.0
      %5062 = vmatprep.subr.mxu0 %v4819
      %5063 = vmatpush1.msra.mxu0 %v4818
      %5064 = vmatprep.subr.mxu0 %v4811
      %5065 = vmatpush1.msra.mxu0 %v4810
      %5066 = vmatprep.subr.mxu0 %v4803
      %5067 = vmatpush1.msra.mxu0 %v4802
      %5068 = vmatprep.subr.mxu0 %v4795
      %5069 = vmatpush1.msra.mxu0 %v4794
      %5070 = vmatprep.subr.mxu0 0.0
      %5071 = vmatpush2.msra.mxu0 0.0
      %5072 = vmatprep.subr.mxu0 0.0
      %5073 = vmatpush2.msra.mxu0 0.0
      %5074 = vmatprep.subr.mxu0 0.0
      %5075 = vmatpush2.msra.mxu0 0.0
      %5076 = vmatprep.subr.mxu0 0.0
      %5077 = vmatpush2.msra.mxu0 0.0
      %5078 = vmatprep.subr.mxu0 0.0
      %5079 = vmatpush2.msra.mxu0 0.0
      %5080 = vmatprep.subr.mxu0 0.0
      %5081 = vmatpush2.msra.mxu0 0.0
      %5082 = vmatprep.subr.mxu0 0.0
      %5083 = vmatpush2.msra.mxu0 0.0
      %5084 = vmatprep.subr.mxu0 0.0
      %5085 = vmatpush2.msra.mxu0 0.0
      %5086 = vmatprep.subr.mxu0 0.0
      %5087 = vmatpush2.msra.mxu0 0.0
      %5088 = vmatprep.subr.mxu0 0.0
      %5089 = vmatpush2.msra.mxu0 0.0
      %5090 = vmatprep.subr.mxu0 0.0
      %5091 = vmatpush2.msra.mxu0 0.0
      %5092 = vmatprep.subr.mxu0 0.0
      %5093 = vmatpush2.msra.mxu0 0.0
      %5094 = vmatprep.subr.mxu0 0.0
      %5095 = vmatpush2.msra.mxu0 0.0
      %5096 = vmatprep.subr.mxu0 0.0
      %5097 = vmatpush2.msra.mxu0 0.0
      %5098 = vmatprep.subr.mxu0 0.0
      %5099 = vmatpush2.msra.mxu0 0.0
      %5100 = vmatprep.subr.mxu0 0.0
      %5101 = vmatpush2.msra.mxu0 0.0
      %5102 = vmatprep.mubr.f32.mxu0 0.0
      %5103 = vmatmul.mubr.f32.gmra.mxu0 %v4823
      %v5104 = vpop.f32.mrf.mxu0
      %v5105 = vadd.f32 0.0, %v5104
      %v5106 = vpop.f32.mrf.mxu0
      %v5107 = vadd.f32 0.0, %v5106
      %5108 = vdwg.mxu0
      %v5109 = vmul.f32 %v4571, %v4892
      %v5110 = vmul.f32 %v4573, %v4894
      %v5111 = vmul.f32 %v4642, %v4963
      %v5112 = vmul.f32 %v4644, %v4965
      %v5113 = vmul.f32 %v4713, %v5034
      %v5114 = vmul.f32 %v4715, %v5036
      %v5115 = vmul.f32 %v4784, %v5105
      %v5116 = vmul.f32 %v4786, %v5107
      %v5117 = vld [vmem:[%s1324] sm:$0xff]
      %v5118 = vld [vmem:[%s1324 + $0x8] sm:$0xff]
      %v5119 = vld [vmem:[%s1324 + $0x10] sm:$0xff]
      %v5120 = vld [vmem:[%s1324 + $0x18] sm:$0xff]
      %v5121 = vld [vmem:[%s1324 + $0x20] sm:$0xff]
      %v5122 = vld [vmem:[%s1324 + $0x28] sm:$0xff]
      %v5123 = vld [vmem:[%s1324 + $0x30] sm:$0xff]
      %v5124 = vld [vmem:[%s1324 + $0x38] sm:$0xff]
      %v5125 = vld [vmem:[%s1324 + $0x40] sm:$0xff]
      %v5126 = vld [vmem:[%s1324 + $0x48] sm:$0xff]
      %v5127 = vld [vmem:[%s1324 + $0x50] sm:$0xff]
      %v5128 = vld [vmem:[%s1324 + $0x58] sm:$0xff]
      %v5129 = vld [vmem:[%s1324 + $0x60] sm:$0xff]
      %v5130 = vld [vmem:[%s1324 + $0x68] sm:$0xff]
      %v5131 = vld [vmem:[%s1324 + $0x70] sm:$0xff]
      %v5132 = vld [vmem:[%s1324 + $0x78] sm:$0xff]
      %v5133 = vld [vmem:[%s1324 + $0x80] sm:$0xff]
      %v5134 = vld [vmem:[%s1324 + $0x88] sm:$0xff]
      %v5135 = vld [vmem:[%s1324 + $0x90] sm:$0xff]
      %v5136 = vld [vmem:[%s1324 + $0x98] sm:$0xff]
      %v5137 = vld [vmem:[%s1324 + $0xa0] sm:$0xff]
      %v5138 = vld [vmem:[%s1324 + $0xa8] sm:$0xff]
      %v5139 = vld [vmem:[%s1324 + $0xb0] sm:$0xff]
      %v5140 = vld [vmem:[%s1324 + $0xb8] sm:$0xff]
      %v5141 = vld [vmem:[%s1324 + $0xc0] sm:$0xff]
      %v5142 = vld [vmem:[%s1324 + $0xc8] sm:$0xff]
      %v5143 = vld [vmem:[%s1324 + $0xd0] sm:$0xff]
      %v5144 = vld [vmem:[%s1324 + $0xd8] sm:$0xff]
      %v5145 = vld [vmem:[%s1324 + $0xe0] sm:$0xff]
      %v5146 = vld [vmem:[%s1324 + $0xe8] sm:$0xff]
      %v5147 = vld [vmem:[%s1324 + $0xf0] sm:$0xff]
      %v5148 = vld [vmem:[%s1324 + $0xf8] sm:$0xff]
      %v5149 = vld [vmem:[%s1324 + $0x100] sm:$0xff]
      %v5150 = vld [vmem:[%s1324 + $0x108] sm:$0xff]
      %v5151 = vld [vmem:[%s1324 + $0x110] sm:$0xff]
      %v5152 = vld [vmem:[%s1324 + $0x118] sm:$0xff]
      %v5153 = vld [vmem:[%s1324 + $0x120] sm:$0xff]
      %v5154 = vld [vmem:[%s1324 + $0x128] sm:$0xff]
      %v5155 = vld [vmem:[%s1324 + $0x130] sm:$0xff]
      %v5156 = vld [vmem:[%s1324 + $0x138] sm:$0xff]
      %v5157 = vld [vmem:[%s1324 + $0x140] sm:$0xff]
      %v5158 = vld [vmem:[%s1324 + $0x148] sm:$0xff]
      %v5159 = vld [vmem:[%s1324 + $0x150] sm:$0xff]
      %v5160 = vld [vmem:[%s1324 + $0x158] sm:$0xff]
      %v5161 = vld [vmem:[%s1324 + $0x160] sm:$0xff]
      %v5162 = vld [vmem:[%s1324 + $0x168] sm:$0xff]
      %v5163 = vld [vmem:[%s1324 + $0x170] sm:$0xff]
      %v5164 = vld [vmem:[%s1324 + $0x178] sm:$0xff]
      %v5165 = vld [vmem:[%s1324 + $0x180] sm:$0xff]
      %v5166 = vld [vmem:[%s1324 + $0x188] sm:$0xff]
      %v5167 = vld [vmem:[%s1324 + $0x190] sm:$0xff]
      %v5168 = vld [vmem:[%s1324 + $0x198] sm:$0xff]
      %v5169 = vld [vmem:[%s1324 + $0x1a0] sm:$0xff]
      %v5170 = vld [vmem:[%s1324 + $0x1a8] sm:$0xff]
      %v5171 = vld [vmem:[%s1324 + $0x1b0] sm:$0xff]
      %v5172 = vld [vmem:[%s1324 + $0x1b8] sm:$0xff]
      %v5173 = vld [vmem:[%s1324 + $0x1c0] sm:$0xff]
      %v5174 = vld [vmem:[%s1324 + $0x1c8] sm:$0xff]
      %v5175 = vld [vmem:[%s1324 + $0x1d0] sm:$0xff]
      %v5176 = vld [vmem:[%s1324 + $0x1d8] sm:$0xff]
      %v5177 = vld [vmem:[%s1324 + $0x1e0] sm:$0xff]
      %v5178 = vld [vmem:[%s1324 + $0x1e8] sm:$0xff]
      %v5179 = vld [vmem:[%s1324 + $0x1f0] sm:$0xff]
      %v5180 = vld [vmem:[%s1324 + $0x1f8] sm:$0xff]
      %v5181 = vld [vmem:[%s1324 + $0x200] sm:$0xff]
      %v5182 = vld [vmem:[%s1324 + $0x208] sm:$0xff]
      %v5183 = vld [vmem:[%s1324 + $0x210] sm:$0xff]
      %v5184 = vld [vmem:[%s1324 + $0x218] sm:$0xff]
      %v5185 = vld [vmem:[%s1324 + $0x220] sm:$0xff]
      %v5186 = vld [vmem:[%s1324 + $0x228] sm:$0xff]
      %v5187 = vld [vmem:[%s1324 + $0x230] sm:$0xff]
      %v5188 = vld [vmem:[%s1324 + $0x238] sm:$0xff]
      %v5189 = vld [vmem:[%s1324 + $0x240] sm:$0xff]
      %v5190 = vld [vmem:[%s1324 + $0x248] sm:$0xff]
      %v5191 = vld [vmem:[%s1324 + $0x250] sm:$0xff]
      %v5192 = vld [vmem:[%s1324 + $0x258] sm:$0xff]
      %v5193 = vld [vmem:[%s1324 + $0x260] sm:$0xff]
      %v5194 = vld [vmem:[%s1324 + $0x268] sm:$0xff]
      %v5195 = vld [vmem:[%s1324 + $0x270] sm:$0xff]
      %v5196 = vld [vmem:[%s1324 + $0x278] sm:$0xff]
      %v5197 = vld [vmem:[%s1324 + $0x280] sm:$0xff]
      %v5198 = vld [vmem:[%s1324 + $0x288] sm:$0xff]
      %v5199 = vld [vmem:[%s1324 + $0x290] sm:$0xff]
      %v5200 = vld [vmem:[%s1324 + $0x298] sm:$0xff]
      %v5201 = vld [vmem:[%s1324 + $0x2a0] sm:$0xff]
      %v5202 = vld [vmem:[%s1324 + $0x2a8] sm:$0xff]
      %v5203 = vld [vmem:[%s1324 + $0x2b0] sm:$0xff]
      %v5204 = vld [vmem:[%s1324 + $0x2b8] sm:$0xff]
      %v5205 = vld [vmem:[%s1324 + $0x2c0] sm:$0xff]
      %v5206 = vld [vmem:[%s1324 + $0x2c8] sm:$0xff]
      %v5207 = vld [vmem:[%s1324 + $0x2d0] sm:$0xff]
      %v5208 = vld [vmem:[%s1324 + $0x2d8] sm:$0xff]
      %v5209 = vld [vmem:[%s1324 + $0x2e0] sm:$0xff]
      %v5210 = vld [vmem:[%s1324 + $0x2e8] sm:$0xff]
      %v5211 = vld [vmem:[%s1324 + $0x2f0] sm:$0xff]
      %v5212 = vld [vmem:[%s1324 + $0x2f8] sm:$0xff]
      %v5213 = vld [vmem:[%s1324 + $0x300] sm:$0xff]
      %v5214 = vld [vmem:[%s1324 + $0x308] sm:$0xff]
      %v5215 = vld [vmem:[%s1324 + $0x310] sm:$0xff]
      %v5216 = vld [vmem:[%s1324 + $0x318] sm:$0xff]
      %v5217 = vld [vmem:[%s1324 + $0x320] sm:$0xff]
      %v5218 = vld [vmem:[%s1324 + $0x328] sm:$0xff]
      %v5219 = vld [vmem:[%s1324 + $0x330] sm:$0xff]
      %v5220 = vld [vmem:[%s1324 + $0x338] sm:$0xff]
      %v5221 = vld [vmem:[%s1324 + $0x340] sm:$0xff]
      %v5222 = vld [vmem:[%s1324 + $0x348] sm:$0xff]
      %v5223 = vld [vmem:[%s1324 + $0x350] sm:$0xff]
      %v5224 = vld [vmem:[%s1324 + $0x358] sm:$0xff]
      %v5225 = vld [vmem:[%s1324 + $0x360] sm:$0xff]
      %v5226 = vld [vmem:[%s1324 + $0x368] sm:$0xff]
      %v5227 = vld [vmem:[%s1324 + $0x370] sm:$0xff]
      %v5228 = vld [vmem:[%s1324 + $0x378] sm:$0xff]
      %v5229 = vld [vmem:[%s1324 + $0x380] sm:$0xff]
      %v5230 = vld [vmem:[%s1324 + $0x388] sm:$0xff]
      %v5231 = vld [vmem:[%s1324 + $0x390] sm:$0xff]
      %v5232 = vld [vmem:[%s1324 + $0x398] sm:$0xff]
      %v5233 = vld [vmem:[%s1324 + $0x3a0] sm:$0xff]
      %v5234 = vld [vmem:[%s1324 + $0x3a8] sm:$0xff]
      %v5235 = vld [vmem:[%s1324 + $0x3b0] sm:$0xff]
      %v5236 = vld [vmem:[%s1324 + $0x3b8] sm:$0xff]
      %v5237 = vld [vmem:[%s1324 + $0x3c0] sm:$0xff]
      %v5238 = vld [vmem:[%s1324 + $0x3c8] sm:$0xff]
      %v5239 = vld [vmem:[%s1324 + $0x3d0] sm:$0xff]
      %v5240 = vld [vmem:[%s1324 + $0x3d8] sm:$0xff]
      %v5241 = vld [vmem:[%s1324 + $0x3e0] sm:$0xff]
      %v5242 = vld [vmem:[%s1324 + $0x3e8] sm:$0xff]
      %v5243 = vld [vmem:[%s1324 + $0x3f0] sm:$0xff]
      %v5244 = vld [vmem:[%s1324 + $0x3f8] sm:$0xff]
      %v5245 = vld [vmem:[%s1327] sm:$0x1]
      %5246 = vmatprep.subr.mxu0 0.0
      %5247 = vmatpush1.msra.mxu0 %v5132
      %5248 = vmatprep.subr.mxu0 0.0
      %5249 = vmatpush1.msra.mxu0 %v5131
      %5250 = vmatprep.subr.mxu0 0.0
      %5251 = vmatpush1.msra.mxu0 %v5130
      %5252 = vmatprep.subr.mxu0 0.0
      %5253 = vmatpush1.msra.mxu0 %v5129
      %5254 = vmatprep.subr.mxu0 0.0
      %5255 = vmatpush1.msra.mxu0 %v5128
      %5256 = vmatprep.subr.mxu0 0.0
      %5257 = vmatpush1.msra.mxu0 %v5127
      %5258 = vmatprep.subr.mxu0 0.0
      %5259 = vmatpush1.msra.mxu0 %v5126
      %5260 = vmatprep.subr.mxu0 0.0
      %5261 = vmatpush1.msra.mxu0 %v5125
      %5262 = vmatprep.subr.mxu0 0.0
      %5263 = vmatpush1.msra.mxu0 %v5124
      %5264 = vmatprep.subr.mxu0 0.0
      %5265 = vmatpush1.msra.mxu0 %v5123
      %5266 = vmatprep.subr.mxu0 0.0
      %5267 = vmatpush1.msra.mxu0 %v5122
      %5268 = vmatprep.subr.mxu0 0.0
      %5269 = vmatpush1.msra.mxu0 %v5121
      %5270 = vmatprep.subr.mxu0 0.0
      %5271 = vmatpush1.msra.mxu0 %v5120
      %5272 = vmatprep.subr.mxu0 0.0
      %5273 = vmatpush1.msra.mxu0 %v5119
      %5274 = vmatprep.subr.mxu0 0.0
      %5275 = vmatpush1.msra.mxu0 %v5118
      %5276 = vmatprep.subr.mxu0 0.0
      %5277 = vmatpush1.msra.mxu0 %v5117
      %5278 = vmatprep.subr.mxu0 0.0
      %5279 = vmatpush2.msra.mxu0 %v5148
      %5280 = vmatprep.subr.mxu0 0.0
      %5281 = vmatpush2.msra.mxu0 %v5147
      %5282 = vmatprep.subr.mxu0 0.0
      %5283 = vmatpush2.msra.mxu0 %v5146
      %5284 = vmatprep.subr.mxu0 0.0
      %5285 = vmatpush2.msra.mxu0 %v5145
      %5286 = vmatprep.subr.mxu0 0.0
      %5287 = vmatpush2.msra.mxu0 %v5144
      %5288 = vmatprep.subr.mxu0 0.0
      %5289 = vmatpush2.msra.mxu0 %v5143
      %5290 = vmatprep.subr.mxu0 0.0
      %5291 = vmatpush2.msra.mxu0 %v5142
      %5292 = vmatprep.subr.mxu0 0.0
      %5293 = vmatpush2.msra.mxu0 %v5141
      %5294 = vmatprep.subr.mxu0 0.0
      %5295 = vmatpush2.msra.mxu0 %v5140
      %5296 = vmatprep.subr.mxu0 0.0
      %5297 = vmatpush2.msra.mxu0 %v5139
      %5298 = vmatprep.subr.mxu0 0.0
      %5299 = vmatpush2.msra.mxu0 %v5138
      %5300 = vmatprep.subr.mxu0 0.0
      %5301 = vmatpush2.msra.mxu0 %v5137
      %5302 = vmatprep.subr.mxu0 0.0
      %5303 = vmatpush2.msra.mxu0 %v5136
      %5304 = vmatprep.subr.mxu0 0.0
      %5305 = vmatpush2.msra.mxu0 %v5135
      %5306 = vmatprep.subr.mxu0 0.0
      %5307 = vmatpush2.msra.mxu0 %v5134
      %5308 = vmatprep.subr.mxu0 0.0
      %5309 = vmatpush2.msra.mxu0 %v5133
      %5310 = vmatprep.mubr.f32.mxu0 %v5110
      %5311 = vmatmul.mubr.f32.gmra.mxu0 %v5109
      %v5312 = vpop.f32.mrf.mxu0
      %v5313 = vadd.f32 %v5245, %v5312
      %v5314 = vpop.f32.mrf.mxu0
      %5315 = vdwg.mxu0
      %5316 = vmatprep.subr.mxu0 0.0
      %5317 = vmatpush1.msra.mxu0 %v5164
      %5318 = vmatprep.subr.mxu0 0.0
      %5319 = vmatpush1.msra.mxu0 %v5163
      %5320 = vmatprep.subr.mxu0 0.0
      %5321 = vmatpush1.msra.mxu0 %v5162
      %5322 = vmatprep.subr.mxu0 0.0
      %5323 = vmatpush1.msra.mxu0 %v5161
      %5324 = vmatprep.subr.mxu0 0.0
      %5325 = vmatpush1.msra.mxu0 %v5160
      %5326 = vmatprep.subr.mxu0 0.0
      %5327 = vmatpush1.msra.mxu0 %v5159
      %5328 = vmatprep.subr.mxu0 0.0
      %5329 = vmatpush1.msra.mxu0 %v5158
      %5330 = vmatprep.subr.mxu0 0.0
      %5331 = vmatpush1.msra.mxu0 %v5157
      %5332 = vmatprep.subr.mxu0 0.0
      %5333 = vmatpush1.msra.mxu0 %v5156
      %5334 = vmatprep.subr.mxu0 0.0
      %5335 = vmatpush1.msra.mxu0 %v5155
      %5336 = vmatprep.subr.mxu0 0.0
      %5337 = vmatpush1.msra.mxu0 %v5154
      %5338 = vmatprep.subr.mxu0 0.0
      %5339 = vmatpush1.msra.mxu0 %v5153
      %5340 = vmatprep.subr.mxu0 0.0
      %5341 = vmatpush1.msra.mxu0 %v5152
      %5342 = vmatprep.subr.mxu0 0.0
      %5343 = vmatpush1.msra.mxu0 %v5151
      %5344 = vmatprep.subr.mxu0 0.0
      %5345 = vmatpush1.msra.mxu0 %v5150
      %5346 = vmatprep.subr.mxu0 0.0
      %5347 = vmatpush1.msra.mxu0 %v5149
      %5348 = vmatprep.subr.mxu0 0.0
      %5349 = vmatpush2.msra.mxu0 %v5180
      %5350 = vmatprep.subr.mxu0 0.0
      %5351 = vmatpush2.msra.mxu0 %v5179
      %5352 = vmatprep.subr.mxu0 0.0
      %5353 = vmatpush2.msra.mxu0 %v5178
      %5354 = vmatprep.subr.mxu0 0.0
      %5355 = vmatpush2.msra.mxu0 %v5177
      %5356 = vmatprep.subr.mxu0 0.0
      %5357 = vmatpush2.msra.mxu0 %v5176
      %5358 = vmatprep.subr.mxu0 0.0
      %5359 = vmatpush2.msra.mxu0 %v5175
      %5360 = vmatprep.subr.mxu0 0.0
      %5361 = vmatpush2.msra.mxu0 %v5174
      %5362 = vmatprep.subr.mxu0 0.0
      %5363 = vmatpush2.msra.mxu0 %v5173
      %5364 = vmatprep.subr.mxu0 0.0
      %5365 = vmatpush2.msra.mxu0 %v5172
      %5366 = vmatprep.subr.mxu0 0.0
      %5367 = vmatpush2.msra.mxu0 %v5171
      %5368 = vmatprep.subr.mxu0 0.0
      %5369 = vmatpush2.msra.mxu0 %v5170
      %5370 = vmatprep.subr.mxu0 0.0
      %5371 = vmatpush2.msra.mxu0 %v5169
      %5372 = vmatprep.subr.mxu0 0.0
      %5373 = vmatpush2.msra.mxu0 %v5168
      %5374 = vmatprep.subr.mxu0 0.0
      %5375 = vmatpush2.msra.mxu0 %v5167
      %5376 = vmatprep.subr.mxu0 0.0
      %5377 = vmatpush2.msra.mxu0 %v5166
      %5378 = vmatprep.subr.mxu0 0.0
      %5379 = vmatpush2.msra.mxu0 %v5165
      %5380 = vmatprep.mubr.f32.mxu0 %v5112
      %5381 = vmatmul.mubr.f32.gmra.mxu0 %v5111
      %v5382 = vpop.f32.mrf.mxu0
      %v5383 = vadd.f32 %v5313, %v5382
      %v5384 = vpop.f32.mrf.mxu0
      %5385 = vdwg.mxu0
      %5386 = vmatprep.subr.mxu0 0.0
      %5387 = vmatpush1.msra.mxu0 %v5196
      %5388 = vmatprep.subr.mxu0 0.0
      %5389 = vmatpush1.msra.mxu0 %v5195
      %5390 = vmatprep.subr.mxu0 0.0
      %5391 = vmatpush1.msra.mxu0 %v5194
      %5392 = vmatprep.subr.mxu0 0.0
      %5393 = vmatpush1.msra.mxu0 %v5193
      %5394 = vmatprep.subr.mxu0 0.0
      %5395 = vmatpush1.msra.mxu0 %v5192
      %5396 = vmatprep.subr.mxu0 0.0
      %5397 = vmatpush1.msra.mxu0 %v5191
      %5398 = vmatprep.subr.mxu0 0.0
      %5399 = vmatpush1.msra.mxu0 %v5190
      %5400 = vmatprep.subr.mxu0 0.0
      %5401 = vmatpush1.msra.mxu0 %v5189
      %5402 = vmatprep.subr.mxu0 0.0
      %5403 = vmatpush1.msra.mxu0 %v5188
      %5404 = vmatprep.subr.mxu0 0.0
      %5405 = vmatpush1.msra.mxu0 %v5187
      %5406 = vmatprep.subr.mxu0 0.0
      %5407 = vmatpush1.msra.mxu0 %v5186
      %5408 = vmatprep.subr.mxu0 0.0
      %5409 = vmatpush1.msra.mxu0 %v5185
      %5410 = vmatprep.subr.mxu0 0.0
      %5411 = vmatpush1.msra.mxu0 %v5184
      %5412 = vmatprep.subr.mxu0 0.0
      %5413 = vmatpush1.msra.mxu0 %v5183
      %5414 = vmatprep.subr.mxu0 0.0
      %5415 = vmatpush1.msra.mxu0 %v5182
      %5416 = vmatprep.subr.mxu0 0.0
      %5417 = vmatpush1.msra.mxu0 %v5181
      %5418 = vmatprep.subr.mxu0 0.0
      %5419 = vmatpush2.msra.mxu0 %v5212
      %5420 = vmatprep.subr.mxu0 0.0
      %5421 = vmatpush2.msra.mxu0 %v5211
      %5422 = vmatprep.subr.mxu0 0.0
      %5423 = vmatpush2.msra.mxu0 %v5210
      %5424 = vmatprep.subr.mxu0 0.0
      %5425 = vmatpush2.msra.mxu0 %v5209
      %5426 = vmatprep.subr.mxu0 0.0
      %5427 = vmatpush2.msra.mxu0 %v5208
      %5428 = vmatprep.subr.mxu0 0.0
      %5429 = vmatpush2.msra.mxu0 %v5207
      %5430 = vmatprep.subr.mxu0 0.0
      %5431 = vmatpush2.msra.mxu0 %v5206
      %5432 = vmatprep.subr.mxu0 0.0
      %5433 = vmatpush2.msra.mxu0 %v5205
      %5434 = vmatprep.subr.mxu0 0.0
      %5435 = vmatpush2.msra.mxu0 %v5204
      %5436 = vmatprep.subr.mxu0 0.0
      %5437 = vmatpush2.msra.mxu0 %v5203
      %5438 = vmatprep.subr.mxu0 0.0
      %5439 = vmatpush2.msra.mxu0 %v5202
      %5440 = vmatprep.subr.mxu0 0.0
      %5441 = vmatpush2.msra.mxu0 %v5201
      %5442 = vmatprep.subr.mxu0 0.0
      %5443 = vmatpush2.msra.mxu0 %v5200
      %5444 = vmatprep.subr.mxu0 0.0
      %5445 = vmatpush2.msra.mxu0 %v5199
      %5446 = vmatprep.subr.mxu0 0.0
      %5447 = vmatpush2.msra.mxu0 %v5198
      %5448 = vmatprep.subr.mxu0 0.0
      %5449 = vmatpush2.msra.mxu0 %v5197
      %5450 = vmatprep.mubr.f32.mxu0 %v5114
      %5451 = vmatmul.mubr.f32.gmra.mxu0 %v5113
      %v5452 = vpop.f32.mrf.mxu0
      %v5453 = vadd.f32 %v5383, %v5452
      %v5454 = vpop.f32.mrf.mxu0
      %5455 = vdwg.mxu0
      %5456 = vmatprep.subr.mxu0 0.0
      %5457 = vmatpush1.msra.mxu0 %v5228
      %5458 = vmatprep.subr.mxu0 0.0
      %5459 = vmatpush1.msra.mxu0 %v5227
      %5460 = vmatprep.subr.mxu0 0.0
      %5461 = vmatpush1.msra.mxu0 %v5226
      %5462 = vmatprep.subr.mxu0 0.0
      %5463 = vmatpush1.msra.mxu0 %v5225
      %5464 = vmatprep.subr.mxu0 0.0
      %5465 = vmatpush1.msra.mxu0 %v5224
      %5466 = vmatprep.subr.mxu0 0.0
      %5467 = vmatpush1.msra.mxu0 %v5223
      %5468 = vmatprep.subr.mxu0 0.0
      %5469 = vmatpush1.msra.mxu0 %v5222
      %5470 = vmatprep.subr.mxu0 0.0
      %5471 = vmatpush1.msra.mxu0 %v5221
      %5472 = vmatprep.subr.mxu0 0.0
      %5473 = vmatpush1.msra.mxu0 %v5220
      %5474 = vmatprep.subr.mxu0 0.0
      %5475 = vmatpush1.msra.mxu0 %v5219
      %5476 = vmatprep.subr.mxu0 0.0
      %5477 = vmatpush1.msra.mxu0 %v5218
      %5478 = vmatprep.subr.mxu0 0.0
      %5479 = vmatpush1.msra.mxu0 %v5217
      %5480 = vmatprep.subr.mxu0 0.0
      %5481 = vmatpush1.msra.mxu0 %v5216
      %5482 = vmatprep.subr.mxu0 0.0
      %5483 = vmatpush1.msra.mxu0 %v5215
      %5484 = vmatprep.subr.mxu0 0.0
      %5485 = vmatpush1.msra.mxu0 %v5214
      %5486 = vmatprep.subr.mxu0 0.0
      %5487 = vmatpush1.msra.mxu0 %v5213
      %5488 = vmatprep.subr.mxu0 0.0
      %5489 = vmatpush2.msra.mxu0 %v5244
      %5490 = vmatprep.subr.mxu0 0.0
      %5491 = vmatpush2.msra.mxu0 %v5243
      %5492 = vmatprep.subr.mxu0 0.0
      %5493 = vmatpush2.msra.mxu0 %v5242
      %5494 = vmatprep.subr.mxu0 0.0
      %5495 = vmatpush2.msra.mxu0 %v5241
      %5496 = vmatprep.subr.mxu0 0.0
      %5497 = vmatpush2.msra.mxu0 %v5240
      %5498 = vmatprep.subr.mxu0 0.0
      %5499 = vmatpush2.msra.mxu0 %v5239
      %5500 = vmatprep.subr.mxu0 0.0
      %5501 = vmatpush2.msra.mxu0 %v5238
      %5502 = vmatprep.subr.mxu0 0.0
      %5503 = vmatpush2.msra.mxu0 %v5237
      %5504 = vmatprep.subr.mxu0 0.0
      %5505 = vmatpush2.msra.mxu0 %v5236
      %5506 = vmatprep.subr.mxu0 0.0
      %5507 = vmatpush2.msra.mxu0 %v5235
      %5508 = vmatprep.subr.mxu0 0.0
      %5509 = vmatpush2.msra.mxu0 %v5234
      %5510 = vmatprep.subr.mxu0 0.0
      %5511 = vmatpush2.msra.mxu0 %v5233
      %5512 = vmatprep.subr.mxu0 0.0
      %5513 = vmatpush2.msra.mxu0 %v5232
      %5514 = vmatprep.subr.mxu0 0.0
      %5515 = vmatpush2.msra.mxu0 %v5231
      %5516 = vmatprep.subr.mxu0 0.0
      %5517 = vmatpush2.msra.mxu0 %v5230
      %5518 = vmatprep.subr.mxu0 0.0
      %5519 = vmatpush2.msra.mxu0 %v5229
      %5520 = vmatprep.mubr.f32.mxu0 %v5116
      %5521 = vmatmul.mubr.f32.gmra.mxu0 %v5115
      %v5522 = vpop.f32.mrf.mxu0
      %v5523 = vadd.f32 %v5453, %v5522
      %v5524 = vpop.f32.mrf.mxu0
      %5525 = vdwg.mxu0
      %v5526 = vtanh.pop %v5523
      %v5527 = vld [vmem:[%s55] sm:$0xff]
      %v5528 = vld [vmem:[%s55 + $0x8] sm:$0xff]
      %v5529 = vld [vmem:[%s55 + $0x10] sm:$0xff]
      %v5530 = vld [vmem:[%s55 + $0x18] sm:$0xff]
      %v5531 = vld [vmem:[%s57] sm:$0x1]
      %v5533 = vsel %vm1421, %v5526, 0
      %5535 = vmatprep.subr.mxu0 0.0
      %5536 = vmatpush1.msra.mxu0 0.0
      %5537 = vmatprep.subr.mxu0 0.0
      %5538 = vmatpush1.msra.mxu0 0.0
      %5539 = vmatprep.subr.mxu0 0.0
      %5540 = vmatpush1.msra.mxu0 0.0
      %5541 = vmatprep.subr.mxu0 0.0
      %5542 = vmatpush1.msra.mxu0 0.0
      %5543 = vmatprep.subr.mxu0 0.0
      %5544 = vmatpush1.msra.mxu0 0.0
      %5545 = vmatprep.subr.mxu0 0.0
      %5546 = vmatpush1.msra.mxu0 0.0
      %5547 = vmatprep.subr.mxu0 0.0
      %5548 = vmatpush1.msra.mxu0 0.0
      %5549 = vmatprep.subr.mxu0 0.0
      %5550 = vmatpush1.msra.mxu0 0.0
      %5551 = vmatprep.subr.mxu0 0.0
      %5552 = vmatpush1.msra.mxu0 0.0
      %5553 = vmatprep.subr.mxu0 0.0
      %5554 = vmatpush1.msra.mxu0 0.0
      %5555 = vmatprep.subr.mxu0 0.0
      %5556 = vmatpush1.msra.mxu0 0.0
      %5557 = vmatprep.subr.mxu0 0.0
      %5558 = vmatpush1.msra.mxu0 0.0
      %5559 = vmatprep.subr.mxu0 0.0
      %5560 = vmatpush1.msra.mxu0 %v5530
      %5561 = vmatprep.subr.mxu0 0.0
      %5562 = vmatpush1.msra.mxu0 %v5529
      %5563 = vmatprep.subr.mxu0 0.0
      %5564 = vmatpush1.msra.mxu0 %v5528
      %5565 = vmatprep.subr.mxu0 0.0
      %5566 = vmatpush1.msra.mxu0 %v5527
      %5567 = vmatprep.subr.mxu0 0.0
      %5568 = vmatpush2.msra.mxu0 0.0
      %5569 = vmatprep.subr.mxu0 0.0
      %5570 = vmatpush2.msra.mxu0 0.0
      %5571 = vmatprep.subr.mxu0 0.0
      %5572 = vmatpush2.msra.mxu0 0.0
      %5573 = vmatprep.subr.mxu0 0.0
      %5574 = vmatpush2.msra.mxu0 0.0
      %5575 = vmatprep.subr.mxu0 0.0
      %5576 = vmatpush2.msra.mxu0 0.0
      %5577 = vmatprep.subr.mxu0 0.0
      %5578 = vmatpush2.msra.mxu0 0.0
      %5579 = vmatprep.subr.mxu0 0.0
      %5580 = vmatpush2.msra.mxu0 0.0
      %5581 = vmatprep.subr.mxu0 0.0
      %5582 = vmatpush2.msra.mxu0 0.0
      %5583 = vmatprep.subr.mxu0 0.0
      %5584 = vmatpush2.msra.mxu0 0.0
      %5585 = vmatprep.subr.mxu0 0.0
      %5586 = vmatpush2.msra.mxu0 0.0
      %5587 = vmatprep.subr.mxu0 0.0
      %5588 = vmatpush2.msra.mxu0 0.0
      %5589 = vmatprep.subr.mxu0 0.0
      %5590 = vmatpush2.msra.mxu0 0.0
      %5591 = vmatprep.subr.mxu0 0.0
      %5592 = vmatpush2.msra.mxu0 0.0
      %5593 = vmatprep.subr.mxu0 0.0
      %5594 = vmatpush2.msra.mxu0 0.0
      %5595 = vmatprep.subr.mxu0 0.0
      %5596 = vmatpush2.msra.mxu0 0.0
      %5597 = vmatprep.subr.mxu0 0.0
      %5598 = vmatpush2.msra.mxu0 0.0
      %5599 = vmatprep.mubr.f32.mxu0 0.0
      %5600 = vmatmul.mubr.f32.gmra.mxu0 %v5533
      %v5601 = vpop.f32.mrf.mxu0
      %v5602 = vadd.f32 %v5531, %v5601
      %v5603 = vpop.f32.mrf.mxu0
      %5604 = vdwg.mxu0
      %v5605 = vtanh.pop %v5602
      %vm5606 = vcmask 8192
      %v5607 = vsel %vm5606, %v5605, -inf
      %5608 = vmax.xlane.f32.xlu0 %v5607
      %v5609 = vpop.xlane.xlu0 %5608
      %v5610 = vsub.f32 %v5605, %v5609
      %v5611 = vmul.f32 %v5610, 1.442695
      %v5612 = vpow.pop %v5611
      %v5613 = vsel %vm5606, %v5612, 0.0
      %5614 = vadd.xlane.f32.xlu0 %v5613
      %v5615 = vpop.xlane.xlu0 %5614
      %v5616 = vrcp.pop %v5615
      %v5617 = vmul.f32 %v5612, %v5616
      %5618 = vst.msk [vmem:[%s1330] sm:$0x1] %vm5606, %v5617
      %p5619 = scmp.lt.s32.totalorder %s70, 2
      %s5620 = scalar_select %p5619, %s70, 2
      %s5621 = scalar_lea.vmem %s59, %s5620
      // Predicated region
      $region137: #{mansf_forward.1} parent=135 // pred_check
        %p5622 = pneg %p822
      $region138: #{mansf_forward.1} parent=135 // pred_check_branch
        %5624 = sbr.rel (%p5622) target = $region140
      $region139: #{mansf_forward.1} parent=135 // pred_region
        _
      $region140: #{mansf_forward.1} parent=135 // pred_fallthru
        _
    $region136: #{mansf_forward.1} parent=5 // pred_fallthru
      _
    %p5625 = scmp.le.s32.totalorder 2, %s65
    // Predicated region
    $region141: #{mansf_forward.1} parent=5 // pred_check
      %p5626 = pneg %p5625
    $region142: #{mansf_forward.1} parent=5 // pred_check_branch
      %5628 = sbr.rel (%p5626) target = $region144
    $region143: #{mansf_forward.1} parent=5 // pred_region
      %s5629 = ssub.s32 %s65, 2
      // Predicated region
      $region145: #{mansf_forward.1} parent=143 // pred_check
        %p5630 = pneg %p828
      $region146: #{mansf_forward.1} parent=143 // pred_check_branch
        %5632 = sbr.rel (%p5630) target = $region148
      $region147: #{mansf_forward.1} parent=143 // pred_region
        %p5633 = scmp.lt.s32.totalorder %s71, 2
        %s5634 = scalar_select %p5633, %s71, 2
        %s5635 = scalar_lea.vmem %s59, %s5634
      $region148: #{mansf_forward.1} parent=143 // pred_fallthru
        _
    $region144: #{mansf_forward.1} parent=5 // pred_fallthru
      _
  $region6: #{mansf_forward.1} parent=0 // loop_footer
    %s69 = sadd.s32 1, %s65
  $region7: #{mansf_forward.1} parent=0 // loop_footer_branch
    %64 = sbr.rel target = $region3
  $region8: #{mansf_forward.1} parent=0 // loop_exit
    _

</llo_original>
